<compile_context>
chip_gen: v5e
topology: v5e:2x2
jax: 0.10.0
libtpu: 0.0.40
codegen_flags: <defaults>
</compile_context>

<pallas_src>
import jax
import jax.numpy as jnp
from jax import lax
from jax.experimental import pallas as pl
from jax.experimental.pallas import tpu as pltpu

BN_EPS = 1e-5
LANES = 128  # channel padding target = vreg lane width


def _bn_maybe_relu(h, gamma, beta, inv_n, relu=True):
    # Train-mode BN (batch mean, biased variance), single pass:
    # var = E[x^2] - E[x]^2 folded into per-channel scale/shift (rsqrt -> EUP slot).
    s = jnp.sum(h, axis=0, keepdims=True)
    ss = jnp.sum(h * h, axis=0, keepdims=True)
    mu = s * inv_n
    var = ss * inv_n - mu * mu
    scale = gamma * lax.rsqrt(var + BN_EPS)
    shift = beta - mu * scale
    y = h * scale + shift
    return jnp.maximum(y, 0.0) if relu else y


def _make_bottleneck_kernel(N, H, W, P, is_skip):
    NR = N * H * W
    inv_n = 1.0 / NR
    pow2 = ((H & (H - 1)) == 0) and ((W & (W - 1)) == 0)
    log2w = W.bit_length() - 1

    def kernel(x_ref, w_ref, bn_ref, o_ref):
        x = x_ref[...]                                   # (NR, 128) f32, lane-dense
        bn = bn_ref[...]                                 # (6, 128)  f32
        g1, b1 = bn[0:1, :], bn[1:2, :]
        g2, b2 = bn[2:3, :], bn[3:4, :]
        g3, b3 = bn[4:5, :], bn[5:6, :]

        # ---- conv1 (1x1) + BN + ReLU : bf16 MXU inputs, f32 accumulation ----
        h1 = jnp.dot(x.astype(jnp.bfloat16), w_ref[0],
                     preferred_element_type=jnp.float32)
        h1 = _bn_maybe_relu(h1, g1, b1, inv_n)

        # ---- conv2 (3x3, stride 1, pad 1): boundary-masked circular row rolls,
        #      taps lane-packed into a single 128-lane group, ONE K=128 matmul ----
        row = lax.broadcasted_iota(jnp.int32, (NR, 1), 0)
        if pow2:
            xx = row & (W - 1)
            yy = (row >> log2w) & (H - 1)
        else:
            xx = row % W
            yy = (row // W) % H
        y_lo, y_hi = yy >= 1, yy <= H - 2                # dy = -1 / +1 valid
        x_lo, x_hi = xx >= 1, xx <= W - 2                # dx = -1 / +1 valid

        cols = None
        t = 0
        for dy in (-1, 0, 1):
            for dx in (-1, 0, 1):
                off = dy * W + dx
                # shifted[r,:] = h1[r+off,:]; wrapped rows are killed by the mask.
                tap = h1 if off == 0 else pltpu.roll(h1, shift=(-off) % NR, axis=0)
                mask = None
                if dy != 0:
                    mask = y_lo if dy < 0 else y_hi
                if dx != 0:
                    m2 = x_lo if dx < 0 else x_hi
                    mask = m2 if mask is None else (mask & m2)
                if mask is not None:
                    tap = jnp.where(mask, tap, 0.0)
                if t:
                    # live lanes of tap t land at [t*P, (t+1)*P): disjoint across taps
                    tap = pltpu.roll(tap, shift=t * P, axis=1)
                cols = tap if cols is None else cols + tap
                t += 1
        h2 = jnp.dot(cols.astype(jnp.bfloat16), w_ref[1],
                     preferred_element_type=jnp.float32)
        h2 = _bn_maybe_relu(h2, g2, b2, inv_n)

        # ---- conv3 (1x1) + BN (no ReLU yet) ----
        h3 = jnp.dot(h2.astype(jnp.bfloat16), w_ref[2],
                     preferred_element_type=jnp.float32)
        h3 = _bn_maybe_relu(h3, g3, b3, inv_n, relu=False)

        if is_skip:                                      # inplanes == outplanes
            h3 = h3 + x                                  # residual stays f32
        o_ref[...] = jnp.maximum(h3, 0.0)                # full-width 128-lane store

    return kernel


def bottleneck_pallas(x_nchw, params):
    x_nchw = x_nchw.astype(jnp.float32)
    N, Cin, H, W = x_nchw.shape
    P = params["w1"].shape[1]
    Cout = params["w3"].shape[1]
    assert max(Cin, P, Cout) <= LANES
    # TODO(synk): fall back to the unpacked K=9*128 im2col when 9*planes > 128.
    assert 9 * P <= LANES, "packed-tap conv2 requires 9*planes <= 128"
    is_skip = (Cin == Cout)
    NR = N * H * W

    # NCHW -> lane-dense (N*H*W, 128) slab (channels zero-padded onto the lane axis).
    x_flat = jnp.transpose(x_nchw, (0, 2, 3, 1)).reshape(NR, Cin)
    x_p = jnp.pad(x_flat, ((0, 0), (0, LANES - Cin)))

    # Weights: pad to the 128-lane width, stack into one input, cast to bf16 (MXU-
    # native).  Zero padding keeps padded channels exactly 0 through every stage.
    w1_p = jnp.pad(params["w1"], ((0, LANES - Cin), (0, LANES - P)))
    w2_rows = params["w2"].reshape(9 * P, P)             # row index = tap*planes + cin
    w2_p = jnp.pad(w2_rows, ((0, LANES - 9 * P), (0, LANES - P)))
    w3_p = jnp.pad(params["w3"], ((0, LANES - P), (0, LANES - Cout)))
    w_stack = jnp.stack([w1_p, w2_p, w3_p]).astype(jnp.bfloat16)   # (3,128,128) bf16

    # BN gamma/beta collapsed into one (6,128) f32 stack (zero-padded lanes give
    # scale=shift=0, keeping padded channels exactly zero).
    def _padp(a, c):
        return jnp.pad(a, ((0, 0), (0, LANES - c)))
    bn_stack = jnp.concatenate([
        _padp(params["g1"], P), _padp(params["b1"], P),
        _padp(params["g2"], P), _padp(params["b2"], P),
        _padp(params["g3"], Cout), _padp(params["b3"], Cout)], axis=0)

    kernel = _make_bottleneck_kernel(N, H, W, P, is_skip)
    vmem = pl.BlockSpec(memory_space=pltpu.MemorySpace.VMEM)
    flops = 2 * NR * LANES * LANES * 3                    # three 128-wide matmuls
    bytes_accessed = 2 * NR * LANES * 4 + w_stack.size * 2 + bn_stack.size * 4
    out_flat = pl.pallas_call(
        kernel,
        out_shape=jax.ShapeDtypeStruct((NR, LANES), jnp.float32),
        in_specs=[vmem, vmem, vmem],
        out_specs=vmem,
        compiler_params=pltpu.CompilerParams(
            # ~1-2 MiB live VMEM at these shapes; 32 MiB is safe headroom on every
            # generation (v7x physical VMEM is 64 MiB, v5e/v6e have 128 MiB).
            vmem_limit_bytes=32 * 1024 * 1024),
        cost_estimate=pl.CostEstimate(
            flops=flops, transcendentals=6 * LANES, bytes_accessed=bytes_accessed),
    )(x_p, w_stack, bn_stack)

    # lane-dense (N*H*W, 128) -> NCHW (layout plumbing fuses outside the kernel)
    out = out_flat[:, :Cout].reshape(N, H, W, Cout)
    return jnp.transpose(out, (0, 3, 1, 2))


def bottleneck_ref(x_nchw, params, matmul_dtype=jnp.float32):
    # Pure-JAX reference (lax.conv) with identical train-mode BN semantics.
    # matmul_dtype=bfloat16 mirrors the kernel's bf16-input / f32-accumulate MXU path.
    x = jnp.transpose(x_nchw, (0, 2, 3, 1)).astype(jnp.float32)
    Cin = x.shape[-1]
    P = params["w1"].shape[1]
    Cout = params["w3"].shape[1]
    dn = ("NHWC", "HWIO", "NHWC")

    def conv(h, w, padding):
        return lax.conv_general_dilated(
            h.astype(matmul_dtype), w.astype(matmul_dtype), (1, 1), padding,
            dimension_numbers=dn, preferred_element_type=jnp.float32)

    def bn(h, g, b, relu=True):
        mu = jnp.mean(h, axis=(0, 1, 2), keepdims=True)
        var = jnp.mean((h - mu) ** 2, axis=(0, 1, 2), keepdims=True)
        y = (h - mu) * lax.rsqrt(var + BN_EPS) * g.reshape(1, 1, 1, -1) + b.reshape(1, 1, 1, -1)
        return jnp.maximum(y, 0.0) if relu else y

    h = conv(x, params["w1"].reshape(1, 1, Cin, P), "VALID")
    h = bn(h, params["g1"], params["b1"])
    h = conv(h, params["w2"], ((1, 1), (1, 1)))
    h = bn(h, params["g2"], params["b2"])
    h = conv(h, params["w3"].reshape(1, 1, P, Cout), "VALID")
    h = bn(h, params["g3"], params["b3"], relu=False)
    if Cin == Cout:
        h = h + x
    h = jnp.maximum(h, 0.0)
    return jnp.transpose(h, (0, 3, 1, 2))


def init_params(key, inplanes, outplanes):
    planes = inplanes // 4
    ks = jax.random.split(key, 9)
    return {
        # conv weights stored channel-contraction friendly: (Cin, Cout) / HWIO.
        "w1": 0.1 * jax.random.normal(ks[0], (inplanes, planes), jnp.float32),
        "w2": 0.1 * jax.random.normal(ks[1], (3, 3, planes, planes), jnp.float32),
        "w3": 0.1 * jax.random.normal(ks[2], (planes, outplanes), jnp.float32),
        # BN affine params (train-mode forward uses batch stats, so only gamma/beta matter).
        "g1": 1.0 + 0.1 * jax.random.normal(ks[3], (1, planes), jnp.float32),
        "b1": 0.1 * jax.random.normal(ks[4], (1, planes), jnp.float32),
        "g2": 1.0 + 0.1 * jax.random.normal(ks[5], (1, planes), jnp.float32),
        "b2": 0.1 * jax.random.normal(ks[6], (1, planes), jnp.float32),
        "g3": 1.0 + 0.1 * jax.random.normal(ks[7], (1, outplanes), jnp.float32),
        "b3": 0.1 * jax.random.normal(ks[8], (1, outplanes), jnp.float32),
    }


if __name__ == "__main__":
    key = jax.random.PRNGKey(0)
    kx, kp = jax.random.split(key)

    N, inplanes, H, W = 2, 16, 16, 16
    outplanes = 16  # == inplanes -> is_skip = True (residual add active)

    x = jax.random.normal(kx, (N, inplanes, H, W), jnp.float32)  # NCHW, like PyTorch
    params = init_params(kp, inplanes, outplanes)

    fwd = jax.jit(bottleneck_pallas)
    out = jax.block_until_ready(fwd(x, params))
    assert out.shape == (N, outplanes, H, W), out.shape

    # 1) Kernel-logic check at matched numerics (reference also feeds bf16 to the convs,
    #    accumulating in f32) — catches any wiring/packing/masking bug.
    ref_bf16 = bottleneck_ref(x, params, matmul_dtype=jnp.bfloat16)
    err_m = float(jnp.max(jnp.abs(out - ref_bf16)))
    assert jnp.allclose(out, ref_bf16, atol=2e-2, rtol=2e-2), f"matched-numerics err {err_m}"

    # 2) End-to-end fidelity vs the all-f32 PyTorch-style reference; the slack budgets
    #    the bf16-input / f32-accumulate MXU numerics adopted from the perf review.
    ref_f32 = bottleneck_ref(x, params, matmul_dtype=jnp.float32)
    err_f = float(jnp.max(jnp.abs(out - ref_f32)))
    assert jnp.allclose(out, ref_f32, atol=5e-2, rtol=5e-2), f"f32-reference err {err_f}"

    print("KERNEL_OK")
</pallas_src>

<mosaic_0001>
module attributes {stable_mosaic.version = 11 : i64} {
  func.func @kernel(%arg0: memref<512x128xf32, #tpu.memory_space<vmem>>, %arg1: memref<3x128x128xbf16, #tpu.memory_space<vmem>>, %arg2: memref<6x128xf32, #tpu.memory_space<vmem>>, %arg3: memref<512x128xf32, #tpu.memory_space<vmem>>) attributes {dimension_semantics = [], scalar_prefetch = 0 : i64, scratch_operands = 0 : i64, tpu.core_type = #tpu.core_type<tc>} {
    %c0 = arith.constant 0 : index
    %c0_0 = arith.constant 0 : index
    %0 = vector.load %arg0[%c0, %c0_0] : memref<512x128xf32, #tpu.memory_space<vmem>>, vector<512x128xf32>
    %c0_1 = arith.constant 0 : index
    %c0_2 = arith.constant 0 : index
    %1 = vector.load %arg2[%c0_1, %c0_2] : memref<6x128xf32, #tpu.memory_space<vmem>>, vector<6x128xf32>
    %2 = vector.extract_strided_slice %1 {offsets = [0, 0], sizes = [1, 128], strides = [1, 1]} : vector<6x128xf32> to vector<1x128xf32>
    %3 = vector.extract_strided_slice %1 {offsets = [1, 0], sizes = [1, 128], strides = [1, 1]} : vector<6x128xf32> to vector<1x128xf32>
    %4 = vector.extract_strided_slice %1 {offsets = [2, 0], sizes = [1, 128], strides = [1, 1]} : vector<6x128xf32> to vector<1x128xf32>
    %5 = vector.extract_strided_slice %1 {offsets = [3, 0], sizes = [1, 128], strides = [1, 1]} : vector<6x128xf32> to vector<1x128xf32>
    %6 = vector.extract_strided_slice %1 {offsets = [4, 0], sizes = [1, 128], strides = [1, 1]} : vector<6x128xf32> to vector<1x128xf32>
    %7 = vector.extract_strided_slice %1 {offsets = [5, 0], sizes = [1, 128], strides = [1, 1]} : vector<6x128xf32> to vector<1x128xf32>
    %8 = arith.truncf %0 : vector<512x128xf32> to vector<512x128xbf16>
    %c0_3 = arith.constant 0 : index
    %c0_4 = arith.constant 0 : index
    %c0_5 = arith.constant 0 : index
    %9 = vector.load %arg1[%c0_3, %c0_4, %c0_5] : memref<3x128x128xbf16, #tpu.memory_space<vmem>>, vector<1x128x128xbf16>
    %10 = vector.shape_cast %9 : vector<1x128x128xbf16> to vector<128x128xbf16>
    %cst = arith.constant dense<0.000000e+00> : vector<512x128xf32>
    %11 = tpu.matmul %8, %10, %cst {dimension_numbers = #tpu.dot_dimension_numbers<[1], [0], [0], [1], [0, 0, 1, 1], [], []>} : vector<512x128xbf16>, vector<128x128xbf16>, vector<512x128xf32> -> vector<512x128xf32>
    %cst_6 = arith.constant dense<0.000000e+00> : vector<128xf32>
    %12 = vector.multi_reduction <add>, %11, %cst_6 [0] : vector<512x128xf32> to vector<128xf32>
    %13 = vector.shape_cast %12 : vector<128xf32> to vector<1x128xf32>
    %14 = arith.mulf %11, %11 : vector<512x128xf32>
    %cst_7 = arith.constant dense<0.000000e+00> : vector<128xf32>
    %15 = vector.multi_reduction <add>, %14, %cst_7 [0] : vector<512x128xf32> to vector<128xf32>
    %16 = vector.shape_cast %15 : vector<128xf32> to vector<1x128xf32>
    %cst_8 = arith.constant 0.001953125 : f32
    %17 = vector.broadcast %cst_8 : f32 to vector<1x128xf32>
    %18 = arith.mulf %13, %17 : vector<1x128xf32>
    %cst_9 = arith.constant 0.001953125 : f32
    %19 = vector.broadcast %cst_9 : f32 to vector<1x128xf32>
    %20 = arith.mulf %16, %19 : vector<1x128xf32>
    %21 = arith.mulf %18, %18 : vector<1x128xf32>
    %22 = arith.subf %20, %21 : vector<1x128xf32>
    %cst_10 = arith.constant 9.99999974E-6 : f32
    %23 = vector.broadcast %cst_10 : f32 to vector<1x128xf32>
    %24 = arith.addf %22, %23 : vector<1x128xf32>
    %25 = math.rsqrt %24 : vector<1x128xf32>
    %26 = arith.mulf %2, %25 : vector<1x128xf32>
    %27 = arith.mulf %18, %26 : vector<1x128xf32>
    %28 = arith.subf %3, %27 : vector<1x128xf32>
    %29 = vector.broadcast %26 : vector<1x128xf32> to vector<512x128xf32>
    %30 = arith.mulf %11, %29 : vector<512x128xf32>
    %31 = vector.broadcast %28 : vector<1x128xf32> to vector<512x128xf32>
    %32 = arith.addf %30, %31 : vector<512x128xf32>
    %cst_11 = arith.constant 0.000000e+00 : f32
    %33 = vector.broadcast %cst_11 : f32 to vector<512x128xf32>
    %34 = arith.maximumf %32, %33 : vector<512x128xf32>
    %35 = tpu.iota {dimensions = array<i32: 0>} : vector<512x1xi32>
    %c15_i32 = arith.constant 15 : i32
    %36 = vector.broadcast %c15_i32 : i32 to vector<512x1xi32>
    %37 = arith.andi %35, %36 : vector<512x1xi32>
    %c4_i32 = arith.constant 4 : i32
    %38 = vector.broadcast %c4_i32 : i32 to vector<512x1xi32>
    %39 = arith.shrsi %35, %38 : vector<512x1xi32>
    %c15_i32_12 = arith.constant 15 : i32
    %40 = vector.broadcast %c15_i32_12 : i32 to vector<512x1xi32>
    %41 = arith.andi %39, %40 : vector<512x1xi32>
    %c1_i32 = arith.constant 1 : i32
    %42 = vector.broadcast %c1_i32 : i32 to vector<512x1xi32>
    %43 = arith.cmpi sge, %41, %42 : vector<512x1xi32>
    %c14_i32 = arith.constant 14 : i32
    %44 = vector.broadcast %c14_i32 : i32 to vector<512x1xi32>
    %45 = arith.cmpi sle, %41, %44 : vector<512x1xi32>
    %c1_i32_13 = arith.constant 1 : i32
    %46 = vector.broadcast %c1_i32_13 : i32 to vector<512x1xi32>
    %47 = arith.cmpi sge, %37, %46 : vector<512x1xi32>
    %c14_i32_14 = arith.constant 14 : i32
    %48 = vector.broadcast %c14_i32_14 : i32 to vector<512x1xi32>
    %49 = arith.cmpi sle, %37, %48 : vector<512x1xi32>
    %c17_i32 = arith.constant 17 : i32
    %50 = tpu.dynamic_rotate %34 by %c17_i32 dim 0 : vector<512x128xf32>, i32 -> vector<512x128xf32>
    %51 = arith.andi %43, %47 : vector<512x1xi1>
    %cst_15 = arith.constant 0.000000e+00 : f32
    %52 = vector.shape_cast %51 : vector<512x1xi1> to vector<512x1xi1>
    %53 = vector.broadcast %52 : vector<512x1xi1> to vector<512x128xi1>
    %54 = vector.broadcast %cst_15 : f32 to vector<512x128xf32>
    %55 = arith.select %53, %50, %54 : vector<512x128xi1>, vector<512x128xf32>
    %c16_i32 = arith.constant 16 : i32
    %56 = tpu.dynamic_rotate %34 by %c16_i32 dim 0 : vector<512x128xf32>, i32 -> vector<512x128xf32>
    %cst_16 = arith.constant 0.000000e+00 : f32
    %57 = vector.shape_cast %43 : vector<512x1xi1> to vector<512x1xi1>
    %58 = vector.broadcast %57 : vector<512x1xi1> to vector<512x128xi1>
    %59 = vector.broadcast %cst_16 : f32 to vector<512x128xf32>
    %60 = arith.select %58, %56, %59 : vector<512x128xi1>, vector<512x128xf32>
    %c4_i32_17 = arith.constant 4 : i32
    %61 = tpu.dynamic_rotate %60 by %c4_i32_17 dim 1 : vector<512x128xf32>, i32 -> vector<512x128xf32>
    %62 = arith.addf %55, %61 : vector<512x128xf32>
    %c15_i32_18 = arith.constant 15 : i32
    %63 = tpu.dynamic_rotate %34 by %c15_i32_18 dim 0 : vector<512x128xf32>, i32 -> vector<512x128xf32>
    %64 = arith.andi %43, %49 : vector<512x1xi1>
    %cst_19 = arith.constant 0.000000e+00 : f32
    %65 = vector.shape_cast %64 : vector<512x1xi1> to vector<512x1xi1>
    %66 = vector.broadcast %65 : vector<512x1xi1> to vector<512x128xi1>
    %67 = vector.broadcast %cst_19 : f32 to vector<512x128xf32>
    %68 = arith.select %66, %63, %67 : vector<512x128xi1>, vector<512x128xf32>
    %c8_i32 = arith.constant 8 : i32
    %69 = tpu.dynamic_rotate %68 by %c8_i32 dim 1 : vector<512x128xf32>, i32 -> vector<512x128xf32>
    %70 = arith.addf %62, %69 : vector<512x128xf32>
    %c1_i32_20 = arith.constant 1 : i32
    %71 = tpu.dynamic_rotate %34 by %c1_i32_20 dim 0 : vector<512x128xf32>, i32 -> vector<512x128xf32>
    %cst_21 = arith.constant 0.000000e+00 : f32
    %72 = vector.shape_cast %47 : vector<512x1xi1> to vector<512x1xi1>
    %73 = vector.broadcast %72 : vector<512x1xi1> to vector<512x128xi1>
    %74 = vector.broadcast %cst_21 : f32 to vector<512x128xf32>
    %75 = arith.select %73, %71, %74 : vector<512x128xi1>, vector<512x128xf32>
    %c12_i32 = arith.constant 12 : i32
    %76 = tpu.dynamic_rotate %75 by %c12_i32 dim 1 : vector<512x128xf32>, i32 -> vector<512x128xf32>
    %77 = arith.addf %70, %76 : vector<512x128xf32>
    %c16_i32_22 = arith.constant 16 : i32
    %78 = tpu.dynamic_rotate %34 by %c16_i32_22 dim 1 : vector<512x128xf32>, i32 -> vector<512x128xf32>
    %79 = arith.addf %77, %78 : vector<512x128xf32>
    %c511_i32 = arith.constant 511 : i32
    %80 = tpu.dynamic_rotate %34 by %c511_i32 dim 0 : vector<512x128xf32>, i32 -> vector<512x128xf32>
    %cst_23 = arith.constant 0.000000e+00 : f32
    %81 = vector.shape_cast %49 : vector<512x1xi1> to vector<512x1xi1>
    %82 = vector.broadcast %81 : vector<512x1xi1> to vector<512x128xi1>
    %83 = vector.broadcast %cst_23 : f32 to vector<512x128xf32>
    %84 = arith.select %82, %80, %83 : vector<512x128xi1>, vector<512x128xf32>
    %c20_i32 = arith.constant 20 : i32
    %85 = tpu.dynamic_rotate %84 by %c20_i32 dim 1 : vector<512x128xf32>, i32 -> vector<512x128xf32>
    %86 = arith.addf %79, %85 : vector<512x128xf32>
    %c497_i32 = arith.constant 497 : i32
    %87 = tpu.dynamic_rotate %34 by %c497_i32 dim 0 : vector<512x128xf32>, i32 -> vector<512x128xf32>
    %88 = arith.andi %45, %47 : vector<512x1xi1>
    %cst_24 = arith.constant 0.000000e+00 : f32
    %89 = vector.shape_cast %88 : vector<512x1xi1> to vector<512x1xi1>
    %90 = vector.broadcast %89 : vector<512x1xi1> to vector<512x128xi1>
    %91 = vector.broadcast %cst_24 : f32 to vector<512x128xf32>
    %92 = arith.select %90, %87, %91 : vector<512x128xi1>, vector<512x128xf32>
    %c24_i32 = arith.constant 24 : i32
    %93 = tpu.dynamic_rotate %92 by %c24_i32 dim 1 : vector<512x128xf32>, i32 -> vector<512x128xf32>
    %94 = arith.addf %86, %93 : vector<512x128xf32>
    %c496_i32 = arith.constant 496 : i32
    %95 = tpu.dynamic_rotate %34 by %c496_i32 dim 0 : vector<512x128xf32>, i32 -> vector<512x128xf32>
    %cst_25 = arith.constant 0.000000e+00 : f32
    %96 = vector.shape_cast %45 : vector<512x1xi1> to vector<512x1xi1>
    %97 = vector.broadcast %96 : vector<512x1xi1> to vector<512x128xi1>
    %98 = vector.broadcast %cst_25 : f32 to vector<512x128xf32>
    %99 = arith.select %97, %95, %98 : vector<512x128xi1>, vector<512x128xf32>
    %c28_i32 = arith.constant 28 : i32
    %100 = tpu.dynamic_rotate %99 by %c28_i32 dim 1 : vector<512x128xf32>, i32 -> vector<512x128xf32>
    %101 = arith.addf %94, %100 : vector<512x128xf32>
    %c495_i32 = arith.constant 495 : i32
    %102 = tpu.dynamic_rotate %34 by %c495_i32 dim 0 : vector<512x128xf32>, i32 -> vector<512x128xf32>
    %103 = arith.andi %45, %49 : vector<512x1xi1>
    %cst_26 = arith.constant 0.000000e+00 : f32
    %104 = vector.shape_cast %103 : vector<512x1xi1> to vector<512x1xi1>
    %105 = vector.broadcast %104 : vector<512x1xi1> to vector<512x128xi1>
    %106 = vector.broadcast %cst_26 : f32 to vector<512x128xf32>
    %107 = arith.select %105, %102, %106 : vector<512x128xi1>, vector<512x128xf32>
    %c32_i32 = arith.constant 32 : i32
    %108 = tpu.dynamic_rotate %107 by %c32_i32 dim 1 : vector<512x128xf32>, i32 -> vector<512x128xf32>
    %109 = arith.addf %101, %108 : vector<512x128xf32>
    %110 = arith.truncf %109 : vector<512x128xf32> to vector<512x128xbf16>
    %c1 = arith.constant 1 : index
    %c0_27 = arith.constant 0 : index
    %c0_28 = arith.constant 0 : index
    %111 = vector.load %arg1[%c1, %c0_27, %c0_28] : memref<3x128x128xbf16, #tpu.memory_space<vmem>>, vector<1x128x128xbf16>
    %112 = vector.shape_cast %111 : vector<1x128x128xbf16> to vector<128x128xbf16>
    %cst_29 = arith.constant dense<0.000000e+00> : vector<512x128xf32>
    %113 = tpu.matmul %110, %112, %cst_29 {dimension_numbers = #tpu.dot_dimension_numbers<[1], [0], [0], [1], [0, 0, 1, 1], [], []>} : vector<512x128xbf16>, vector<128x128xbf16>, vector<512x128xf32> -> vector<512x128xf32>
    %cst_30 = arith.constant dense<0.000000e+00> : vector<128xf32>
    %114 = vector.multi_reduction <add>, %113, %cst_30 [0] : vector<512x128xf32> to vector<128xf32>
    %115 = vector.shape_cast %114 : vector<128xf32> to vector<1x128xf32>
    %116 = arith.mulf %113, %113 : vector<512x128xf32>
    %cst_31 = arith.constant dense<0.000000e+00> : vector<128xf32>
    %117 = vector.multi_reduction <add>, %116, %cst_31 [0] : vector<512x128xf32> to vector<128xf32>
    %118 = vector.shape_cast %117 : vector<128xf32> to vector<1x128xf32>
    %cst_32 = arith.constant 0.001953125 : f32
    %119 = vector.broadcast %cst_32 : f32 to vector<1x128xf32>
    %120 = arith.mulf %115, %119 : vector<1x128xf32>
    %cst_33 = arith.constant 0.001953125 : f32
    %121 = vector.broadcast %cst_33 : f32 to vector<1x128xf32>
    %122 = arith.mulf %118, %121 : vector<1x128xf32>
    %123 = arith.mulf %120, %120 : vector<1x128xf32>
    %124 = arith.subf %122, %123 : vector<1x128xf32>
    %cst_34 = arith.constant 9.99999974E-6 : f32
    %125 = vector.broadcast %cst_34 : f32 to vector<1x128xf32>
    %126 = arith.addf %124, %125 : vector<1x128xf32>
    %127 = math.rsqrt %126 : vector<1x128xf32>
    %128 = arith.mulf %4, %127 : vector<1x128xf32>
    %129 = arith.mulf %120, %128 : vector<1x128xf32>
    %130 = arith.subf %5, %129 : vector<1x128xf32>
    %131 = vector.broadcast %128 : vector<1x128xf32> to vector<512x128xf32>
    %132 = arith.mulf %113, %131 : vector<512x128xf32>
    %133 = vector.broadcast %130 : vector<1x128xf32> to vector<512x128xf32>
    %134 = arith.addf %132, %133 : vector<512x128xf32>
    %cst_35 = arith.constant 0.000000e+00 : f32
    %135 = vector.broadcast %cst_35 : f32 to vector<512x128xf32>
    %136 = arith.maximumf %134, %135 : vector<512x128xf32>
    %137 = arith.truncf %136 : vector<512x128xf32> to vector<512x128xbf16>
    %c2 = arith.constant 2 : index
    %c0_36 = arith.constant 0 : index
    %c0_37 = arith.constant 0 : index
    %138 = vector.load %arg1[%c2, %c0_36, %c0_37] : memref<3x128x128xbf16, #tpu.memory_space<vmem>>, vector<1x128x128xbf16>
    %139 = vector.shape_cast %138 : vector<1x128x128xbf16> to vector<128x128xbf16>
    %cst_38 = arith.constant dense<0.000000e+00> : vector<512x128xf32>
    %140 = tpu.matmul %137, %139, %cst_38 {dimension_numbers = #tpu.dot_dimension_numbers<[1], [0], [0], [1], [0, 0, 1, 1], [], []>} : vector<512x128xbf16>, vector<128x128xbf16>, vector<512x128xf32> -> vector<512x128xf32>
    %cst_39 = arith.constant dense<0.000000e+00> : vector<128xf32>
    %141 = vector.multi_reduction <add>, %140, %cst_39 [0] : vector<512x128xf32> to vector<128xf32>
    %142 = vector.shape_cast %141 : vector<128xf32> to vector<1x128xf32>
    %143 = arith.mulf %140, %140 : vector<512x128xf32>
    %cst_40 = arith.constant dense<0.000000e+00> : vector<128xf32>
    %144 = vector.multi_reduction <add>, %143, %cst_40 [0] : vector<512x128xf32> to vector<128xf32>
    %145 = vector.shape_cast %144 : vector<128xf32> to vector<1x128xf32>
    %cst_41 = arith.constant 0.001953125 : f32
    %146 = vector.broadcast %cst_41 : f32 to vector<1x128xf32>
    %147 = arith.mulf %142, %146 : vector<1x128xf32>
    %cst_42 = arith.constant 0.001953125 : f32
    %148 = vector.broadcast %cst_42 : f32 to vector<1x128xf32>
    %149 = arith.mulf %145, %148 : vector<1x128xf32>
    %150 = arith.mulf %147, %147 : vector<1x128xf32>
    %151 = arith.subf %149, %150 : vector<1x128xf32>
    %cst_43 = arith.constant 9.99999974E-6 : f32
    %152 = vector.broadcast %cst_43 : f32 to vector<1x128xf32>
    %153 = arith.addf %151, %152 : vector<1x128xf32>
    %154 = math.rsqrt %153 : vector<1x128xf32>
    %155 = arith.mulf %6, %154 : vector<1x128xf32>
    %156 = arith.mulf %147, %155 : vector<1x128xf32>
    %157 = arith.subf %7, %156 : vector<1x128xf32>
    %158 = vector.broadcast %155 : vector<1x128xf32> to vector<512x128xf32>
    %159 = arith.mulf %140, %158 : vector<512x128xf32>
    %160 = vector.broadcast %157 : vector<1x128xf32> to vector<512x128xf32>
    %161 = arith.addf %159, %160 : vector<512x128xf32>
    %162 = arith.addf %161, %0 : vector<512x128xf32>
    %cst_44 = arith.constant 0.000000e+00 : f32
    %163 = vector.broadcast %cst_44 : f32 to vector<512x128xf32>
    %164 = arith.maximumf %162, %163 : vector<512x128xf32>
    %c0_45 = arith.constant 0 : index
    %c0_46 = arith.constant 0 : index
    %165 = vector.load %arg3[%c0_45, %c0_46] : memref<512x128xf32, #tpu.memory_space<vmem>>, vector<512x128xf32>
    tpu.vector_store %arg3[%c0_45, %c0_46], %164 {strides = array<i32>} : memref<512x128xf32, #tpu.memory_space<vmem>>, vector<512x128xf32>,
    return
  }
}

</mosaic_0001>

<llo_original>
// kernel: bottleneck_pallas.1
$region0: #{bottleneck_pallas.1}
  #allocation0 [shape = 'u32[]', space=smem, size = 0x4, offset = 0x4, fixed_abs, tag = 'smem constant byte address 0x4 - core index']
  #allocation1 [shape = 'u32[72,128]{1,0:T(1,128)}', space=vmem, size = 0x9000, scoped, tag = 'internal scratch']
  %s0 = inlined_call_operand.vmem [shape: f32[512,128], index: 0, kind: input, shape index: {}]
  %s1 = inlined_call_operand.vmem [shape: bf16[3,128,128], index: 1, kind: input, shape index: {}]
  %s2 = inlined_call_operand.vmem [shape: f32[6,128], index: 2, kind: input, shape index: {}]
  %s3 = inlined_call_operand.vmem [shape: f32[512,128], index: 3, kind: output, shape index: {}]
  %s4 = sld [smem:[#allocation0]]
  $region22: #{bottleneck_pallas.1} parent=0
    _
  %s6 = ssub.s32 1, %s4
  %s7 = scalar_select 0, %s6, %s4
  // Predicated region
  $region2: #{bottleneck_pallas.1} parent=0 // pred_check
    _
  $region3: #{bottleneck_pallas.1} parent=0 // pred_check_branch
    %9 = sbr.rel (0) target = $region5
  $region4: #{bottleneck_pallas.1} parent=0 // pred_region
    _
  $region5: #{bottleneck_pallas.1} parent=0 // pred_fallthru
    _
  // Predicated region
  $region6: #{bottleneck_pallas.1} parent=0 // pred_check
    _
  $region7: #{bottleneck_pallas.1} parent=0 // pred_check_branch
    %11 = sbr.rel (0) target = $region9
  $region8: #{bottleneck_pallas.1} parent=0 // pred_region
    _
  $region9: #{bottleneck_pallas.1} parent=0 // pred_fallthru
    _
  // Predicated region
  $region10: #{bottleneck_pallas.1} parent=0 // pred_check
    _
  $region11: #{bottleneck_pallas.1} parent=0 // pred_check_branch
    %13 = sbr.rel (0) target = $region13
  $region12: #{bottleneck_pallas.1} parent=0 // pred_region
    _
  $region13: #{bottleneck_pallas.1} parent=0 // pred_fallthru
    _
  %v14 = vld [vmem:[%s0] sm:$0xff]
  %v15 = vld [vmem:[%s0 + $0x8] sm:$0xff]
  %v16 = vld [vmem:[%s0 + $0x10] sm:$0xff]
  %v17 = vld [vmem:[%s0 + $0x18] sm:$0xff]
  %v18 = vld [vmem:[%s0 + $0x20] sm:$0xff]
  %v19 = vld [vmem:[%s0 + $0x28] sm:$0xff]
  %v20 = vld [vmem:[%s0 + $0x30] sm:$0xff]
  %v21 = vld [vmem:[%s0 + $0x38] sm:$0xff]
  %v22 = vld [vmem:[%s0 + $0x40] sm:$0xff]
  %v23 = vld [vmem:[%s0 + $0x48] sm:$0xff]
  %v24 = vld [vmem:[%s0 + $0x50] sm:$0xff]
  %v25 = vld [vmem:[%s0 + $0x58] sm:$0xff]
  %v26 = vld [vmem:[%s0 + $0x60] sm:$0xff]
  %v27 = vld [vmem:[%s0 + $0x68] sm:$0xff]
  %v28 = vld [vmem:[%s0 + $0x70] sm:$0xff]
  %v29 = vld [vmem:[%s0 + $0x78] sm:$0xff]
  %v30 = vld [vmem:[%s0 + $0x80] sm:$0xff]
  %v31 = vld [vmem:[%s0 + $0x88] sm:$0xff]
  %v32 = vld [vmem:[%s0 + $0x90] sm:$0xff]
  %v33 = vld [vmem:[%s0 + $0x98] sm:$0xff]
  %v34 = vld [vmem:[%s0 + $0xa0] sm:$0xff]
  %v35 = vld [vmem:[%s0 + $0xa8] sm:$0xff]
  %v36 = vld [vmem:[%s0 + $0xb0] sm:$0xff]
  %v37 = vld [vmem:[%s0 + $0xb8] sm:$0xff]
  %v38 = vld [vmem:[%s0 + $0xc0] sm:$0xff]
  %v39 = vld [vmem:[%s0 + $0xc8] sm:$0xff]
  %v40 = vld [vmem:[%s0 + $0xd0] sm:$0xff]
  %v41 = vld [vmem:[%s0 + $0xd8] sm:$0xff]
  %v42 = vld [vmem:[%s0 + $0xe0] sm:$0xff]
  %v43 = vld [vmem:[%s0 + $0xe8] sm:$0xff]
  %v44 = vld [vmem:[%s0 + $0xf0] sm:$0xff]
  %v45 = vld [vmem:[%s0 + $0xf8] sm:$0xff]
  %v46 = vld [vmem:[%s0 + $0x100] sm:$0xff]
  %v47 = vld [vmem:[%s0 + $0x108] sm:$0xff]
  %v48 = vld [vmem:[%s0 + $0x110] sm:$0xff]
  %v49 = vld [vmem:[%s0 + $0x118] sm:$0xff]
  %v50 = vld [vmem:[%s0 + $0x120] sm:$0xff]
  %v51 = vld [vmem:[%s0 + $0x128] sm:$0xff]
  %v52 = vld [vmem:[%s0 + $0x130] sm:$0xff]
  %v53 = vld [vmem:[%s0 + $0x138] sm:$0xff]
  %v54 = vld [vmem:[%s0 + $0x140] sm:$0xff]
  %v55 = vld [vmem:[%s0 + $0x148] sm:$0xff]
  %v56 = vld [vmem:[%s0 + $0x150] sm:$0xff]
  %v57 = vld [vmem:[%s0 + $0x158] sm:$0xff]
  %v58 = vld [vmem:[%s0 + $0x160] sm:$0xff]
  %v59 = vld [vmem:[%s0 + $0x168] sm:$0xff]
  %v60 = vld [vmem:[%s0 + $0x170] sm:$0xff]
  %v61 = vld [vmem:[%s0 + $0x178] sm:$0xff]
  %v62 = vld [vmem:[%s0 + $0x180] sm:$0xff]
  %v63 = vld [vmem:[%s0 + $0x188] sm:$0xff]
  %v64 = vld [vmem:[%s0 + $0x190] sm:$0xff]
  %v65 = vld [vmem:[%s0 + $0x198] sm:$0xff]
  %v66 = vld [vmem:[%s0 + $0x1a0] sm:$0xff]
  %v67 = vld [vmem:[%s0 + $0x1a8] sm:$0xff]
  %v68 = vld [vmem:[%s0 + $0x1b0] sm:$0xff]
  %v69 = vld [vmem:[%s0 + $0x1b8] sm:$0xff]
  %v70 = vld [vmem:[%s0 + $0x1c0] sm:$0xff]
  %v71 = vld [vmem:[%s0 + $0x1c8] sm:$0xff]
  %v72 = vld [vmem:[%s0 + $0x1d0] sm:$0xff]
  %v73 = vld [vmem:[%s0 + $0x1d8] sm:$0xff]
  %v74 = vld [vmem:[%s0 + $0x1e0] sm:$0xff]
  %v75 = vld [vmem:[%s0 + $0x1e8] sm:$0xff]
  %v76 = vld [vmem:[%s0 + $0x1f0] sm:$0xff]
  %v77 = vld [vmem:[%s0 + $0x1f8] sm:$0xff]
  %v78 = vld [vmem:[%s2] sm:$0x3f]
  %v79 = vpack.c.bf16 %v15, %v14
  %v80 = vpack.c.bf16 %v17, %v16
  %v81 = vpack.c.bf16 %v19, %v18
  %v82 = vpack.c.bf16 %v21, %v20
  %v83 = vpack.c.bf16 %v23, %v22
  %v84 = vpack.c.bf16 %v25, %v24
  %v85 = vpack.c.bf16 %v27, %v26
  %v86 = vpack.c.bf16 %v29, %v28
  %v87 = vpack.c.bf16 %v31, %v30
  %v88 = vpack.c.bf16 %v33, %v32
  %v89 = vpack.c.bf16 %v35, %v34
  %v90 = vpack.c.bf16 %v37, %v36
  %v91 = vpack.c.bf16 %v39, %v38
  %v92 = vpack.c.bf16 %v41, %v40
  %v93 = vpack.c.bf16 %v43, %v42
  %v94 = vpack.c.bf16 %v45, %v44
  %v95 = vpack.c.bf16 %v47, %v46
  %v96 = vpack.c.bf16 %v49, %v48
  %v97 = vpack.c.bf16 %v51, %v50
  %v98 = vpack.c.bf16 %v53, %v52
  %v99 = vpack.c.bf16 %v55, %v54
  %v100 = vpack.c.bf16 %v57, %v56
  %v101 = vpack.c.bf16 %v59, %v58
  %v102 = vpack.c.bf16 %v61, %v60
  %v103 = vpack.c.bf16 %v63, %v62
  %v104 = vpack.c.bf16 %v65, %v64
  %v105 = vpack.c.bf16 %v67, %v66
  %v106 = vpack.c.bf16 %v69, %v68
  %v107 = vpack.c.bf16 %v71, %v70
  %v108 = vpack.c.bf16 %v73, %v72
  %v109 = vpack.c.bf16 %v75, %v74
  %v110 = vpack.c.bf16 %v77, %v76
  %v111 = vld [vmem:[%s1] sm:$0xf]
  %v112 = vld [vmem:[%s1 + $0x4] sm:$0xf]
  %v113 = vld [vmem:[%s1 + $0x8] sm:$0xf]
  %v114 = vld [vmem:[%s1 + $0xc] sm:$0xf]
  %v115 = vld [vmem:[%s1 + $0x10] sm:$0xf]
  %v116 = vld [vmem:[%s1 + $0x14] sm:$0xf]
  %v117 = vld [vmem:[%s1 + $0x18] sm:$0xf]
  %v118 = vld [vmem:[%s1 + $0x1c] sm:$0xf]
  %v119 = vld [vmem:[%s1 + $0x20] sm:$0xf]
  %v120 = vld [vmem:[%s1 + $0x24] sm:$0xf]
  %v121 = vld [vmem:[%s1 + $0x28] sm:$0xf]
  %v122 = vld [vmem:[%s1 + $0x2c] sm:$0xf]
  %v123 = vld [vmem:[%s1 + $0x30] sm:$0xf]
  %v124 = vld [vmem:[%s1 + $0x34] sm:$0xf]
  %v125 = vld [vmem:[%s1 + $0x38] sm:$0xf]
  %v126 = vld [vmem:[%s1 + $0x3c] sm:$0xf]
  %v143 = vunpack.c.l.b16 %v111
  %v144 = vunpack.c.l.b16 %v112
  %v145 = vunpack.c.l.b16 %v113
  %v146 = vunpack.c.l.b16 %v114
  %v147 = vunpack.c.l.b16 %v115
  %v148 = vunpack.c.l.b16 %v116
  %v149 = vunpack.c.l.b16 %v117
  %v150 = vunpack.c.l.b16 %v118
  %v151 = vunpack.c.l.b16 %v119
  %v152 = vunpack.c.l.b16 %v120
  %v153 = vunpack.c.l.b16 %v121
  %v154 = vunpack.c.l.b16 %v122
  %v155 = vunpack.c.l.b16 %v123
  %v156 = vunpack.c.l.b16 %v124
  %v157 = vunpack.c.l.b16 %v125
  %v158 = vunpack.c.l.b16 %v126
  %v159 = vpack.c.b16 %v144, %v143
  %v160 = vpack.c.b16 %v146, %v145
  %v161 = vpack.c.b16 %v148, %v147
  %v162 = vpack.c.b16 %v150, %v149
  %v163 = vpack.c.b16 %v152, %v151
  %v164 = vpack.c.b16 %v154, %v153
  %v165 = vpack.c.b16 %v156, %v155
  %v166 = vpack.c.b16 %v158, %v157
  %175 = vmatpush.bf16.msra.mxu0 %v166
  %176 = vmatpush.bf16.msra.mxu0 %v165
  %177 = vmatpush.bf16.msra.mxu0 %v164
  %178 = vmatpush.bf16.msra.mxu0 %v163
  %179 = vmatpush.bf16.msra.mxu0 %v162
  %180 = vmatpush.bf16.msra.mxu0 %v161
  %181 = vmatpush.bf16.msra.mxu0 %v160
  %182 = vmatpush.bf16.msra.mxu0 %v159
  %183 = vmatmul.bf16.gmra.mxu0 %v79
  %v184 = vpop.f32.mrf.mxu0
  %v185 = vadd.f32 0.0, %v184
  %v186 = vpop.f32.mrf.mxu0
  %v187 = vadd.f32 0.0, %v186
  %188 = vmatmul.bf16.gmra.mxu0 %v80
  %v189 = vpop.f32.mrf.mxu0
  %v190 = vadd.f32 0.0, %v189
  %v191 = vpop.f32.mrf.mxu0
  %v192 = vadd.f32 0.0, %v191
  %193 = vmatmul.bf16.gmra.mxu0 %v81
  %v194 = vpop.f32.mrf.mxu0
  %v195 = vadd.f32 0.0, %v194
  %v196 = vpop.f32.mrf.mxu0
  %v197 = vadd.f32 0.0, %v196
  %198 = vmatmul.bf16.gmra.mxu0 %v82
  %v199 = vpop.f32.mrf.mxu0
  %v200 = vadd.f32 0.0, %v199
  %v201 = vpop.f32.mrf.mxu0
  %v202 = vadd.f32 0.0, %v201
  %203 = vmatmul.bf16.gmra.mxu0 %v83
  %v204 = vpop.f32.mrf.mxu0
  %v205 = vadd.f32 0.0, %v204
  %v206 = vpop.f32.mrf.mxu0
  %v207 = vadd.f32 0.0, %v206
  %208 = vmatmul.bf16.gmra.mxu0 %v84
  %v209 = vpop.f32.mrf.mxu0
  %v210 = vadd.f32 0.0, %v209
  %v211 = vpop.f32.mrf.mxu0
  %v212 = vadd.f32 0.0, %v211
  %213 = vmatmul.bf16.gmra.mxu0 %v85
  %v214 = vpop.f32.mrf.mxu0
  %v215 = vadd.f32 0.0, %v214
  %v216 = vpop.f32.mrf.mxu0
  %v217 = vadd.f32 0.0, %v216
  %218 = vmatmul.bf16.gmra.mxu0 %v86
  %v219 = vpop.f32.mrf.mxu0
  %v220 = vadd.f32 0.0, %v219
  %v221 = vpop.f32.mrf.mxu0
  %v222 = vadd.f32 0.0, %v221
  %223 = vmatmul.bf16.gmra.mxu0 %v87
  %v224 = vpop.f32.mrf.mxu0
  %v225 = vadd.f32 0.0, %v224
  %v226 = vpop.f32.mrf.mxu0
  %v227 = vadd.f32 0.0, %v226
  %228 = vmatmul.bf16.gmra.mxu0 %v88
  %v229 = vpop.f32.mrf.mxu0
  %v230 = vadd.f32 0.0, %v229
  %v231 = vpop.f32.mrf.mxu0
  %v232 = vadd.f32 0.0, %v231
  %233 = vmatmul.bf16.gmra.mxu0 %v89
  %v234 = vpop.f32.mrf.mxu0
  %v235 = vadd.f32 0.0, %v234
  %v236 = vpop.f32.mrf.mxu0
  %v237 = vadd.f32 0.0, %v236
  %238 = vmatmul.bf16.gmra.mxu0 %v90
  %v239 = vpop.f32.mrf.mxu0
  %v240 = vadd.f32 0.0, %v239
  %v241 = vpop.f32.mrf.mxu0
  %v242 = vadd.f32 0.0, %v241
  %243 = vmatmul.bf16.gmra.mxu0 %v91
  %v244 = vpop.f32.mrf.mxu0
  %v245 = vadd.f32 0.0, %v244
  %v246 = vpop.f32.mrf.mxu0
  %v247 = vadd.f32 0.0, %v246
  %248 = vmatmul.bf16.gmra.mxu0 %v92
  %v249 = vpop.f32.mrf.mxu0
  %v250 = vadd.f32 0.0, %v249
  %v251 = vpop.f32.mrf.mxu0
  %v252 = vadd.f32 0.0, %v251
  %253 = vmatmul.bf16.gmra.mxu0 %v93
  %v254 = vpop.f32.mrf.mxu0
  %v255 = vadd.f32 0.0, %v254
  %v256 = vpop.f32.mrf.mxu0
  %v257 = vadd.f32 0.0, %v256
  %258 = vmatmul.bf16.gmra.mxu0 %v94
  %v259 = vpop.f32.mrf.mxu0
  %v260 = vadd.f32 0.0, %v259
  %v261 = vpop.f32.mrf.mxu0
  %v262 = vadd.f32 0.0, %v261
  %263 = vmatmul.bf16.gmra.mxu0 %v95
  %v264 = vpop.f32.mrf.mxu0
  %v265 = vadd.f32 0.0, %v264
  %v266 = vpop.f32.mrf.mxu0
  %v267 = vadd.f32 0.0, %v266
  %268 = vmatmul.bf16.gmra.mxu0 %v96
  %v269 = vpop.f32.mrf.mxu0
  %v270 = vadd.f32 0.0, %v269
  %v271 = vpop.f32.mrf.mxu0
  %v272 = vadd.f32 0.0, %v271
  %273 = vmatmul.bf16.gmra.mxu0 %v97
  %v274 = vpop.f32.mrf.mxu0
  %v275 = vadd.f32 0.0, %v274
  %v276 = vpop.f32.mrf.mxu0
  %v277 = vadd.f32 0.0, %v276
  %278 = vmatmul.bf16.gmra.mxu0 %v98
  %v279 = vpop.f32.mrf.mxu0
  %v280 = vadd.f32 0.0, %v279
  %v281 = vpop.f32.mrf.mxu0
  %v282 = vadd.f32 0.0, %v281
  %283 = vmatmul.bf16.gmra.mxu0 %v99
  %v284 = vpop.f32.mrf.mxu0
  %v285 = vadd.f32 0.0, %v284
  %v286 = vpop.f32.mrf.mxu0
  %v287 = vadd.f32 0.0, %v286
  %288 = vmatmul.bf16.gmra.mxu0 %v100
  %v289 = vpop.f32.mrf.mxu0
  %v290 = vadd.f32 0.0, %v289
  %v291 = vpop.f32.mrf.mxu0
  %v292 = vadd.f32 0.0, %v291
  %293 = vmatmul.bf16.gmra.mxu0 %v101
  %v294 = vpop.f32.mrf.mxu0
  %v295 = vadd.f32 0.0, %v294
  %v296 = vpop.f32.mrf.mxu0
  %v297 = vadd.f32 0.0, %v296
  %298 = vmatmul.bf16.gmra.mxu0 %v102
  %v299 = vpop.f32.mrf.mxu0
  %v300 = vadd.f32 0.0, %v299
  %v301 = vpop.f32.mrf.mxu0
  %v302 = vadd.f32 0.0, %v301
  %303 = vmatmul.bf16.gmra.mxu0 %v103
  %v304 = vpop.f32.mrf.mxu0
  %v305 = vadd.f32 0.0, %v304
  %v306 = vpop.f32.mrf.mxu0
  %v307 = vadd.f32 0.0, %v306
  %308 = vmatmul.bf16.gmra.mxu0 %v104
  %v309 = vpop.f32.mrf.mxu0
  %v310 = vadd.f32 0.0, %v309
  %v311 = vpop.f32.mrf.mxu0
  %v312 = vadd.f32 0.0, %v311
  %313 = vmatmul.bf16.gmra.mxu0 %v105
  %v314 = vpop.f32.mrf.mxu0
  %v315 = vadd.f32 0.0, %v314
  %v316 = vpop.f32.mrf.mxu0
  %v317 = vadd.f32 0.0, %v316
  %318 = vmatmul.bf16.gmra.mxu0 %v106
  %v319 = vpop.f32.mrf.mxu0
  %v320 = vadd.f32 0.0, %v319
  %v321 = vpop.f32.mrf.mxu0
  %v322 = vadd.f32 0.0, %v321
  %323 = vmatmul.bf16.gmra.mxu0 %v107
  %v324 = vpop.f32.mrf.mxu0
  %v325 = vadd.f32 0.0, %v324
  %v326 = vpop.f32.mrf.mxu0
  %v327 = vadd.f32 0.0, %v326
  %328 = vmatmul.bf16.gmra.mxu0 %v108
  %v329 = vpop.f32.mrf.mxu0
  %v330 = vadd.f32 0.0, %v329
  %v331 = vpop.f32.mrf.mxu0
  %v332 = vadd.f32 0.0, %v331
  %333 = vmatmul.bf16.gmra.mxu0 %v109
  %v334 = vpop.f32.mrf.mxu0
  %v335 = vadd.f32 0.0, %v334
  %v336 = vpop.f32.mrf.mxu0
  %v337 = vadd.f32 0.0, %v336
  %338 = vmatmul.bf16.gmra.mxu0 %v110
  %v339 = vpop.f32.mrf.mxu0
  %v340 = vadd.f32 0.0, %v339
  %v341 = vpop.f32.mrf.mxu0
  %v342 = vadd.f32 0.0, %v341
  %343 = vdwg.mxu0
  %v344 = vadd.f32 %v185, %v187
  %v345 = vadd.f32 %v344, %v190
  %v346 = vadd.f32 %v345, %v192
  %v347 = vadd.f32 %v346, %v195
  %v348 = vadd.f32 %v347, %v197
  %v349 = vadd.f32 %v348, %v200
  %v350 = vadd.f32 %v349, %v202
  %v351 = vadd.f32 %v350, %v205
  %v352 = vadd.f32 %v351, %v207
  %v353 = vadd.f32 %v352, %v210
  %v354 = vadd.f32 %v353, %v212
  %v355 = vadd.f32 %v354, %v215
  %v356 = vadd.f32 %v355, %v217
  %v357 = vadd.f32 %v356, %v220
  %v358 = vadd.f32 %v357, %v222
  %v359 = vadd.f32 %v358, %v225
  %v360 = vadd.f32 %v359, %v227
  %v361 = vadd.f32 %v360, %v230
  %v362 = vadd.f32 %v361, %v232
  %v363 = vadd.f32 %v362, %v235
  %v364 = vadd.f32 %v363, %v237
  %v365 = vadd.f32 %v364, %v240
  %v366 = vadd.f32 %v365, %v242
  %v367 = vadd.f32 %v366, %v245
  %v368 = vadd.f32 %v367, %v247
  %v369 = vadd.f32 %v368, %v250
  %v370 = vadd.f32 %v369, %v252
  %v371 = vadd.f32 %v370, %v255
  %v372 = vadd.f32 %v371, %v257
  %v373 = vadd.f32 %v372, %v260
  %v374 = vadd.f32 %v373, %v262
  %v375 = vadd.f32 %v374, %v265
  %v376 = vadd.f32 %v375, %v267
  %v377 = vadd.f32 %v376, %v270
  %v378 = vadd.f32 %v377, %v272
  %v379 = vadd.f32 %v378, %v275
  %v380 = vadd.f32 %v379, %v277
  %v381 = vadd.f32 %v380, %v280
  %v382 = vadd.f32 %v381, %v282
  %v383 = vadd.f32 %v382, %v285
  %v384 = vadd.f32 %v383, %v287
  %v385 = vadd.f32 %v384, %v290
  %v386 = vadd.f32 %v385, %v292
  %v387 = vadd.f32 %v386, %v295
  %v388 = vadd.f32 %v387, %v297
  %v389 = vadd.f32 %v388, %v300
  %v390 = vadd.f32 %v389, %v302
  %v391 = vadd.f32 %v390, %v305
  %v392 = vadd.f32 %v391, %v307
  %v393 = vadd.f32 %v392, %v310
  %v394 = vadd.f32 %v393, %v312
  %v395 = vadd.f32 %v394, %v315
  %v396 = vadd.f32 %v395, %v317
  %v397 = vadd.f32 %v396, %v320
  %v398 = vadd.f32 %v397, %v322
  %v399 = vadd.f32 %v398, %v325
  %v400 = vadd.f32 %v399, %v327
  %v401 = vadd.f32 %v400, %v330
  %v402 = vadd.f32 %v401, %v332
  %v403 = vadd.f32 %v402, %v335
  %v404 = vadd.f32 %v403, %v337
  %v405 = vadd.f32 %v404, %v340
  %v406 = vadd.f32 %v405, %v342
  %v407 = vrot.slane %v406, 4
  %v408 = vadd.f32 %v406, %v407
  %v409 = vrot.slane %v408, 2
  %v410 = vadd.f32 %v408, %v409
  %v411 = vrot.slane %v410, 1
  %v412 = vadd.f32 %v410, %v411
  %v413 = vmul.f32 %v185, %v185
  %v414 = vmul.f32 %v187, %v187
  %v415 = vmul.f32 %v190, %v190
  %v416 = vmul.f32 %v192, %v192
  %v417 = vmul.f32 %v195, %v195
  %v418 = vmul.f32 %v197, %v197
  %v419 = vmul.f32 %v200, %v200
  %v420 = vmul.f32 %v202, %v202
  %v421 = vmul.f32 %v205, %v205
  %v422 = vmul.f32 %v207, %v207
  %v423 = vmul.f32 %v210, %v210
  %v424 = vmul.f32 %v212, %v212
  %v425 = vmul.f32 %v215, %v215
  %v426 = vmul.f32 %v217, %v217
  %v427 = vmul.f32 %v220, %v220
  %v428 = vmul.f32 %v222, %v222
  %v429 = vmul.f32 %v225, %v225
  %v430 = vmul.f32 %v227, %v227
  %v431 = vmul.f32 %v230, %v230
  %v432 = vmul.f32 %v232, %v232
  %v433 = vmul.f32 %v235, %v235
  %v434 = vmul.f32 %v237, %v237
  %v435 = vmul.f32 %v240, %v240
  %v436 = vmul.f32 %v242, %v242
  %v437 = vmul.f32 %v245, %v245
  %v438 = vmul.f32 %v247, %v247
  %v439 = vmul.f32 %v250, %v250
  %v440 = vmul.f32 %v252, %v252
  %v441 = vmul.f32 %v255, %v255
  %v442 = vmul.f32 %v257, %v257
  %v443 = vmul.f32 %v260, %v260
  %v444 = vmul.f32 %v262, %v262
  %v445 = vmul.f32 %v265, %v265
  %v446 = vmul.f32 %v267, %v267
  %v447 = vmul.f32 %v270, %v270
  %v448 = vmul.f32 %v272, %v272
  %v449 = vmul.f32 %v275, %v275
  %v450 = vmul.f32 %v277, %v277
  %v451 = vmul.f32 %v280, %v280
  %v452 = vmul.f32 %v282, %v282
  %v453 = vmul.f32 %v285, %v285
  %v454 = vmul.f32 %v287, %v287
  %v455 = vmul.f32 %v290, %v290
  %v456 = vmul.f32 %v292, %v292
  %v457 = vmul.f32 %v295, %v295
  %v458 = vmul.f32 %v297, %v297
  %v459 = vmul.f32 %v300, %v300
  %v460 = vmul.f32 %v302, %v302
  %v461 = vmul.f32 %v305, %v305
  %v462 = vmul.f32 %v307, %v307
  %v463 = vmul.f32 %v310, %v310
  %v464 = vmul.f32 %v312, %v312
  %v465 = vmul.f32 %v315, %v315
  %v466 = vmul.f32 %v317, %v317
  %v467 = vmul.f32 %v320, %v320
  %v468 = vmul.f32 %v322, %v322
  %v469 = vmul.f32 %v325, %v325
  %v470 = vmul.f32 %v327, %v327
  %v471 = vmul.f32 %v330, %v330
  %v472 = vmul.f32 %v332, %v332
  %v473 = vmul.f32 %v335, %v335
  %v474 = vmul.f32 %v337, %v337
  %v475 = vmul.f32 %v340, %v340
  %v476 = vmul.f32 %v342, %v342
  %v477 = vadd.f32 %v413, %v414
  %v478 = vadd.f32 %v477, %v415
  %v479 = vadd.f32 %v478, %v416
  %v480 = vadd.f32 %v479, %v417
  %v481 = vadd.f32 %v480, %v418
  %v482 = vadd.f32 %v481, %v419
  %v483 = vadd.f32 %v482, %v420
  %v484 = vadd.f32 %v483, %v421
  %v485 = vadd.f32 %v484, %v422
  %v486 = vadd.f32 %v485, %v423
  %v487 = vadd.f32 %v486, %v424
  %v488 = vadd.f32 %v487, %v425
  %v489 = vadd.f32 %v488, %v426
  %v490 = vadd.f32 %v489, %v427
  %v491 = vadd.f32 %v490, %v428
  %v492 = vadd.f32 %v491, %v429
  %v493 = vadd.f32 %v492, %v430
  %v494 = vadd.f32 %v493, %v431
  %v495 = vadd.f32 %v494, %v432
  %v496 = vadd.f32 %v495, %v433
  %v497 = vadd.f32 %v496, %v434
  %v498 = vadd.f32 %v497, %v435
  %v499 = vadd.f32 %v498, %v436
  %v500 = vadd.f32 %v499, %v437
  %v501 = vadd.f32 %v500, %v438
  %v502 = vadd.f32 %v501, %v439
  %v503 = vadd.f32 %v502, %v440
  %v504 = vadd.f32 %v503, %v441
  %v505 = vadd.f32 %v504, %v442
  %v506 = vadd.f32 %v505, %v443
  %v507 = vadd.f32 %v506, %v444
  %v508 = vadd.f32 %v507, %v445
  %v509 = vadd.f32 %v508, %v446
  %v510 = vadd.f32 %v509, %v447
  %v511 = vadd.f32 %v510, %v448
  %v512 = vadd.f32 %v511, %v449
  %v513 = vadd.f32 %v512, %v450
  %v514 = vadd.f32 %v513, %v451
  %v515 = vadd.f32 %v514, %v452
  %v516 = vadd.f32 %v515, %v453
  %v517 = vadd.f32 %v516, %v454
  %v518 = vadd.f32 %v517, %v455
  %v519 = vadd.f32 %v518, %v456
  %v520 = vadd.f32 %v519, %v457
  %v521 = vadd.f32 %v520, %v458
  %v522 = vadd.f32 %v521, %v459
  %v523 = vadd.f32 %v522, %v460
  %v524 = vadd.f32 %v523, %v461
  %v525 = vadd.f32 %v524, %v462
  %v526 = vadd.f32 %v525, %v463
  %v527 = vadd.f32 %v526, %v464
  %v528 = vadd.f32 %v527, %v465
  %v529 = vadd.f32 %v528, %v466
  %v530 = vadd.f32 %v529, %v467
  %v531 = vadd.f32 %v530, %v468
  %v532 = vadd.f32 %v531, %v469
  %v533 = vadd.f32 %v532, %v470
  %v534 = vadd.f32 %v533, %v471
  %v535 = vadd.f32 %v534, %v472
  %v536 = vadd.f32 %v535, %v473
  %v537 = vadd.f32 %v536, %v474
  %v538 = vadd.f32 %v537, %v475
  %v539 = vadd.f32 %v538, %v476
  %v540 = vrot.slane %v539, 4
  %v541 = vadd.f32 %v539, %v540
  %v542 = vrot.slane %v541, 2
  %v543 = vadd.f32 %v541, %v542
  %v544 = vrot.slane %v543, 1
  %v545 = vadd.f32 %v543, %v544
  %v546 = vmul.f32 %v412, 0.001953125
  %v547 = vmul.f32 %v545, 0.001953125
  %v548 = vmul.f32 %v546, %v546
  %v549 = vsub.f32 %v547, %v548
  %v550 = vadd.f32 %v549, 1e-05
  %v551 = vrsqrt.pop %v550
  %v552 = vmul.f32 %v551, %v550
  %v553 = vmul.f32 %v552, %v551
  %v554 = vmul.f32 0.5, %v553
  %v555 = vsub.f32 1.5, %v554
  %v556 = vmul.f32 %v551, %v555
  %vm557 = vweird.f32 %v550
  %vm558 = vweird.f32 %v551
  %vm559 = vmor %vm557, %vm558
  %v560 = vsel %vm559, %v551, %v556
  %v561 = vmul.f32 %v78, %v560
  %v562 = vmul.f32 %v546, %v561
  %v564 = vrot.slane %v562, 7
  %v566 = vsub.f32 %v78, %v564
  %v567 = vperm.slane %v561, 0
  %v568 = vmul.f32 %v185, %v567
  %v569 = vmul.f32 %v187, %v567
  %v570 = vmul.f32 %v190, %v567
  %v571 = vmul.f32 %v192, %v567
  %v572 = vmul.f32 %v195, %v567
  %v573 = vmul.f32 %v197, %v567
  %v574 = vmul.f32 %v200, %v567
  %v575 = vmul.f32 %v202, %v567
  %v576 = vmul.f32 %v205, %v567
  %v577 = vmul.f32 %v207, %v567
  %v578 = vmul.f32 %v210, %v567
  %v579 = vmul.f32 %v212, %v567
  %v580 = vmul.f32 %v215, %v567
  %v581 = vmul.f32 %v217, %v567
  %v582 = vmul.f32 %v220, %v567
  %v583 = vmul.f32 %v222, %v567
  %v584 = vmul.f32 %v225, %v567
  %v585 = vmul.f32 %v227, %v567
  %v586 = vmul.f32 %v230, %v567
  %v587 = vmul.f32 %v232, %v567
  %v588 = vmul.f32 %v235, %v567
  %v589 = vmul.f32 %v237, %v567
  %v590 = vmul.f32 %v240, %v567
  %v591 = vmul.f32 %v242, %v567
  %v592 = vmul.f32 %v245, %v567
  %v593 = vmul.f32 %v247, %v567
  %v594 = vmul.f32 %v250, %v567
  %v595 = vmul.f32 %v252, %v567
  %v596 = vmul.f32 %v255, %v567
  %v597 = vmul.f32 %v257, %v567
  %v598 = vmul.f32 %v260, %v567
  %v599 = vmul.f32 %v262, %v567
  %v600 = vmul.f32 %v265, %v567
  %v601 = vmul.f32 %v267, %v567
  %v602 = vmul.f32 %v270, %v567
  %v603 = vmul.f32 %v272, %v567
  %v604 = vmul.f32 %v275, %v567
  %v605 = vmul.f32 %v277, %v567
  %v606 = vmul.f32 %v280, %v567
  %v607 = vmul.f32 %v282, %v567
  %v608 = vmul.f32 %v285, %v567
  %v609 = vmul.f32 %v287, %v567
  %v610 = vmul.f32 %v290, %v567
  %v611 = vmul.f32 %v292, %v567
  %v612 = vmul.f32 %v295, %v567
  %v613 = vmul.f32 %v297, %v567
  %v614 = vmul.f32 %v300, %v567
  %v615 = vmul.f32 %v302, %v567
  %v616 = vmul.f32 %v305, %v567
  %v617 = vmul.f32 %v307, %v567
  %v618 = vmul.f32 %v310, %v567
  %v619 = vmul.f32 %v312, %v567
  %v620 = vmul.f32 %v315, %v567
  %v621 = vmul.f32 %v317, %v567
  %v622 = vmul.f32 %v320, %v567
  %v623 = vmul.f32 %v322, %v567
  %v624 = vmul.f32 %v325, %v567
  %v625 = vmul.f32 %v327, %v567
  %v626 = vmul.f32 %v330, %v567
  %v627 = vmul.f32 %v332, %v567
  %v628 = vmul.f32 %v335, %v567
  %v629 = vmul.f32 %v337, %v567
  %v630 = vmul.f32 %v340, %v567
  %v631 = vmul.f32 %v342, %v567
  %v632 = vperm.slane %v566, 1
  %v633 = vadd.f32 %v568, %v632
  %v634 = vadd.f32 %v569, %v632
  %v635 = vadd.f32 %v570, %v632
  %v636 = vadd.f32 %v571, %v632
  %v637 = vadd.f32 %v572, %v632
  %v638 = vadd.f32 %v573, %v632
  %v639 = vadd.f32 %v574, %v632
  %v640 = vadd.f32 %v575, %v632
  %v641 = vadd.f32 %v576, %v632
  %v642 = vadd.f32 %v577, %v632
  %v643 = vadd.f32 %v578, %v632
  %v644 = vadd.f32 %v579, %v632
  %v645 = vadd.f32 %v580, %v632
  %v646 = vadd.f32 %v581, %v632
  %v647 = vadd.f32 %v582, %v632
  %v648 = vadd.f32 %v583, %v632
  %v649 = vadd.f32 %v584, %v632
  %v650 = vadd.f32 %v585, %v632
  %v651 = vadd.f32 %v586, %v632
  %v652 = vadd.f32 %v587, %v632
  %v653 = vadd.f32 %v588, %v632
  %v654 = vadd.f32 %v589, %v632
  %v655 = vadd.f32 %v590, %v632
  %v656 = vadd.f32 %v591, %v632
  %v657 = vadd.f32 %v592, %v632
  %v658 = vadd.f32 %v593, %v632
  %v659 = vadd.f32 %v594, %v632
  %v660 = vadd.f32 %v595, %v632
  %v661 = vadd.f32 %v596, %v632
  %v662 = vadd.f32 %v597, %v632
  %v663 = vadd.f32 %v598, %v632
  %v664 = vadd.f32 %v599, %v632
  %v665 = vadd.f32 %v600, %v632
  %v666 = vadd.f32 %v601, %v632
  %v667 = vadd.f32 %v602, %v632
  %v668 = vadd.f32 %v603, %v632
  %v669 = vadd.f32 %v604, %v632
  %v670 = vadd.f32 %v605, %v632
  %v671 = vadd.f32 %v606, %v632
  %v672 = vadd.f32 %v607, %v632
  %v673 = vadd.f32 %v608, %v632
  %v674 = vadd.f32 %v609, %v632
  %v675 = vadd.f32 %v610, %v632
  %v676 = vadd.f32 %v611, %v632
  %v677 = vadd.f32 %v612, %v632
  %v678 = vadd.f32 %v613, %v632
  %v679 = vadd.f32 %v614, %v632
  %v680 = vadd.f32 %v615, %v632
  %v681 = vadd.f32 %v616, %v632
  %v682 = vadd.f32 %v617, %v632
  %v683 = vadd.f32 %v618, %v632
  %v684 = vadd.f32 %v619, %v632
  %v685 = vadd.f32 %v620, %v632
  %v686 = vadd.f32 %v621, %v632
  %v687 = vadd.f32 %v622, %v632
  %v688 = vadd.f32 %v623, %v632
  %v689 = vadd.f32 %v624, %v632
  %v690 = vadd.f32 %v625, %v632
  %v691 = vadd.f32 %v626, %v632
  %v692 = vadd.f32 %v627, %v632
  %v693 = vadd.f32 %v628, %v632
  %v694 = vadd.f32 %v629, %v632
  %v695 = vadd.f32 %v630, %v632
  %v696 = vadd.f32 %v631, %v632
  %v697 = vmax.f32 %v633, 0.0
  %v698 = vmax.f32 %v634, 0.0
  %v699 = vmax.f32 %v635, 0.0
  %v700 = vmax.f32 %v636, 0.0
  %v701 = vmax.f32 %v637, 0.0
  %v702 = vmax.f32 %v638, 0.0
  %v703 = vmax.f32 %v639, 0.0
  %v704 = vmax.f32 %v640, 0.0
  %v705 = vmax.f32 %v641, 0.0
  %v706 = vmax.f32 %v642, 0.0
  %v707 = vmax.f32 %v643, 0.0
  %v708 = vmax.f32 %v644, 0.0
  %v709 = vmax.f32 %v645, 0.0
  %v710 = vmax.f32 %v646, 0.0
  %v711 = vmax.f32 %v647, 0.0
  %v712 = vmax.f32 %v648, 0.0
  %v713 = vmax.f32 %v649, 0.0
  %v714 = vmax.f32 %v650, 0.0
  %v715 = vmax.f32 %v651, 0.0
  %v716 = vmax.f32 %v652, 0.0
  %v717 = vmax.f32 %v653, 0.0
  %v718 = vmax.f32 %v654, 0.0
  %v719 = vmax.f32 %v655, 0.0
  %v720 = vmax.f32 %v656, 0.0
  %v721 = vmax.f32 %v657, 0.0
  %v722 = vmax.f32 %v658, 0.0
  %v723 = vmax.f32 %v659, 0.0
  %v724 = vmax.f32 %v660, 0.0
  %v725 = vmax.f32 %v661, 0.0
  %v726 = vmax.f32 %v662, 0.0
  %v727 = vmax.f32 %v663, 0.0
  %v728 = vmax.f32 %v664, 0.0
  %v729 = vmax.f32 %v665, 0.0
  %v730 = vmax.f32 %v666, 0.0
  %v731 = vmax.f32 %v667, 0.0
  %v732 = vmax.f32 %v668, 0.0
  %v733 = vmax.f32 %v669, 0.0
  %v734 = vmax.f32 %v670, 0.0
  %v735 = vmax.f32 %v671, 0.0
  %v736 = vmax.f32 %v672, 0.0
  %v737 = vmax.f32 %v673, 0.0
  %v738 = vmax.f32 %v674, 0.0
  %v739 = vmax.f32 %v675, 0.0
  %v740 = vmax.f32 %v676, 0.0
  %v741 = vmax.f32 %v677, 0.0
  %v742 = vmax.f32 %v678, 0.0
  %v743 = vmax.f32 %v679, 0.0
  %v744 = vmax.f32 %v680, 0.0
  %v745 = vmax.f32 %v681, 0.0
  %v746 = vmax.f32 %v682, 0.0
  %v747 = vmax.f32 %v683, 0.0
  %v748 = vmax.f32 %v684, 0.0
  %v749 = vmax.f32 %v685, 0.0
  %v750 = vmax.f32 %v686, 0.0
  %v751 = vmax.f32 %v687, 0.0
  %v752 = vmax.f32 %v688, 0.0
  %v753 = vmax.f32 %v689, 0.0
  %v754 = vmax.f32 %v690, 0.0
  %v755 = vmax.f32 %v691, 0.0
  %v756 = vmax.f32 %v692, 0.0
  %v757 = vmax.f32 %v693, 0.0
  %v758 = vmax.f32 %v694, 0.0
  %v759 = vmax.f32 %v695, 0.0
  %v760 = vmax.f32 %v696, 0.0
  %v761 = vlaneseq
  %v762 = vshrl.u32 %v761, 7
  %v763 = vadd.s32 %v762, 8
  %v764 = vadd.s32 %v762, 16
  %v765 = vadd.s32 %v762, 24
  %v766 = vadd.s32 %v762, 32
  %v767 = vadd.s32 %v762, 40
  %v768 = vadd.s32 %v762, 48
  %v769 = vadd.s32 %v762, 56
  %v770 = vadd.s32 %v762, 64
  %v771 = vadd.s32 %v762, 72
  %v772 = vadd.s32 %v762, 80
  %v773 = vadd.s32 %v762, 88
  %v774 = vadd.s32 %v762, 96
  %v775 = vadd.s32 %v762, 104
  %v776 = vadd.s32 %v762, 112
  %v777 = vadd.s32 %v762, 120
  %v778 = vadd.s32 %v762, 128
  %v779 = vadd.s32 %v762, 136
  %v780 = vadd.s32 %v762, 144
  %v781 = vadd.s32 %v762, 152
  %v782 = vadd.s32 %v762, 160
  %v783 = vadd.s32 %v762, 168
  %v784 = vadd.s32 %v762, 176
  %v785 = vadd.s32 %v762, 184
  %v786 = vadd.s32 %v762, 192
  %v787 = vadd.s32 %v762, 200
  %v788 = vadd.s32 %v762, 208
  %v789 = vadd.s32 %v762, 216
  %v790 = vadd.s32 %v762, 224
  %v791 = vadd.s32 %v762, 232
  %v792 = vadd.s32 %v762, 240
  %v793 = vadd.s32 %v762, 248
  %v794 = vadd.s32 %v762, 256
  %v795 = vadd.s32 %v762, 264
  %v796 = vadd.s32 %v762, 272
  %v797 = vadd.s32 %v762, 280
  %v798 = vadd.s32 %v762, 288
  %v799 = vadd.s32 %v762, 296
  %v800 = vadd.s32 %v762, 304
  %v801 = vadd.s32 %v762, 312
  %v802 = vadd.s32 %v762, 320
  %v803 = vadd.s32 %v762, 328
  %v804 = vadd.s32 %v762, 336
  %v805 = vadd.s32 %v762, 344
  %v806 = vadd.s32 %v762, 352
  %v807 = vadd.s32 %v762, 360
  %v808 = vadd.s32 %v762, 368
  %v809 = vadd.s32 %v762, 376
  %v810 = vadd.s32 %v762, 384
  %v811 = vadd.s32 %v762, 392
  %v812 = vadd.s32 %v762, 400
  %v813 = vadd.s32 %v762, 408
  %v814 = vadd.s32 %v762, 416
  %v815 = vadd.s32 %v762, 424
  %v816 = vadd.s32 %v762, 432
  %v817 = vadd.s32 %v762, 440
  %v818 = vadd.s32 %v762, 448
  %v819 = vadd.s32 %v762, 456
  %v820 = vadd.s32 %v762, 464
  %v821 = vadd.s32 %v762, 472
  %v822 = vadd.s32 %v762, 480
  %v823 = vadd.s32 %v762, 488
  %v824 = vadd.s32 %v762, 496
  %v825 = vadd.s32 %v762, 504
  %v826 = vand.u32 %v762, 15
  %v827 = vand.u32 %v763, 15
  %v828 = vand.u32 %v764, 15
  %v829 = vand.u32 %v765, 15
  %v830 = vand.u32 %v766, 15
  %v831 = vand.u32 %v767, 15
  %v832 = vand.u32 %v768, 15
  %v833 = vand.u32 %v769, 15
  %v834 = vand.u32 %v770, 15
  %v835 = vand.u32 %v771, 15
  %v836 = vand.u32 %v772, 15
  %v837 = vand.u32 %v773, 15
  %v838 = vand.u32 %v774, 15
  %v839 = vand.u32 %v775, 15
  %v840 = vand.u32 %v776, 15
  %v841 = vand.u32 %v777, 15
  %v842 = vand.u32 %v778, 15
  %v843 = vand.u32 %v779, 15
  %v844 = vand.u32 %v780, 15
  %v845 = vand.u32 %v781, 15
  %v846 = vand.u32 %v782, 15
  %v847 = vand.u32 %v783, 15
  %v848 = vand.u32 %v784, 15
  %v849 = vand.u32 %v785, 15
  %v850 = vand.u32 %v786, 15
  %v851 = vand.u32 %v787, 15
  %v852 = vand.u32 %v788, 15
  %v853 = vand.u32 %v789, 15
  %v854 = vand.u32 %v790, 15
  %v855 = vand.u32 %v791, 15
  %v856 = vand.u32 %v792, 15
  %v857 = vand.u32 %v793, 15
  %v858 = vand.u32 %v794, 15
  %v859 = vand.u32 %v795, 15
  %v860 = vand.u32 %v796, 15
  %v861 = vand.u32 %v797, 15
  %v862 = vand.u32 %v798, 15
  %v863 = vand.u32 %v799, 15
  %v864 = vand.u32 %v800, 15
  %v865 = vand.u32 %v801, 15
  %v866 = vand.u32 %v802, 15
  %v867 = vand.u32 %v803, 15
  %v868 = vand.u32 %v804, 15
  %v869 = vand.u32 %v805, 15
  %v870 = vand.u32 %v806, 15
  %v871 = vand.u32 %v807, 15
  %v872 = vand.u32 %v808, 15
  %v873 = vand.u32 %v809, 15
  %v874 = vand.u32 %v810, 15
  %v875 = vand.u32 %v811, 15
  %v876 = vand.u32 %v812, 15
  %v877 = vand.u32 %v813, 15
  %v878 = vand.u32 %v814, 15
  %v879 = vand.u32 %v815, 15
  %v880 = vand.u32 %v816, 15
  %v881 = vand.u32 %v817, 15
  %v882 = vand.u32 %v818, 15
  %v883 = vand.u32 %v819, 15
  %v884 = vand.u32 %v820, 15
  %v885 = vand.u32 %v821, 15
  %v886 = vand.u32 %v822, 15
  %v887 = vand.u32 %v823, 15
  %v888 = vand.u32 %v824, 15
  %v889 = vand.u32 %v825, 15
  %v890 = vshra.s32 %v762, 4
  %v891 = vshra.s32 %v763, 4
  %v892 = vshra.s32 %v764, 4
  %v893 = vshra.s32 %v765, 4
  %v894 = vshra.s32 %v766, 4
  %v895 = vshra.s32 %v767, 4
  %v896 = vshra.s32 %v768, 4
  %v897 = vshra.s32 %v769, 4
  %v898 = vshra.s32 %v770, 4
  %v899 = vshra.s32 %v771, 4
  %v900 = vshra.s32 %v772, 4
  %v901 = vshra.s32 %v773, 4
  %v902 = vshra.s32 %v774, 4
  %v903 = vshra.s32 %v775, 4
  %v904 = vshra.s32 %v776, 4
  %v905 = vshra.s32 %v777, 4
  %v906 = vshra.s32 %v778, 4
  %v907 = vshra.s32 %v779, 4
  %v908 = vshra.s32 %v780, 4
  %v909 = vshra.s32 %v781, 4
  %v910 = vshra.s32 %v782, 4
  %v911 = vshra.s32 %v783, 4
  %v912 = vshra.s32 %v784, 4
  %v913 = vshra.s32 %v785, 4
  %v914 = vshra.s32 %v786, 4
  %v915 = vshra.s32 %v787, 4
  %v916 = vshra.s32 %v788, 4
  %v917 = vshra.s32 %v789, 4
  %v918 = vshra.s32 %v790, 4
  %v919 = vshra.s32 %v791, 4
  %v920 = vshra.s32 %v792, 4
  %v921 = vshra.s32 %v793, 4
  %v922 = vshra.s32 %v794, 4
  %v923 = vshra.s32 %v795, 4
  %v924 = vshra.s32 %v796, 4
  %v925 = vshra.s32 %v797, 4
  %v926 = vshra.s32 %v798, 4
  %v927 = vshra.s32 %v799, 4
  %v928 = vshra.s32 %v800, 4
  %v929 = vshra.s32 %v801, 4
  %v930 = vshra.s32 %v802, 4
  %v931 = vshra.s32 %v803, 4
  %v932 = vshra.s32 %v804, 4
  %v933 = vshra.s32 %v805, 4
  %v934 = vshra.s32 %v806, 4
  %v935 = vshra.s32 %v807, 4
  %v936 = vshra.s32 %v808, 4
  %v937 = vshra.s32 %v809, 4
  %v938 = vshra.s32 %v810, 4
  %v939 = vshra.s32 %v811, 4
  %v940 = vshra.s32 %v812, 4
  %v941 = vshra.s32 %v813, 4
  %v942 = vshra.s32 %v814, 4
  %v943 = vshra.s32 %v815, 4
  %v944 = vshra.s32 %v816, 4
  %v945 = vshra.s32 %v817, 4
  %v946 = vshra.s32 %v818, 4
  %v947 = vshra.s32 %v819, 4
  %v948 = vshra.s32 %v820, 4
  %v949 = vshra.s32 %v821, 4
  %v950 = vshra.s32 %v822, 4
  %v951 = vshra.s32 %v823, 4
  %v952 = vshra.s32 %v824, 4
  %v953 = vshra.s32 %v825, 4
  %v954 = vand.u32 %v890, 15
  %v955 = vand.u32 %v891, 15
  %v956 = vand.u32 %v892, 15
  %v957 = vand.u32 %v893, 15
  %v958 = vand.u32 %v894, 15
  %v959 = vand.u32 %v895, 15
  %v960 = vand.u32 %v896, 15
  %v961 = vand.u32 %v897, 15
  %v962 = vand.u32 %v898, 15
  %v963 = vand.u32 %v899, 15
  %v964 = vand.u32 %v900, 15
  %v965 = vand.u32 %v901, 15
  %v966 = vand.u32 %v902, 15
  %v967 = vand.u32 %v903, 15
  %v968 = vand.u32 %v904, 15
  %v969 = vand.u32 %v905, 15
  %v970 = vand.u32 %v906, 15
  %v971 = vand.u32 %v907, 15
  %v972 = vand.u32 %v908, 15
  %v973 = vand.u32 %v909, 15
  %v974 = vand.u32 %v910, 15
  %v975 = vand.u32 %v911, 15
  %v976 = vand.u32 %v912, 15
  %v977 = vand.u32 %v913, 15
  %v978 = vand.u32 %v914, 15
  %v979 = vand.u32 %v915, 15
  %v980 = vand.u32 %v916, 15
  %v981 = vand.u32 %v917, 15
  %v982 = vand.u32 %v918, 15
  %v983 = vand.u32 %v919, 15
  %v984 = vand.u32 %v920, 15
  %v985 = vand.u32 %v921, 15
  %v986 = vand.u32 %v922, 15
  %v987 = vand.u32 %v923, 15
  %v988 = vand.u32 %v924, 15
  %v989 = vand.u32 %v925, 15
  %v990 = vand.u32 %v926, 15
  %v991 = vand.u32 %v927, 15
  %v992 = vand.u32 %v928, 15
  %v993 = vand.u32 %v929, 15
  %v994 = vand.u32 %v930, 15
  %v995 = vand.u32 %v931, 15
  %v996 = vand.u32 %v932, 15
  %v997 = vand.u32 %v933, 15
  %v998 = vand.u32 %v934, 15
  %v999 = vand.u32 %v935, 15
  %v1000 = vand.u32 %v936, 15
  %v1001 = vand.u32 %v937, 15
  %v1002 = vand.u32 %v938, 15
  %v1003 = vand.u32 %v939, 15
  %v1004 = vand.u32 %v940, 15
  %v1005 = vand.u32 %v941, 15
  %v1006 = vand.u32 %v942, 15
  %v1007 = vand.u32 %v943, 15
  %v1008 = vand.u32 %v944, 15
  %v1009 = vand.u32 %v945, 15
  %v1010 = vand.u32 %v946, 15
  %v1011 = vand.u32 %v947, 15
  %v1012 = vand.u32 %v948, 15
  %v1013 = vand.u32 %v949, 15
  %v1014 = vand.u32 %v950, 15
  %v1015 = vand.u32 %v951, 15
  %v1016 = vand.u32 %v952, 15
  %v1017 = vand.u32 %v953, 15
  %vm1018 = vcmp.ge.s32.totalorder %v954, 1
  %vm1019 = vcmp.ge.s32.totalorder %v955, 1
  %vm1020 = vcmp.ge.s32.totalorder %v956, 1
  %vm1021 = vcmp.ge.s32.totalorder %v957, 1
  %vm1022 = vcmp.ge.s32.totalorder %v958, 1
  %vm1023 = vcmp.ge.s32.totalorder %v959, 1
  %vm1024 = vcmp.ge.s32.totalorder %v960, 1
  %vm1025 = vcmp.ge.s32.totalorder %v961, 1
  %vm1026 = vcmp.ge.s32.totalorder %v962, 1
  %vm1027 = vcmp.ge.s32.totalorder %v963, 1
  %vm1028 = vcmp.ge.s32.totalorder %v964, 1
  %vm1029 = vcmp.ge.s32.totalorder %v965, 1
  %vm1030 = vcmp.ge.s32.totalorder %v966, 1
  %vm1031 = vcmp.ge.s32.totalorder %v967, 1
  %vm1032 = vcmp.ge.s32.totalorder %v968, 1
  %vm1033 = vcmp.ge.s32.totalorder %v969, 1
  %vm1034 = vcmp.ge.s32.totalorder %v970, 1
  %vm1035 = vcmp.ge.s32.totalorder %v971, 1
  %vm1036 = vcmp.ge.s32.totalorder %v972, 1
  %vm1037 = vcmp.ge.s32.totalorder %v973, 1
  %vm1038 = vcmp.ge.s32.totalorder %v974, 1
  %vm1039 = vcmp.ge.s32.totalorder %v975, 1
  %vm1040 = vcmp.ge.s32.totalorder %v976, 1
  %vm1041 = vcmp.ge.s32.totalorder %v977, 1
  %vm1042 = vcmp.ge.s32.totalorder %v978, 1
  %vm1043 = vcmp.ge.s32.totalorder %v979, 1
  %vm1044 = vcmp.ge.s32.totalorder %v980, 1
  %vm1045 = vcmp.ge.s32.totalorder %v981, 1
  %vm1046 = vcmp.ge.s32.totalorder %v982, 1
  %vm1047 = vcmp.ge.s32.totalorder %v983, 1
  %vm1048 = vcmp.ge.s32.totalorder %v984, 1
  %vm1049 = vcmp.ge.s32.totalorder %v985, 1
  %vm1050 = vcmp.ge.s32.totalorder %v986, 1
  %vm1051 = vcmp.ge.s32.totalorder %v987, 1
  %vm1052 = vcmp.ge.s32.totalorder %v988, 1
  %vm1053 = vcmp.ge.s32.totalorder %v989, 1
  %vm1054 = vcmp.ge.s32.totalorder %v990, 1
  %vm1055 = vcmp.ge.s32.totalorder %v991, 1
  %vm1056 = vcmp.ge.s32.totalorder %v992, 1
  %vm1057 = vcmp.ge.s32.totalorder %v993, 1
  %vm1058 = vcmp.ge.s32.totalorder %v994, 1
  %vm1059 = vcmp.ge.s32.totalorder %v995, 1
  %vm1060 = vcmp.ge.s32.totalorder %v996, 1
  %vm1061 = vcmp.ge.s32.totalorder %v997, 1
  %vm1062 = vcmp.ge.s32.totalorder %v998, 1
  %vm1063 = vcmp.ge.s32.totalorder %v999, 1
  %vm1064 = vcmp.ge.s32.totalorder %v1000, 1
  %vm1065 = vcmp.ge.s32.totalorder %v1001, 1
  %vm1066 = vcmp.ge.s32.totalorder %v1002, 1
  %vm1067 = vcmp.ge.s32.totalorder %v1003, 1
  %vm1068 = vcmp.ge.s32.totalorder %v1004, 1
  %vm1069 = vcmp.ge.s32.totalorder %v1005, 1
  %vm1070 = vcmp.ge.s32.totalorder %v1006, 1
  %vm1071 = vcmp.ge.s32.totalorder %v1007, 1
  %vm1072 = vcmp.ge.s32.totalorder %v1008, 1
  %vm1073 = vcmp.ge.s32.totalorder %v1009, 1
  %vm1074 = vcmp.ge.s32.totalorder %v1010, 1
  %vm1075 = vcmp.ge.s32.totalorder %v1011, 1
  %vm1076 = vcmp.ge.s32.totalorder %v1012, 1
  %vm1077 = vcmp.ge.s32.totalorder %v1013, 1
  %vm1078 = vcmp.ge.s32.totalorder %v1014, 1
  %vm1079 = vcmp.ge.s32.totalorder %v1015, 1
  %vm1080 = vcmp.ge.s32.totalorder %v1016, 1
  %vm1081 = vcmp.ge.s32.totalorder %v1017, 1
  %vm1082 = vcmp.le.s32.totalorder %v954, 14
  %vm1083 = vcmp.le.s32.totalorder %v955, 14
  %vm1084 = vcmp.le.s32.totalorder %v956, 14
  %vm1085 = vcmp.le.s32.totalorder %v957, 14
  %vm1086 = vcmp.le.s32.totalorder %v958, 14
  %vm1087 = vcmp.le.s32.totalorder %v959, 14
  %vm1088 = vcmp.le.s32.totalorder %v960, 14
  %vm1089 = vcmp.le.s32.totalorder %v961, 14
  %vm1090 = vcmp.le.s32.totalorder %v962, 14
  %vm1091 = vcmp.le.s32.totalorder %v963, 14
  %vm1092 = vcmp.le.s32.totalorder %v964, 14
  %vm1093 = vcmp.le.s32.totalorder %v965, 14
  %vm1094 = vcmp.le.s32.totalorder %v966, 14
  %vm1095 = vcmp.le.s32.totalorder %v967, 14
  %vm1096 = vcmp.le.s32.totalorder %v968, 14
  %vm1097 = vcmp.le.s32.totalorder %v969, 14
  %vm1098 = vcmp.le.s32.totalorder %v970, 14
  %vm1099 = vcmp.le.s32.totalorder %v971, 14
  %vm1100 = vcmp.le.s32.totalorder %v972, 14
  %vm1101 = vcmp.le.s32.totalorder %v973, 14
  %vm1102 = vcmp.le.s32.totalorder %v974, 14
  %vm1103 = vcmp.le.s32.totalorder %v975, 14
  %vm1104 = vcmp.le.s32.totalorder %v976, 14
  %vm1105 = vcmp.le.s32.totalorder %v977, 14
  %vm1106 = vcmp.le.s32.totalorder %v978, 14
  %vm1107 = vcmp.le.s32.totalorder %v979, 14
  %vm1108 = vcmp.le.s32.totalorder %v980, 14
  %vm1109 = vcmp.le.s32.totalorder %v981, 14
  %vm1110 = vcmp.le.s32.totalorder %v982, 14
  %vm1111 = vcmp.le.s32.totalorder %v983, 14
  %vm1112 = vcmp.le.s32.totalorder %v984, 14
  %vm1113 = vcmp.le.s32.totalorder %v985, 14
  %vm1114 = vcmp.le.s32.totalorder %v986, 14
  %vm1115 = vcmp.le.s32.totalorder %v987, 14
  %vm1116 = vcmp.le.s32.totalorder %v988, 14
  %vm1117 = vcmp.le.s32.totalorder %v989, 14
  %vm1118 = vcmp.le.s32.totalorder %v990, 14
  %vm1119 = vcmp.le.s32.totalorder %v991, 14
  %vm1120 = vcmp.le.s32.totalorder %v992, 14
  %vm1121 = vcmp.le.s32.totalorder %v993, 14
  %vm1122 = vcmp.le.s32.totalorder %v994, 14
  %vm1123 = vcmp.le.s32.totalorder %v995, 14
  %vm1124 = vcmp.le.s32.totalorder %v996, 14
  %vm1125 = vcmp.le.s32.totalorder %v997, 14
  %vm1126 = vcmp.le.s32.totalorder %v998, 14
  %vm1127 = vcmp.le.s32.totalorder %v999, 14
  %vm1128 = vcmp.le.s32.totalorder %v1000, 14
  %vm1129 = vcmp.le.s32.totalorder %v1001, 14
  %vm1130 = vcmp.le.s32.totalorder %v1002, 14
  %vm1131 = vcmp.le.s32.totalorder %v1003, 14
  %vm1132 = vcmp.le.s32.totalorder %v1004, 14
  %vm1133 = vcmp.le.s32.totalorder %v1005, 14
  %vm1134 = vcmp.le.s32.totalorder %v1006, 14
  %vm1135 = vcmp.le.s32.totalorder %v1007, 14
  %vm1136 = vcmp.le.s32.totalorder %v1008, 14
  %vm1137 = vcmp.le.s32.totalorder %v1009, 14
  %vm1138 = vcmp.le.s32.totalorder %v1010, 14
  %vm1139 = vcmp.le.s32.totalorder %v1011, 14
  %vm1140 = vcmp.le.s32.totalorder %v1012, 14
  %vm1141 = vcmp.le.s32.totalorder %v1013, 14
  %vm1142 = vcmp.le.s32.totalorder %v1014, 14
  %vm1143 = vcmp.le.s32.totalorder %v1015, 14
  %vm1144 = vcmp.le.s32.totalorder %v1016, 14
  %vm1145 = vcmp.le.s32.totalorder %v1017, 14
  %vm1146 = vcmp.ge.s32.totalorder %v826, 1
  %vm1147 = vcmp.ge.s32.totalorder %v827, 1
  %vm1148 = vcmp.ge.s32.totalorder %v828, 1
  %vm1149 = vcmp.ge.s32.totalorder %v829, 1
  %vm1150 = vcmp.ge.s32.totalorder %v830, 1
  %vm1151 = vcmp.ge.s32.totalorder %v831, 1
  %vm1152 = vcmp.ge.s32.totalorder %v832, 1
  %vm1153 = vcmp.ge.s32.totalorder %v833, 1
  %vm1154 = vcmp.ge.s32.totalorder %v834, 1
  %vm1155 = vcmp.ge.s32.totalorder %v835, 1
  %vm1156 = vcmp.ge.s32.totalorder %v836, 1
  %vm1157 = vcmp.ge.s32.totalorder %v837, 1
  %vm1158 = vcmp.ge.s32.totalorder %v838, 1
  %vm1159 = vcmp.ge.s32.totalorder %v839, 1
  %vm1160 = vcmp.ge.s32.totalorder %v840, 1
  %vm1161 = vcmp.ge.s32.totalorder %v841, 1
  %vm1162 = vcmp.ge.s32.totalorder %v842, 1
  %vm1163 = vcmp.ge.s32.totalorder %v843, 1
  %vm1164 = vcmp.ge.s32.totalorder %v844, 1
  %vm1165 = vcmp.ge.s32.totalorder %v845, 1
  %vm1166 = vcmp.ge.s32.totalorder %v846, 1
  %vm1167 = vcmp.ge.s32.totalorder %v847, 1
  %vm1168 = vcmp.ge.s32.totalorder %v848, 1
  %vm1169 = vcmp.ge.s32.totalorder %v849, 1
  %vm1170 = vcmp.ge.s32.totalorder %v850, 1
  %vm1171 = vcmp.ge.s32.totalorder %v851, 1
  %vm1172 = vcmp.ge.s32.totalorder %v852, 1
  %vm1173 = vcmp.ge.s32.totalorder %v853, 1
  %vm1174 = vcmp.ge.s32.totalorder %v854, 1
  %vm1175 = vcmp.ge.s32.totalorder %v855, 1
  %vm1176 = vcmp.ge.s32.totalorder %v856, 1
  %vm1177 = vcmp.ge.s32.totalorder %v857, 1
  %vm1178 = vcmp.ge.s32.totalorder %v858, 1
  %vm1179 = vcmp.ge.s32.totalorder %v859, 1
  %vm1180 = vcmp.ge.s32.totalorder %v860, 1
  %vm1181 = vcmp.ge.s32.totalorder %v861, 1
  %vm1182 = vcmp.ge.s32.totalorder %v862, 1
  %vm1183 = vcmp.ge.s32.totalorder %v863, 1
  %vm1184 = vcmp.ge.s32.totalorder %v864, 1
  %vm1185 = vcmp.ge.s32.totalorder %v865, 1
  %vm1186 = vcmp.ge.s32.totalorder %v866, 1
  %vm1187 = vcmp.ge.s32.totalorder %v867, 1
  %vm1188 = vcmp.ge.s32.totalorder %v868, 1
  %vm1189 = vcmp.ge.s32.totalorder %v869, 1
  %vm1190 = vcmp.ge.s32.totalorder %v870, 1
  %vm1191 = vcmp.ge.s32.totalorder %v871, 1
  %vm1192 = vcmp.ge.s32.totalorder %v872, 1
  %vm1193 = vcmp.ge.s32.totalorder %v873, 1
  %vm1194 = vcmp.ge.s32.totalorder %v874, 1
  %vm1195 = vcmp.ge.s32.totalorder %v875, 1
  %vm1196 = vcmp.ge.s32.totalorder %v876, 1
  %vm1197 = vcmp.ge.s32.totalorder %v877, 1
  %vm1198 = vcmp.ge.s32.totalorder %v878, 1
  %vm1199 = vcmp.ge.s32.totalorder %v879, 1
  %vm1200 = vcmp.ge.s32.totalorder %v880, 1
  %vm1201 = vcmp.ge.s32.totalorder %v881, 1
  %vm1202 = vcmp.ge.s32.totalorder %v882, 1
  %vm1203 = vcmp.ge.s32.totalorder %v883, 1
  %vm1204 = vcmp.ge.s32.totalorder %v884, 1
  %vm1205 = vcmp.ge.s32.totalorder %v885, 1
  %vm1206 = vcmp.ge.s32.totalorder %v886, 1
  %vm1207 = vcmp.ge.s32.totalorder %v887, 1
  %vm1208 = vcmp.ge.s32.totalorder %v888, 1
  %vm1209 = vcmp.ge.s32.totalorder %v889, 1
  %vm1210 = vcmp.le.s32.totalorder %v826, 14
  %vm1211 = vcmp.le.s32.totalorder %v827, 14
  %vm1212 = vcmp.le.s32.totalorder %v828, 14
  %vm1213 = vcmp.le.s32.totalorder %v829, 14
  %vm1214 = vcmp.le.s32.totalorder %v830, 14
  %vm1215 = vcmp.le.s32.totalorder %v831, 14
  %vm1216 = vcmp.le.s32.totalorder %v832, 14
  %vm1217 = vcmp.le.s32.totalorder %v833, 14
  %vm1218 = vcmp.le.s32.totalorder %v834, 14
  %vm1219 = vcmp.le.s32.totalorder %v835, 14
  %vm1220 = vcmp.le.s32.totalorder %v836, 14
  %vm1221 = vcmp.le.s32.totalorder %v837, 14
  %vm1222 = vcmp.le.s32.totalorder %v838, 14
  %vm1223 = vcmp.le.s32.totalorder %v839, 14
  %vm1224 = vcmp.le.s32.totalorder %v840, 14
  %vm1225 = vcmp.le.s32.totalorder %v841, 14
  %vm1226 = vcmp.le.s32.totalorder %v842, 14
  %vm1227 = vcmp.le.s32.totalorder %v843, 14
  %vm1228 = vcmp.le.s32.totalorder %v844, 14
  %vm1229 = vcmp.le.s32.totalorder %v845, 14
  %vm1230 = vcmp.le.s32.totalorder %v846, 14
  %vm1231 = vcmp.le.s32.totalorder %v847, 14
  %vm1232 = vcmp.le.s32.totalorder %v848, 14
  %vm1233 = vcmp.le.s32.totalorder %v849, 14
  %vm1234 = vcmp.le.s32.totalorder %v850, 14
  %vm1235 = vcmp.le.s32.totalorder %v851, 14
  %vm1236 = vcmp.le.s32.totalorder %v852, 14
  %vm1237 = vcmp.le.s32.totalorder %v853, 14
  %vm1238 = vcmp.le.s32.totalorder %v854, 14
  %vm1239 = vcmp.le.s32.totalorder %v855, 14
  %vm1240 = vcmp.le.s32.totalorder %v856, 14
  %vm1241 = vcmp.le.s32.totalorder %v857, 14
  %vm1242 = vcmp.le.s32.totalorder %v858, 14
  %vm1243 = vcmp.le.s32.totalorder %v859, 14
  %vm1244 = vcmp.le.s32.totalorder %v860, 14
  %vm1245 = vcmp.le.s32.totalorder %v861, 14
  %vm1246 = vcmp.le.s32.totalorder %v862, 14
  %vm1247 = vcmp.le.s32.totalorder %v863, 14
  %vm1248 = vcmp.le.s32.totalorder %v864, 14
  %vm1249 = vcmp.le.s32.totalorder %v865, 14
  %vm1250 = vcmp.le.s32.totalorder %v866, 14
  %vm1251 = vcmp.le.s32.totalorder %v867, 14
  %vm1252 = vcmp.le.s32.totalorder %v868, 14
  %vm1253 = vcmp.le.s32.totalorder %v869, 14
  %vm1254 = vcmp.le.s32.totalorder %v870, 14
  %vm1255 = vcmp.le.s32.totalorder %v871, 14
  %vm1256 = vcmp.le.s32.totalorder %v872, 14
  %vm1257 = vcmp.le.s32.totalorder %v873, 14
  %vm1258 = vcmp.le.s32.totalorder %v874, 14
  %vm1259 = vcmp.le.s32.totalorder %v875, 14
  %vm1260 = vcmp.le.s32.totalorder %v876, 14
  %vm1261 = vcmp.le.s32.totalorder %v877, 14
  %vm1262 = vcmp.le.s32.totalorder %v878, 14
  %vm1263 = vcmp.le.s32.totalorder %v879, 14
  %vm1264 = vcmp.le.s32.totalorder %v880, 14
  %vm1265 = vcmp.le.s32.totalorder %v881, 14
  %vm1266 = vcmp.le.s32.totalorder %v882, 14
  %vm1267 = vcmp.le.s32.totalorder %v883, 14
  %vm1268 = vcmp.le.s32.totalorder %v884, 14
  %vm1269 = vcmp.le.s32.totalorder %v885, 14
  %vm1270 = vcmp.le.s32.totalorder %v886, 14
  %vm1271 = vcmp.le.s32.totalorder %v887, 14
  %vm1272 = vcmp.le.s32.totalorder %v888, 14
  %vm1273 = vcmp.le.s32.totalorder %v889, 14
  %v1274 = vrot.slane %v697, 7
  %v1275 = vrot.slane %v698, 7
  %v1276 = vrot.slane %v699, 7
  %v1277 = vrot.slane %v700, 7
  %v1278 = vrot.slane %v701, 7
  %v1279 = vrot.slane %v702, 7
  %v1280 = vrot.slane %v703, 7
  %v1281 = vrot.slane %v704, 7
  %v1282 = vrot.slane %v705, 7
  %v1283 = vrot.slane %v706, 7
  %v1284 = vrot.slane %v707, 7
  %v1285 = vrot.slane %v708, 7
  %v1286 = vrot.slane %v709, 7
  %v1287 = vrot.slane %v710, 7
  %v1288 = vrot.slane %v711, 7
  %v1289 = vrot.slane %v712, 7
  %v1290 = vrot.slane %v713, 7
  %v1291 = vrot.slane %v714, 7
  %v1292 = vrot.slane %v715, 7
  %v1293 = vrot.slane %v716, 7
  %v1294 = vrot.slane %v717, 7
  %v1295 = vrot.slane %v718, 7
  %v1296 = vrot.slane %v719, 7
  %v1297 = vrot.slane %v720, 7
  %v1298 = vrot.slane %v721, 7
  %v1299 = vrot.slane %v722, 7
  %v1300 = vrot.slane %v723, 7
  %v1301 = vrot.slane %v724, 7
  %v1302 = vrot.slane %v725, 7
  %v1303 = vrot.slane %v726, 7
  %v1304 = vrot.slane %v727, 7
  %v1305 = vrot.slane %v728, 7
  %v1306 = vrot.slane %v729, 7
  %v1307 = vrot.slane %v730, 7
  %v1308 = vrot.slane %v731, 7
  %v1309 = vrot.slane %v732, 7
  %v1310 = vrot.slane %v733, 7
  %v1311 = vrot.slane %v734, 7
  %v1312 = vrot.slane %v735, 7
  %v1313 = vrot.slane %v736, 7
  %v1314 = vrot.slane %v737, 7
  %v1315 = vrot.slane %v738, 7
  %v1316 = vrot.slane %v739, 7
  %v1317 = vrot.slane %v740, 7
  %v1318 = vrot.slane %v741, 7
  %v1319 = vrot.slane %v742, 7
  %v1320 = vrot.slane %v743, 7
  %v1321 = vrot.slane %v744, 7
  %v1322 = vrot.slane %v745, 7
  %v1323 = vrot.slane %v746, 7
  %v1324 = vrot.slane %v747, 7
  %v1325 = vrot.slane %v748, 7
  %v1326 = vrot.slane %v749, 7
  %v1327 = vrot.slane %v750, 7
  %v1328 = vrot.slane %v751, 7
  %v1329 = vrot.slane %v752, 7
  %v1330 = vrot.slane %v753, 7
  %v1331 = vrot.slane %v754, 7
  %v1332 = vrot.slane %v755, 7
  %v1333 = vrot.slane %v756, 7
  %v1334 = vrot.slane %v757, 7
  %v1335 = vrot.slane %v758, 7
  %v1336 = vrot.slane %v759, 7
  %v1337 = vrot.slane %v760, 7
  %vm1338 = vcmp.lt.s32.totalorder %v762, 1
  %v1339 = vsel %vm1338, %v1336, %v1337
  %v1340 = vsel %vm1338, %v1335, %v1336
  %v1341 = vsel %vm1338, %v1334, %v1335
  %v1342 = vsel %vm1338, %v1333, %v1334
  %v1343 = vsel %vm1338, %v1332, %v1333
  %v1344 = vsel %vm1338, %v1331, %v1332
  %v1345 = vsel %vm1338, %v1330, %v1331
  %v1346 = vsel %vm1338, %v1329, %v1330
  %v1347 = vsel %vm1338, %v1328, %v1329
  %v1348 = vsel %vm1338, %v1327, %v1328
  %v1349 = vsel %vm1338, %v1326, %v1327
  %v1350 = vsel %vm1338, %v1325, %v1326
  %v1351 = vsel %vm1338, %v1324, %v1325
  %v1352 = vsel %vm1338, %v1323, %v1324
  %v1353 = vsel %vm1338, %v1322, %v1323
  %v1354 = vsel %vm1338, %v1321, %v1322
  %v1355 = vsel %vm1338, %v1320, %v1321
  %v1356 = vsel %vm1338, %v1319, %v1320
  %v1357 = vsel %vm1338, %v1318, %v1319
  %v1358 = vsel %vm1338, %v1317, %v1318
  %v1359 = vsel %vm1338, %v1316, %v1317
  %v1360 = vsel %vm1338, %v1315, %v1316
  %v1361 = vsel %vm1338, %v1314, %v1315
  %v1362 = vsel %vm1338, %v1313, %v1314
  %v1363 = vsel %vm1338, %v1312, %v1313
  %v1364 = vsel %vm1338, %v1311, %v1312
  %v1365 = vsel %vm1338, %v1310, %v1311
  %v1366 = vsel %vm1338, %v1309, %v1310
  %v1367 = vsel %vm1338, %v1308, %v1309
  %v1368 = vsel %vm1338, %v1307, %v1308
  %v1369 = vsel %vm1338, %v1306, %v1307
  %v1370 = vsel %vm1338, %v1305, %v1306
  %v1371 = vsel %vm1338, %v1304, %v1305
  %v1372 = vsel %vm1338, %v1303, %v1304
  %v1373 = vsel %vm1338, %v1302, %v1303
  %v1374 = vsel %vm1338, %v1301, %v1302
  %v1375 = vsel %vm1338, %v1300, %v1301
  %v1376 = vsel %vm1338, %v1299, %v1300
  %v1377 = vsel %vm1338, %v1298, %v1299
  %v1378 = vsel %vm1338, %v1297, %v1298
  %v1379 = vsel %vm1338, %v1296, %v1297
  %v1380 = vsel %vm1338, %v1295, %v1296
  %v1381 = vsel %vm1338, %v1294, %v1295
  %v1382 = vsel %vm1338, %v1293, %v1294
  %v1383 = vsel %vm1338, %v1292, %v1293
  %v1384 = vsel %vm1338, %v1291, %v1292
  %v1385 = vsel %vm1338, %v1290, %v1291
  %v1386 = vsel %vm1338, %v1289, %v1290
  %v1387 = vsel %vm1338, %v1288, %v1289
  %v1388 = vsel %vm1338, %v1287, %v1288
  %v1389 = vsel %vm1338, %v1286, %v1287
  %v1390 = vsel %vm1338, %v1285, %v1286
  %v1391 = vsel %vm1338, %v1284, %v1285
  %v1392 = vsel %vm1338, %v1283, %v1284
  %v1393 = vsel %vm1338, %v1282, %v1283
  %v1394 = vsel %vm1338, %v1281, %v1282
  %v1395 = vsel %vm1338, %v1280, %v1281
  %v1396 = vsel %vm1338, %v1279, %v1280
  %v1397 = vsel %vm1338, %v1278, %v1279
  %v1398 = vsel %vm1338, %v1277, %v1278
  %v1399 = vsel %vm1338, %v1276, %v1277
  %v1400 = vsel %vm1338, %v1275, %v1276
  %v1401 = vsel %vm1338, %v1274, %v1275
  %v1402 = vsel %vm1338, %v1337, %v1274
  %vm1403 = vmand %vm1018, %vm1146
  %vm1404 = vmand %vm1019, %vm1147
  %vm1405 = vmand %vm1020, %vm1148
  %vm1406 = vmand %vm1021, %vm1149
  %vm1407 = vmand %vm1022, %vm1150
  %vm1408 = vmand %vm1023, %vm1151
  %vm1409 = vmand %vm1024, %vm1152
  %vm1410 = vmand %vm1025, %vm1153
  %vm1411 = vmand %vm1026, %vm1154
  %vm1412 = vmand %vm1027, %vm1155
  %vm1413 = vmand %vm1028, %vm1156
  %vm1414 = vmand %vm1029, %vm1157
  %vm1415 = vmand %vm1030, %vm1158
  %vm1416 = vmand %vm1031, %vm1159
  %vm1417 = vmand %vm1032, %vm1160
  %vm1418 = vmand %vm1033, %vm1161
  %vm1419 = vmand %vm1034, %vm1162
  %vm1420 = vmand %vm1035, %vm1163
  %vm1421 = vmand %vm1036, %vm1164
  %vm1422 = vmand %vm1037, %vm1165
  %vm1423 = vmand %vm1038, %vm1166
  %vm1424 = vmand %vm1039, %vm1167
  %vm1425 = vmand %vm1040, %vm1168
  %vm1426 = vmand %vm1041, %vm1169
  %vm1427 = vmand %vm1042, %vm1170
  %vm1428 = vmand %vm1043, %vm1171
  %vm1429 = vmand %vm1044, %vm1172
  %vm1430 = vmand %vm1045, %vm1173
  %vm1431 = vmand %vm1046, %vm1174
  %vm1432 = vmand %vm1047, %vm1175
  %vm1433 = vmand %vm1048, %vm1176
  %vm1434 = vmand %vm1049, %vm1177
  %vm1435 = vmand %vm1050, %vm1178
  %vm1436 = vmand %vm1051, %vm1179
  %vm1437 = vmand %vm1052, %vm1180
  %vm1438 = vmand %vm1053, %vm1181
  %vm1439 = vmand %vm1054, %vm1182
  %vm1440 = vmand %vm1055, %vm1183
  %vm1441 = vmand %vm1056, %vm1184
  %vm1442 = vmand %vm1057, %vm1185
  %vm1443 = vmand %vm1058, %vm1186
  %vm1444 = vmand %vm1059, %vm1187
  %vm1445 = vmand %vm1060, %vm1188
  %vm1446 = vmand %vm1061, %vm1189
  %vm1447 = vmand %vm1062, %vm1190
  %vm1448 = vmand %vm1063, %vm1191
  %vm1449 = vmand %vm1064, %vm1192
  %vm1450 = vmand %vm1065, %vm1193
  %vm1451 = vmand %vm1066, %vm1194
  %vm1452 = vmand %vm1067, %vm1195
  %vm1453 = vmand %vm1068, %vm1196
  %vm1454 = vmand %vm1069, %vm1197
  %vm1455 = vmand %vm1070, %vm1198
  %vm1456 = vmand %vm1071, %vm1199
  %vm1457 = vmand %vm1072, %vm1200
  %vm1458 = vmand %vm1073, %vm1201
  %vm1459 = vmand %vm1074, %vm1202
  %vm1460 = vmand %vm1075, %vm1203
  %vm1461 = vmand %vm1076, %vm1204
  %vm1462 = vmand %vm1077, %vm1205
  %vm1463 = vmand %vm1078, %vm1206
  %vm1464 = vmand %vm1079, %vm1207
  %vm1465 = vmand %vm1080, %vm1208
  %vm1466 = vmand %vm1081, %vm1209
  %v1467 = vsel %vm1403, 1, 0
  %v1468 = vsel %vm1404, 1, 0
  %v1469 = vsel %vm1405, 1, 0
  %v1470 = vsel %vm1406, 1, 0
  %v1471 = vsel %vm1407, 1, 0
  %v1472 = vsel %vm1408, 1, 0
  %v1473 = vsel %vm1409, 1, 0
  %v1474 = vsel %vm1410, 1, 0
  %v1475 = vsel %vm1411, 1, 0
  %v1476 = vsel %vm1412, 1, 0
  %v1477 = vsel %vm1413, 1, 0
  %v1478 = vsel %vm1414, 1, 0
  %v1479 = vsel %vm1415, 1, 0
  %v1480 = vsel %vm1416, 1, 0
  %v1481 = vsel %vm1417, 1, 0
  %v1482 = vsel %vm1418, 1, 0
  %v1483 = vsel %vm1419, 1, 0
  %v1484 = vsel %vm1420, 1, 0
  %v1485 = vsel %vm1421, 1, 0
  %v1486 = vsel %vm1422, 1, 0
  %v1487 = vsel %vm1423, 1, 0
  %v1488 = vsel %vm1424, 1, 0
  %v1489 = vsel %vm1425, 1, 0
  %v1490 = vsel %vm1426, 1, 0
  %v1491 = vsel %vm1427, 1, 0
  %v1492 = vsel %vm1428, 1, 0
  %v1493 = vsel %vm1429, 1, 0
  %v1494 = vsel %vm1430, 1, 0
  %v1495 = vsel %vm1431, 1, 0
  %v1496 = vsel %vm1432, 1, 0
  %v1497 = vsel %vm1433, 1, 0
  %v1498 = vsel %vm1434, 1, 0
  %v1499 = vsel %vm1435, 1, 0
  %v1500 = vsel %vm1436, 1, 0
  %v1501 = vsel %vm1437, 1, 0
  %v1502 = vsel %vm1438, 1, 0
  %v1503 = vsel %vm1439, 1, 0
  %v1504 = vsel %vm1440, 1, 0
  %v1505 = vsel %vm1441, 1, 0
  %v1506 = vsel %vm1442, 1, 0
  %v1507 = vsel %vm1443, 1, 0
  %v1508 = vsel %vm1444, 1, 0
  %v1509 = vsel %vm1445, 1, 0
  %v1510 = vsel %vm1446, 1, 0
  %v1511 = vsel %vm1447, 1, 0
  %v1512 = vsel %vm1448, 1, 0
  %v1513 = vsel %vm1449, 1, 0
  %v1514 = vsel %vm1450, 1, 0
  %v1515 = vsel %vm1451, 1, 0
  %v1516 = vsel %vm1452, 1, 0
  %v1517 = vsel %vm1453, 1, 0
  %v1518 = vsel %vm1454, 1, 0
  %v1519 = vsel %vm1455, 1, 0
  %v1520 = vsel %vm1456, 1, 0
  %v1521 = vsel %vm1457, 1, 0
  %v1522 = vsel %vm1458, 1, 0
  %v1523 = vsel %vm1459, 1, 0
  %v1524 = vsel %vm1460, 1, 0
  %v1525 = vsel %vm1461, 1, 0
  %v1526 = vsel %vm1462, 1, 0
  %v1527 = vsel %vm1463, 1, 0
  %v1528 = vsel %vm1464, 1, 0
  %v1529 = vsel %vm1465, 1, 0
  %v1530 = vsel %vm1466, 1, 0
  %vm1531 = vcmp.eq.s32.totalorder %v1467, 1
  %vm1532 = vcmp.eq.s32.totalorder %v1468, 1
  %vm1533 = vcmp.eq.s32.totalorder %v1469, 1
  %vm1534 = vcmp.eq.s32.totalorder %v1470, 1
  %vm1535 = vcmp.eq.s32.totalorder %v1471, 1
  %vm1536 = vcmp.eq.s32.totalorder %v1472, 1
  %vm1537 = vcmp.eq.s32.totalorder %v1473, 1
  %vm1538 = vcmp.eq.s32.totalorder %v1474, 1
  %vm1539 = vcmp.eq.s32.totalorder %v1475, 1
  %vm1540 = vcmp.eq.s32.totalorder %v1476, 1
  %vm1541 = vcmp.eq.s32.totalorder %v1477, 1
  %vm1542 = vcmp.eq.s32.totalorder %v1478, 1
  %vm1543 = vcmp.eq.s32.totalorder %v1479, 1
  %vm1544 = vcmp.eq.s32.totalorder %v1480, 1
  %vm1545 = vcmp.eq.s32.totalorder %v1481, 1
  %vm1546 = vcmp.eq.s32.totalorder %v1482, 1
  %vm1547 = vcmp.eq.s32.totalorder %v1483, 1
  %vm1548 = vcmp.eq.s32.totalorder %v1484, 1
  %vm1549 = vcmp.eq.s32.totalorder %v1485, 1
  %vm1550 = vcmp.eq.s32.totalorder %v1486, 1
  %vm1551 = vcmp.eq.s32.totalorder %v1487, 1
  %vm1552 = vcmp.eq.s32.totalorder %v1488, 1
  %vm1553 = vcmp.eq.s32.totalorder %v1489, 1
  %vm1554 = vcmp.eq.s32.totalorder %v1490, 1
  %vm1555 = vcmp.eq.s32.totalorder %v1491, 1
  %vm1556 = vcmp.eq.s32.totalorder %v1492, 1
  %vm1557 = vcmp.eq.s32.totalorder %v1493, 1
  %vm1558 = vcmp.eq.s32.totalorder %v1494, 1
  %vm1559 = vcmp.eq.s32.totalorder %v1495, 1
  %vm1560 = vcmp.eq.s32.totalorder %v1496, 1
  %vm1561 = vcmp.eq.s32.totalorder %v1497, 1
  %vm1562 = vcmp.eq.s32.totalorder %v1498, 1
  %vm1563 = vcmp.eq.s32.totalorder %v1499, 1
  %vm1564 = vcmp.eq.s32.totalorder %v1500, 1
  %vm1565 = vcmp.eq.s32.totalorder %v1501, 1
  %vm1566 = vcmp.eq.s32.totalorder %v1502, 1
  %vm1567 = vcmp.eq.s32.totalorder %v1503, 1
  %vm1568 = vcmp.eq.s32.totalorder %v1504, 1
  %vm1569 = vcmp.eq.s32.totalorder %v1505, 1
  %vm1570 = vcmp.eq.s32.totalorder %v1506, 1
  %vm1571 = vcmp.eq.s32.totalorder %v1507, 1
  %vm1572 = vcmp.eq.s32.totalorder %v1508, 1
  %vm1573 = vcmp.eq.s32.totalorder %v1509, 1
  %vm1574 = vcmp.eq.s32.totalorder %v1510, 1
  %vm1575 = vcmp.eq.s32.totalorder %v1511, 1
  %vm1576 = vcmp.eq.s32.totalorder %v1512, 1
  %vm1577 = vcmp.eq.s32.totalorder %v1513, 1
  %vm1578 = vcmp.eq.s32.totalorder %v1514, 1
  %vm1579 = vcmp.eq.s32.totalorder %v1515, 1
  %vm1580 = vcmp.eq.s32.totalorder %v1516, 1
  %vm1581 = vcmp.eq.s32.totalorder %v1517, 1
  %vm1582 = vcmp.eq.s32.totalorder %v1518, 1
  %vm1583 = vcmp.eq.s32.totalorder %v1519, 1
  %vm1584 = vcmp.eq.s32.totalorder %v1520, 1
  %vm1585 = vcmp.eq.s32.totalorder %v1521, 1
  %vm1586 = vcmp.eq.s32.totalorder %v1522, 1
  %vm1587 = vcmp.eq.s32.totalorder %v1523, 1
  %vm1588 = vcmp.eq.s32.totalorder %v1524, 1
  %vm1589 = vcmp.eq.s32.totalorder %v1525, 1
  %vm1590 = vcmp.eq.s32.totalorder %v1526, 1
  %vm1591 = vcmp.eq.s32.totalorder %v1527, 1
  %vm1592 = vcmp.eq.s32.totalorder %v1528, 1
  %vm1593 = vcmp.eq.s32.totalorder %v1529, 1
  %vm1594 = vcmp.eq.s32.totalorder %v1530, 1
  %v1595 = vsel %vm1531, %v1340, 0.0
  %v1596 = vsel %vm1532, %v1339, 0.0
  %v1597 = vsel %vm1533, %v1402, 0.0
  %v1598 = vsel %vm1534, %v1401, 0.0
  %v1599 = vsel %vm1535, %v1400, 0.0
  %v1600 = vsel %vm1536, %v1399, 0.0
  %v1601 = vsel %vm1537, %v1398, 0.0
  %v1602 = vsel %vm1538, %v1397, 0.0
  %v1603 = vsel %vm1539, %v1396, 0.0
  %v1604 = vsel %vm1540, %v1395, 0.0
  %v1605 = vsel %vm1541, %v1394, 0.0
  %v1606 = vsel %vm1542, %v1393, 0.0
  %v1607 = vsel %vm1543, %v1392, 0.0
  %v1608 = vsel %vm1544, %v1391, 0.0
  %v1609 = vsel %vm1545, %v1390, 0.0
  %v1610 = vsel %vm1546, %v1389, 0.0
  %v1611 = vsel %vm1547, %v1388, 0.0
  %v1612 = vsel %vm1548, %v1387, 0.0
  %v1613 = vsel %vm1549, %v1386, 0.0
  %v1614 = vsel %vm1550, %v1385, 0.0
  %v1615 = vsel %vm1551, %v1384, 0.0
  %v1616 = vsel %vm1552, %v1383, 0.0
  %v1617 = vsel %vm1553, %v1382, 0.0
  %v1618 = vsel %vm1554, %v1381, 0.0
  %v1619 = vsel %vm1555, %v1380, 0.0
  %v1620 = vsel %vm1556, %v1379, 0.0
  %v1621 = vsel %vm1557, %v1378, 0.0
  %v1622 = vsel %vm1558, %v1377, 0.0
  %v1623 = vsel %vm1559, %v1376, 0.0
  %v1624 = vsel %vm1560, %v1375, 0.0
  %v1625 = vsel %vm1561, %v1374, 0.0
  %v1626 = vsel %vm1562, %v1373, 0.0
  %v1627 = vsel %vm1563, %v1372, 0.0
  %v1628 = vsel %vm1564, %v1371, 0.0
  %v1629 = vsel %vm1565, %v1370, 0.0
  %v1630 = vsel %vm1566, %v1369, 0.0
  %v1631 = vsel %vm1567, %v1368, 0.0
  %v1632 = vsel %vm1568, %v1367, 0.0
  %v1633 = vsel %vm1569, %v1366, 0.0
  %v1634 = vsel %vm1570, %v1365, 0.0
  %v1635 = vsel %vm1571, %v1364, 0.0
  %v1636 = vsel %vm1572, %v1363, 0.0
  %v1637 = vsel %vm1573, %v1362, 0.0
  %v1638 = vsel %vm1574, %v1361, 0.0
  %v1639 = vsel %vm1575, %v1360, 0.0
  %v1640 = vsel %vm1576, %v1359, 0.0
  %v1641 = vsel %vm1577, %v1358, 0.0
  %v1642 = vsel %vm1578, %v1357, 0.0
  %v1643 = vsel %vm1579, %v1356, 0.0
  %v1644 = vsel %vm1580, %v1355, 0.0
  %v1645 = vsel %vm1581, %v1354, 0.0
  %v1646 = vsel %vm1582, %v1353, 0.0
  %v1647 = vsel %vm1583, %v1352, 0.0
  %v1648 = vsel %vm1584, %v1351, 0.0
  %v1649 = vsel %vm1585, %v1350, 0.0
  %v1650 = vsel %vm1586, %v1349, 0.0
  %v1651 = vsel %vm1587, %v1348, 0.0
  %v1652 = vsel %vm1588, %v1347, 0.0
  %v1653 = vsel %vm1589, %v1346, 0.0
  %v1654 = vsel %vm1590, %v1345, 0.0
  %v1655 = vsel %vm1591, %v1344, 0.0
  %v1656 = vsel %vm1592, %v1343, 0.0
  %v1657 = vsel %vm1593, %v1342, 0.0
  %v1658 = vsel %vm1594, %v1341, 0.0
  %v1659 = vsel %vm1018, 1, 0
  %v1660 = vsel %vm1019, 1, 0
  %v1661 = vsel %vm1020, 1, 0
  %v1662 = vsel %vm1021, 1, 0
  %v1663 = vsel %vm1022, 1, 0
  %v1664 = vsel %vm1023, 1, 0
  %v1665 = vsel %vm1024, 1, 0
  %v1666 = vsel %vm1025, 1, 0
  %v1667 = vsel %vm1026, 1, 0
  %v1668 = vsel %vm1027, 1, 0
  %v1669 = vsel %vm1028, 1, 0
  %v1670 = vsel %vm1029, 1, 0
  %v1671 = vsel %vm1030, 1, 0
  %v1672 = vsel %vm1031, 1, 0
  %v1673 = vsel %vm1032, 1, 0
  %v1674 = vsel %vm1033, 1, 0
  %v1675 = vsel %vm1034, 1, 0
  %v1676 = vsel %vm1035, 1, 0
  %v1677 = vsel %vm1036, 1, 0
  %v1678 = vsel %vm1037, 1, 0
  %v1679 = vsel %vm1038, 1, 0
  %v1680 = vsel %vm1039, 1, 0
  %v1681 = vsel %vm1040, 1, 0
  %v1682 = vsel %vm1041, 1, 0
  %v1683 = vsel %vm1042, 1, 0
  %v1684 = vsel %vm1043, 1, 0
  %v1685 = vsel %vm1044, 1, 0
  %v1686 = vsel %vm1045, 1, 0
  %v1687 = vsel %vm1046, 1, 0
  %v1688 = vsel %vm1047, 1, 0
  %v1689 = vsel %vm1048, 1, 0
  %v1690 = vsel %vm1049, 1, 0
  %v1691 = vsel %vm1050, 1, 0
  %v1692 = vsel %vm1051, 1, 0
  %v1693 = vsel %vm1052, 1, 0
  %v1694 = vsel %vm1053, 1, 0
  %v1695 = vsel %vm1054, 1, 0
  %v1696 = vsel %vm1055, 1, 0
  %v1697 = vsel %vm1056, 1, 0
  %v1698 = vsel %vm1057, 1, 0
  %v1699 = vsel %vm1058, 1, 0
  %v1700 = vsel %vm1059, 1, 0
  %v1701 = vsel %vm1060, 1, 0
  %v1702 = vsel %vm1061, 1, 0
  %v1703 = vsel %vm1062, 1, 0
  %v1704 = vsel %vm1063, 1, 0
  %v1705 = vsel %vm1064, 1, 0
  %v1706 = vsel %vm1065, 1, 0
  %v1707 = vsel %vm1066, 1, 0
  %v1708 = vsel %vm1067, 1, 0
  %v1709 = vsel %vm1068, 1, 0
  %v1710 = vsel %vm1069, 1, 0
  %v1711 = vsel %vm1070, 1, 0
  %v1712 = vsel %vm1071, 1, 0
  %v1713 = vsel %vm1072, 1, 0
  %v1714 = vsel %vm1073, 1, 0
  %v1715 = vsel %vm1074, 1, 0
  %v1716 = vsel %vm1075, 1, 0
  %v1717 = vsel %vm1076, 1, 0
  %v1718 = vsel %vm1077, 1, 0
  %v1719 = vsel %vm1078, 1, 0
  %v1720 = vsel %vm1079, 1, 0
  %v1721 = vsel %vm1080, 1, 0
  %v1722 = vsel %vm1081, 1, 0
  %vm1723 = vcmp.eq.s32.totalorder %v1659, 1
  %vm1724 = vcmp.eq.s32.totalorder %v1660, 1
  %vm1725 = vcmp.eq.s32.totalorder %v1661, 1
  %vm1726 = vcmp.eq.s32.totalorder %v1662, 1
  %vm1727 = vcmp.eq.s32.totalorder %v1663, 1
  %vm1728 = vcmp.eq.s32.totalorder %v1664, 1
  %vm1729 = vcmp.eq.s32.totalorder %v1665, 1
  %vm1730 = vcmp.eq.s32.totalorder %v1666, 1
  %vm1731 = vcmp.eq.s32.totalorder %v1667, 1
  %vm1732 = vcmp.eq.s32.totalorder %v1668, 1
  %vm1733 = vcmp.eq.s32.totalorder %v1669, 1
  %vm1734 = vcmp.eq.s32.totalorder %v1670, 1
  %vm1735 = vcmp.eq.s32.totalorder %v1671, 1
  %vm1736 = vcmp.eq.s32.totalorder %v1672, 1
  %vm1737 = vcmp.eq.s32.totalorder %v1673, 1
  %vm1738 = vcmp.eq.s32.totalorder %v1674, 1
  %vm1739 = vcmp.eq.s32.totalorder %v1675, 1
  %vm1740 = vcmp.eq.s32.totalorder %v1676, 1
  %vm1741 = vcmp.eq.s32.totalorder %v1677, 1
  %vm1742 = vcmp.eq.s32.totalorder %v1678, 1
  %vm1743 = vcmp.eq.s32.totalorder %v1679, 1
  %vm1744 = vcmp.eq.s32.totalorder %v1680, 1
  %vm1745 = vcmp.eq.s32.totalorder %v1681, 1
  %vm1746 = vcmp.eq.s32.totalorder %v1682, 1
  %vm1747 = vcmp.eq.s32.totalorder %v1683, 1
  %vm1748 = vcmp.eq.s32.totalorder %v1684, 1
  %vm1749 = vcmp.eq.s32.totalorder %v1685, 1
  %vm1750 = vcmp.eq.s32.totalorder %v1686, 1
  %vm1751 = vcmp.eq.s32.totalorder %v1687, 1
  %vm1752 = vcmp.eq.s32.totalorder %v1688, 1
  %vm1753 = vcmp.eq.s32.totalorder %v1689, 1
  %vm1754 = vcmp.eq.s32.totalorder %v1690, 1
  %vm1755 = vcmp.eq.s32.totalorder %v1691, 1
  %vm1756 = vcmp.eq.s32.totalorder %v1692, 1
  %vm1757 = vcmp.eq.s32.totalorder %v1693, 1
  %vm1758 = vcmp.eq.s32.totalorder %v1694, 1
  %vm1759 = vcmp.eq.s32.totalorder %v1695, 1
  %vm1760 = vcmp.eq.s32.totalorder %v1696, 1
  %vm1761 = vcmp.eq.s32.totalorder %v1697, 1
  %vm1762 = vcmp.eq.s32.totalorder %v1698, 1
  %vm1763 = vcmp.eq.s32.totalorder %v1699, 1
  %vm1764 = vcmp.eq.s32.totalorder %v1700, 1
  %vm1765 = vcmp.eq.s32.totalorder %v1701, 1
  %vm1766 = vcmp.eq.s32.totalorder %v1702, 1
  %vm1767 = vcmp.eq.s32.totalorder %v1703, 1
  %vm1768 = vcmp.eq.s32.totalorder %v1704, 1
  %vm1769 = vcmp.eq.s32.totalorder %v1705, 1
  %vm1770 = vcmp.eq.s32.totalorder %v1706, 1
  %vm1771 = vcmp.eq.s32.totalorder %v1707, 1
  %vm1772 = vcmp.eq.s32.totalorder %v1708, 1
  %vm1773 = vcmp.eq.s32.totalorder %v1709, 1
  %vm1774 = vcmp.eq.s32.totalorder %v1710, 1
  %vm1775 = vcmp.eq.s32.totalorder %v1711, 1
  %vm1776 = vcmp.eq.s32.totalorder %v1712, 1
  %vm1777 = vcmp.eq.s32.totalorder %v1713, 1
  %vm1778 = vcmp.eq.s32.totalorder %v1714, 1
  %vm1779 = vcmp.eq.s32.totalorder %v1715, 1
  %vm1780 = vcmp.eq.s32.totalorder %v1716, 1
  %vm1781 = vcmp.eq.s32.totalorder %v1717, 1
  %vm1782 = vcmp.eq.s32.totalorder %v1718, 1
  %vm1783 = vcmp.eq.s32.totalorder %v1719, 1
  %vm1784 = vcmp.eq.s32.totalorder %v1720, 1
  %vm1785 = vcmp.eq.s32.totalorder %v1721, 1
  %vm1786 = vcmp.eq.s32.totalorder %v1722, 1
  %v1787 = vsel %vm1723, %v759, 0.0
  %v1788 = vsel %vm1724, %v760, 0.0
  %v1789 = vsel %vm1725, %v697, 0.0
  %v1790 = vsel %vm1726, %v698, 0.0
  %v1791 = vsel %vm1727, %v699, 0.0
  %v1792 = vsel %vm1728, %v700, 0.0
  %v1793 = vsel %vm1729, %v701, 0.0
  %v1794 = vsel %vm1730, %v702, 0.0
  %v1795 = vsel %vm1731, %v703, 0.0
  %v1796 = vsel %vm1732, %v704, 0.0
  %v1797 = vsel %vm1733, %v705, 0.0
  %v1798 = vsel %vm1734, %v706, 0.0
  %v1799 = vsel %vm1735, %v707, 0.0
  %v1800 = vsel %vm1736, %v708, 0.0
  %v1801 = vsel %vm1737, %v709, 0.0
  %v1802 = vsel %vm1738, %v710, 0.0
  %v1803 = vsel %vm1739, %v711, 0.0
  %v1804 = vsel %vm1740, %v712, 0.0
  %v1805 = vsel %vm1741, %v713, 0.0
  %v1806 = vsel %vm1742, %v714, 0.0
  %v1807 = vsel %vm1743, %v715, 0.0
  %v1808 = vsel %vm1744, %v716, 0.0
  %v1809 = vsel %vm1745, %v717, 0.0
  %v1810 = vsel %vm1746, %v718, 0.0
  %v1811 = vsel %vm1747, %v719, 0.0
  %v1812 = vsel %vm1748, %v720, 0.0
  %v1813 = vsel %vm1749, %v721, 0.0
  %v1814 = vsel %vm1750, %v722, 0.0
  %v1815 = vsel %vm1751, %v723, 0.0
  %v1816 = vsel %vm1752, %v724, 0.0
  %v1817 = vsel %vm1753, %v725, 0.0
  %v1818 = vsel %vm1754, %v726, 0.0
  %v1819 = vsel %vm1755, %v727, 0.0
  %v1820 = vsel %vm1756, %v728, 0.0
  %v1821 = vsel %vm1757, %v729, 0.0
  %v1822 = vsel %vm1758, %v730, 0.0
  %v1823 = vsel %vm1759, %v731, 0.0
  %v1824 = vsel %vm1760, %v732, 0.0
  %v1825 = vsel %vm1761, %v733, 0.0
  %v1826 = vsel %vm1762, %v734, 0.0
  %v1827 = vsel %vm1763, %v735, 0.0
  %v1828 = vsel %vm1764, %v736, 0.0
  %v1829 = vsel %vm1765, %v737, 0.0
  %v1830 = vsel %vm1766, %v738, 0.0
  %v1831 = vsel %vm1767, %v739, 0.0
  %v1832 = vsel %vm1768, %v740, 0.0
  %v1833 = vsel %vm1769, %v741, 0.0
  %v1834 = vsel %vm1770, %v742, 0.0
  %v1835 = vsel %vm1771, %v743, 0.0
  %v1836 = vsel %vm1772, %v744, 0.0
  %v1837 = vsel %vm1773, %v745, 0.0
  %v1838 = vsel %vm1774, %v746, 0.0
  %v1839 = vsel %vm1775, %v747, 0.0
  %v1840 = vsel %vm1776, %v748, 0.0
  %v1841 = vsel %vm1777, %v749, 0.0
  %v1842 = vsel %vm1778, %v750, 0.0
  %v1843 = vsel %vm1779, %v751, 0.0
  %v1844 = vsel %vm1780, %v752, 0.0
  %v1845 = vsel %vm1781, %v753, 0.0
  %v1846 = vsel %vm1782, %v754, 0.0
  %v1847 = vsel %vm1783, %v755, 0.0
  %v1848 = vsel %vm1784, %v756, 0.0
  %v1849 = vsel %vm1785, %v757, 0.0
  %v1850 = vsel %vm1786, %v758, 0.0
  %1851 = vrot.lane.b32.xlu0 %v1787, 4
  %v1852 = vpop.permute.xlu0 %1851
  %1853 = vrot.lane.b32.xlu0 %v1788, 4
  %v1854 = vpop.permute.xlu0 %1853
  %1855 = vrot.lane.b32.xlu0 %v1789, 4
  %v1856 = vpop.permute.xlu0 %1855
  %1857 = vrot.lane.b32.xlu0 %v1790, 4
  %v1858 = vpop.permute.xlu0 %1857
  %1859 = vrot.lane.b32.xlu0 %v1791, 4
  %v1860 = vpop.permute.xlu0 %1859
  %1861 = vrot.lane.b32.xlu0 %v1792, 4
  %v1862 = vpop.permute.xlu0 %1861
  %1863 = vrot.lane.b32.xlu0 %v1793, 4
  %v1864 = vpop.permute.xlu0 %1863
  %1865 = vrot.lane.b32.xlu0 %v1794, 4
  %v1866 = vpop.permute.xlu0 %1865
  %1867 = vrot.lane.b32.xlu0 %v1795, 4
  %v1868 = vpop.permute.xlu0 %1867
  %1869 = vrot.lane.b32.xlu0 %v1796, 4
  %v1870 = vpop.permute.xlu0 %1869
  %1871 = vrot.lane.b32.xlu0 %v1797, 4
  %v1872 = vpop.permute.xlu0 %1871
  %1873 = vrot.lane.b32.xlu0 %v1798, 4
  %v1874 = vpop.permute.xlu0 %1873
  %1875 = vrot.lane.b32.xlu0 %v1799, 4
  %v1876 = vpop.permute.xlu0 %1875
  %1877 = vrot.lane.b32.xlu0 %v1800, 4
  %v1878 = vpop.permute.xlu0 %1877
  %1879 = vrot.lane.b32.xlu0 %v1801, 4
  %v1880 = vpop.permute.xlu0 %1879
  %1881 = vrot.lane.b32.xlu0 %v1802, 4
  %v1882 = vpop.permute.xlu0 %1881
  %1883 = vrot.lane.b32.xlu0 %v1803, 4
  %v1884 = vpop.permute.xlu0 %1883
  %1885 = vrot.lane.b32.xlu0 %v1804, 4
  %v1886 = vpop.permute.xlu0 %1885
  %1887 = vrot.lane.b32.xlu0 %v1805, 4
  %v1888 = vpop.permute.xlu0 %1887
  %1889 = vrot.lane.b32.xlu0 %v1806, 4
  %v1890 = vpop.permute.xlu0 %1889
  %1891 = vrot.lane.b32.xlu0 %v1807, 4
  %v1892 = vpop.permute.xlu0 %1891
  %1893 = vrot.lane.b32.xlu0 %v1808, 4
  %v1894 = vpop.permute.xlu0 %1893
  %1895 = vrot.lane.b32.xlu0 %v1809, 4
  %v1896 = vpop.permute.xlu0 %1895
  %1897 = vrot.lane.b32.xlu0 %v1810, 4
  %v1898 = vpop.permute.xlu0 %1897
  %1899 = vrot.lane.b32.xlu0 %v1811, 4
  %v1900 = vpop.permute.xlu0 %1899
  %1901 = vrot.lane.b32.xlu0 %v1812, 4
  %v1902 = vpop.permute.xlu0 %1901
  %1903 = vrot.lane.b32.xlu0 %v1813, 4
  %v1904 = vpop.permute.xlu0 %1903
  %1905 = vrot.lane.b32.xlu0 %v1814, 4
  %v1906 = vpop.permute.xlu0 %1905
  %1907 = vrot.lane.b32.xlu0 %v1815, 4
  %v1908 = vpop.permute.xlu0 %1907
  %1909 = vrot.lane.b32.xlu0 %v1816, 4
  %v1910 = vpop.permute.xlu0 %1909
  %1911 = vrot.lane.b32.xlu0 %v1817, 4
  %v1912 = vpop.permute.xlu0 %1911
  %1913 = vrot.lane.b32.xlu0 %v1818, 4
  %v1914 = vpop.permute.xlu0 %1913
  %1915 = vrot.lane.b32.xlu0 %v1819, 4
  %v1916 = vpop.permute.xlu0 %1915
  %1917 = vrot.lane.b32.xlu0 %v1820, 4
  %v1918 = vpop.permute.xlu0 %1917
  %1919 = vrot.lane.b32.xlu0 %v1821, 4
  %v1920 = vpop.permute.xlu0 %1919
  %1921 = vrot.lane.b32.xlu0 %v1822, 4
  %v1922 = vpop.permute.xlu0 %1921
  %1923 = vrot.lane.b32.xlu0 %v1823, 4
  %v1924 = vpop.permute.xlu0 %1923
  %1925 = vrot.lane.b32.xlu0 %v1824, 4
  %v1926 = vpop.permute.xlu0 %1925
  %1927 = vrot.lane.b32.xlu0 %v1825, 4
  %v1928 = vpop.permute.xlu0 %1927
  %1929 = vrot.lane.b32.xlu0 %v1826, 4
  %v1930 = vpop.permute.xlu0 %1929
  %1931 = vrot.lane.b32.xlu0 %v1827, 4
  %v1932 = vpop.permute.xlu0 %1931
  %1933 = vrot.lane.b32.xlu0 %v1828, 4
  %v1934 = vpop.permute.xlu0 %1933
  %1935 = vrot.lane.b32.xlu0 %v1829, 4
  %v1936 = vpop.permute.xlu0 %1935
  %1937 = vrot.lane.b32.xlu0 %v1830, 4
  %v1938 = vpop.permute.xlu0 %1937
  %1939 = vrot.lane.b32.xlu0 %v1831, 4
  %v1940 = vpop.permute.xlu0 %1939
  %1941 = vrot.lane.b32.xlu0 %v1832, 4
  %v1942 = vpop.permute.xlu0 %1941
  %1943 = vrot.lane.b32.xlu0 %v1833, 4
  %v1944 = vpop.permute.xlu0 %1943
  %1945 = vrot.lane.b32.xlu0 %v1834, 4
  %v1946 = vpop.permute.xlu0 %1945
  %1947 = vrot.lane.b32.xlu0 %v1835, 4
  %v1948 = vpop.permute.xlu0 %1947
  %1949 = vrot.lane.b32.xlu0 %v1836, 4
  %v1950 = vpop.permute.xlu0 %1949
  %1951 = vrot.lane.b32.xlu0 %v1837, 4
  %v1952 = vpop.permute.xlu0 %1951
  %1953 = vrot.lane.b32.xlu0 %v1838, 4
  %v1954 = vpop.permute.xlu0 %1953
  %1955 = vrot.lane.b32.xlu0 %v1839, 4
  %v1956 = vpop.permute.xlu0 %1955
  %1957 = vrot.lane.b32.xlu0 %v1840, 4
  %v1958 = vpop.permute.xlu0 %1957
  %1959 = vrot.lane.b32.xlu0 %v1841, 4
  %v1960 = vpop.permute.xlu0 %1959
  %1961 = vrot.lane.b32.xlu0 %v1842, 4
  %v1962 = vpop.permute.xlu0 %1961
  %1963 = vrot.lane.b32.xlu0 %v1843, 4
  %v1964 = vpop.permute.xlu0 %1963
  %1965 = vrot.lane.b32.xlu0 %v1844, 4
  %v1966 = vpop.permute.xlu0 %1965
  %1967 = vrot.lane.b32.xlu0 %v1845, 4
  %v1968 = vpop.permute.xlu0 %1967
  %1969 = vrot.lane.b32.xlu0 %v1846, 4
  %v1970 = vpop.permute.xlu0 %1969
  %1971 = vrot.lane.b32.xlu0 %v1847, 4
  %v1972 = vpop.permute.xlu0 %1971
  %1973 = vrot.lane.b32.xlu0 %v1848, 4
  %v1974 = vpop.permute.xlu0 %1973
  %1975 = vrot.lane.b32.xlu0 %v1849, 4
  %v1976 = vpop.permute.xlu0 %1975
  %1977 = vrot.lane.b32.xlu0 %v1850, 4
  %v1978 = vpop.permute.xlu0 %1977
  %v1979 = vadd.f32 %v1595, %v1852
  %v1980 = vadd.f32 %v1596, %v1854
  %v1981 = vadd.f32 %v1597, %v1856
  %v1982 = vadd.f32 %v1598, %v1858
  %v1983 = vadd.f32 %v1599, %v1860
  %v1984 = vadd.f32 %v1600, %v1862
  %v1985 = vadd.f32 %v1601, %v1864
  %v1986 = vadd.f32 %v1602, %v1866
  %v1987 = vadd.f32 %v1603, %v1868
  %v1988 = vadd.f32 %v1604, %v1870
  %v1989 = vadd.f32 %v1605, %v1872
  %v1990 = vadd.f32 %v1606, %v1874
  %v1991 = vadd.f32 %v1607, %v1876
  %v1992 = vadd.f32 %v1608, %v1878
  %v1993 = vadd.f32 %v1609, %v1880
  %v1994 = vadd.f32 %v1610, %v1882
  %v1995 = vadd.f32 %v1611, %v1884
  %v1996 = vadd.f32 %v1612, %v1886
  %v1997 = vadd.f32 %v1613, %v1888
  %v1998 = vadd.f32 %v1614, %v1890
  %v1999 = vadd.f32 %v1615, %v1892
  %v2000 = vadd.f32 %v1616, %v1894
  %v2001 = vadd.f32 %v1617, %v1896
  %v2002 = vadd.f32 %v1618, %v1898
  %v2003 = vadd.f32 %v1619, %v1900
  %v2004 = vadd.f32 %v1620, %v1902
  %v2005 = vadd.f32 %v1621, %v1904
  %v2006 = vadd.f32 %v1622, %v1906
  %v2007 = vadd.f32 %v1623, %v1908
  %v2008 = vadd.f32 %v1624, %v1910
  %v2009 = vadd.f32 %v1625, %v1912
  %v2010 = vadd.f32 %v1626, %v1914
  %v2011 = vadd.f32 %v1627, %v1916
  %v2012 = vadd.f32 %v1628, %v1918
  %v2013 = vadd.f32 %v1629, %v1920
  %v2014 = vadd.f32 %v1630, %v1922
  %v2015 = vadd.f32 %v1631, %v1924
  %v2016 = vadd.f32 %v1632, %v1926
  %v2017 = vadd.f32 %v1633, %v1928
  %v2018 = vadd.f32 %v1634, %v1930
  %v2019 = vadd.f32 %v1635, %v1932
  %v2020 = vadd.f32 %v1636, %v1934
  %v2021 = vadd.f32 %v1637, %v1936
  %v2022 = vadd.f32 %v1638, %v1938
  %v2023 = vadd.f32 %v1639, %v1940
  %v2024 = vadd.f32 %v1640, %v1942
  %v2025 = vadd.f32 %v1641, %v1944
  %v2026 = vadd.f32 %v1642, %v1946
  %v2027 = vadd.f32 %v1643, %v1948
  %v2028 = vadd.f32 %v1644, %v1950
  %v2029 = vadd.f32 %v1645, %v1952
  %v2030 = vadd.f32 %v1646, %v1954
  %v2031 = vadd.f32 %v1647, %v1956
  %v2032 = vadd.f32 %v1648, %v1958
  %v2033 = vadd.f32 %v1649, %v1960
  %v2034 = vadd.f32 %v1650, %v1962
  %v2035 = vadd.f32 %v1651, %v1964
  %v2036 = vadd.f32 %v1652, %v1966
  %v2037 = vadd.f32 %v1653, %v1968
  %v2038 = vadd.f32 %v1654, %v1970
  %v2039 = vadd.f32 %v1655, %v1972
  %v2040 = vadd.f32 %v1656, %v1974
  %v2041 = vadd.f32 %v1657, %v1976
  %v2042 = vadd.f32 %v1658, %v1978
  %v2043 = vrot.slane %v697, 1
  %v2044 = vrot.slane %v698, 1
  %v2045 = vrot.slane %v699, 1
  %v2046 = vrot.slane %v700, 1
  %v2047 = vrot.slane %v701, 1
  %v2048 = vrot.slane %v702, 1
  %v2049 = vrot.slane %v703, 1
  %v2050 = vrot.slane %v704, 1
  %v2051 = vrot.slane %v705, 1
  %v2052 = vrot.slane %v706, 1
  %v2053 = vrot.slane %v707, 1
  %v2054 = vrot.slane %v708, 1
  %v2055 = vrot.slane %v709, 1
  %v2056 = vrot.slane %v710, 1
  %v2057 = vrot.slane %v711, 1
  %v2058 = vrot.slane %v712, 1
  %v2059 = vrot.slane %v713, 1
  %v2060 = vrot.slane %v714, 1
  %v2061 = vrot.slane %v715, 1
  %v2062 = vrot.slane %v716, 1
  %v2063 = vrot.slane %v717, 1
  %v2064 = vrot.slane %v718, 1
  %v2065 = vrot.slane %v719, 1
  %v2066 = vrot.slane %v720, 1
  %v2067 = vrot.slane %v721, 1
  %v2068 = vrot.slane %v722, 1
  %v2069 = vrot.slane %v723, 1
  %v2070 = vrot.slane %v724, 1
  %v2071 = vrot.slane %v725, 1
  %v2072 = vrot.slane %v726, 1
  %v2073 = vrot.slane %v727, 1
  %v2074 = vrot.slane %v728, 1
  %v2075 = vrot.slane %v729, 1
  %v2076 = vrot.slane %v730, 1
  %v2077 = vrot.slane %v731, 1
  %v2078 = vrot.slane %v732, 1
  %v2079 = vrot.slane %v733, 1
  %v2080 = vrot.slane %v734, 1
  %v2081 = vrot.slane %v735, 1
  %v2082 = vrot.slane %v736, 1
  %v2083 = vrot.slane %v737, 1
  %v2084 = vrot.slane %v738, 1
  %v2085 = vrot.slane %v739, 1
  %v2086 = vrot.slane %v740, 1
  %v2087 = vrot.slane %v741, 1
  %v2088 = vrot.slane %v742, 1
  %v2089 = vrot.slane %v743, 1
  %v2090 = vrot.slane %v744, 1
  %v2091 = vrot.slane %v745, 1
  %v2092 = vrot.slane %v746, 1
  %v2093 = vrot.slane %v747, 1
  %v2094 = vrot.slane %v748, 1
  %v2095 = vrot.slane %v749, 1
  %v2096 = vrot.slane %v750, 1
  %v2097 = vrot.slane %v751, 1
  %v2098 = vrot.slane %v752, 1
  %v2099 = vrot.slane %v753, 1
  %v2100 = vrot.slane %v754, 1
  %v2101 = vrot.slane %v755, 1
  %v2102 = vrot.slane %v756, 1
  %v2103 = vrot.slane %v757, 1
  %v2104 = vrot.slane %v758, 1
  %v2105 = vrot.slane %v759, 1
  %v2106 = vrot.slane %v760, 1
  %vm2107 = vcmp.lt.s32.totalorder %v762, 7
  %v2108 = vsel %vm2107, %v2105, %v2106
  %v2109 = vsel %vm2107, %v2104, %v2105
  %v2110 = vsel %vm2107, %v2103, %v2104
  %v2111 = vsel %vm2107, %v2102, %v2103
  %v2112 = vsel %vm2107, %v2101, %v2102
  %v2113 = vsel %vm2107, %v2100, %v2101
  %v2114 = vsel %vm2107, %v2099, %v2100
  %v2115 = vsel %vm2107, %v2098, %v2099
  %v2116 = vsel %vm2107, %v2097, %v2098
  %v2117 = vsel %vm2107, %v2096, %v2097
  %v2118 = vsel %vm2107, %v2095, %v2096
  %v2119 = vsel %vm2107, %v2094, %v2095
  %v2120 = vsel %vm2107, %v2093, %v2094
  %v2121 = vsel %vm2107, %v2092, %v2093
  %v2122 = vsel %vm2107, %v2091, %v2092
  %v2123 = vsel %vm2107, %v2090, %v2091
  %v2124 = vsel %vm2107, %v2089, %v2090
  %v2125 = vsel %vm2107, %v2088, %v2089
  %v2126 = vsel %vm2107, %v2087, %v2088
  %v2127 = vsel %vm2107, %v2086, %v2087
  %v2128 = vsel %vm2107, %v2085, %v2086
  %v2129 = vsel %vm2107, %v2084, %v2085
  %v2130 = vsel %vm2107, %v2083, %v2084
  %v2131 = vsel %vm2107, %v2082, %v2083
  %v2132 = vsel %vm2107, %v2081, %v2082
  %v2133 = vsel %vm2107, %v2080, %v2081
  %v2134 = vsel %vm2107, %v2079, %v2080
  %v2135 = vsel %vm2107, %v2078, %v2079
  %v2136 = vsel %vm2107, %v2077, %v2078
  %v2137 = vsel %vm2107, %v2076, %v2077
  %v2138 = vsel %vm2107, %v2075, %v2076
  %v2139 = vsel %vm2107, %v2074, %v2075
  %v2140 = vsel %vm2107, %v2073, %v2074
  %v2141 = vsel %vm2107, %v2072, %v2073
  %v2142 = vsel %vm2107, %v2071, %v2072
  %v2143 = vsel %vm2107, %v2070, %v2071
  %v2144 = vsel %vm2107, %v2069, %v2070
  %v2145 = vsel %vm2107, %v2068, %v2069
  %v2146 = vsel %vm2107, %v2067, %v2068
  %v2147 = vsel %vm2107, %v2066, %v2067
  %v2148 = vsel %vm2107, %v2065, %v2066
  %v2149 = vsel %vm2107, %v2064, %v2065
  %v2150 = vsel %vm2107, %v2063, %v2064
  %v2151 = vsel %vm2107, %v2062, %v2063
  %v2152 = vsel %vm2107, %v2061, %v2062
  %v2153 = vsel %vm2107, %v2060, %v2061
  %v2154 = vsel %vm2107, %v2059, %v2060
  %v2155 = vsel %vm2107, %v2058, %v2059
  %v2156 = vsel %vm2107, %v2057, %v2058
  %v2157 = vsel %vm2107, %v2056, %v2057
  %v2158 = vsel %vm2107, %v2055, %v2056
  %v2159 = vsel %vm2107, %v2054, %v2055
  %v2160 = vsel %vm2107, %v2053, %v2054
  %v2161 = vsel %vm2107, %v2052, %v2053
  %v2162 = vsel %vm2107, %v2051, %v2052
  %v2163 = vsel %vm2107, %v2050, %v2051
  %v2164 = vsel %vm2107, %v2049, %v2050
  %v2165 = vsel %vm2107, %v2048, %v2049
  %v2166 = vsel %vm2107, %v2047, %v2048
  %v2167 = vsel %vm2107, %v2046, %v2047
  %v2168 = vsel %vm2107, %v2045, %v2046
  %v2169 = vsel %vm2107, %v2044, %v2045
  %v2170 = vsel %vm2107, %v2043, %v2044
  %v2171 = vsel %vm2107, %v2106, %v2043
  %vm2172 = vmand %vm1018, %vm1210
  %vm2173 = vmand %vm1019, %vm1211
  %vm2174 = vmand %vm1020, %vm1212
  %vm2175 = vmand %vm1021, %vm1213
  %vm2176 = vmand %vm1022, %vm1214
  %vm2177 = vmand %vm1023, %vm1215
  %vm2178 = vmand %vm1024, %vm1216
  %vm2179 = vmand %vm1025, %vm1217
  %vm2180 = vmand %vm1026, %vm1218
  %vm2181 = vmand %vm1027, %vm1219
  %vm2182 = vmand %vm1028, %vm1220
  %vm2183 = vmand %vm1029, %vm1221
  %vm2184 = vmand %vm1030, %vm1222
  %vm2185 = vmand %vm1031, %vm1223
  %vm2186 = vmand %vm1032, %vm1224
  %vm2187 = vmand %vm1033, %vm1225
  %vm2188 = vmand %vm1034, %vm1226
  %vm2189 = vmand %vm1035, %vm1227
  %vm2190 = vmand %vm1036, %vm1228
  %vm2191 = vmand %vm1037, %vm1229
  %vm2192 = vmand %vm1038, %vm1230
  %vm2193 = vmand %vm1039, %vm1231
  %vm2194 = vmand %vm1040, %vm1232
  %vm2195 = vmand %vm1041, %vm1233
  %vm2196 = vmand %vm1042, %vm1234
  %vm2197 = vmand %vm1043, %vm1235
  %vm2198 = vmand %vm1044, %vm1236
  %vm2199 = vmand %vm1045, %vm1237
  %vm2200 = vmand %vm1046, %vm1238
  %vm2201 = vmand %vm1047, %vm1239
  %vm2202 = vmand %vm1048, %vm1240
  %vm2203 = vmand %vm1049, %vm1241
  %vm2204 = vmand %vm1050, %vm1242
  %vm2205 = vmand %vm1051, %vm1243
  %vm2206 = vmand %vm1052, %vm1244
  %vm2207 = vmand %vm1053, %vm1245
  %vm2208 = vmand %vm1054, %vm1246
  %vm2209 = vmand %vm1055, %vm1247
  %vm2210 = vmand %vm1056, %vm1248
  %vm2211 = vmand %vm1057, %vm1249
  %vm2212 = vmand %vm1058, %vm1250
  %vm2213 = vmand %vm1059, %vm1251
  %vm2214 = vmand %vm1060, %vm1252
  %vm2215 = vmand %vm1061, %vm1253
  %vm2216 = vmand %vm1062, %vm1254
  %vm2217 = vmand %vm1063, %vm1255
  %vm2218 = vmand %vm1064, %vm1256
  %vm2219 = vmand %vm1065, %vm1257
  %vm2220 = vmand %vm1066, %vm1258
  %vm2221 = vmand %vm1067, %vm1259
  %vm2222 = vmand %vm1068, %vm1260
  %vm2223 = vmand %vm1069, %vm1261
  %vm2224 = vmand %vm1070, %vm1262
  %vm2225 = vmand %vm1071, %vm1263
  %vm2226 = vmand %vm1072, %vm1264
  %vm2227 = vmand %vm1073, %vm1265
  %vm2228 = vmand %vm1074, %vm1266
  %vm2229 = vmand %vm1075, %vm1267
  %vm2230 = vmand %vm1076, %vm1268
  %vm2231 = vmand %vm1077, %vm1269
  %vm2232 = vmand %vm1078, %vm1270
  %vm2233 = vmand %vm1079, %vm1271
  %vm2234 = vmand %vm1080, %vm1272
  %vm2235 = vmand %vm1081, %vm1273
  %v2236 = vsel %vm2172, 1, 0
  %v2237 = vsel %vm2173, 1, 0
  %v2238 = vsel %vm2174, 1, 0
  %v2239 = vsel %vm2175, 1, 0
  %v2240 = vsel %vm2176, 1, 0
  %v2241 = vsel %vm2177, 1, 0
  %v2242 = vsel %vm2178, 1, 0
  %v2243 = vsel %vm2179, 1, 0
  %v2244 = vsel %vm2180, 1, 0
  %v2245 = vsel %vm2181, 1, 0
  %v2246 = vsel %vm2182, 1, 0
  %v2247 = vsel %vm2183, 1, 0
  %v2248 = vsel %vm2184, 1, 0
  %v2249 = vsel %vm2185, 1, 0
  %v2250 = vsel %vm2186, 1, 0
  %v2251 = vsel %vm2187, 1, 0
  %v2252 = vsel %vm2188, 1, 0
  %v2253 = vsel %vm2189, 1, 0
  %v2254 = vsel %vm2190, 1, 0
  %v2255 = vsel %vm2191, 1, 0
  %v2256 = vsel %vm2192, 1, 0
  %v2257 = vsel %vm2193, 1, 0
  %v2258 = vsel %vm2194, 1, 0
  %v2259 = vsel %vm2195, 1, 0
  %v2260 = vsel %vm2196, 1, 0
  %v2261 = vsel %vm2197, 1, 0
  %v2262 = vsel %vm2198, 1, 0
  %v2263 = vsel %vm2199, 1, 0
  %v2264 = vsel %vm2200, 1, 0
  %v2265 = vsel %vm2201, 1, 0
  %v2266 = vsel %vm2202, 1, 0
  %v2267 = vsel %vm2203, 1, 0
  %v2268 = vsel %vm2204, 1, 0
  %v2269 = vsel %vm2205, 1, 0
  %v2270 = vsel %vm2206, 1, 0
  %v2271 = vsel %vm2207, 1, 0
  %v2272 = vsel %vm2208, 1, 0
  %v2273 = vsel %vm2209, 1, 0
  %v2274 = vsel %vm2210, 1, 0
  %v2275 = vsel %vm2211, 1, 0
  %v2276 = vsel %vm2212, 1, 0
  %v2277 = vsel %vm2213, 1, 0
  %v2278 = vsel %vm2214, 1, 0
  %v2279 = vsel %vm2215, 1, 0
  %v2280 = vsel %vm2216, 1, 0
  %v2281 = vsel %vm2217, 1, 0
  %v2282 = vsel %vm2218, 1, 0
  %v2283 = vsel %vm2219, 1, 0
  %v2284 = vsel %vm2220, 1, 0
  %v2285 = vsel %vm2221, 1, 0
  %v2286 = vsel %vm2222, 1, 0
  %v2287 = vsel %vm2223, 1, 0
  %v2288 = vsel %vm2224, 1, 0
  %v2289 = vsel %vm2225, 1, 0
  %v2290 = vsel %vm2226, 1, 0
  %v2291 = vsel %vm2227, 1, 0
  %v2292 = vsel %vm2228, 1, 0
  %v2293 = vsel %vm2229, 1, 0
  %v2294 = vsel %vm2230, 1, 0
  %v2295 = vsel %vm2231, 1, 0
  %v2296 = vsel %vm2232, 1, 0
  %v2297 = vsel %vm2233, 1, 0
  %v2298 = vsel %vm2234, 1, 0
  %v2299 = vsel %vm2235, 1, 0
  %vm2300 = vcmp.eq.s32.totalorder %v2236, 1
  %vm2301 = vcmp.eq.s32.totalorder %v2237, 1
  %vm2302 = vcmp.eq.s32.totalorder %v2238, 1
  %vm2303 = vcmp.eq.s32.totalorder %v2239, 1
  %vm2304 = vcmp.eq.s32.totalorder %v2240, 1
  %vm2305 = vcmp.eq.s32.totalorder %v2241, 1
  %vm2306 = vcmp.eq.s32.totalorder %v2242, 1
  %vm2307 = vcmp.eq.s32.totalorder %v2243, 1
  %vm2308 = vcmp.eq.s32.totalorder %v2244, 1
  %vm2309 = vcmp.eq.s32.totalorder %v2245, 1
  %vm2310 = vcmp.eq.s32.totalorder %v2246, 1
  %vm2311 = vcmp.eq.s32.totalorder %v2247, 1
  %vm2312 = vcmp.eq.s32.totalorder %v2248, 1
  %vm2313 = vcmp.eq.s32.totalorder %v2249, 1
  %vm2314 = vcmp.eq.s32.totalorder %v2250, 1
  %vm2315 = vcmp.eq.s32.totalorder %v2251, 1
  %vm2316 = vcmp.eq.s32.totalorder %v2252, 1
  %vm2317 = vcmp.eq.s32.totalorder %v2253, 1
  %vm2318 = vcmp.eq.s32.totalorder %v2254, 1
  %vm2319 = vcmp.eq.s32.totalorder %v2255, 1
  %vm2320 = vcmp.eq.s32.totalorder %v2256, 1
  %vm2321 = vcmp.eq.s32.totalorder %v2257, 1
  %vm2322 = vcmp.eq.s32.totalorder %v2258, 1
  %vm2323 = vcmp.eq.s32.totalorder %v2259, 1
  %vm2324 = vcmp.eq.s32.totalorder %v2260, 1
  %vm2325 = vcmp.eq.s32.totalorder %v2261, 1
  %vm2326 = vcmp.eq.s32.totalorder %v2262, 1
  %vm2327 = vcmp.eq.s32.totalorder %v2263, 1
  %vm2328 = vcmp.eq.s32.totalorder %v2264, 1
  %vm2329 = vcmp.eq.s32.totalorder %v2265, 1
  %vm2330 = vcmp.eq.s32.totalorder %v2266, 1
  %vm2331 = vcmp.eq.s32.totalorder %v2267, 1
  %vm2332 = vcmp.eq.s32.totalorder %v2268, 1
  %vm2333 = vcmp.eq.s32.totalorder %v2269, 1
  %vm2334 = vcmp.eq.s32.totalorder %v2270, 1
  %vm2335 = vcmp.eq.s32.totalorder %v2271, 1
  %vm2336 = vcmp.eq.s32.totalorder %v2272, 1
  %vm2337 = vcmp.eq.s32.totalorder %v2273, 1
  %vm2338 = vcmp.eq.s32.totalorder %v2274, 1
  %vm2339 = vcmp.eq.s32.totalorder %v2275, 1
  %vm2340 = vcmp.eq.s32.totalorder %v2276, 1
  %vm2341 = vcmp.eq.s32.totalorder %v2277, 1
  %vm2342 = vcmp.eq.s32.totalorder %v2278, 1
  %vm2343 = vcmp.eq.s32.totalorder %v2279, 1
  %vm2344 = vcmp.eq.s32.totalorder %v2280, 1
  %vm2345 = vcmp.eq.s32.totalorder %v2281, 1
  %vm2346 = vcmp.eq.s32.totalorder %v2282, 1
  %vm2347 = vcmp.eq.s32.totalorder %v2283, 1
  %vm2348 = vcmp.eq.s32.totalorder %v2284, 1
  %vm2349 = vcmp.eq.s32.totalorder %v2285, 1
  %vm2350 = vcmp.eq.s32.totalorder %v2286, 1
  %vm2351 = vcmp.eq.s32.totalorder %v2287, 1
  %vm2352 = vcmp.eq.s32.totalorder %v2288, 1
  %vm2353 = vcmp.eq.s32.totalorder %v2289, 1
  %vm2354 = vcmp.eq.s32.totalorder %v2290, 1
  %vm2355 = vcmp.eq.s32.totalorder %v2291, 1
  %vm2356 = vcmp.eq.s32.totalorder %v2292, 1
  %vm2357 = vcmp.eq.s32.totalorder %v2293, 1
  %vm2358 = vcmp.eq.s32.totalorder %v2294, 1
  %vm2359 = vcmp.eq.s32.totalorder %v2295, 1
  %vm2360 = vcmp.eq.s32.totalorder %v2296, 1
  %vm2361 = vcmp.eq.s32.totalorder %v2297, 1
  %vm2362 = vcmp.eq.s32.totalorder %v2298, 1
  %vm2363 = vcmp.eq.s32.totalorder %v2299, 1
  %v2364 = vsel %vm2300, %v2108, 0.0
  %v2365 = vsel %vm2301, %v2171, 0.0
  %v2366 = vsel %vm2302, %v2170, 0.0
  %v2367 = vsel %vm2303, %v2169, 0.0
  %v2368 = vsel %vm2304, %v2168, 0.0
  %v2369 = vsel %vm2305, %v2167, 0.0
  %v2370 = vsel %vm2306, %v2166, 0.0
  %v2371 = vsel %vm2307, %v2165, 0.0
  %v2372 = vsel %vm2308, %v2164, 0.0
  %v2373 = vsel %vm2309, %v2163, 0.0
  %v2374 = vsel %vm2310, %v2162, 0.0
  %v2375 = vsel %vm2311, %v2161, 0.0
  %v2376 = vsel %vm2312, %v2160, 0.0
  %v2377 = vsel %vm2313, %v2159, 0.0
  %v2378 = vsel %vm2314, %v2158, 0.0
  %v2379 = vsel %vm2315, %v2157, 0.0
  %v2380 = vsel %vm2316, %v2156, 0.0
  %v2381 = vsel %vm2317, %v2155, 0.0
  %v2382 = vsel %vm2318, %v2154, 0.0
  %v2383 = vsel %vm2319, %v2153, 0.0
  %v2384 = vsel %vm2320, %v2152, 0.0
  %v2385 = vsel %vm2321, %v2151, 0.0
  %v2386 = vsel %vm2322, %v2150, 0.0
  %v2387 = vsel %vm2323, %v2149, 0.0
  %v2388 = vsel %vm2324, %v2148, 0.0
  %v2389 = vsel %vm2325, %v2147, 0.0
  %v2390 = vsel %vm2326, %v2146, 0.0
  %v2391 = vsel %vm2327, %v2145, 0.0
  %v2392 = vsel %vm2328, %v2144, 0.0
  %v2393 = vsel %vm2329, %v2143, 0.0
  %v2394 = vsel %vm2330, %v2142, 0.0
  %v2395 = vsel %vm2331, %v2141, 0.0
  %v2396 = vsel %vm2332, %v2140, 0.0
  %v2397 = vsel %vm2333, %v2139, 0.0
  %v2398 = vsel %vm2334, %v2138, 0.0
  %v2399 = vsel %vm2335, %v2137, 0.0
  %v2400 = vsel %vm2336, %v2136, 0.0
  %v2401 = vsel %vm2337, %v2135, 0.0
  %v2402 = vsel %vm2338, %v2134, 0.0
  %v2403 = vsel %vm2339, %v2133, 0.0
  %v2404 = vsel %vm2340, %v2132, 0.0
  %v2405 = vsel %vm2341, %v2131, 0.0
  %v2406 = vsel %vm2342, %v2130, 0.0
  %v2407 = vsel %vm2343, %v2129, 0.0
  %v2408 = vsel %vm2344, %v2128, 0.0
  %v2409 = vsel %vm2345, %v2127, 0.0
  %v2410 = vsel %vm2346, %v2126, 0.0
  %v2411 = vsel %vm2347, %v2125, 0.0
  %v2412 = vsel %vm2348, %v2124, 0.0
  %v2413 = vsel %vm2349, %v2123, 0.0
  %v2414 = vsel %vm2350, %v2122, 0.0
  %v2415 = vsel %vm2351, %v2121, 0.0
  %v2416 = vsel %vm2352, %v2120, 0.0
  %v2417 = vsel %vm2353, %v2119, 0.0
  %v2418 = vsel %vm2354, %v2118, 0.0
  %v2419 = vsel %vm2355, %v2117, 0.0
  %v2420 = vsel %vm2356, %v2116, 0.0
  %v2421 = vsel %vm2357, %v2115, 0.0
  %v2422 = vsel %vm2358, %v2114, 0.0
  %v2423 = vsel %vm2359, %v2113, 0.0
  %v2424 = vsel %vm2360, %v2112, 0.0
  %v2425 = vsel %vm2361, %v2111, 0.0
  %v2426 = vsel %vm2362, %v2110, 0.0
  %v2427 = vsel %vm2363, %v2109, 0.0
  %2428 = vrot.lane.b32.xlu0 %v2364, 8
  %v2429 = vpop.permute.xlu0 %2428
  %2430 = vrot.lane.b32.xlu0 %v2365, 8
  %v2431 = vpop.permute.xlu0 %2430
  %2432 = vrot.lane.b32.xlu0 %v2366, 8
  %v2433 = vpop.permute.xlu0 %2432
  %2434 = vrot.lane.b32.xlu0 %v2367, 8
  %v2435 = vpop.permute.xlu0 %2434
  %2436 = vrot.lane.b32.xlu0 %v2368, 8
  %v2437 = vpop.permute.xlu0 %2436
  %2438 = vrot.lane.b32.xlu0 %v2369, 8
  %v2439 = vpop.permute.xlu0 %2438
  %2440 = vrot.lane.b32.xlu0 %v2370, 8
  %v2441 = vpop.permute.xlu0 %2440
  %2442 = vrot.lane.b32.xlu0 %v2371, 8
  %v2443 = vpop.permute.xlu0 %2442
  %2444 = vrot.lane.b32.xlu0 %v2372, 8
  %v2445 = vpop.permute.xlu0 %2444
  %2446 = vrot.lane.b32.xlu0 %v2373, 8
  %v2447 = vpop.permute.xlu0 %2446
  %2448 = vrot.lane.b32.xlu0 %v2374, 8
  %v2449 = vpop.permute.xlu0 %2448
  %2450 = vrot.lane.b32.xlu0 %v2375, 8
  %v2451 = vpop.permute.xlu0 %2450
  %2452 = vrot.lane.b32.xlu0 %v2376, 8
  %v2453 = vpop.permute.xlu0 %2452
  %2454 = vrot.lane.b32.xlu0 %v2377, 8
  %v2455 = vpop.permute.xlu0 %2454
  %2456 = vrot.lane.b32.xlu0 %v2378, 8
  %v2457 = vpop.permute.xlu0 %2456
  %2458 = vrot.lane.b32.xlu0 %v2379, 8
  %v2459 = vpop.permute.xlu0 %2458
  %2460 = vrot.lane.b32.xlu0 %v2380, 8
  %v2461 = vpop.permute.xlu0 %2460
  %2462 = vrot.lane.b32.xlu0 %v2381, 8
  %v2463 = vpop.permute.xlu0 %2462
  %2464 = vrot.lane.b32.xlu0 %v2382, 8
  %v2465 = vpop.permute.xlu0 %2464
  %2466 = vrot.lane.b32.xlu0 %v2383, 8
  %v2467 = vpop.permute.xlu0 %2466
  %2468 = vrot.lane.b32.xlu0 %v2384, 8
  %v2469 = vpop.permute.xlu0 %2468
  %2470 = vrot.lane.b32.xlu0 %v2385, 8
  %v2471 = vpop.permute.xlu0 %2470
  %2472 = vrot.lane.b32.xlu0 %v2386, 8
  %v2473 = vpop.permute.xlu0 %2472
  %2474 = vrot.lane.b32.xlu0 %v2387, 8
  %v2475 = vpop.permute.xlu0 %2474
  %2476 = vrot.lane.b32.xlu0 %v2388, 8
  %v2477 = vpop.permute.xlu0 %2476
  %2478 = vrot.lane.b32.xlu0 %v2389, 8
  %v2479 = vpop.permute.xlu0 %2478
  %2480 = vrot.lane.b32.xlu0 %v2390, 8
  %v2481 = vpop.permute.xlu0 %2480
  %2482 = vrot.lane.b32.xlu0 %v2391, 8
  %v2483 = vpop.permute.xlu0 %2482
  %2484 = vrot.lane.b32.xlu0 %v2392, 8
  %v2485 = vpop.permute.xlu0 %2484
  %2486 = vrot.lane.b32.xlu0 %v2393, 8
  %v2487 = vpop.permute.xlu0 %2486
  %2488 = vrot.lane.b32.xlu0 %v2394, 8
  %v2489 = vpop.permute.xlu0 %2488
  %2490 = vrot.lane.b32.xlu0 %v2395, 8
  %v2491 = vpop.permute.xlu0 %2490
  %2492 = vrot.lane.b32.xlu0 %v2396, 8
  %v2493 = vpop.permute.xlu0 %2492
  %2494 = vrot.lane.b32.xlu0 %v2397, 8
  %v2495 = vpop.permute.xlu0 %2494
  %2496 = vrot.lane.b32.xlu0 %v2398, 8
  %v2497 = vpop.permute.xlu0 %2496
  %2498 = vrot.lane.b32.xlu0 %v2399, 8
  %v2499 = vpop.permute.xlu0 %2498
  %2500 = vrot.lane.b32.xlu0 %v2400, 8
  %v2501 = vpop.permute.xlu0 %2500
  %2502 = vrot.lane.b32.xlu0 %v2401, 8
  %v2503 = vpop.permute.xlu0 %2502
  %2504 = vrot.lane.b32.xlu0 %v2402, 8
  %v2505 = vpop.permute.xlu0 %2504
  %2506 = vrot.lane.b32.xlu0 %v2403, 8
  %v2507 = vpop.permute.xlu0 %2506
  %2508 = vrot.lane.b32.xlu0 %v2404, 8
  %v2509 = vpop.permute.xlu0 %2508
  %2510 = vrot.lane.b32.xlu0 %v2405, 8
  %v2511 = vpop.permute.xlu0 %2510
  %2512 = vrot.lane.b32.xlu0 %v2406, 8
  %v2513 = vpop.permute.xlu0 %2512
  %2514 = vrot.lane.b32.xlu0 %v2407, 8
  %v2515 = vpop.permute.xlu0 %2514
  %2516 = vrot.lane.b32.xlu0 %v2408, 8
  %v2517 = vpop.permute.xlu0 %2516
  %2518 = vrot.lane.b32.xlu0 %v2409, 8
  %v2519 = vpop.permute.xlu0 %2518
  %2520 = vrot.lane.b32.xlu0 %v2410, 8
  %v2521 = vpop.permute.xlu0 %2520
  %2522 = vrot.lane.b32.xlu0 %v2411, 8
  %v2523 = vpop.permute.xlu0 %2522
  %2524 = vrot.lane.b32.xlu0 %v2412, 8
  %v2525 = vpop.permute.xlu0 %2524
  %2526 = vrot.lane.b32.xlu0 %v2413, 8
  %v2527 = vpop.permute.xlu0 %2526
  %2528 = vrot.lane.b32.xlu0 %v2414, 8
  %v2529 = vpop.permute.xlu0 %2528
  %2530 = vrot.lane.b32.xlu0 %v2415, 8
  %v2531 = vpop.permute.xlu0 %2530
  %2532 = vrot.lane.b32.xlu0 %v2416, 8
  %v2533 = vpop.permute.xlu0 %2532
  %2534 = vrot.lane.b32.xlu0 %v2417, 8
  %v2535 = vpop.permute.xlu0 %2534
  %2536 = vrot.lane.b32.xlu0 %v2418, 8
  %v2537 = vpop.permute.xlu0 %2536
  %2538 = vrot.lane.b32.xlu0 %v2419, 8
  %v2539 = vpop.permute.xlu0 %2538
  %2540 = vrot.lane.b32.xlu0 %v2420, 8
  %v2541 = vpop.permute.xlu0 %2540
  %2542 = vrot.lane.b32.xlu0 %v2421, 8
  %v2543 = vpop.permute.xlu0 %2542
  %2544 = vrot.lane.b32.xlu0 %v2422, 8
  %v2545 = vpop.permute.xlu0 %2544
  %2546 = vrot.lane.b32.xlu0 %v2423, 8
  %v2547 = vpop.permute.xlu0 %2546
  %2548 = vrot.lane.b32.xlu0 %v2424, 8
  %v2549 = vpop.permute.xlu0 %2548
  %2550 = vrot.lane.b32.xlu0 %v2425, 8
  %v2551 = vpop.permute.xlu0 %2550
  %2552 = vrot.lane.b32.xlu0 %v2426, 8
  %v2553 = vpop.permute.xlu0 %2552
  %2554 = vrot.lane.b32.xlu0 %v2427, 8
  %v2555 = vpop.permute.xlu0 %2554
  %v2556 = vadd.f32 %v1979, %v2429
  %v2557 = vadd.f32 %v1980, %v2431
  %v2558 = vadd.f32 %v1981, %v2433
  %v2559 = vadd.f32 %v1982, %v2435
  %v2560 = vadd.f32 %v1983, %v2437
  %v2561 = vadd.f32 %v1984, %v2439
  %v2562 = vadd.f32 %v1985, %v2441
  %v2563 = vadd.f32 %v1986, %v2443
  %v2564 = vadd.f32 %v1987, %v2445
  %v2565 = vadd.f32 %v1988, %v2447
  %v2566 = vadd.f32 %v1989, %v2449
  %v2567 = vadd.f32 %v1990, %v2451
  %v2568 = vadd.f32 %v1991, %v2453
  %v2569 = vadd.f32 %v1992, %v2455
  %v2570 = vadd.f32 %v1993, %v2457
  %v2571 = vadd.f32 %v1994, %v2459
  %v2572 = vadd.f32 %v1995, %v2461
  %v2573 = vadd.f32 %v1996, %v2463
  %v2574 = vadd.f32 %v1997, %v2465
  %v2575 = vadd.f32 %v1998, %v2467
  %v2576 = vadd.f32 %v1999, %v2469
  %v2577 = vadd.f32 %v2000, %v2471
  %v2578 = vadd.f32 %v2001, %v2473
  %v2579 = vadd.f32 %v2002, %v2475
  %v2580 = vadd.f32 %v2003, %v2477
  %v2581 = vadd.f32 %v2004, %v2479
  %v2582 = vadd.f32 %v2005, %v2481
  %v2583 = vadd.f32 %v2006, %v2483
  %v2584 = vadd.f32 %v2007, %v2485
  %v2585 = vadd.f32 %v2008, %v2487
  %v2586 = vadd.f32 %v2009, %v2489
  %v2587 = vadd.f32 %v2010, %v2491
  %v2588 = vadd.f32 %v2011, %v2493
  %v2589 = vadd.f32 %v2012, %v2495
  %v2590 = vadd.f32 %v2013, %v2497
  %v2591 = vadd.f32 %v2014, %v2499
  %v2592 = vadd.f32 %v2015, %v2501
  %v2593 = vadd.f32 %v2016, %v2503
  %v2594 = vadd.f32 %v2017, %v2505
  %v2595 = vadd.f32 %v2018, %v2507
  %v2596 = vadd.f32 %v2019, %v2509
  %v2597 = vadd.f32 %v2020, %v2511
  %v2598 = vadd.f32 %v2021, %v2513
  %v2599 = vadd.f32 %v2022, %v2515
  %v2600 = vadd.f32 %v2023, %v2517
  %v2601 = vadd.f32 %v2024, %v2519
  %v2602 = vadd.f32 %v2025, %v2521
  %v2603 = vadd.f32 %v2026, %v2523
  %v2604 = vadd.f32 %v2027, %v2525
  %v2605 = vadd.f32 %v2028, %v2527
  %v2606 = vadd.f32 %v2029, %v2529
  %v2607 = vadd.f32 %v2030, %v2531
  %v2608 = vadd.f32 %v2031, %v2533
  %v2609 = vadd.f32 %v2032, %v2535
  %v2610 = vadd.f32 %v2033, %v2537
  %v2611 = vadd.f32 %v2034, %v2539
  %v2612 = vadd.f32 %v2035, %v2541
  %v2613 = vadd.f32 %v2036, %v2543
  %v2614 = vadd.f32 %v2037, %v2545
  %v2615 = vadd.f32 %v2038, %v2547
  %v2616 = vadd.f32 %v2039, %v2549
  %v2617 = vadd.f32 %v2040, %v2551
  %v2618 = vadd.f32 %v2041, %v2553
  %v2619 = vadd.f32 %v2042, %v2555
  %v2620 = vsel %vm1146, 1, 0
  %v2621 = vsel %vm1147, 1, 0
  %v2622 = vsel %vm1148, 1, 0
  %v2623 = vsel %vm1149, 1, 0
  %v2624 = vsel %vm1150, 1, 0
  %v2625 = vsel %vm1151, 1, 0
  %v2626 = vsel %vm1152, 1, 0
  %v2627 = vsel %vm1153, 1, 0
  %v2628 = vsel %vm1154, 1, 0
  %v2629 = vsel %vm1155, 1, 0
  %v2630 = vsel %vm1156, 1, 0
  %v2631 = vsel %vm1157, 1, 0
  %v2632 = vsel %vm1158, 1, 0
  %v2633 = vsel %vm1159, 1, 0
  %v2634 = vsel %vm1160, 1, 0
  %v2635 = vsel %vm1161, 1, 0
  %v2636 = vsel %vm1162, 1, 0
  %v2637 = vsel %vm1163, 1, 0
  %v2638 = vsel %vm1164, 1, 0
  %v2639 = vsel %vm1165, 1, 0
  %v2640 = vsel %vm1166, 1, 0
  %v2641 = vsel %vm1167, 1, 0
  %v2642 = vsel %vm1168, 1, 0
  %v2643 = vsel %vm1169, 1, 0
  %v2644 = vsel %vm1170, 1, 0
  %v2645 = vsel %vm1171, 1, 0
  %v2646 = vsel %vm1172, 1, 0
  %v2647 = vsel %vm1173, 1, 0
  %v2648 = vsel %vm1174, 1, 0
  %v2649 = vsel %vm1175, 1, 0
  %v2650 = vsel %vm1176, 1, 0
  %v2651 = vsel %vm1177, 1, 0
  %v2652 = vsel %vm1178, 1, 0
  %v2653 = vsel %vm1179, 1, 0
  %v2654 = vsel %vm1180, 1, 0
  %v2655 = vsel %vm1181, 1, 0
  %v2656 = vsel %vm1182, 1, 0
  %v2657 = vsel %vm1183, 1, 0
  %v2658 = vsel %vm1184, 1, 0
  %v2659 = vsel %vm1185, 1, 0
  %v2660 = vsel %vm1186, 1, 0
  %v2661 = vsel %vm1187, 1, 0
  %v2662 = vsel %vm1188, 1, 0
  %v2663 = vsel %vm1189, 1, 0
  %v2664 = vsel %vm1190, 1, 0
  %v2665 = vsel %vm1191, 1, 0
  %v2666 = vsel %vm1192, 1, 0
  %v2667 = vsel %vm1193, 1, 0
  %v2668 = vsel %vm1194, 1, 0
  %v2669 = vsel %vm1195, 1, 0
  %v2670 = vsel %vm1196, 1, 0
  %v2671 = vsel %vm1197, 1, 0
  %v2672 = vsel %vm1198, 1, 0
  %v2673 = vsel %vm1199, 1, 0
  %v2674 = vsel %vm1200, 1, 0
  %v2675 = vsel %vm1201, 1, 0
  %v2676 = vsel %vm1202, 1, 0
  %v2677 = vsel %vm1203, 1, 0
  %v2678 = vsel %vm1204, 1, 0
  %v2679 = vsel %vm1205, 1, 0
  %v2680 = vsel %vm1206, 1, 0
  %v2681 = vsel %vm1207, 1, 0
  %v2682 = vsel %vm1208, 1, 0
  %v2683 = vsel %vm1209, 1, 0
  %vm2684 = vcmp.eq.s32.totalorder %v2620, 1
  %vm2685 = vcmp.eq.s32.totalorder %v2621, 1
  %vm2686 = vcmp.eq.s32.totalorder %v2622, 1
  %vm2687 = vcmp.eq.s32.totalorder %v2623, 1
  %vm2688 = vcmp.eq.s32.totalorder %v2624, 1
  %vm2689 = vcmp.eq.s32.totalorder %v2625, 1
  %vm2690 = vcmp.eq.s32.totalorder %v2626, 1
  %vm2691 = vcmp.eq.s32.totalorder %v2627, 1
  %vm2692 = vcmp.eq.s32.totalorder %v2628, 1
  %vm2693 = vcmp.eq.s32.totalorder %v2629, 1
  %vm2694 = vcmp.eq.s32.totalorder %v2630, 1
  %vm2695 = vcmp.eq.s32.totalorder %v2631, 1
  %vm2696 = vcmp.eq.s32.totalorder %v2632, 1
  %vm2697 = vcmp.eq.s32.totalorder %v2633, 1
  %vm2698 = vcmp.eq.s32.totalorder %v2634, 1
  %vm2699 = vcmp.eq.s32.totalorder %v2635, 1
  %vm2700 = vcmp.eq.s32.totalorder %v2636, 1
  %vm2701 = vcmp.eq.s32.totalorder %v2637, 1
  %vm2702 = vcmp.eq.s32.totalorder %v2638, 1
  %vm2703 = vcmp.eq.s32.totalorder %v2639, 1
  %vm2704 = vcmp.eq.s32.totalorder %v2640, 1
  %vm2705 = vcmp.eq.s32.totalorder %v2641, 1
  %vm2706 = vcmp.eq.s32.totalorder %v2642, 1
  %vm2707 = vcmp.eq.s32.totalorder %v2643, 1
  %vm2708 = vcmp.eq.s32.totalorder %v2644, 1
  %vm2709 = vcmp.eq.s32.totalorder %v2645, 1
  %vm2710 = vcmp.eq.s32.totalorder %v2646, 1
  %vm2711 = vcmp.eq.s32.totalorder %v2647, 1
  %vm2712 = vcmp.eq.s32.totalorder %v2648, 1
  %vm2713 = vcmp.eq.s32.totalorder %v2649, 1
  %vm2714 = vcmp.eq.s32.totalorder %v2650, 1
  %vm2715 = vcmp.eq.s32.totalorder %v2651, 1
  %vm2716 = vcmp.eq.s32.totalorder %v2652, 1
  %vm2717 = vcmp.eq.s32.totalorder %v2653, 1
  %vm2718 = vcmp.eq.s32.totalorder %v2654, 1
  %vm2719 = vcmp.eq.s32.totalorder %v2655, 1
  %vm2720 = vcmp.eq.s32.totalorder %v2656, 1
  %vm2721 = vcmp.eq.s32.totalorder %v2657, 1
  %vm2722 = vcmp.eq.s32.totalorder %v2658, 1
  %vm2723 = vcmp.eq.s32.totalorder %v2659, 1
  %vm2724 = vcmp.eq.s32.totalorder %v2660, 1
  %vm2725 = vcmp.eq.s32.totalorder %v2661, 1
  %vm2726 = vcmp.eq.s32.totalorder %v2662, 1
  %vm2727 = vcmp.eq.s32.totalorder %v2663, 1
  %vm2728 = vcmp.eq.s32.totalorder %v2664, 1
  %vm2729 = vcmp.eq.s32.totalorder %v2665, 1
  %vm2730 = vcmp.eq.s32.totalorder %v2666, 1
  %vm2731 = vcmp.eq.s32.totalorder %v2667, 1
  %vm2732 = vcmp.eq.s32.totalorder %v2668, 1
  %vm2733 = vcmp.eq.s32.totalorder %v2669, 1
  %vm2734 = vcmp.eq.s32.totalorder %v2670, 1
  %vm2735 = vcmp.eq.s32.totalorder %v2671, 1
  %vm2736 = vcmp.eq.s32.totalorder %v2672, 1
  %vm2737 = vcmp.eq.s32.totalorder %v2673, 1
  %vm2738 = vcmp.eq.s32.totalorder %v2674, 1
  %vm2739 = vcmp.eq.s32.totalorder %v2675, 1
  %vm2740 = vcmp.eq.s32.totalorder %v2676, 1
  %vm2741 = vcmp.eq.s32.totalorder %v2677, 1
  %vm2742 = vcmp.eq.s32.totalorder %v2678, 1
  %vm2743 = vcmp.eq.s32.totalorder %v2679, 1
  %vm2744 = vcmp.eq.s32.totalorder %v2680, 1
  %vm2745 = vcmp.eq.s32.totalorder %v2681, 1
  %vm2746 = vcmp.eq.s32.totalorder %v2682, 1
  %vm2747 = vcmp.eq.s32.totalorder %v2683, 1
  %v2748 = vsel %vm2684, %v1402, 0.0
  %v2749 = vsel %vm2685, %v1401, 0.0
  %v2750 = vsel %vm2686, %v1400, 0.0
  %v2751 = vsel %vm2687, %v1399, 0.0
  %v2752 = vsel %vm2688, %v1398, 0.0
  %v2753 = vsel %vm2689, %v1397, 0.0
  %v2754 = vsel %vm2690, %v1396, 0.0
  %v2755 = vsel %vm2691, %v1395, 0.0
  %v2756 = vsel %vm2692, %v1394, 0.0
  %v2757 = vsel %vm2693, %v1393, 0.0
  %v2758 = vsel %vm2694, %v1392, 0.0
  %v2759 = vsel %vm2695, %v1391, 0.0
  %v2760 = vsel %vm2696, %v1390, 0.0
  %v2761 = vsel %vm2697, %v1389, 0.0
  %v2762 = vsel %vm2698, %v1388, 0.0
  %v2763 = vsel %vm2699, %v1387, 0.0
  %v2764 = vsel %vm2700, %v1386, 0.0
  %v2765 = vsel %vm2701, %v1385, 0.0
  %v2766 = vsel %vm2702, %v1384, 0.0
  %v2767 = vsel %vm2703, %v1383, 0.0
  %v2768 = vsel %vm2704, %v1382, 0.0
  %v2769 = vsel %vm2705, %v1381, 0.0
  %v2770 = vsel %vm2706, %v1380, 0.0
  %v2771 = vsel %vm2707, %v1379, 0.0
  %v2772 = vsel %vm2708, %v1378, 0.0
  %v2773 = vsel %vm2709, %v1377, 0.0
  %v2774 = vsel %vm2710, %v1376, 0.0
  %v2775 = vsel %vm2711, %v1375, 0.0
  %v2776 = vsel %vm2712, %v1374, 0.0
  %v2777 = vsel %vm2713, %v1373, 0.0
  %v2778 = vsel %vm2714, %v1372, 0.0
  %v2779 = vsel %vm2715, %v1371, 0.0
  %v2780 = vsel %vm2716, %v1370, 0.0
  %v2781 = vsel %vm2717, %v1369, 0.0
  %v2782 = vsel %vm2718, %v1368, 0.0
  %v2783 = vsel %vm2719, %v1367, 0.0
  %v2784 = vsel %vm2720, %v1366, 0.0
  %v2785 = vsel %vm2721, %v1365, 0.0
  %v2786 = vsel %vm2722, %v1364, 0.0
  %v2787 = vsel %vm2723, %v1363, 0.0
  %v2788 = vsel %vm2724, %v1362, 0.0
  %v2789 = vsel %vm2725, %v1361, 0.0
  %v2790 = vsel %vm2726, %v1360, 0.0
  %v2791 = vsel %vm2727, %v1359, 0.0
  %v2792 = vsel %vm2728, %v1358, 0.0
  %v2793 = vsel %vm2729, %v1357, 0.0
  %v2794 = vsel %vm2730, %v1356, 0.0
  %v2795 = vsel %vm2731, %v1355, 0.0
  %v2796 = vsel %vm2732, %v1354, 0.0
  %v2797 = vsel %vm2733, %v1353, 0.0
  %v2798 = vsel %vm2734, %v1352, 0.0
  %v2799 = vsel %vm2735, %v1351, 0.0
  %v2800 = vsel %vm2736, %v1350, 0.0
  %v2801 = vsel %vm2737, %v1349, 0.0
  %v2802 = vsel %vm2738, %v1348, 0.0
  %v2803 = vsel %vm2739, %v1347, 0.0
  %v2804 = vsel %vm2740, %v1346, 0.0
  %v2805 = vsel %vm2741, %v1345, 0.0
  %v2806 = vsel %vm2742, %v1344, 0.0
  %v2807 = vsel %vm2743, %v1343, 0.0
  %v2808 = vsel %vm2744, %v1342, 0.0
  %v2809 = vsel %vm2745, %v1341, 0.0
  %v2810 = vsel %vm2746, %v1340, 0.0
  %v2811 = vsel %vm2747, %v1339, 0.0
  %2812 = vrot.lane.b32.xlu0 %v2748, 12
  %v2813 = vpop.permute.xlu0 %2812
  %2814 = vrot.lane.b32.xlu0 %v2749, 12
  %v2815 = vpop.permute.xlu0 %2814
  %2816 = vrot.lane.b32.xlu0 %v2750, 12
  %v2817 = vpop.permute.xlu0 %2816
  %2818 = vrot.lane.b32.xlu0 %v2751, 12
  %v2819 = vpop.permute.xlu0 %2818
  %2820 = vrot.lane.b32.xlu0 %v2752, 12
  %v2821 = vpop.permute.xlu0 %2820
  %2822 = vrot.lane.b32.xlu0 %v2753, 12
  %v2823 = vpop.permute.xlu0 %2822
  %2824 = vrot.lane.b32.xlu0 %v2754, 12
  %v2825 = vpop.permute.xlu0 %2824
  %2826 = vrot.lane.b32.xlu0 %v2755, 12
  %v2827 = vpop.permute.xlu0 %2826
  %2828 = vrot.lane.b32.xlu0 %v2756, 12
  %v2829 = vpop.permute.xlu0 %2828
  %2830 = vrot.lane.b32.xlu0 %v2757, 12
  %v2831 = vpop.permute.xlu0 %2830
  %2832 = vrot.lane.b32.xlu0 %v2758, 12
  %v2833 = vpop.permute.xlu0 %2832
  %2834 = vrot.lane.b32.xlu0 %v2759, 12
  %v2835 = vpop.permute.xlu0 %2834
  %2836 = vrot.lane.b32.xlu0 %v2760, 12
  %v2837 = vpop.permute.xlu0 %2836
  %2838 = vrot.lane.b32.xlu0 %v2761, 12
  %v2839 = vpop.permute.xlu0 %2838
  %2840 = vrot.lane.b32.xlu0 %v2762, 12
  %v2841 = vpop.permute.xlu0 %2840
  %2842 = vrot.lane.b32.xlu0 %v2763, 12
  %v2843 = vpop.permute.xlu0 %2842
  %2844 = vrot.lane.b32.xlu0 %v2764, 12
  %v2845 = vpop.permute.xlu0 %2844
  %2846 = vrot.lane.b32.xlu0 %v2765, 12
  %v2847 = vpop.permute.xlu0 %2846
  %2848 = vrot.lane.b32.xlu0 %v2766, 12
  %v2849 = vpop.permute.xlu0 %2848
  %2850 = vrot.lane.b32.xlu0 %v2767, 12
  %v2851 = vpop.permute.xlu0 %2850
  %2852 = vrot.lane.b32.xlu0 %v2768, 12
  %v2853 = vpop.permute.xlu0 %2852
  %2854 = vrot.lane.b32.xlu0 %v2769, 12
  %v2855 = vpop.permute.xlu0 %2854
  %2856 = vrot.lane.b32.xlu0 %v2770, 12
  %v2857 = vpop.permute.xlu0 %2856
  %2858 = vrot.lane.b32.xlu0 %v2771, 12
  %v2859 = vpop.permute.xlu0 %2858
  %2860 = vrot.lane.b32.xlu0 %v2772, 12
  %v2861 = vpop.permute.xlu0 %2860
  %2862 = vrot.lane.b32.xlu0 %v2773, 12
  %v2863 = vpop.permute.xlu0 %2862
  %2864 = vrot.lane.b32.xlu0 %v2774, 12
  %v2865 = vpop.permute.xlu0 %2864
  %2866 = vrot.lane.b32.xlu0 %v2775, 12
  %v2867 = vpop.permute.xlu0 %2866
  %2868 = vrot.lane.b32.xlu0 %v2776, 12
  %v2869 = vpop.permute.xlu0 %2868
  %2870 = vrot.lane.b32.xlu0 %v2777, 12
  %v2871 = vpop.permute.xlu0 %2870
  %2872 = vrot.lane.b32.xlu0 %v2778, 12
  %v2873 = vpop.permute.xlu0 %2872
  %2874 = vrot.lane.b32.xlu0 %v2779, 12
  %v2875 = vpop.permute.xlu0 %2874
  %2876 = vrot.lane.b32.xlu0 %v2780, 12
  %v2877 = vpop.permute.xlu0 %2876
  %2878 = vrot.lane.b32.xlu0 %v2781, 12
  %v2879 = vpop.permute.xlu0 %2878
  %2880 = vrot.lane.b32.xlu0 %v2782, 12
  %v2881 = vpop.permute.xlu0 %2880
  %2882 = vrot.lane.b32.xlu0 %v2783, 12
  %v2883 = vpop.permute.xlu0 %2882
  %2884 = vrot.lane.b32.xlu0 %v2784, 12
  %v2885 = vpop.permute.xlu0 %2884
  %2886 = vrot.lane.b32.xlu0 %v2785, 12
  %v2887 = vpop.permute.xlu0 %2886
  %2888 = vrot.lane.b32.xlu0 %v2786, 12
  %v2889 = vpop.permute.xlu0 %2888
  %2890 = vrot.lane.b32.xlu0 %v2787, 12
  %v2891 = vpop.permute.xlu0 %2890
  %2892 = vrot.lane.b32.xlu0 %v2788, 12
  %v2893 = vpop.permute.xlu0 %2892
  %2894 = vrot.lane.b32.xlu0 %v2789, 12
  %v2895 = vpop.permute.xlu0 %2894
  %2896 = vrot.lane.b32.xlu0 %v2790, 12
  %v2897 = vpop.permute.xlu0 %2896
  %2898 = vrot.lane.b32.xlu0 %v2791, 12
  %v2899 = vpop.permute.xlu0 %2898
  %2900 = vrot.lane.b32.xlu0 %v2792, 12
  %v2901 = vpop.permute.xlu0 %2900
  %2902 = vrot.lane.b32.xlu0 %v2793, 12
  %v2903 = vpop.permute.xlu0 %2902
  %2904 = vrot.lane.b32.xlu0 %v2794, 12
  %v2905 = vpop.permute.xlu0 %2904
  %2906 = vrot.lane.b32.xlu0 %v2795, 12
  %v2907 = vpop.permute.xlu0 %2906
  %2908 = vrot.lane.b32.xlu0 %v2796, 12
  %v2909 = vpop.permute.xlu0 %2908
  %2910 = vrot.lane.b32.xlu0 %v2797, 12
  %v2911 = vpop.permute.xlu0 %2910
  %2912 = vrot.lane.b32.xlu0 %v2798, 12
  %v2913 = vpop.permute.xlu0 %2912
  %2914 = vrot.lane.b32.xlu0 %v2799, 12
  %v2915 = vpop.permute.xlu0 %2914
  %2916 = vrot.lane.b32.xlu0 %v2800, 12
  %v2917 = vpop.permute.xlu0 %2916
  %2918 = vrot.lane.b32.xlu0 %v2801, 12
  %v2919 = vpop.permute.xlu0 %2918
  %2920 = vrot.lane.b32.xlu0 %v2802, 12
  %v2921 = vpop.permute.xlu0 %2920
  %2922 = vrot.lane.b32.xlu0 %v2803, 12
  %v2923 = vpop.permute.xlu0 %2922
  %2924 = vrot.lane.b32.xlu0 %v2804, 12
  %v2925 = vpop.permute.xlu0 %2924
  %2926 = vrot.lane.b32.xlu0 %v2805, 12
  %v2927 = vpop.permute.xlu0 %2926
  %2928 = vrot.lane.b32.xlu0 %v2806, 12
  %v2929 = vpop.permute.xlu0 %2928
  %2930 = vrot.lane.b32.xlu0 %v2807, 12
  %v2931 = vpop.permute.xlu0 %2930
  %2932 = vrot.lane.b32.xlu0 %v2808, 12
  %v2933 = vpop.permute.xlu0 %2932
  %2934 = vrot.lane.b32.xlu0 %v2809, 12
  %v2935 = vpop.permute.xlu0 %2934
  %2936 = vrot.lane.b32.xlu0 %v2810, 12
  %v2937 = vpop.permute.xlu0 %2936
  %2938 = vrot.lane.b32.xlu0 %v2811, 12
  %v2939 = vpop.permute.xlu0 %2938
  %v2940 = vadd.f32 %v2556, %v2813
  %v2941 = vadd.f32 %v2557, %v2815
  %v2942 = vadd.f32 %v2558, %v2817
  %v2943 = vadd.f32 %v2559, %v2819
  %v2944 = vadd.f32 %v2560, %v2821
  %v2945 = vadd.f32 %v2561, %v2823
  %v2946 = vadd.f32 %v2562, %v2825
  %v2947 = vadd.f32 %v2563, %v2827
  %v2948 = vadd.f32 %v2564, %v2829
  %v2949 = vadd.f32 %v2565, %v2831
  %v2950 = vadd.f32 %v2566, %v2833
  %v2951 = vadd.f32 %v2567, %v2835
  %v2952 = vadd.f32 %v2568, %v2837
  %v2953 = vadd.f32 %v2569, %v2839
  %v2954 = vadd.f32 %v2570, %v2841
  %v2955 = vadd.f32 %v2571, %v2843
  %v2956 = vadd.f32 %v2572, %v2845
  %v2957 = vadd.f32 %v2573, %v2847
  %v2958 = vadd.f32 %v2574, %v2849
  %v2959 = vadd.f32 %v2575, %v2851
  %v2960 = vadd.f32 %v2576, %v2853
  %v2961 = vadd.f32 %v2577, %v2855
  %v2962 = vadd.f32 %v2578, %v2857
  %v2963 = vadd.f32 %v2579, %v2859
  %v2964 = vadd.f32 %v2580, %v2861
  %v2965 = vadd.f32 %v2581, %v2863
  %v2966 = vadd.f32 %v2582, %v2865
  %v2967 = vadd.f32 %v2583, %v2867
  %v2968 = vadd.f32 %v2584, %v2869
  %v2969 = vadd.f32 %v2585, %v2871
  %v2970 = vadd.f32 %v2586, %v2873
  %v2971 = vadd.f32 %v2587, %v2875
  %v2972 = vadd.f32 %v2588, %v2877
  %v2973 = vadd.f32 %v2589, %v2879
  %v2974 = vadd.f32 %v2590, %v2881
  %v2975 = vadd.f32 %v2591, %v2883
  %v2976 = vadd.f32 %v2592, %v2885
  %v2977 = vadd.f32 %v2593, %v2887
  %v2978 = vadd.f32 %v2594, %v2889
  %v2979 = vadd.f32 %v2595, %v2891
  %v2980 = vadd.f32 %v2596, %v2893
  %v2981 = vadd.f32 %v2597, %v2895
  %v2982 = vadd.f32 %v2598, %v2897
  %v2983 = vadd.f32 %v2599, %v2899
  %v2984 = vadd.f32 %v2600, %v2901
  %v2985 = vadd.f32 %v2601, %v2903
  %v2986 = vadd.f32 %v2602, %v2905
  %v2987 = vadd.f32 %v2603, %v2907
  %v2988 = vadd.f32 %v2604, %v2909
  %v2989 = vadd.f32 %v2605, %v2911
  %v2990 = vadd.f32 %v2606, %v2913
  %v2991 = vadd.f32 %v2607, %v2915
  %v2992 = vadd.f32 %v2608, %v2917
  %v2993 = vadd.f32 %v2609, %v2919
  %v2994 = vadd.f32 %v2610, %v2921
  %v2995 = vadd.f32 %v2611, %v2923
  %v2996 = vadd.f32 %v2612, %v2925
  %v2997 = vadd.f32 %v2613, %v2927
  %v2998 = vadd.f32 %v2614, %v2929
  %v2999 = vadd.f32 %v2615, %v2931
  %v3000 = vadd.f32 %v2616, %v2933
  %v3001 = vadd.f32 %v2617, %v2935
  %v3002 = vadd.f32 %v2618, %v2937
  %v3003 = vadd.f32 %v2619, %v2939
  %3004 = vrot.lane.b32.xlu0 %v697, 16
  %v3005 = vpop.permute.xlu0 %3004
  %3006 = vrot.lane.b32.xlu0 %v698, 16
  %v3007 = vpop.permute.xlu0 %3006
  %3008 = vrot.lane.b32.xlu0 %v699, 16
  %v3009 = vpop.permute.xlu0 %3008
  %3010 = vrot.lane.b32.xlu0 %v700, 16
  %v3011 = vpop.permute.xlu0 %3010
  %3012 = vrot.lane.b32.xlu0 %v701, 16
  %v3013 = vpop.permute.xlu0 %3012
  %3014 = vrot.lane.b32.xlu0 %v702, 16
  %v3015 = vpop.permute.xlu0 %3014
  %3016 = vrot.lane.b32.xlu0 %v703, 16
  %v3017 = vpop.permute.xlu0 %3016
  %3018 = vrot.lane.b32.xlu0 %v704, 16
  %v3019 = vpop.permute.xlu0 %3018
  %3020 = vrot.lane.b32.xlu0 %v705, 16
  %v3021 = vpop.permute.xlu0 %3020
  %3022 = vrot.lane.b32.xlu0 %v706, 16
  %v3023 = vpop.permute.xlu0 %3022
  %3024 = vrot.lane.b32.xlu0 %v707, 16
  %v3025 = vpop.permute.xlu0 %3024
  %3026 = vrot.lane.b32.xlu0 %v708, 16
  %v3027 = vpop.permute.xlu0 %3026
  %3028 = vrot.lane.b32.xlu0 %v709, 16
  %v3029 = vpop.permute.xlu0 %3028
  %3030 = vrot.lane.b32.xlu0 %v710, 16
  %v3031 = vpop.permute.xlu0 %3030
  %3032 = vrot.lane.b32.xlu0 %v711, 16
  %v3033 = vpop.permute.xlu0 %3032
  %3034 = vrot.lane.b32.xlu0 %v712, 16
  %v3035 = vpop.permute.xlu0 %3034
  %3036 = vrot.lane.b32.xlu0 %v713, 16
  %v3037 = vpop.permute.xlu0 %3036
  %3038 = vrot.lane.b32.xlu0 %v714, 16
  %v3039 = vpop.permute.xlu0 %3038
  %3040 = vrot.lane.b32.xlu0 %v715, 16
  %v3041 = vpop.permute.xlu0 %3040
  %3042 = vrot.lane.b32.xlu0 %v716, 16
  %v3043 = vpop.permute.xlu0 %3042
  %3044 = vrot.lane.b32.xlu0 %v717, 16
  %v3045 = vpop.permute.xlu0 %3044
  %3046 = vrot.lane.b32.xlu0 %v718, 16
  %v3047 = vpop.permute.xlu0 %3046
  %3048 = vrot.lane.b32.xlu0 %v719, 16
  %v3049 = vpop.permute.xlu0 %3048
  %3050 = vrot.lane.b32.xlu0 %v720, 16
  %v3051 = vpop.permute.xlu0 %3050
  %3052 = vrot.lane.b32.xlu0 %v721, 16
  %v3053 = vpop.permute.xlu0 %3052
  %3054 = vrot.lane.b32.xlu0 %v722, 16
  %v3055 = vpop.permute.xlu0 %3054
  %3056 = vrot.lane.b32.xlu0 %v723, 16
  %v3057 = vpop.permute.xlu0 %3056
  %3058 = vrot.lane.b32.xlu0 %v724, 16
  %v3059 = vpop.permute.xlu0 %3058
  %3060 = vrot.lane.b32.xlu0 %v725, 16
  %v3061 = vpop.permute.xlu0 %3060
  %3062 = vrot.lane.b32.xlu0 %v726, 16
  %v3063 = vpop.permute.xlu0 %3062
  %3064 = vrot.lane.b32.xlu0 %v727, 16
  %v3065 = vpop.permute.xlu0 %3064
  %3066 = vrot.lane.b32.xlu0 %v728, 16
  %v3067 = vpop.permute.xlu0 %3066
  %3068 = vrot.lane.b32.xlu0 %v729, 16
  %v3069 = vpop.permute.xlu0 %3068
  %3070 = vrot.lane.b32.xlu0 %v730, 16
  %v3071 = vpop.permute.xlu0 %3070
  %3072 = vrot.lane.b32.xlu0 %v731, 16
  %v3073 = vpop.permute.xlu0 %3072
  %3074 = vrot.lane.b32.xlu0 %v732, 16
  %v3075 = vpop.permute.xlu0 %3074
  %3076 = vrot.lane.b32.xlu0 %v733, 16
  %v3077 = vpop.permute.xlu0 %3076
  %3078 = vrot.lane.b32.xlu0 %v734, 16
  %v3079 = vpop.permute.xlu0 %3078
  %3080 = vrot.lane.b32.xlu0 %v735, 16
  %v3081 = vpop.permute.xlu0 %3080
  %3082 = vrot.lane.b32.xlu0 %v736, 16
  %v3083 = vpop.permute.xlu0 %3082
  %3084 = vrot.lane.b32.xlu0 %v737, 16
  %v3085 = vpop.permute.xlu0 %3084
  %3086 = vrot.lane.b32.xlu0 %v738, 16
  %v3087 = vpop.permute.xlu0 %3086
  %3088 = vrot.lane.b32.xlu0 %v739, 16
  %v3089 = vpop.permute.xlu0 %3088
  %3090 = vrot.lane.b32.xlu0 %v740, 16
  %v3091 = vpop.permute.xlu0 %3090
  %3092 = vrot.lane.b32.xlu0 %v741, 16
  %v3093 = vpop.permute.xlu0 %3092
  %3094 = vrot.lane.b32.xlu0 %v742, 16
  %v3095 = vpop.permute.xlu0 %3094
  %3096 = vrot.lane.b32.xlu0 %v743, 16
  %v3097 = vpop.permute.xlu0 %3096
  %3098 = vrot.lane.b32.xlu0 %v744, 16
  %v3099 = vpop.permute.xlu0 %3098
  %3100 = vrot.lane.b32.xlu0 %v745, 16
  %v3101 = vpop.permute.xlu0 %3100
  %3102 = vrot.lane.b32.xlu0 %v746, 16
  %v3103 = vpop.permute.xlu0 %3102
  %3104 = vrot.lane.b32.xlu0 %v747, 16
  %v3105 = vpop.permute.xlu0 %3104
  %3106 = vrot.lane.b32.xlu0 %v748, 16
  %v3107 = vpop.permute.xlu0 %3106
  %3108 = vrot.lane.b32.xlu0 %v749, 16
  %v3109 = vpop.permute.xlu0 %3108
  %3110 = vrot.lane.b32.xlu0 %v750, 16
  %v3111 = vpop.permute.xlu0 %3110
  %3112 = vrot.lane.b32.xlu0 %v751, 16
  %v3113 = vpop.permute.xlu0 %3112
  %3114 = vrot.lane.b32.xlu0 %v752, 16
  %v3115 = vpop.permute.xlu0 %3114
  %3116 = vrot.lane.b32.xlu0 %v753, 16
  %v3117 = vpop.permute.xlu0 %3116
  %3118 = vrot.lane.b32.xlu0 %v754, 16
  %v3119 = vpop.permute.xlu0 %3118
  %3120 = vrot.lane.b32.xlu0 %v755, 16
  %v3121 = vpop.permute.xlu0 %3120
  %3122 = vrot.lane.b32.xlu0 %v756, 16
  %v3123 = vpop.permute.xlu0 %3122
  %3124 = vrot.lane.b32.xlu0 %v757, 16
  %v3125 = vpop.permute.xlu0 %3124
  %3126 = vrot.lane.b32.xlu0 %v758, 16
  %v3127 = vpop.permute.xlu0 %3126
  %3128 = vrot.lane.b32.xlu0 %v759, 16
  %v3129 = vpop.permute.xlu0 %3128
  %3130 = vrot.lane.b32.xlu0 %v760, 16
  %v3131 = vpop.permute.xlu0 %3130
  %v3132 = vadd.f32 %v2940, %v3005
  %v3133 = vadd.f32 %v2941, %v3007
  %v3134 = vadd.f32 %v2942, %v3009
  %v3135 = vadd.f32 %v2943, %v3011
  %v3136 = vadd.f32 %v2944, %v3013
  %v3137 = vadd.f32 %v2945, %v3015
  %v3138 = vadd.f32 %v2946, %v3017
  %v3139 = vadd.f32 %v2947, %v3019
  %v3140 = vadd.f32 %v2948, %v3021
  %v3141 = vadd.f32 %v2949, %v3023
  %v3142 = vadd.f32 %v2950, %v3025
  %v3143 = vadd.f32 %v2951, %v3027
  %v3144 = vadd.f32 %v2952, %v3029
  %v3145 = vadd.f32 %v2953, %v3031
  %v3146 = vadd.f32 %v2954, %v3033
  %v3147 = vadd.f32 %v2955, %v3035
  %v3148 = vadd.f32 %v2956, %v3037
  %v3149 = vadd.f32 %v2957, %v3039
  %v3150 = vadd.f32 %v2958, %v3041
  %v3151 = vadd.f32 %v2959, %v3043
  %v3152 = vadd.f32 %v2960, %v3045
  %v3153 = vadd.f32 %v2961, %v3047
  %v3154 = vadd.f32 %v2962, %v3049
  %v3155 = vadd.f32 %v2963, %v3051
  %v3156 = vadd.f32 %v2964, %v3053
  %v3157 = vadd.f32 %v2965, %v3055
  %v3158 = vadd.f32 %v2966, %v3057
  %v3159 = vadd.f32 %v2967, %v3059
  %v3160 = vadd.f32 %v2968, %v3061
  %v3161 = vadd.f32 %v2969, %v3063
  %v3162 = vadd.f32 %v2970, %v3065
  %v3163 = vadd.f32 %v2971, %v3067
  %v3164 = vadd.f32 %v2972, %v3069
  %v3165 = vadd.f32 %v2973, %v3071
  %v3166 = vadd.f32 %v2974, %v3073
  %v3167 = vadd.f32 %v2975, %v3075
  %v3168 = vadd.f32 %v2976, %v3077
  %v3169 = vadd.f32 %v2977, %v3079
  %v3170 = vadd.f32 %v2978, %v3081
  %v3171 = vadd.f32 %v2979, %v3083
  %v3172 = vadd.f32 %v2980, %v3085
  %v3173 = vadd.f32 %v2981, %v3087
  %v3174 = vadd.f32 %v2982, %v3089
  %v3175 = vadd.f32 %v2983, %v3091
  %v3176 = vadd.f32 %v2984, %v3093
  %v3177 = vadd.f32 %v2985, %v3095
  %v3178 = vadd.f32 %v2986, %v3097
  %v3179 = vadd.f32 %v2987, %v3099
  %v3180 = vadd.f32 %v2988, %v3101
  %v3181 = vadd.f32 %v2989, %v3103
  %v3182 = vadd.f32 %v2990, %v3105
  %v3183 = vadd.f32 %v2991, %v3107
  %v3184 = vadd.f32 %v2992, %v3109
  %v3185 = vadd.f32 %v2993, %v3111
  %v3186 = vadd.f32 %v2994, %v3113
  %v3187 = vadd.f32 %v2995, %v3115
  %v3188 = vadd.f32 %v2996, %v3117
  %v3189 = vadd.f32 %v2997, %v3119
  %v3190 = vadd.f32 %v2998, %v3121
  %v3191 = vadd.f32 %v2999, %v3123
  %v3192 = vadd.f32 %v3000, %v3125
  %v3193 = vadd.f32 %v3001, %v3127
  %v3194 = vadd.f32 %v3002, %v3129
  %v3195 = vadd.f32 %v3003, %v3131
  %v3196 = vsel %vm1210, 1, 0
  %v3197 = vsel %vm1211, 1, 0
  %v3198 = vsel %vm1212, 1, 0
  %v3199 = vsel %vm1213, 1, 0
  %v3200 = vsel %vm1214, 1, 0
  %v3201 = vsel %vm1215, 1, 0
  %v3202 = vsel %vm1216, 1, 0
  %v3203 = vsel %vm1217, 1, 0
  %v3204 = vsel %vm1218, 1, 0
  %v3205 = vsel %vm1219, 1, 0
  %v3206 = vsel %vm1220, 1, 0
  %v3207 = vsel %vm1221, 1, 0
  %v3208 = vsel %vm1222, 1, 0
  %v3209 = vsel %vm1223, 1, 0
  %v3210 = vsel %vm1224, 1, 0
  %v3211 = vsel %vm1225, 1, 0
  %v3212 = vsel %vm1226, 1, 0
  %v3213 = vsel %vm1227, 1, 0
  %v3214 = vsel %vm1228, 1, 0
  %v3215 = vsel %vm1229, 1, 0
  %v3216 = vsel %vm1230, 1, 0
  %v3217 = vsel %vm1231, 1, 0
  %v3218 = vsel %vm1232, 1, 0
  %v3219 = vsel %vm1233, 1, 0
  %v3220 = vsel %vm1234, 1, 0
  %v3221 = vsel %vm1235, 1, 0
  %v3222 = vsel %vm1236, 1, 0
  %v3223 = vsel %vm1237, 1, 0
  %v3224 = vsel %vm1238, 1, 0
  %v3225 = vsel %vm1239, 1, 0
  %v3226 = vsel %vm1240, 1, 0
  %v3227 = vsel %vm1241, 1, 0
  %v3228 = vsel %vm1242, 1, 0
  %v3229 = vsel %vm1243, 1, 0
  %v3230 = vsel %vm1244, 1, 0
  %v3231 = vsel %vm1245, 1, 0
  %v3232 = vsel %vm1246, 1, 0
  %v3233 = vsel %vm1247, 1, 0
  %v3234 = vsel %vm1248, 1, 0
  %v3235 = vsel %vm1249, 1, 0
  %v3236 = vsel %vm1250, 1, 0
  %v3237 = vsel %vm1251, 1, 0
  %v3238 = vsel %vm1252, 1, 0
  %v3239 = vsel %vm1253, 1, 0
  %v3240 = vsel %vm1254, 1, 0
  %v3241 = vsel %vm1255, 1, 0
  %v3242 = vsel %vm1256, 1, 0
  %v3243 = vsel %vm1257, 1, 0
  %v3244 = vsel %vm1258, 1, 0
  %v3245 = vsel %vm1259, 1, 0
  %v3246 = vsel %vm1260, 1, 0
  %v3247 = vsel %vm1261, 1, 0
  %v3248 = vsel %vm1262, 1, 0
  %v3249 = vsel %vm1263, 1, 0
  %v3250 = vsel %vm1264, 1, 0
  %v3251 = vsel %vm1265, 1, 0
  %v3252 = vsel %vm1266, 1, 0
  %v3253 = vsel %vm1267, 1, 0
  %v3254 = vsel %vm1268, 1, 0
  %v3255 = vsel %vm1269, 1, 0
  %v3256 = vsel %vm1270, 1, 0
  %v3257 = vsel %vm1271, 1, 0
  %v3258 = vsel %vm1272, 1, 0
  %v3259 = vsel %vm1273, 1, 0
  %vm3260 = vcmp.eq.s32.totalorder %v3196, 1
  %vm3261 = vcmp.eq.s32.totalorder %v3197, 1
  %vm3262 = vcmp.eq.s32.totalorder %v3198, 1
  %vm3263 = vcmp.eq.s32.totalorder %v3199, 1
  %vm3264 = vcmp.eq.s32.totalorder %v3200, 1
  %vm3265 = vcmp.eq.s32.totalorder %v3201, 1
  %vm3266 = vcmp.eq.s32.totalorder %v3202, 1
  %vm3267 = vcmp.eq.s32.totalorder %v3203, 1
  %vm3268 = vcmp.eq.s32.totalorder %v3204, 1
  %vm3269 = vcmp.eq.s32.totalorder %v3205, 1
  %vm3270 = vcmp.eq.s32.totalorder %v3206, 1
  %vm3271 = vcmp.eq.s32.totalorder %v3207, 1
  %vm3272 = vcmp.eq.s32.totalorder %v3208, 1
  %vm3273 = vcmp.eq.s32.totalorder %v3209, 1
  %vm3274 = vcmp.eq.s32.totalorder %v3210, 1
  %vm3275 = vcmp.eq.s32.totalorder %v3211, 1
  %vm3276 = vcmp.eq.s32.totalorder %v3212, 1
  %vm3277 = vcmp.eq.s32.totalorder %v3213, 1
  %vm3278 = vcmp.eq.s32.totalorder %v3214, 1
  %vm3279 = vcmp.eq.s32.totalorder %v3215, 1
  %vm3280 = vcmp.eq.s32.totalorder %v3216, 1
  %vm3281 = vcmp.eq.s32.totalorder %v3217, 1
  %vm3282 = vcmp.eq.s32.totalorder %v3218, 1
  %vm3283 = vcmp.eq.s32.totalorder %v3219, 1
  %vm3284 = vcmp.eq.s32.totalorder %v3220, 1
  %vm3285 = vcmp.eq.s32.totalorder %v3221, 1
  %vm3286 = vcmp.eq.s32.totalorder %v3222, 1
  %vm3287 = vcmp.eq.s32.totalorder %v3223, 1
  %vm3288 = vcmp.eq.s32.totalorder %v3224, 1
  %vm3289 = vcmp.eq.s32.totalorder %v3225, 1
  %vm3290 = vcmp.eq.s32.totalorder %v3226, 1
  %vm3291 = vcmp.eq.s32.totalorder %v3227, 1
  %vm3292 = vcmp.eq.s32.totalorder %v3228, 1
  %vm3293 = vcmp.eq.s32.totalorder %v3229, 1
  %vm3294 = vcmp.eq.s32.totalorder %v3230, 1
  %vm3295 = vcmp.eq.s32.totalorder %v3231, 1
  %vm3296 = vcmp.eq.s32.totalorder %v3232, 1
  %vm3297 = vcmp.eq.s32.totalorder %v3233, 1
  %vm3298 = vcmp.eq.s32.totalorder %v3234, 1
  %vm3299 = vcmp.eq.s32.totalorder %v3235, 1
  %vm3300 = vcmp.eq.s32.totalorder %v3236, 1
  %vm3301 = vcmp.eq.s32.totalorder %v3237, 1
  %vm3302 = vcmp.eq.s32.totalorder %v3238, 1
  %vm3303 = vcmp.eq.s32.totalorder %v3239, 1
  %vm3304 = vcmp.eq.s32.totalorder %v3240, 1
  %vm3305 = vcmp.eq.s32.totalorder %v3241, 1
  %vm3306 = vcmp.eq.s32.totalorder %v3242, 1
  %vm3307 = vcmp.eq.s32.totalorder %v3243, 1
  %vm3308 = vcmp.eq.s32.totalorder %v3244, 1
  %vm3309 = vcmp.eq.s32.totalorder %v3245, 1
  %vm3310 = vcmp.eq.s32.totalorder %v3246, 1
  %vm3311 = vcmp.eq.s32.totalorder %v3247, 1
  %vm3312 = vcmp.eq.s32.totalorder %v3248, 1
  %vm3313 = vcmp.eq.s32.totalorder %v3249, 1
  %vm3314 = vcmp.eq.s32.totalorder %v3250, 1
  %vm3315 = vcmp.eq.s32.totalorder %v3251, 1
  %vm3316 = vcmp.eq.s32.totalorder %v3252, 1
  %vm3317 = vcmp.eq.s32.totalorder %v3253, 1
  %vm3318 = vcmp.eq.s32.totalorder %v3254, 1
  %vm3319 = vcmp.eq.s32.totalorder %v3255, 1
  %vm3320 = vcmp.eq.s32.totalorder %v3256, 1
  %vm3321 = vcmp.eq.s32.totalorder %v3257, 1
  %vm3322 = vcmp.eq.s32.totalorder %v3258, 1
  %vm3323 = vcmp.eq.s32.totalorder %v3259, 1
  %v3324 = vsel %vm3260, %v2170, 0.0
  %v3325 = vsel %vm3261, %v2169, 0.0
  %v3326 = vsel %vm3262, %v2168, 0.0
  %v3327 = vsel %vm3263, %v2167, 0.0
  %v3328 = vsel %vm3264, %v2166, 0.0
  %v3329 = vsel %vm3265, %v2165, 0.0
  %v3330 = vsel %vm3266, %v2164, 0.0
  %v3331 = vsel %vm3267, %v2163, 0.0
  %v3332 = vsel %vm3268, %v2162, 0.0
  %v3333 = vsel %vm3269, %v2161, 0.0
  %v3334 = vsel %vm3270, %v2160, 0.0
  %v3335 = vsel %vm3271, %v2159, 0.0
  %v3336 = vsel %vm3272, %v2158, 0.0
  %v3337 = vsel %vm3273, %v2157, 0.0
  %v3338 = vsel %vm3274, %v2156, 0.0
  %v3339 = vsel %vm3275, %v2155, 0.0
  %v3340 = vsel %vm3276, %v2154, 0.0
  %v3341 = vsel %vm3277, %v2153, 0.0
  %v3342 = vsel %vm3278, %v2152, 0.0
  %v3343 = vsel %vm3279, %v2151, 0.0
  %v3344 = vsel %vm3280, %v2150, 0.0
  %v3345 = vsel %vm3281, %v2149, 0.0
  %v3346 = vsel %vm3282, %v2148, 0.0
  %v3347 = vsel %vm3283, %v2147, 0.0
  %v3348 = vsel %vm3284, %v2146, 0.0
  %v3349 = vsel %vm3285, %v2145, 0.0
  %v3350 = vsel %vm3286, %v2144, 0.0
  %v3351 = vsel %vm3287, %v2143, 0.0
  %v3352 = vsel %vm3288, %v2142, 0.0
  %v3353 = vsel %vm3289, %v2141, 0.0
  %v3354 = vsel %vm3290, %v2140, 0.0
  %v3355 = vsel %vm3291, %v2139, 0.0
  %v3356 = vsel %vm3292, %v2138, 0.0
  %v3357 = vsel %vm3293, %v2137, 0.0
  %v3358 = vsel %vm3294, %v2136, 0.0
  %v3359 = vsel %vm3295, %v2135, 0.0
  %v3360 = vsel %vm3296, %v2134, 0.0
  %v3361 = vsel %vm3297, %v2133, 0.0
  %v3362 = vsel %vm3298, %v2132, 0.0
  %v3363 = vsel %vm3299, %v2131, 0.0
  %v3364 = vsel %vm3300, %v2130, 0.0
  %v3365 = vsel %vm3301, %v2129, 0.0
  %v3366 = vsel %vm3302, %v2128, 0.0
  %v3367 = vsel %vm3303, %v2127, 0.0
  %v3368 = vsel %vm3304, %v2126, 0.0
  %v3369 = vsel %vm3305, %v2125, 0.0
  %v3370 = vsel %vm3306, %v2124, 0.0
  %v3371 = vsel %vm3307, %v2123, 0.0
  %v3372 = vsel %vm3308, %v2122, 0.0
  %v3373 = vsel %vm3309, %v2121, 0.0
  %v3374 = vsel %vm3310, %v2120, 0.0
  %v3375 = vsel %vm3311, %v2119, 0.0
  %v3376 = vsel %vm3312, %v2118, 0.0
  %v3377 = vsel %vm3313, %v2117, 0.0
  %v3378 = vsel %vm3314, %v2116, 0.0
  %v3379 = vsel %vm3315, %v2115, 0.0
  %v3380 = vsel %vm3316, %v2114, 0.0
  %v3381 = vsel %vm3317, %v2113, 0.0
  %v3382 = vsel %vm3318, %v2112, 0.0
  %v3383 = vsel %vm3319, %v2111, 0.0
  %v3384 = vsel %vm3320, %v2110, 0.0
  %v3385 = vsel %vm3321, %v2109, 0.0
  %v3386 = vsel %vm3322, %v2108, 0.0
  %v3387 = vsel %vm3323, %v2171, 0.0
  %3388 = vrot.lane.b32.xlu0 %v3324, 20
  %v3389 = vpop.permute.xlu0 %3388
  %3390 = vrot.lane.b32.xlu0 %v3325, 20
  %v3391 = vpop.permute.xlu0 %3390
  %3392 = vrot.lane.b32.xlu0 %v3326, 20
  %v3393 = vpop.permute.xlu0 %3392
  %3394 = vrot.lane.b32.xlu0 %v3327, 20
  %v3395 = vpop.permute.xlu0 %3394
  %3396 = vrot.lane.b32.xlu0 %v3328, 20
  %v3397 = vpop.permute.xlu0 %3396
  %3398 = vrot.lane.b32.xlu0 %v3329, 20
  %v3399 = vpop.permute.xlu0 %3398
  %3400 = vrot.lane.b32.xlu0 %v3330, 20
  %v3401 = vpop.permute.xlu0 %3400
  %3402 = vrot.lane.b32.xlu0 %v3331, 20
  %v3403 = vpop.permute.xlu0 %3402
  %3404 = vrot.lane.b32.xlu0 %v3332, 20
  %v3405 = vpop.permute.xlu0 %3404
  %3406 = vrot.lane.b32.xlu0 %v3333, 20
  %v3407 = vpop.permute.xlu0 %3406
  %3408 = vrot.lane.b32.xlu0 %v3334, 20
  %v3409 = vpop.permute.xlu0 %3408
  %3410 = vrot.lane.b32.xlu0 %v3335, 20
  %v3411 = vpop.permute.xlu0 %3410
  %3412 = vrot.lane.b32.xlu0 %v3336, 20
  %v3413 = vpop.permute.xlu0 %3412
  %3414 = vrot.lane.b32.xlu0 %v3337, 20
  %v3415 = vpop.permute.xlu0 %3414
  %3416 = vrot.lane.b32.xlu0 %v3338, 20
  %v3417 = vpop.permute.xlu0 %3416
  %3418 = vrot.lane.b32.xlu0 %v3339, 20
  %v3419 = vpop.permute.xlu0 %3418
  %3420 = vrot.lane.b32.xlu0 %v3340, 20
  %v3421 = vpop.permute.xlu0 %3420
  %3422 = vrot.lane.b32.xlu0 %v3341, 20
  %v3423 = vpop.permute.xlu0 %3422
  %3424 = vrot.lane.b32.xlu0 %v3342, 20
  %v3425 = vpop.permute.xlu0 %3424
  %3426 = vrot.lane.b32.xlu0 %v3343, 20
  %v3427 = vpop.permute.xlu0 %3426
  %3428 = vrot.lane.b32.xlu0 %v3344, 20
  %v3429 = vpop.permute.xlu0 %3428
  %3430 = vrot.lane.b32.xlu0 %v3345, 20
  %v3431 = vpop.permute.xlu0 %3430
  %3432 = vrot.lane.b32.xlu0 %v3346, 20
  %v3433 = vpop.permute.xlu0 %3432
  %3434 = vrot.lane.b32.xlu0 %v3347, 20
  %v3435 = vpop.permute.xlu0 %3434
  %3436 = vrot.lane.b32.xlu0 %v3348, 20
  %v3437 = vpop.permute.xlu0 %3436
  %3438 = vrot.lane.b32.xlu0 %v3349, 20
  %v3439 = vpop.permute.xlu0 %3438
  %3440 = vrot.lane.b32.xlu0 %v3350, 20
  %v3441 = vpop.permute.xlu0 %3440
  %3442 = vrot.lane.b32.xlu0 %v3351, 20
  %v3443 = vpop.permute.xlu0 %3442
  %3444 = vrot.lane.b32.xlu0 %v3352, 20
  %v3445 = vpop.permute.xlu0 %3444
  %3446 = vrot.lane.b32.xlu0 %v3353, 20
  %v3447 = vpop.permute.xlu0 %3446
  %3448 = vrot.lane.b32.xlu0 %v3354, 20
  %v3449 = vpop.permute.xlu0 %3448
  %3450 = vrot.lane.b32.xlu0 %v3355, 20
  %v3451 = vpop.permute.xlu0 %3450
  %3452 = vrot.lane.b32.xlu0 %v3356, 20
  %v3453 = vpop.permute.xlu0 %3452
  %3454 = vrot.lane.b32.xlu0 %v3357, 20
  %v3455 = vpop.permute.xlu0 %3454
  %3456 = vrot.lane.b32.xlu0 %v3358, 20
  %v3457 = vpop.permute.xlu0 %3456
  %3458 = vrot.lane.b32.xlu0 %v3359, 20
  %v3459 = vpop.permute.xlu0 %3458
  %3460 = vrot.lane.b32.xlu0 %v3360, 20
  %v3461 = vpop.permute.xlu0 %3460
  %3462 = vrot.lane.b32.xlu0 %v3361, 20
  %v3463 = vpop.permute.xlu0 %3462
  %3464 = vrot.lane.b32.xlu0 %v3362, 20
  %v3465 = vpop.permute.xlu0 %3464
  %3466 = vrot.lane.b32.xlu0 %v3363, 20
  %v3467 = vpop.permute.xlu0 %3466
  %3468 = vrot.lane.b32.xlu0 %v3364, 20
  %v3469 = vpop.permute.xlu0 %3468
  %3470 = vrot.lane.b32.xlu0 %v3365, 20
  %v3471 = vpop.permute.xlu0 %3470
  %3472 = vrot.lane.b32.xlu0 %v3366, 20
  %v3473 = vpop.permute.xlu0 %3472
  %3474 = vrot.lane.b32.xlu0 %v3367, 20
  %v3475 = vpop.permute.xlu0 %3474
  %3476 = vrot.lane.b32.xlu0 %v3368, 20
  %v3477 = vpop.permute.xlu0 %3476
  %3478 = vrot.lane.b32.xlu0 %v3369, 20
  %v3479 = vpop.permute.xlu0 %3478
  %3480 = vrot.lane.b32.xlu0 %v3370, 20
  %v3481 = vpop.permute.xlu0 %3480
  %3482 = vrot.lane.b32.xlu0 %v3371, 20
  %v3483 = vpop.permute.xlu0 %3482
  %3484 = vrot.lane.b32.xlu0 %v3372, 20
  %v3485 = vpop.permute.xlu0 %3484
  %3486 = vrot.lane.b32.xlu0 %v3373, 20
  %v3487 = vpop.permute.xlu0 %3486
  %3488 = vrot.lane.b32.xlu0 %v3374, 20
  %v3489 = vpop.permute.xlu0 %3488
  %3490 = vrot.lane.b32.xlu0 %v3375, 20
  %v3491 = vpop.permute.xlu0 %3490
  %3492 = vrot.lane.b32.xlu0 %v3376, 20
  %v3493 = vpop.permute.xlu0 %3492
  %3494 = vrot.lane.b32.xlu0 %v3377, 20
  %v3495 = vpop.permute.xlu0 %3494
  %3496 = vrot.lane.b32.xlu0 %v3378, 20
  %v3497 = vpop.permute.xlu0 %3496
  %3498 = vrot.lane.b32.xlu0 %v3379, 20
  %v3499 = vpop.permute.xlu0 %3498
  %3500 = vrot.lane.b32.xlu0 %v3380, 20
  %v3501 = vpop.permute.xlu0 %3500
  %3502 = vrot.lane.b32.xlu0 %v3381, 20
  %v3503 = vpop.permute.xlu0 %3502
  %3504 = vrot.lane.b32.xlu0 %v3382, 20
  %v3505 = vpop.permute.xlu0 %3504
  %3506 = vrot.lane.b32.xlu0 %v3383, 20
  %v3507 = vpop.permute.xlu0 %3506
  %3508 = vrot.lane.b32.xlu0 %v3384, 20
  %v3509 = vpop.permute.xlu0 %3508
  %3510 = vrot.lane.b32.xlu0 %v3385, 20
  %v3511 = vpop.permute.xlu0 %3510
  %3512 = vrot.lane.b32.xlu0 %v3386, 20
  %v3513 = vpop.permute.xlu0 %3512
  %3514 = vrot.lane.b32.xlu0 %v3387, 20
  %v3515 = vpop.permute.xlu0 %3514
  %v3516 = vadd.f32 %v3132, %v3389
  %v3517 = vadd.f32 %v3133, %v3391
  %v3518 = vadd.f32 %v3134, %v3393
  %v3519 = vadd.f32 %v3135, %v3395
  %v3520 = vadd.f32 %v3136, %v3397
  %v3521 = vadd.f32 %v3137, %v3399
  %v3522 = vadd.f32 %v3138, %v3401
  %v3523 = vadd.f32 %v3139, %v3403
  %v3524 = vadd.f32 %v3140, %v3405
  %v3525 = vadd.f32 %v3141, %v3407
  %v3526 = vadd.f32 %v3142, %v3409
  %v3527 = vadd.f32 %v3143, %v3411
  %v3528 = vadd.f32 %v3144, %v3413
  %v3529 = vadd.f32 %v3145, %v3415
  %v3530 = vadd.f32 %v3146, %v3417
  %v3531 = vadd.f32 %v3147, %v3419
  %v3532 = vadd.f32 %v3148, %v3421
  %v3533 = vadd.f32 %v3149, %v3423
  %v3534 = vadd.f32 %v3150, %v3425
  %v3535 = vadd.f32 %v3151, %v3427
  %v3536 = vadd.f32 %v3152, %v3429
  %v3537 = vadd.f32 %v3153, %v3431
  %v3538 = vadd.f32 %v3154, %v3433
  %v3539 = vadd.f32 %v3155, %v3435
  %v3540 = vadd.f32 %v3156, %v3437
  %v3541 = vadd.f32 %v3157, %v3439
  %v3542 = vadd.f32 %v3158, %v3441
  %v3543 = vadd.f32 %v3159, %v3443
  %v3544 = vadd.f32 %v3160, %v3445
  %v3545 = vadd.f32 %v3161, %v3447
  %v3546 = vadd.f32 %v3162, %v3449
  %v3547 = vadd.f32 %v3163, %v3451
  %v3548 = vadd.f32 %v3164, %v3453
  %v3549 = vadd.f32 %v3165, %v3455
  %v3550 = vadd.f32 %v3166, %v3457
  %v3551 = vadd.f32 %v3167, %v3459
  %v3552 = vadd.f32 %v3168, %v3461
  %v3553 = vadd.f32 %v3169, %v3463
  %v3554 = vadd.f32 %v3170, %v3465
  %v3555 = vadd.f32 %v3171, %v3467
  %v3556 = vadd.f32 %v3172, %v3469
  %v3557 = vadd.f32 %v3173, %v3471
  %v3558 = vadd.f32 %v3174, %v3473
  %v3559 = vadd.f32 %v3175, %v3475
  %v3560 = vadd.f32 %v3176, %v3477
  %v3561 = vadd.f32 %v3177, %v3479
  %v3562 = vadd.f32 %v3178, %v3481
  %v3563 = vadd.f32 %v3179, %v3483
  %v3564 = vadd.f32 %v3180, %v3485
  %v3565 = vadd.f32 %v3181, %v3487
  %v3566 = vadd.f32 %v3182, %v3489
  %v3567 = vadd.f32 %v3183, %v3491
  %v3568 = vadd.f32 %v3184, %v3493
  %v3569 = vadd.f32 %v3185, %v3495
  %v3570 = vadd.f32 %v3186, %v3497
  %v3571 = vadd.f32 %v3187, %v3499
  %v3572 = vadd.f32 %v3188, %v3501
  %v3573 = vadd.f32 %v3189, %v3503
  %v3574 = vadd.f32 %v3190, %v3505
  %v3575 = vadd.f32 %v3191, %v3507
  %v3576 = vadd.f32 %v3192, %v3509
  %v3577 = vadd.f32 %v3193, %v3511
  %v3578 = vadd.f32 %v3194, %v3513
  %v3579 = vadd.f32 %v3195, %v3515
  %vm3580 = vmand %vm1082, %vm1146
  %vm3581 = vmand %vm1083, %vm1147
  %vm3582 = vmand %vm1084, %vm1148
  %vm3583 = vmand %vm1085, %vm1149
  %vm3584 = vmand %vm1086, %vm1150
  %vm3585 = vmand %vm1087, %vm1151
  %vm3586 = vmand %vm1088, %vm1152
  %vm3587 = vmand %vm1089, %vm1153
  %vm3588 = vmand %vm1090, %vm1154
  %vm3589 = vmand %vm1091, %vm1155
  %vm3590 = vmand %vm1092, %vm1156
  %vm3591 = vmand %vm1093, %vm1157
  %vm3592 = vmand %vm1094, %vm1158
  %vm3593 = vmand %vm1095, %vm1159
  %vm3594 = vmand %vm1096, %vm1160
  %vm3595 = vmand %vm1097, %vm1161
  %vm3596 = vmand %vm1098, %vm1162
  %vm3597 = vmand %vm1099, %vm1163
  %vm3598 = vmand %vm1100, %vm1164
  %vm3599 = vmand %vm1101, %vm1165
  %vm3600 = vmand %vm1102, %vm1166
  %vm3601 = vmand %vm1103, %vm1167
  %vm3602 = vmand %vm1104, %vm1168
  %vm3603 = vmand %vm1105, %vm1169
  %vm3604 = vmand %vm1106, %vm1170
  %vm3605 = vmand %vm1107, %vm1171
  %vm3606 = vmand %vm1108, %vm1172
  %vm3607 = vmand %vm1109, %vm1173
  %vm3608 = vmand %vm1110, %vm1174
  %vm3609 = vmand %vm1111, %vm1175
  %vm3610 = vmand %vm1112, %vm1176
  %vm3611 = vmand %vm1113, %vm1177
  %vm3612 = vmand %vm1114, %vm1178
  %vm3613 = vmand %vm1115, %vm1179
  %vm3614 = vmand %vm1116, %vm1180
  %vm3615 = vmand %vm1117, %vm1181
  %vm3616 = vmand %vm1118, %vm1182
  %vm3617 = vmand %vm1119, %vm1183
  %vm3618 = vmand %vm1120, %vm1184
  %vm3619 = vmand %vm1121, %vm1185
  %vm3620 = vmand %vm1122, %vm1186
  %vm3621 = vmand %vm1123, %vm1187
  %vm3622 = vmand %vm1124, %vm1188
  %vm3623 = vmand %vm1125, %vm1189
  %vm3624 = vmand %vm1126, %vm1190
  %vm3625 = vmand %vm1127, %vm1191
  %vm3626 = vmand %vm1128, %vm1192
  %vm3627 = vmand %vm1129, %vm1193
  %vm3628 = vmand %vm1130, %vm1194
  %vm3629 = vmand %vm1131, %vm1195
  %vm3630 = vmand %vm1132, %vm1196
  %vm3631 = vmand %vm1133, %vm1197
  %vm3632 = vmand %vm1134, %vm1198
  %vm3633 = vmand %vm1135, %vm1199
  %vm3634 = vmand %vm1136, %vm1200
  %vm3635 = vmand %vm1137, %vm1201
  %vm3636 = vmand %vm1138, %vm1202
  %vm3637 = vmand %vm1139, %vm1203
  %vm3638 = vmand %vm1140, %vm1204
  %vm3639 = vmand %vm1141, %vm1205
  %vm3640 = vmand %vm1142, %vm1206
  %vm3641 = vmand %vm1143, %vm1207
  %vm3642 = vmand %vm1144, %vm1208
  %vm3643 = vmand %vm1145, %vm1209
  %v3644 = vsel %vm3580, 1, 0
  %v3645 = vsel %vm3581, 1, 0
  %v3646 = vsel %vm3582, 1, 0
  %v3647 = vsel %vm3583, 1, 0
  %v3648 = vsel %vm3584, 1, 0
  %v3649 = vsel %vm3585, 1, 0
  %v3650 = vsel %vm3586, 1, 0
  %v3651 = vsel %vm3587, 1, 0
  %v3652 = vsel %vm3588, 1, 0
  %v3653 = vsel %vm3589, 1, 0
  %v3654 = vsel %vm3590, 1, 0
  %v3655 = vsel %vm3591, 1, 0
  %v3656 = vsel %vm3592, 1, 0
  %v3657 = vsel %vm3593, 1, 0
  %v3658 = vsel %vm3594, 1, 0
  %v3659 = vsel %vm3595, 1, 0
  %v3660 = vsel %vm3596, 1, 0
  %v3661 = vsel %vm3597, 1, 0
  %v3662 = vsel %vm3598, 1, 0
  %v3663 = vsel %vm3599, 1, 0
  %v3664 = vsel %vm3600, 1, 0
  %v3665 = vsel %vm3601, 1, 0
  %v3666 = vsel %vm3602, 1, 0
  %v3667 = vsel %vm3603, 1, 0
  %v3668 = vsel %vm3604, 1, 0
  %v3669 = vsel %vm3605, 1, 0
  %v3670 = vsel %vm3606, 1, 0
  %v3671 = vsel %vm3607, 1, 0
  %v3672 = vsel %vm3608, 1, 0
  %v3673 = vsel %vm3609, 1, 0
  %v3674 = vsel %vm3610, 1, 0
  %v3675 = vsel %vm3611, 1, 0
  %v3676 = vsel %vm3612, 1, 0
  %v3677 = vsel %vm3613, 1, 0
  %v3678 = vsel %vm3614, 1, 0
  %v3679 = vsel %vm3615, 1, 0
  %v3680 = vsel %vm3616, 1, 0
  %v3681 = vsel %vm3617, 1, 0
  %v3682 = vsel %vm3618, 1, 0
  %v3683 = vsel %vm3619, 1, 0
  %v3684 = vsel %vm3620, 1, 0
  %v3685 = vsel %vm3621, 1, 0
  %v3686 = vsel %vm3622, 1, 0
  %v3687 = vsel %vm3623, 1, 0
  %v3688 = vsel %vm3624, 1, 0
  %v3689 = vsel %vm3625, 1, 0
  %v3690 = vsel %vm3626, 1, 0
  %v3691 = vsel %vm3627, 1, 0
  %v3692 = vsel %vm3628, 1, 0
  %v3693 = vsel %vm3629, 1, 0
  %v3694 = vsel %vm3630, 1, 0
  %v3695 = vsel %vm3631, 1, 0
  %v3696 = vsel %vm3632, 1, 0
  %v3697 = vsel %vm3633, 1, 0
  %v3698 = vsel %vm3634, 1, 0
  %v3699 = vsel %vm3635, 1, 0
  %v3700 = vsel %vm3636, 1, 0
  %v3701 = vsel %vm3637, 1, 0
  %v3702 = vsel %vm3638, 1, 0
  %v3703 = vsel %vm3639, 1, 0
  %v3704 = vsel %vm3640, 1, 0
  %v3705 = vsel %vm3641, 1, 0
  %v3706 = vsel %vm3642, 1, 0
  %v3707 = vsel %vm3643, 1, 0
  %vm3708 = vcmp.eq.s32.totalorder %v3644, 1
  %vm3709 = vcmp.eq.s32.totalorder %v3645, 1
  %vm3710 = vcmp.eq.s32.totalorder %v3646, 1
  %vm3711 = vcmp.eq.s32.totalorder %v3647, 1
  %vm3712 = vcmp.eq.s32.totalorder %v3648, 1
  %vm3713 = vcmp.eq.s32.totalorder %v3649, 1
  %vm3714 = vcmp.eq.s32.totalorder %v3650, 1
  %vm3715 = vcmp.eq.s32.totalorder %v3651, 1
  %vm3716 = vcmp.eq.s32.totalorder %v3652, 1
  %vm3717 = vcmp.eq.s32.totalorder %v3653, 1
  %vm3718 = vcmp.eq.s32.totalorder %v3654, 1
  %vm3719 = vcmp.eq.s32.totalorder %v3655, 1
  %vm3720 = vcmp.eq.s32.totalorder %v3656, 1
  %vm3721 = vcmp.eq.s32.totalorder %v3657, 1
  %vm3722 = vcmp.eq.s32.totalorder %v3658, 1
  %vm3723 = vcmp.eq.s32.totalorder %v3659, 1
  %vm3724 = vcmp.eq.s32.totalorder %v3660, 1
  %vm3725 = vcmp.eq.s32.totalorder %v3661, 1
  %vm3726 = vcmp.eq.s32.totalorder %v3662, 1
  %vm3727 = vcmp.eq.s32.totalorder %v3663, 1
  %vm3728 = vcmp.eq.s32.totalorder %v3664, 1
  %vm3729 = vcmp.eq.s32.totalorder %v3665, 1
  %vm3730 = vcmp.eq.s32.totalorder %v3666, 1
  %vm3731 = vcmp.eq.s32.totalorder %v3667, 1
  %vm3732 = vcmp.eq.s32.totalorder %v3668, 1
  %vm3733 = vcmp.eq.s32.totalorder %v3669, 1
  %vm3734 = vcmp.eq.s32.totalorder %v3670, 1
  %vm3735 = vcmp.eq.s32.totalorder %v3671, 1
  %vm3736 = vcmp.eq.s32.totalorder %v3672, 1
  %vm3737 = vcmp.eq.s32.totalorder %v3673, 1
  %vm3738 = vcmp.eq.s32.totalorder %v3674, 1
  %vm3739 = vcmp.eq.s32.totalorder %v3675, 1
  %vm3740 = vcmp.eq.s32.totalorder %v3676, 1
  %vm3741 = vcmp.eq.s32.totalorder %v3677, 1
  %vm3742 = vcmp.eq.s32.totalorder %v3678, 1
  %vm3743 = vcmp.eq.s32.totalorder %v3679, 1
  %vm3744 = vcmp.eq.s32.totalorder %v3680, 1
  %vm3745 = vcmp.eq.s32.totalorder %v3681, 1
  %vm3746 = vcmp.eq.s32.totalorder %v3682, 1
  %vm3747 = vcmp.eq.s32.totalorder %v3683, 1
  %vm3748 = vcmp.eq.s32.totalorder %v3684, 1
  %vm3749 = vcmp.eq.s32.totalorder %v3685, 1
  %vm3750 = vcmp.eq.s32.totalorder %v3686, 1
  %vm3751 = vcmp.eq.s32.totalorder %v3687, 1
  %vm3752 = vcmp.eq.s32.totalorder %v3688, 1
  %vm3753 = vcmp.eq.s32.totalorder %v3689, 1
  %vm3754 = vcmp.eq.s32.totalorder %v3690, 1
  %vm3755 = vcmp.eq.s32.totalorder %v3691, 1
  %vm3756 = vcmp.eq.s32.totalorder %v3692, 1
  %vm3757 = vcmp.eq.s32.totalorder %v3693, 1
  %vm3758 = vcmp.eq.s32.totalorder %v3694, 1
  %vm3759 = vcmp.eq.s32.totalorder %v3695, 1
  %vm3760 = vcmp.eq.s32.totalorder %v3696, 1
  %vm3761 = vcmp.eq.s32.totalorder %v3697, 1
  %vm3762 = vcmp.eq.s32.totalorder %v3698, 1
  %vm3763 = vcmp.eq.s32.totalorder %v3699, 1
  %vm3764 = vcmp.eq.s32.totalorder %v3700, 1
  %vm3765 = vcmp.eq.s32.totalorder %v3701, 1
  %vm3766 = vcmp.eq.s32.totalorder %v3702, 1
  %vm3767 = vcmp.eq.s32.totalorder %v3703, 1
  %vm3768 = vcmp.eq.s32.totalorder %v3704, 1
  %vm3769 = vcmp.eq.s32.totalorder %v3705, 1
  %vm3770 = vcmp.eq.s32.totalorder %v3706, 1
  %vm3771 = vcmp.eq.s32.totalorder %v3707, 1
  %v3772 = vsel %vm3708, %v1400, 0.0
  %v3773 = vsel %vm3709, %v1399, 0.0
  %v3774 = vsel %vm3710, %v1398, 0.0
  %v3775 = vsel %vm3711, %v1397, 0.0
  %v3776 = vsel %vm3712, %v1396, 0.0
  %v3777 = vsel %vm3713, %v1395, 0.0
  %v3778 = vsel %vm3714, %v1394, 0.0
  %v3779 = vsel %vm3715, %v1393, 0.0
  %v3780 = vsel %vm3716, %v1392, 0.0
  %v3781 = vsel %vm3717, %v1391, 0.0
  %v3782 = vsel %vm3718, %v1390, 0.0
  %v3783 = vsel %vm3719, %v1389, 0.0
  %v3784 = vsel %vm3720, %v1388, 0.0
  %v3785 = vsel %vm3721, %v1387, 0.0
  %v3786 = vsel %vm3722, %v1386, 0.0
  %v3787 = vsel %vm3723, %v1385, 0.0
  %v3788 = vsel %vm3724, %v1384, 0.0
  %v3789 = vsel %vm3725, %v1383, 0.0
  %v3790 = vsel %vm3726, %v1382, 0.0
  %v3791 = vsel %vm3727, %v1381, 0.0
  %v3792 = vsel %vm3728, %v1380, 0.0
  %v3793 = vsel %vm3729, %v1379, 0.0
  %v3794 = vsel %vm3730, %v1378, 0.0
  %v3795 = vsel %vm3731, %v1377, 0.0
  %v3796 = vsel %vm3732, %v1376, 0.0
  %v3797 = vsel %vm3733, %v1375, 0.0
  %v3798 = vsel %vm3734, %v1374, 0.0
  %v3799 = vsel %vm3735, %v1373, 0.0
  %v3800 = vsel %vm3736, %v1372, 0.0
  %v3801 = vsel %vm3737, %v1371, 0.0
  %v3802 = vsel %vm3738, %v1370, 0.0
  %v3803 = vsel %vm3739, %v1369, 0.0
  %v3804 = vsel %vm3740, %v1368, 0.0
  %v3805 = vsel %vm3741, %v1367, 0.0
  %v3806 = vsel %vm3742, %v1366, 0.0
  %v3807 = vsel %vm3743, %v1365, 0.0
  %v3808 = vsel %vm3744, %v1364, 0.0
  %v3809 = vsel %vm3745, %v1363, 0.0
  %v3810 = vsel %vm3746, %v1362, 0.0
  %v3811 = vsel %vm3747, %v1361, 0.0
  %v3812 = vsel %vm3748, %v1360, 0.0
  %v3813 = vsel %vm3749, %v1359, 0.0
  %v3814 = vsel %vm3750, %v1358, 0.0
  %v3815 = vsel %vm3751, %v1357, 0.0
  %v3816 = vsel %vm3752, %v1356, 0.0
  %v3817 = vsel %vm3753, %v1355, 0.0
  %v3818 = vsel %vm3754, %v1354, 0.0
  %v3819 = vsel %vm3755, %v1353, 0.0
  %v3820 = vsel %vm3756, %v1352, 0.0
  %v3821 = vsel %vm3757, %v1351, 0.0
  %v3822 = vsel %vm3758, %v1350, 0.0
  %v3823 = vsel %vm3759, %v1349, 0.0
  %v3824 = vsel %vm3760, %v1348, 0.0
  %v3825 = vsel %vm3761, %v1347, 0.0
  %v3826 = vsel %vm3762, %v1346, 0.0
  %v3827 = vsel %vm3763, %v1345, 0.0
  %v3828 = vsel %vm3764, %v1344, 0.0
  %v3829 = vsel %vm3765, %v1343, 0.0
  %v3830 = vsel %vm3766, %v1342, 0.0
  %v3831 = vsel %vm3767, %v1341, 0.0
  %v3832 = vsel %vm3768, %v1340, 0.0
  %v3833 = vsel %vm3769, %v1339, 0.0
  %v3834 = vsel %vm3770, %v1402, 0.0
  %v3835 = vsel %vm3771, %v1401, 0.0
  %3836 = vrot.lane.b32.xlu0 %v3772, 24
  %v3837 = vpop.permute.xlu0 %3836
  %3838 = vrot.lane.b32.xlu0 %v3773, 24
  %v3839 = vpop.permute.xlu0 %3838
  %3840 = vrot.lane.b32.xlu0 %v3774, 24
  %v3841 = vpop.permute.xlu0 %3840
  %3842 = vrot.lane.b32.xlu0 %v3775, 24
  %v3843 = vpop.permute.xlu0 %3842
  %3844 = vrot.lane.b32.xlu0 %v3776, 24
  %v3845 = vpop.permute.xlu0 %3844
  %3846 = vrot.lane.b32.xlu0 %v3777, 24
  %v3847 = vpop.permute.xlu0 %3846
  %3848 = vrot.lane.b32.xlu0 %v3778, 24
  %v3849 = vpop.permute.xlu0 %3848
  %3850 = vrot.lane.b32.xlu0 %v3779, 24
  %v3851 = vpop.permute.xlu0 %3850
  %3852 = vrot.lane.b32.xlu0 %v3780, 24
  %v3853 = vpop.permute.xlu0 %3852
  %3854 = vrot.lane.b32.xlu0 %v3781, 24
  %v3855 = vpop.permute.xlu0 %3854
  %3856 = vrot.lane.b32.xlu0 %v3782, 24
  %v3857 = vpop.permute.xlu0 %3856
  %3858 = vrot.lane.b32.xlu0 %v3783, 24
  %v3859 = vpop.permute.xlu0 %3858
  %3860 = vrot.lane.b32.xlu0 %v3784, 24
  %v3861 = vpop.permute.xlu0 %3860
  %3862 = vrot.lane.b32.xlu0 %v3785, 24
  %v3863 = vpop.permute.xlu0 %3862
  %3864 = vrot.lane.b32.xlu0 %v3786, 24
  %v3865 = vpop.permute.xlu0 %3864
  %3866 = vrot.lane.b32.xlu0 %v3787, 24
  %v3867 = vpop.permute.xlu0 %3866
  %3868 = vrot.lane.b32.xlu0 %v3788, 24
  %v3869 = vpop.permute.xlu0 %3868
  %3870 = vrot.lane.b32.xlu0 %v3789, 24
  %v3871 = vpop.permute.xlu0 %3870
  %3872 = vrot.lane.b32.xlu0 %v3790, 24
  %v3873 = vpop.permute.xlu0 %3872
  %3874 = vrot.lane.b32.xlu0 %v3791, 24
  %v3875 = vpop.permute.xlu0 %3874
  %3876 = vrot.lane.b32.xlu0 %v3792, 24
  %v3877 = vpop.permute.xlu0 %3876
  %3878 = vrot.lane.b32.xlu0 %v3793, 24
  %v3879 = vpop.permute.xlu0 %3878
  %3880 = vrot.lane.b32.xlu0 %v3794, 24
  %v3881 = vpop.permute.xlu0 %3880
  %3882 = vrot.lane.b32.xlu0 %v3795, 24
  %v3883 = vpop.permute.xlu0 %3882
  %3884 = vrot.lane.b32.xlu0 %v3796, 24
  %v3885 = vpop.permute.xlu0 %3884
  %3886 = vrot.lane.b32.xlu0 %v3797, 24
  %v3887 = vpop.permute.xlu0 %3886
  %3888 = vrot.lane.b32.xlu0 %v3798, 24
  %v3889 = vpop.permute.xlu0 %3888
  %3890 = vrot.lane.b32.xlu0 %v3799, 24
  %v3891 = vpop.permute.xlu0 %3890
  %3892 = vrot.lane.b32.xlu0 %v3800, 24
  %v3893 = vpop.permute.xlu0 %3892
  %3894 = vrot.lane.b32.xlu0 %v3801, 24
  %v3895 = vpop.permute.xlu0 %3894
  %3896 = vrot.lane.b32.xlu0 %v3802, 24
  %v3897 = vpop.permute.xlu0 %3896
  %3898 = vrot.lane.b32.xlu0 %v3803, 24
  %v3899 = vpop.permute.xlu0 %3898
  %3900 = vrot.lane.b32.xlu0 %v3804, 24
  %v3901 = vpop.permute.xlu0 %3900
  %3902 = vrot.lane.b32.xlu0 %v3805, 24
  %v3903 = vpop.permute.xlu0 %3902
  %3904 = vrot.lane.b32.xlu0 %v3806, 24
  %v3905 = vpop.permute.xlu0 %3904
  %3906 = vrot.lane.b32.xlu0 %v3807, 24
  %v3907 = vpop.permute.xlu0 %3906
  %3908 = vrot.lane.b32.xlu0 %v3808, 24
  %v3909 = vpop.permute.xlu0 %3908
  %3910 = vrot.lane.b32.xlu0 %v3809, 24
  %v3911 = vpop.permute.xlu0 %3910
  %3912 = vrot.lane.b32.xlu0 %v3810, 24
  %v3913 = vpop.permute.xlu0 %3912
  %3914 = vrot.lane.b32.xlu0 %v3811, 24
  %v3915 = vpop.permute.xlu0 %3914
  %3916 = vrot.lane.b32.xlu0 %v3812, 24
  %v3917 = vpop.permute.xlu0 %3916
  %3918 = vrot.lane.b32.xlu0 %v3813, 24
  %v3919 = vpop.permute.xlu0 %3918
  %3920 = vrot.lane.b32.xlu0 %v3814, 24
  %v3921 = vpop.permute.xlu0 %3920
  %3922 = vrot.lane.b32.xlu0 %v3815, 24
  %v3923 = vpop.permute.xlu0 %3922
  %3924 = vrot.lane.b32.xlu0 %v3816, 24
  %v3925 = vpop.permute.xlu0 %3924
  %3926 = vrot.lane.b32.xlu0 %v3817, 24
  %v3927 = vpop.permute.xlu0 %3926
  %3928 = vrot.lane.b32.xlu0 %v3818, 24
  %v3929 = vpop.permute.xlu0 %3928
  %3930 = vrot.lane.b32.xlu0 %v3819, 24
  %v3931 = vpop.permute.xlu0 %3930
  %3932 = vrot.lane.b32.xlu0 %v3820, 24
  %v3933 = vpop.permute.xlu0 %3932
  %3934 = vrot.lane.b32.xlu0 %v3821, 24
  %v3935 = vpop.permute.xlu0 %3934
  %3936 = vrot.lane.b32.xlu0 %v3822, 24
  %v3937 = vpop.permute.xlu0 %3936
  %3938 = vrot.lane.b32.xlu0 %v3823, 24
  %v3939 = vpop.permute.xlu0 %3938
  %3940 = vrot.lane.b32.xlu0 %v3824, 24
  %v3941 = vpop.permute.xlu0 %3940
  %3942 = vrot.lane.b32.xlu0 %v3825, 24
  %v3943 = vpop.permute.xlu0 %3942
  %3944 = vrot.lane.b32.xlu0 %v3826, 24
  %v3945 = vpop.permute.xlu0 %3944
  %3946 = vrot.lane.b32.xlu0 %v3827, 24
  %v3947 = vpop.permute.xlu0 %3946
  %3948 = vrot.lane.b32.xlu0 %v3828, 24
  %v3949 = vpop.permute.xlu0 %3948
  %3950 = vrot.lane.b32.xlu0 %v3829, 24
  %v3951 = vpop.permute.xlu0 %3950
  %3952 = vrot.lane.b32.xlu0 %v3830, 24
  %v3953 = vpop.permute.xlu0 %3952
  %3954 = vrot.lane.b32.xlu0 %v3831, 24
  %v3955 = vpop.permute.xlu0 %3954
  %3956 = vrot.lane.b32.xlu0 %v3832, 24
  %v3957 = vpop.permute.xlu0 %3956
  %3958 = vrot.lane.b32.xlu0 %v3833, 24
  %v3959 = vpop.permute.xlu0 %3958
  %3960 = vrot.lane.b32.xlu0 %v3834, 24
  %v3961 = vpop.permute.xlu0 %3960
  %3962 = vrot.lane.b32.xlu0 %v3835, 24
  %v3963 = vpop.permute.xlu0 %3962
  %v3964 = vadd.f32 %v3516, %v3837
  %v3965 = vadd.f32 %v3517, %v3839
  %v3966 = vadd.f32 %v3518, %v3841
  %v3967 = vadd.f32 %v3519, %v3843
  %v3968 = vadd.f32 %v3520, %v3845
  %v3969 = vadd.f32 %v3521, %v3847
  %v3970 = vadd.f32 %v3522, %v3849
  %v3971 = vadd.f32 %v3523, %v3851
  %v3972 = vadd.f32 %v3524, %v3853
  %v3973 = vadd.f32 %v3525, %v3855
  %v3974 = vadd.f32 %v3526, %v3857
  %v3975 = vadd.f32 %v3527, %v3859
  %v3976 = vadd.f32 %v3528, %v3861
  %v3977 = vadd.f32 %v3529, %v3863
  %v3978 = vadd.f32 %v3530, %v3865
  %v3979 = vadd.f32 %v3531, %v3867
  %v3980 = vadd.f32 %v3532, %v3869
  %v3981 = vadd.f32 %v3533, %v3871
  %v3982 = vadd.f32 %v3534, %v3873
  %v3983 = vadd.f32 %v3535, %v3875
  %v3984 = vadd.f32 %v3536, %v3877
  %v3985 = vadd.f32 %v3537, %v3879
  %v3986 = vadd.f32 %v3538, %v3881
  %v3987 = vadd.f32 %v3539, %v3883
  %v3988 = vadd.f32 %v3540, %v3885
  %v3989 = vadd.f32 %v3541, %v3887
  %v3990 = vadd.f32 %v3542, %v3889
  %v3991 = vadd.f32 %v3543, %v3891
  %v3992 = vadd.f32 %v3544, %v3893
  %v3993 = vadd.f32 %v3545, %v3895
  %v3994 = vadd.f32 %v3546, %v3897
  %v3995 = vadd.f32 %v3547, %v3899
  %v3996 = vadd.f32 %v3548, %v3901
  %v3997 = vadd.f32 %v3549, %v3903
  %v3998 = vadd.f32 %v3550, %v3905
  %v3999 = vadd.f32 %v3551, %v3907
  %v4000 = vadd.f32 %v3552, %v3909
  %v4001 = vadd.f32 %v3553, %v3911
  %v4002 = vadd.f32 %v3554, %v3913
  %v4003 = vadd.f32 %v3555, %v3915
  %v4004 = vadd.f32 %v3556, %v3917
  %v4005 = vadd.f32 %v3557, %v3919
  %v4006 = vadd.f32 %v3558, %v3921
  %v4007 = vadd.f32 %v3559, %v3923
  %v4008 = vadd.f32 %v3560, %v3925
  %v4009 = vadd.f32 %v3561, %v3927
  %v4010 = vadd.f32 %v3562, %v3929
  %v4011 = vadd.f32 %v3563, %v3931
  %v4012 = vadd.f32 %v3564, %v3933
  %v4013 = vadd.f32 %v3565, %v3935
  %v4014 = vadd.f32 %v3566, %v3937
  %v4015 = vadd.f32 %v3567, %v3939
  %v4016 = vadd.f32 %v3568, %v3941
  %v4017 = vadd.f32 %v3569, %v3943
  %v4018 = vadd.f32 %v3570, %v3945
  %v4019 = vadd.f32 %v3571, %v3947
  %v4020 = vadd.f32 %v3572, %v3949
  %v4021 = vadd.f32 %v3573, %v3951
  %v4022 = vadd.f32 %v3574, %v3953
  %v4023 = vadd.f32 %v3575, %v3955
  %v4024 = vadd.f32 %v3576, %v3957
  %v4025 = vadd.f32 %v3577, %v3959
  %v4026 = vadd.f32 %v3578, %v3961
  %v4027 = vadd.f32 %v3579, %v3963
  %v4028 = vsel %vm1082, 1, 0
  %v4029 = vsel %vm1083, 1, 0
  %v4030 = vsel %vm1084, 1, 0
  %v4031 = vsel %vm1085, 1, 0
  %v4032 = vsel %vm1086, 1, 0
  %v4033 = vsel %vm1087, 1, 0
  %v4034 = vsel %vm1088, 1, 0
  %v4035 = vsel %vm1089, 1, 0
  %v4036 = vsel %vm1090, 1, 0
  %v4037 = vsel %vm1091, 1, 0
  %v4038 = vsel %vm1092, 1, 0
  %v4039 = vsel %vm1093, 1, 0
  %v4040 = vsel %vm1094, 1, 0
  %v4041 = vsel %vm1095, 1, 0
  %v4042 = vsel %vm1096, 1, 0
  %v4043 = vsel %vm1097, 1, 0
  %v4044 = vsel %vm1098, 1, 0
  %v4045 = vsel %vm1099, 1, 0
  %v4046 = vsel %vm1100, 1, 0
  %v4047 = vsel %vm1101, 1, 0
  %v4048 = vsel %vm1102, 1, 0
  %v4049 = vsel %vm1103, 1, 0
  %v4050 = vsel %vm1104, 1, 0
  %v4051 = vsel %vm1105, 1, 0
  %v4052 = vsel %vm1106, 1, 0
  %v4053 = vsel %vm1107, 1, 0
  %v4054 = vsel %vm1108, 1, 0
  %v4055 = vsel %vm1109, 1, 0
  %v4056 = vsel %vm1110, 1, 0
  %v4057 = vsel %vm1111, 1, 0
  %v4058 = vsel %vm1112, 1, 0
  %v4059 = vsel %vm1113, 1, 0
  %v4060 = vsel %vm1114, 1, 0
  %v4061 = vsel %vm1115, 1, 0
  %v4062 = vsel %vm1116, 1, 0
  %v4063 = vsel %vm1117, 1, 0
  %v4064 = vsel %vm1118, 1, 0
  %v4065 = vsel %vm1119, 1, 0
  %v4066 = vsel %vm1120, 1, 0
  %v4067 = vsel %vm1121, 1, 0
  %v4068 = vsel %vm1122, 1, 0
  %v4069 = vsel %vm1123, 1, 0
  %v4070 = vsel %vm1124, 1, 0
  %v4071 = vsel %vm1125, 1, 0
  %v4072 = vsel %vm1126, 1, 0
  %v4073 = vsel %vm1127, 1, 0
  %v4074 = vsel %vm1128, 1, 0
  %v4075 = vsel %vm1129, 1, 0
  %v4076 = vsel %vm1130, 1, 0
  %v4077 = vsel %vm1131, 1, 0
  %v4078 = vsel %vm1132, 1, 0
  %v4079 = vsel %vm1133, 1, 0
  %v4080 = vsel %vm1134, 1, 0
  %v4081 = vsel %vm1135, 1, 0
  %v4082 = vsel %vm1136, 1, 0
  %v4083 = vsel %vm1137, 1, 0
  %v4084 = vsel %vm1138, 1, 0
  %v4085 = vsel %vm1139, 1, 0
  %v4086 = vsel %vm1140, 1, 0
  %v4087 = vsel %vm1141, 1, 0
  %v4088 = vsel %vm1142, 1, 0
  %v4089 = vsel %vm1143, 1, 0
  %v4090 = vsel %vm1144, 1, 0
  %v4091 = vsel %vm1145, 1, 0
  %vm4092 = vcmp.eq.s32.totalorder %v4028, 1
  %vm4093 = vcmp.eq.s32.totalorder %v4029, 1
  %vm4094 = vcmp.eq.s32.totalorder %v4030, 1
  %vm4095 = vcmp.eq.s32.totalorder %v4031, 1
  %vm4096 = vcmp.eq.s32.totalorder %v4032, 1
  %vm4097 = vcmp.eq.s32.totalorder %v4033, 1
  %vm4098 = vcmp.eq.s32.totalorder %v4034, 1
  %vm4099 = vcmp.eq.s32.totalorder %v4035, 1
  %vm4100 = vcmp.eq.s32.totalorder %v4036, 1
  %vm4101 = vcmp.eq.s32.totalorder %v4037, 1
  %vm4102 = vcmp.eq.s32.totalorder %v4038, 1
  %vm4103 = vcmp.eq.s32.totalorder %v4039, 1
  %vm4104 = vcmp.eq.s32.totalorder %v4040, 1
  %vm4105 = vcmp.eq.s32.totalorder %v4041, 1
  %vm4106 = vcmp.eq.s32.totalorder %v4042, 1
  %vm4107 = vcmp.eq.s32.totalorder %v4043, 1
  %vm4108 = vcmp.eq.s32.totalorder %v4044, 1
  %vm4109 = vcmp.eq.s32.totalorder %v4045, 1
  %vm4110 = vcmp.eq.s32.totalorder %v4046, 1
  %vm4111 = vcmp.eq.s32.totalorder %v4047, 1
  %vm4112 = vcmp.eq.s32.totalorder %v4048, 1
  %vm4113 = vcmp.eq.s32.totalorder %v4049, 1
  %vm4114 = vcmp.eq.s32.totalorder %v4050, 1
  %vm4115 = vcmp.eq.s32.totalorder %v4051, 1
  %vm4116 = vcmp.eq.s32.totalorder %v4052, 1
  %vm4117 = vcmp.eq.s32.totalorder %v4053, 1
  %vm4118 = vcmp.eq.s32.totalorder %v4054, 1
  %vm4119 = vcmp.eq.s32.totalorder %v4055, 1
  %vm4120 = vcmp.eq.s32.totalorder %v4056, 1
  %vm4121 = vcmp.eq.s32.totalorder %v4057, 1
  %vm4122 = vcmp.eq.s32.totalorder %v4058, 1
  %vm4123 = vcmp.eq.s32.totalorder %v4059, 1
  %vm4124 = vcmp.eq.s32.totalorder %v4060, 1
  %vm4125 = vcmp.eq.s32.totalorder %v4061, 1
  %vm4126 = vcmp.eq.s32.totalorder %v4062, 1
  %vm4127 = vcmp.eq.s32.totalorder %v4063, 1
  %vm4128 = vcmp.eq.s32.totalorder %v4064, 1
  %vm4129 = vcmp.eq.s32.totalorder %v4065, 1
  %vm4130 = vcmp.eq.s32.totalorder %v4066, 1
  %vm4131 = vcmp.eq.s32.totalorder %v4067, 1
  %vm4132 = vcmp.eq.s32.totalorder %v4068, 1
  %vm4133 = vcmp.eq.s32.totalorder %v4069, 1
  %vm4134 = vcmp.eq.s32.totalorder %v4070, 1
  %vm4135 = vcmp.eq.s32.totalorder %v4071, 1
  %vm4136 = vcmp.eq.s32.totalorder %v4072, 1
  %vm4137 = vcmp.eq.s32.totalorder %v4073, 1
  %vm4138 = vcmp.eq.s32.totalorder %v4074, 1
  %vm4139 = vcmp.eq.s32.totalorder %v4075, 1
  %vm4140 = vcmp.eq.s32.totalorder %v4076, 1
  %vm4141 = vcmp.eq.s32.totalorder %v4077, 1
  %vm4142 = vcmp.eq.s32.totalorder %v4078, 1
  %vm4143 = vcmp.eq.s32.totalorder %v4079, 1
  %vm4144 = vcmp.eq.s32.totalorder %v4080, 1
  %vm4145 = vcmp.eq.s32.totalorder %v4081, 1
  %vm4146 = vcmp.eq.s32.totalorder %v4082, 1
  %vm4147 = vcmp.eq.s32.totalorder %v4083, 1
  %vm4148 = vcmp.eq.s32.totalorder %v4084, 1
  %vm4149 = vcmp.eq.s32.totalorder %v4085, 1
  %vm4150 = vcmp.eq.s32.totalorder %v4086, 1
  %vm4151 = vcmp.eq.s32.totalorder %v4087, 1
  %vm4152 = vcmp.eq.s32.totalorder %v4088, 1
  %vm4153 = vcmp.eq.s32.totalorder %v4089, 1
  %vm4154 = vcmp.eq.s32.totalorder %v4090, 1
  %vm4155 = vcmp.eq.s32.totalorder %v4091, 1
  %v4156 = vsel %vm4092, %v699, 0.0
  %v4157 = vsel %vm4093, %v700, 0.0
  %v4158 = vsel %vm4094, %v701, 0.0
  %v4159 = vsel %vm4095, %v702, 0.0
  %v4160 = vsel %vm4096, %v703, 0.0
  %v4161 = vsel %vm4097, %v704, 0.0
  %v4162 = vsel %vm4098, %v705, 0.0
  %v4163 = vsel %vm4099, %v706, 0.0
  %v4164 = vsel %vm4100, %v707, 0.0
  %v4165 = vsel %vm4101, %v708, 0.0
  %v4166 = vsel %vm4102, %v709, 0.0
  %v4167 = vsel %vm4103, %v710, 0.0
  %v4168 = vsel %vm4104, %v711, 0.0
  %v4169 = vsel %vm4105, %v712, 0.0
  %v4170 = vsel %vm4106, %v713, 0.0
  %v4171 = vsel %vm4107, %v714, 0.0
  %v4172 = vsel %vm4108, %v715, 0.0
  %v4173 = vsel %vm4109, %v716, 0.0
  %v4174 = vsel %vm4110, %v717, 0.0
  %v4175 = vsel %vm4111, %v718, 0.0
  %v4176 = vsel %vm4112, %v719, 0.0
  %v4177 = vsel %vm4113, %v720, 0.0
  %v4178 = vsel %vm4114, %v721, 0.0
  %v4179 = vsel %vm4115, %v722, 0.0
  %v4180 = vsel %vm4116, %v723, 0.0
  %v4181 = vsel %vm4117, %v724, 0.0
  %v4182 = vsel %vm4118, %v725, 0.0
  %v4183 = vsel %vm4119, %v726, 0.0
  %v4184 = vsel %vm4120, %v727, 0.0
  %v4185 = vsel %vm4121, %v728, 0.0
  %v4186 = vsel %vm4122, %v729, 0.0
  %v4187 = vsel %vm4123, %v730, 0.0
  %v4188 = vsel %vm4124, %v731, 0.0
  %v4189 = vsel %vm4125, %v732, 0.0
  %v4190 = vsel %vm4126, %v733, 0.0
  %v4191 = vsel %vm4127, %v734, 0.0
  %v4192 = vsel %vm4128, %v735, 0.0
  %v4193 = vsel %vm4129, %v736, 0.0
  %v4194 = vsel %vm4130, %v737, 0.0
  %v4195 = vsel %vm4131, %v738, 0.0
  %v4196 = vsel %vm4132, %v739, 0.0
  %v4197 = vsel %vm4133, %v740, 0.0
  %v4198 = vsel %vm4134, %v741, 0.0
  %v4199 = vsel %vm4135, %v742, 0.0
  %v4200 = vsel %vm4136, %v743, 0.0
  %v4201 = vsel %vm4137, %v744, 0.0
  %v4202 = vsel %vm4138, %v745, 0.0
  %v4203 = vsel %vm4139, %v746, 0.0
  %v4204 = vsel %vm4140, %v747, 0.0
  %v4205 = vsel %vm4141, %v748, 0.0
  %v4206 = vsel %vm4142, %v749, 0.0
  %v4207 = vsel %vm4143, %v750, 0.0
  %v4208 = vsel %vm4144, %v751, 0.0
  %v4209 = vsel %vm4145, %v752, 0.0
  %v4210 = vsel %vm4146, %v753, 0.0
  %v4211 = vsel %vm4147, %v754, 0.0
  %v4212 = vsel %vm4148, %v755, 0.0
  %v4213 = vsel %vm4149, %v756, 0.0
  %v4214 = vsel %vm4150, %v757, 0.0
  %v4215 = vsel %vm4151, %v758, 0.0
  %v4216 = vsel %vm4152, %v759, 0.0
  %v4217 = vsel %vm4153, %v760, 0.0
  %v4218 = vsel %vm4154, %v697, 0.0
  %v4219 = vsel %vm4155, %v698, 0.0
  %4220 = vrot.lane.b32.xlu0 %v4156, 28
  %v4221 = vpop.permute.xlu0 %4220
  %4222 = vrot.lane.b32.xlu0 %v4157, 28
  %v4223 = vpop.permute.xlu0 %4222
  %4224 = vrot.lane.b32.xlu0 %v4158, 28
  %v4225 = vpop.permute.xlu0 %4224
  %4226 = vrot.lane.b32.xlu0 %v4159, 28
  %v4227 = vpop.permute.xlu0 %4226
  %4228 = vrot.lane.b32.xlu0 %v4160, 28
  %v4229 = vpop.permute.xlu0 %4228
  %4230 = vrot.lane.b32.xlu0 %v4161, 28
  %v4231 = vpop.permute.xlu0 %4230
  %4232 = vrot.lane.b32.xlu0 %v4162, 28
  %v4233 = vpop.permute.xlu0 %4232
  %4234 = vrot.lane.b32.xlu0 %v4163, 28
  %v4235 = vpop.permute.xlu0 %4234
  %4236 = vrot.lane.b32.xlu0 %v4164, 28
  %v4237 = vpop.permute.xlu0 %4236
  %4238 = vrot.lane.b32.xlu0 %v4165, 28
  %v4239 = vpop.permute.xlu0 %4238
  %4240 = vrot.lane.b32.xlu0 %v4166, 28
  %v4241 = vpop.permute.xlu0 %4240
  %4242 = vrot.lane.b32.xlu0 %v4167, 28
  %v4243 = vpop.permute.xlu0 %4242
  %4244 = vrot.lane.b32.xlu0 %v4168, 28
  %v4245 = vpop.permute.xlu0 %4244
  %4246 = vrot.lane.b32.xlu0 %v4169, 28
  %v4247 = vpop.permute.xlu0 %4246
  %4248 = vrot.lane.b32.xlu0 %v4170, 28
  %v4249 = vpop.permute.xlu0 %4248
  %4250 = vrot.lane.b32.xlu0 %v4171, 28
  %v4251 = vpop.permute.xlu0 %4250
  %4252 = vrot.lane.b32.xlu0 %v4172, 28
  %v4253 = vpop.permute.xlu0 %4252
  %4254 = vrot.lane.b32.xlu0 %v4173, 28
  %v4255 = vpop.permute.xlu0 %4254
  %4256 = vrot.lane.b32.xlu0 %v4174, 28
  %v4257 = vpop.permute.xlu0 %4256
  %4258 = vrot.lane.b32.xlu0 %v4175, 28
  %v4259 = vpop.permute.xlu0 %4258
  %4260 = vrot.lane.b32.xlu0 %v4176, 28
  %v4261 = vpop.permute.xlu0 %4260
  %4262 = vrot.lane.b32.xlu0 %v4177, 28
  %v4263 = vpop.permute.xlu0 %4262
  %4264 = vrot.lane.b32.xlu0 %v4178, 28
  %v4265 = vpop.permute.xlu0 %4264
  %4266 = vrot.lane.b32.xlu0 %v4179, 28
  %v4267 = vpop.permute.xlu0 %4266
  %4268 = vrot.lane.b32.xlu0 %v4180, 28
  %v4269 = vpop.permute.xlu0 %4268
  %4270 = vrot.lane.b32.xlu0 %v4181, 28
  %v4271 = vpop.permute.xlu0 %4270
  %4272 = vrot.lane.b32.xlu0 %v4182, 28
  %v4273 = vpop.permute.xlu0 %4272
  %4274 = vrot.lane.b32.xlu0 %v4183, 28
  %v4275 = vpop.permute.xlu0 %4274
  %4276 = vrot.lane.b32.xlu0 %v4184, 28
  %v4277 = vpop.permute.xlu0 %4276
  %4278 = vrot.lane.b32.xlu0 %v4185, 28
  %v4279 = vpop.permute.xlu0 %4278
  %4280 = vrot.lane.b32.xlu0 %v4186, 28
  %v4281 = vpop.permute.xlu0 %4280
  %4282 = vrot.lane.b32.xlu0 %v4187, 28
  %v4283 = vpop.permute.xlu0 %4282
  %4284 = vrot.lane.b32.xlu0 %v4188, 28
  %v4285 = vpop.permute.xlu0 %4284
  %4286 = vrot.lane.b32.xlu0 %v4189, 28
  %v4287 = vpop.permute.xlu0 %4286
  %4288 = vrot.lane.b32.xlu0 %v4190, 28
  %v4289 = vpop.permute.xlu0 %4288
  %4290 = vrot.lane.b32.xlu0 %v4191, 28
  %v4291 = vpop.permute.xlu0 %4290
  %4292 = vrot.lane.b32.xlu0 %v4192, 28
  %v4293 = vpop.permute.xlu0 %4292
  %4294 = vrot.lane.b32.xlu0 %v4193, 28
  %v4295 = vpop.permute.xlu0 %4294
  %4296 = vrot.lane.b32.xlu0 %v4194, 28
  %v4297 = vpop.permute.xlu0 %4296
  %4298 = vrot.lane.b32.xlu0 %v4195, 28
  %v4299 = vpop.permute.xlu0 %4298
  %4300 = vrot.lane.b32.xlu0 %v4196, 28
  %v4301 = vpop.permute.xlu0 %4300
  %4302 = vrot.lane.b32.xlu0 %v4197, 28
  %v4303 = vpop.permute.xlu0 %4302
  %4304 = vrot.lane.b32.xlu0 %v4198, 28
  %v4305 = vpop.permute.xlu0 %4304
  %4306 = vrot.lane.b32.xlu0 %v4199, 28
  %v4307 = vpop.permute.xlu0 %4306
  %4308 = vrot.lane.b32.xlu0 %v4200, 28
  %v4309 = vpop.permute.xlu0 %4308
  %4310 = vrot.lane.b32.xlu0 %v4201, 28
  %v4311 = vpop.permute.xlu0 %4310
  %4312 = vrot.lane.b32.xlu0 %v4202, 28
  %v4313 = vpop.permute.xlu0 %4312
  %4314 = vrot.lane.b32.xlu0 %v4203, 28
  %v4315 = vpop.permute.xlu0 %4314
  %4316 = vrot.lane.b32.xlu0 %v4204, 28
  %v4317 = vpop.permute.xlu0 %4316
  %4318 = vrot.lane.b32.xlu0 %v4205, 28
  %v4319 = vpop.permute.xlu0 %4318
  %4320 = vrot.lane.b32.xlu0 %v4206, 28
  %v4321 = vpop.permute.xlu0 %4320
  %4322 = vrot.lane.b32.xlu0 %v4207, 28
  %v4323 = vpop.permute.xlu0 %4322
  %4324 = vrot.lane.b32.xlu0 %v4208, 28
  %v4325 = vpop.permute.xlu0 %4324
  %4326 = vrot.lane.b32.xlu0 %v4209, 28
  %v4327 = vpop.permute.xlu0 %4326
  %4328 = vrot.lane.b32.xlu0 %v4210, 28
  %v4329 = vpop.permute.xlu0 %4328
  %4330 = vrot.lane.b32.xlu0 %v4211, 28
  %v4331 = vpop.permute.xlu0 %4330
  %4332 = vrot.lane.b32.xlu0 %v4212, 28
  %v4333 = vpop.permute.xlu0 %4332
  %4334 = vrot.lane.b32.xlu0 %v4213, 28
  %v4335 = vpop.permute.xlu0 %4334
  %4336 = vrot.lane.b32.xlu0 %v4214, 28
  %v4337 = vpop.permute.xlu0 %4336
  %4338 = vrot.lane.b32.xlu0 %v4215, 28
  %v4339 = vpop.permute.xlu0 %4338
  %4340 = vrot.lane.b32.xlu0 %v4216, 28
  %v4341 = vpop.permute.xlu0 %4340
  %4342 = vrot.lane.b32.xlu0 %v4217, 28
  %v4343 = vpop.permute.xlu0 %4342
  %4344 = vrot.lane.b32.xlu0 %v4218, 28
  %v4345 = vpop.permute.xlu0 %4344
  %4346 = vrot.lane.b32.xlu0 %v4219, 28
  %v4347 = vpop.permute.xlu0 %4346
  %v4348 = vadd.f32 %v3964, %v4221
  %v4349 = vadd.f32 %v3965, %v4223
  %v4350 = vadd.f32 %v3966, %v4225
  %v4351 = vadd.f32 %v3967, %v4227
  %v4352 = vadd.f32 %v3968, %v4229
  %v4353 = vadd.f32 %v3969, %v4231
  %v4354 = vadd.f32 %v3970, %v4233
  %v4355 = vadd.f32 %v3971, %v4235
  %v4356 = vadd.f32 %v3972, %v4237
  %v4357 = vadd.f32 %v3973, %v4239
  %v4358 = vadd.f32 %v3974, %v4241
  %v4359 = vadd.f32 %v3975, %v4243
  %v4360 = vadd.f32 %v3976, %v4245
  %v4361 = vadd.f32 %v3977, %v4247
  %v4362 = vadd.f32 %v3978, %v4249
  %v4363 = vadd.f32 %v3979, %v4251
  %v4364 = vadd.f32 %v3980, %v4253
  %v4365 = vadd.f32 %v3981, %v4255
  %v4366 = vadd.f32 %v3982, %v4257
  %v4367 = vadd.f32 %v3983, %v4259
  %v4368 = vadd.f32 %v3984, %v4261
  %v4369 = vadd.f32 %v3985, %v4263
  %v4370 = vadd.f32 %v3986, %v4265
  %v4371 = vadd.f32 %v3987, %v4267
  %v4372 = vadd.f32 %v3988, %v4269
  %v4373 = vadd.f32 %v3989, %v4271
  %v4374 = vadd.f32 %v3990, %v4273
  %v4375 = vadd.f32 %v3991, %v4275
  %v4376 = vadd.f32 %v3992, %v4277
  %v4377 = vadd.f32 %v3993, %v4279
  %v4378 = vadd.f32 %v3994, %v4281
  %v4379 = vadd.f32 %v3995, %v4283
  %v4380 = vadd.f32 %v3996, %v4285
  %v4381 = vadd.f32 %v3997, %v4287
  %v4382 = vadd.f32 %v3998, %v4289
  %v4383 = vadd.f32 %v3999, %v4291
  %v4384 = vadd.f32 %v4000, %v4293
  %v4385 = vadd.f32 %v4001, %v4295
  %v4386 = vadd.f32 %v4002, %v4297
  %v4387 = vadd.f32 %v4003, %v4299
  %v4388 = vadd.f32 %v4004, %v4301
  %v4389 = vadd.f32 %v4005, %v4303
  %v4390 = vadd.f32 %v4006, %v4305
  %v4391 = vadd.f32 %v4007, %v4307
  %v4392 = vadd.f32 %v4008, %v4309
  %v4393 = vadd.f32 %v4009, %v4311
  %v4394 = vadd.f32 %v4010, %v4313
  %v4395 = vadd.f32 %v4011, %v4315
  %v4396 = vadd.f32 %v4012, %v4317
  %v4397 = vadd.f32 %v4013, %v4319
  %v4398 = vadd.f32 %v4014, %v4321
  %v4399 = vadd.f32 %v4015, %v4323
  %v4400 = vadd.f32 %v4016, %v4325
  %v4401 = vadd.f32 %v4017, %v4327
  %v4402 = vadd.f32 %v4018, %v4329
  %v4403 = vadd.f32 %v4019, %v4331
  %v4404 = vadd.f32 %v4020, %v4333
  %v4405 = vadd.f32 %v4021, %v4335
  %v4406 = vadd.f32 %v4022, %v4337
  %v4407 = vadd.f32 %v4023, %v4339
  %v4408 = vadd.f32 %v4024, %v4341
  %v4409 = vadd.f32 %v4025, %v4343
  %v4410 = vadd.f32 %v4026, %v4345
  %v4411 = vadd.f32 %v4027, %v4347
  %vm4412 = vmand %vm1082, %vm1210
  %vm4413 = vmand %vm1083, %vm1211
  %vm4414 = vmand %vm1084, %vm1212
  %vm4415 = vmand %vm1085, %vm1213
  %vm4416 = vmand %vm1086, %vm1214
  %vm4417 = vmand %vm1087, %vm1215
  %vm4418 = vmand %vm1088, %vm1216
  %vm4419 = vmand %vm1089, %vm1217
  %vm4420 = vmand %vm1090, %vm1218
  %vm4421 = vmand %vm1091, %vm1219
  %vm4422 = vmand %vm1092, %vm1220
  %vm4423 = vmand %vm1093, %vm1221
  %vm4424 = vmand %vm1094, %vm1222
  %vm4425 = vmand %vm1095, %vm1223
  %vm4426 = vmand %vm1096, %vm1224
  %vm4427 = vmand %vm1097, %vm1225
  %vm4428 = vmand %vm1098, %vm1226
  %vm4429 = vmand %vm1099, %vm1227
  %vm4430 = vmand %vm1100, %vm1228
  %vm4431 = vmand %vm1101, %vm1229
  %vm4432 = vmand %vm1102, %vm1230
  %vm4433 = vmand %vm1103, %vm1231
  %vm4434 = vmand %vm1104, %vm1232
  %vm4435 = vmand %vm1105, %vm1233
  %vm4436 = vmand %vm1106, %vm1234
  %vm4437 = vmand %vm1107, %vm1235
  %vm4438 = vmand %vm1108, %vm1236
  %vm4439 = vmand %vm1109, %vm1237
  %vm4440 = vmand %vm1110, %vm1238
  %vm4441 = vmand %vm1111, %vm1239
  %vm4442 = vmand %vm1112, %vm1240
  %vm4443 = vmand %vm1113, %vm1241
  %vm4444 = vmand %vm1114, %vm1242
  %vm4445 = vmand %vm1115, %vm1243
  %vm4446 = vmand %vm1116, %vm1244
  %vm4447 = vmand %vm1117, %vm1245
  %vm4448 = vmand %vm1118, %vm1246
  %vm4449 = vmand %vm1119, %vm1247
  %vm4450 = vmand %vm1120, %vm1248
  %vm4451 = vmand %vm1121, %vm1249
  %vm4452 = vmand %vm1122, %vm1250
  %vm4453 = vmand %vm1123, %vm1251
  %vm4454 = vmand %vm1124, %vm1252
  %vm4455 = vmand %vm1125, %vm1253
  %vm4456 = vmand %vm1126, %vm1254
  %vm4457 = vmand %vm1127, %vm1255
  %vm4458 = vmand %vm1128, %vm1256
  %vm4459 = vmand %vm1129, %vm1257
  %vm4460 = vmand %vm1130, %vm1258
  %vm4461 = vmand %vm1131, %vm1259
  %vm4462 = vmand %vm1132, %vm1260
  %vm4463 = vmand %vm1133, %vm1261
  %vm4464 = vmand %vm1134, %vm1262
  %vm4465 = vmand %vm1135, %vm1263
  %vm4466 = vmand %vm1136, %vm1264
  %vm4467 = vmand %vm1137, %vm1265
  %vm4468 = vmand %vm1138, %vm1266
  %vm4469 = vmand %vm1139, %vm1267
  %vm4470 = vmand %vm1140, %vm1268
  %vm4471 = vmand %vm1141, %vm1269
  %vm4472 = vmand %vm1142, %vm1270
  %vm4473 = vmand %vm1143, %vm1271
  %vm4474 = vmand %vm1144, %vm1272
  %vm4475 = vmand %vm1145, %vm1273
  %v4476 = vsel %vm4412, 1, 0
  %v4477 = vsel %vm4413, 1, 0
  %v4478 = vsel %vm4414, 1, 0
  %v4479 = vsel %vm4415, 1, 0
  %v4480 = vsel %vm4416, 1, 0
  %v4481 = vsel %vm4417, 1, 0
  %v4482 = vsel %vm4418, 1, 0
  %v4483 = vsel %vm4419, 1, 0
  %v4484 = vsel %vm4420, 1, 0
  %v4485 = vsel %vm4421, 1, 0
  %v4486 = vsel %vm4422, 1, 0
  %v4487 = vsel %vm4423, 1, 0
  %v4488 = vsel %vm4424, 1, 0
  %v4489 = vsel %vm4425, 1, 0
  %v4490 = vsel %vm4426, 1, 0
  %v4491 = vsel %vm4427, 1, 0
  %v4492 = vsel %vm4428, 1, 0
  %v4493 = vsel %vm4429, 1, 0
  %v4494 = vsel %vm4430, 1, 0
  %v4495 = vsel %vm4431, 1, 0
  %v4496 = vsel %vm4432, 1, 0
  %v4497 = vsel %vm4433, 1, 0
  %v4498 = vsel %vm4434, 1, 0
  %v4499 = vsel %vm4435, 1, 0
  %v4500 = vsel %vm4436, 1, 0
  %v4501 = vsel %vm4437, 1, 0
  %v4502 = vsel %vm4438, 1, 0
  %v4503 = vsel %vm4439, 1, 0
  %v4504 = vsel %vm4440, 1, 0
  %v4505 = vsel %vm4441, 1, 0
  %v4506 = vsel %vm4442, 1, 0
  %v4507 = vsel %vm4443, 1, 0
  %v4508 = vsel %vm4444, 1, 0
  %v4509 = vsel %vm4445, 1, 0
  %v4510 = vsel %vm4446, 1, 0
  %v4511 = vsel %vm4447, 1, 0
  %v4512 = vsel %vm4448, 1, 0
  %v4513 = vsel %vm4449, 1, 0
  %v4514 = vsel %vm4450, 1, 0
  %v4515 = vsel %vm4451, 1, 0
  %v4516 = vsel %vm4452, 1, 0
  %v4517 = vsel %vm4453, 1, 0
  %v4518 = vsel %vm4454, 1, 0
  %v4519 = vsel %vm4455, 1, 0
  %v4520 = vsel %vm4456, 1, 0
  %v4521 = vsel %vm4457, 1, 0
  %v4522 = vsel %vm4458, 1, 0
  %v4523 = vsel %vm4459, 1, 0
  %v4524 = vsel %vm4460, 1, 0
  %v4525 = vsel %vm4461, 1, 0
  %v4526 = vsel %vm4462, 1, 0
  %v4527 = vsel %vm4463, 1, 0
  %v4528 = vsel %vm4464, 1, 0
  %v4529 = vsel %vm4465, 1, 0
  %v4530 = vsel %vm4466, 1, 0
  %v4531 = vsel %vm4467, 1, 0
  %v4532 = vsel %vm4468, 1, 0
  %v4533 = vsel %vm4469, 1, 0
  %v4534 = vsel %vm4470, 1, 0
  %v4535 = vsel %vm4471, 1, 0
  %v4536 = vsel %vm4472, 1, 0
  %v4537 = vsel %vm4473, 1, 0
  %v4538 = vsel %vm4474, 1, 0
  %v4539 = vsel %vm4475, 1, 0
  %vm4540 = vcmp.eq.s32.totalorder %v4476, 1
  %vm4541 = vcmp.eq.s32.totalorder %v4477, 1
  %vm4542 = vcmp.eq.s32.totalorder %v4478, 1
  %vm4543 = vcmp.eq.s32.totalorder %v4479, 1
  %vm4544 = vcmp.eq.s32.totalorder %v4480, 1
  %vm4545 = vcmp.eq.s32.totalorder %v4481, 1
  %vm4546 = vcmp.eq.s32.totalorder %v4482, 1
  %vm4547 = vcmp.eq.s32.totalorder %v4483, 1
  %vm4548 = vcmp.eq.s32.totalorder %v4484, 1
  %vm4549 = vcmp.eq.s32.totalorder %v4485, 1
  %vm4550 = vcmp.eq.s32.totalorder %v4486, 1
  %vm4551 = vcmp.eq.s32.totalorder %v4487, 1
  %vm4552 = vcmp.eq.s32.totalorder %v4488, 1
  %vm4553 = vcmp.eq.s32.totalorder %v4489, 1
  %vm4554 = vcmp.eq.s32.totalorder %v4490, 1
  %vm4555 = vcmp.eq.s32.totalorder %v4491, 1
  %vm4556 = vcmp.eq.s32.totalorder %v4492, 1
  %vm4557 = vcmp.eq.s32.totalorder %v4493, 1
  %vm4558 = vcmp.eq.s32.totalorder %v4494, 1
  %vm4559 = vcmp.eq.s32.totalorder %v4495, 1
  %vm4560 = vcmp.eq.s32.totalorder %v4496, 1
  %vm4561 = vcmp.eq.s32.totalorder %v4497, 1
  %vm4562 = vcmp.eq.s32.totalorder %v4498, 1
  %vm4563 = vcmp.eq.s32.totalorder %v4499, 1
  %vm4564 = vcmp.eq.s32.totalorder %v4500, 1
  %vm4565 = vcmp.eq.s32.totalorder %v4501, 1
  %vm4566 = vcmp.eq.s32.totalorder %v4502, 1
  %vm4567 = vcmp.eq.s32.totalorder %v4503, 1
  %vm4568 = vcmp.eq.s32.totalorder %v4504, 1
  %vm4569 = vcmp.eq.s32.totalorder %v4505, 1
  %vm4570 = vcmp.eq.s32.totalorder %v4506, 1
  %vm4571 = vcmp.eq.s32.totalorder %v4507, 1
  %vm4572 = vcmp.eq.s32.totalorder %v4508, 1
  %vm4573 = vcmp.eq.s32.totalorder %v4509, 1
  %vm4574 = vcmp.eq.s32.totalorder %v4510, 1
  %vm4575 = vcmp.eq.s32.totalorder %v4511, 1
  %vm4576 = vcmp.eq.s32.totalorder %v4512, 1
  %vm4577 = vcmp.eq.s32.totalorder %v4513, 1
  %vm4578 = vcmp.eq.s32.totalorder %v4514, 1
  %vm4579 = vcmp.eq.s32.totalorder %v4515, 1
  %vm4580 = vcmp.eq.s32.totalorder %v4516, 1
  %vm4581 = vcmp.eq.s32.totalorder %v4517, 1
  %vm4582 = vcmp.eq.s32.totalorder %v4518, 1
  %vm4583 = vcmp.eq.s32.totalorder %v4519, 1
  %vm4584 = vcmp.eq.s32.totalorder %v4520, 1
  %vm4585 = vcmp.eq.s32.totalorder %v4521, 1
  %vm4586 = vcmp.eq.s32.totalorder %v4522, 1
  %vm4587 = vcmp.eq.s32.totalorder %v4523, 1
  %vm4588 = vcmp.eq.s32.totalorder %v4524, 1
  %vm4589 = vcmp.eq.s32.totalorder %v4525, 1
  %vm4590 = vcmp.eq.s32.totalorder %v4526, 1
  %vm4591 = vcmp.eq.s32.totalorder %v4527, 1
  %vm4592 = vcmp.eq.s32.totalorder %v4528, 1
  %vm4593 = vcmp.eq.s32.totalorder %v4529, 1
  %vm4594 = vcmp.eq.s32.totalorder %v4530, 1
  %vm4595 = vcmp.eq.s32.totalorder %v4531, 1
  %vm4596 = vcmp.eq.s32.totalorder %v4532, 1
  %vm4597 = vcmp.eq.s32.totalorder %v4533, 1
  %vm4598 = vcmp.eq.s32.totalorder %v4534, 1
  %vm4599 = vcmp.eq.s32.totalorder %v4535, 1
  %vm4600 = vcmp.eq.s32.totalorder %v4536, 1
  %vm4601 = vcmp.eq.s32.totalorder %v4537, 1
  %vm4602 = vcmp.eq.s32.totalorder %v4538, 1
  %vm4603 = vcmp.eq.s32.totalorder %v4539, 1
  %v4604 = vsel %vm4540, %v2168, 0.0
  %v4605 = vsel %vm4541, %v2167, 0.0
  %v4606 = vsel %vm4542, %v2166, 0.0
  %v4607 = vsel %vm4543, %v2165, 0.0
  %v4608 = vsel %vm4544, %v2164, 0.0
  %v4609 = vsel %vm4545, %v2163, 0.0
  %v4610 = vsel %vm4546, %v2162, 0.0
  %v4611 = vsel %vm4547, %v2161, 0.0
  %v4612 = vsel %vm4548, %v2160, 0.0
  %v4613 = vsel %vm4549, %v2159, 0.0
  %v4614 = vsel %vm4550, %v2158, 0.0
  %v4615 = vsel %vm4551, %v2157, 0.0
  %v4616 = vsel %vm4552, %v2156, 0.0
  %v4617 = vsel %vm4553, %v2155, 0.0
  %v4618 = vsel %vm4554, %v2154, 0.0
  %v4619 = vsel %vm4555, %v2153, 0.0
  %v4620 = vsel %vm4556, %v2152, 0.0
  %v4621 = vsel %vm4557, %v2151, 0.0
  %v4622 = vsel %vm4558, %v2150, 0.0
  %v4623 = vsel %vm4559, %v2149, 0.0
  %v4624 = vsel %vm4560, %v2148, 0.0
  %v4625 = vsel %vm4561, %v2147, 0.0
  %v4626 = vsel %vm4562, %v2146, 0.0
  %v4627 = vsel %vm4563, %v2145, 0.0
  %v4628 = vsel %vm4564, %v2144, 0.0
  %v4629 = vsel %vm4565, %v2143, 0.0
  %v4630 = vsel %vm4566, %v2142, 0.0
  %v4631 = vsel %vm4567, %v2141, 0.0
  %v4632 = vsel %vm4568, %v2140, 0.0
  %v4633 = vsel %vm4569, %v2139, 0.0
  %v4634 = vsel %vm4570, %v2138, 0.0
  %v4635 = vsel %vm4571, %v2137, 0.0
  %v4636 = vsel %vm4572, %v2136, 0.0
  %v4637 = vsel %vm4573, %v2135, 0.0
  %v4638 = vsel %vm4574, %v2134, 0.0
  %v4639 = vsel %vm4575, %v2133, 0.0
  %v4640 = vsel %vm4576, %v2132, 0.0
  %v4641 = vsel %vm4577, %v2131, 0.0
  %v4642 = vsel %vm4578, %v2130, 0.0
  %v4643 = vsel %vm4579, %v2129, 0.0
  %v4644 = vsel %vm4580, %v2128, 0.0
  %v4645 = vsel %vm4581, %v2127, 0.0
  %v4646 = vsel %vm4582, %v2126, 0.0
  %v4647 = vsel %vm4583, %v2125, 0.0
  %v4648 = vsel %vm4584, %v2124, 0.0
  %v4649 = vsel %vm4585, %v2123, 0.0
  %v4650 = vsel %vm4586, %v2122, 0.0
  %v4651 = vsel %vm4587, %v2121, 0.0
  %v4652 = vsel %vm4588, %v2120, 0.0
  %v4653 = vsel %vm4589, %v2119, 0.0
  %v4654 = vsel %vm4590, %v2118, 0.0
  %v4655 = vsel %vm4591, %v2117, 0.0
  %v4656 = vsel %vm4592, %v2116, 0.0
  %v4657 = vsel %vm4593, %v2115, 0.0
  %v4658 = vsel %vm4594, %v2114, 0.0
  %v4659 = vsel %vm4595, %v2113, 0.0
  %v4660 = vsel %vm4596, %v2112, 0.0
  %v4661 = vsel %vm4597, %v2111, 0.0
  %v4662 = vsel %vm4598, %v2110, 0.0
  %v4663 = vsel %vm4599, %v2109, 0.0
  %v4664 = vsel %vm4600, %v2108, 0.0
  %v4665 = vsel %vm4601, %v2171, 0.0
  %v4666 = vsel %vm4602, %v2170, 0.0
  %v4667 = vsel %vm4603, %v2169, 0.0
  %4668 = vrot.lane.b32.xlu0 %v4604, 32
  %v4669 = vpop.permute.xlu0 %4668
  %4670 = vrot.lane.b32.xlu0 %v4605, 32
  %v4671 = vpop.permute.xlu0 %4670
  %4672 = vrot.lane.b32.xlu0 %v4606, 32
  %v4673 = vpop.permute.xlu0 %4672
  %4674 = vrot.lane.b32.xlu0 %v4607, 32
  %v4675 = vpop.permute.xlu0 %4674
  %4676 = vrot.lane.b32.xlu0 %v4608, 32
  %v4677 = vpop.permute.xlu0 %4676
  %4678 = vrot.lane.b32.xlu0 %v4609, 32
  %v4679 = vpop.permute.xlu0 %4678
  %4680 = vrot.lane.b32.xlu0 %v4610, 32
  %v4681 = vpop.permute.xlu0 %4680
  %4682 = vrot.lane.b32.xlu0 %v4611, 32
  %v4683 = vpop.permute.xlu0 %4682
  %4684 = vrot.lane.b32.xlu0 %v4612, 32
  %v4685 = vpop.permute.xlu0 %4684
  %4686 = vrot.lane.b32.xlu0 %v4613, 32
  %v4687 = vpop.permute.xlu0 %4686
  %4688 = vrot.lane.b32.xlu0 %v4614, 32
  %v4689 = vpop.permute.xlu0 %4688
  %4690 = vrot.lane.b32.xlu0 %v4615, 32
  %v4691 = vpop.permute.xlu0 %4690
  %4692 = vrot.lane.b32.xlu0 %v4616, 32
  %v4693 = vpop.permute.xlu0 %4692
  %4694 = vrot.lane.b32.xlu0 %v4617, 32
  %v4695 = vpop.permute.xlu0 %4694
  %4696 = vrot.lane.b32.xlu0 %v4618, 32
  %v4697 = vpop.permute.xlu0 %4696
  %4698 = vrot.lane.b32.xlu0 %v4619, 32
  %v4699 = vpop.permute.xlu0 %4698
  %4700 = vrot.lane.b32.xlu0 %v4620, 32
  %v4701 = vpop.permute.xlu0 %4700
  %4702 = vrot.lane.b32.xlu0 %v4621, 32
  %v4703 = vpop.permute.xlu0 %4702
  %4704 = vrot.lane.b32.xlu0 %v4622, 32
  %v4705 = vpop.permute.xlu0 %4704
  %4706 = vrot.lane.b32.xlu0 %v4623, 32
  %v4707 = vpop.permute.xlu0 %4706
  %4708 = vrot.lane.b32.xlu0 %v4624, 32
  %v4709 = vpop.permute.xlu0 %4708
  %4710 = vrot.lane.b32.xlu0 %v4625, 32
  %v4711 = vpop.permute.xlu0 %4710
  %4712 = vrot.lane.b32.xlu0 %v4626, 32
  %v4713 = vpop.permute.xlu0 %4712
  %4714 = vrot.lane.b32.xlu0 %v4627, 32
  %v4715 = vpop.permute.xlu0 %4714
  %4716 = vrot.lane.b32.xlu0 %v4628, 32
  %v4717 = vpop.permute.xlu0 %4716
  %4718 = vrot.lane.b32.xlu0 %v4629, 32
  %v4719 = vpop.permute.xlu0 %4718
  %4720 = vrot.lane.b32.xlu0 %v4630, 32
  %v4721 = vpop.permute.xlu0 %4720
  %4722 = vrot.lane.b32.xlu0 %v4631, 32
  %v4723 = vpop.permute.xlu0 %4722
  %4724 = vrot.lane.b32.xlu0 %v4632, 32
  %v4725 = vpop.permute.xlu0 %4724
  %4726 = vrot.lane.b32.xlu0 %v4633, 32
  %v4727 = vpop.permute.xlu0 %4726
  %4728 = vrot.lane.b32.xlu0 %v4634, 32
  %v4729 = vpop.permute.xlu0 %4728
  %4730 = vrot.lane.b32.xlu0 %v4635, 32
  %v4731 = vpop.permute.xlu0 %4730
  %4732 = vrot.lane.b32.xlu0 %v4636, 32
  %v4733 = vpop.permute.xlu0 %4732
  %4734 = vrot.lane.b32.xlu0 %v4637, 32
  %v4735 = vpop.permute.xlu0 %4734
  %4736 = vrot.lane.b32.xlu0 %v4638, 32
  %v4737 = vpop.permute.xlu0 %4736
  %4738 = vrot.lane.b32.xlu0 %v4639, 32
  %v4739 = vpop.permute.xlu0 %4738
  %4740 = vrot.lane.b32.xlu0 %v4640, 32
  %v4741 = vpop.permute.xlu0 %4740
  %4742 = vrot.lane.b32.xlu0 %v4641, 32
  %v4743 = vpop.permute.xlu0 %4742
  %4744 = vrot.lane.b32.xlu0 %v4642, 32
  %v4745 = vpop.permute.xlu0 %4744
  %4746 = vrot.lane.b32.xlu0 %v4643, 32
  %v4747 = vpop.permute.xlu0 %4746
  %4748 = vrot.lane.b32.xlu0 %v4644, 32
  %v4749 = vpop.permute.xlu0 %4748
  %4750 = vrot.lane.b32.xlu0 %v4645, 32
  %v4751 = vpop.permute.xlu0 %4750
  %4752 = vrot.lane.b32.xlu0 %v4646, 32
  %v4753 = vpop.permute.xlu0 %4752
  %4754 = vrot.lane.b32.xlu0 %v4647, 32
  %v4755 = vpop.permute.xlu0 %4754
  %4756 = vrot.lane.b32.xlu0 %v4648, 32
  %v4757 = vpop.permute.xlu0 %4756
  %4758 = vrot.lane.b32.xlu0 %v4649, 32
  %v4759 = vpop.permute.xlu0 %4758
  %4760 = vrot.lane.b32.xlu0 %v4650, 32
  %v4761 = vpop.permute.xlu0 %4760
  %4762 = vrot.lane.b32.xlu0 %v4651, 32
  %v4763 = vpop.permute.xlu0 %4762
  %4764 = vrot.lane.b32.xlu0 %v4652, 32
  %v4765 = vpop.permute.xlu0 %4764
  %4766 = vrot.lane.b32.xlu0 %v4653, 32
  %v4767 = vpop.permute.xlu0 %4766
  %4768 = vrot.lane.b32.xlu0 %v4654, 32
  %v4769 = vpop.permute.xlu0 %4768
  %4770 = vrot.lane.b32.xlu0 %v4655, 32
  %v4771 = vpop.permute.xlu0 %4770
  %4772 = vrot.lane.b32.xlu0 %v4656, 32
  %v4773 = vpop.permute.xlu0 %4772
  %4774 = vrot.lane.b32.xlu0 %v4657, 32
  %v4775 = vpop.permute.xlu0 %4774
  %4776 = vrot.lane.b32.xlu0 %v4658, 32
  %v4777 = vpop.permute.xlu0 %4776
  %4778 = vrot.lane.b32.xlu0 %v4659, 32
  %v4779 = vpop.permute.xlu0 %4778
  %4780 = vrot.lane.b32.xlu0 %v4660, 32
  %v4781 = vpop.permute.xlu0 %4780
  %4782 = vrot.lane.b32.xlu0 %v4661, 32
  %v4783 = vpop.permute.xlu0 %4782
  %4784 = vrot.lane.b32.xlu0 %v4662, 32
  %v4785 = vpop.permute.xlu0 %4784
  %4786 = vrot.lane.b32.xlu0 %v4663, 32
  %v4787 = vpop.permute.xlu0 %4786
  %4788 = vrot.lane.b32.xlu0 %v4664, 32
  %v4789 = vpop.permute.xlu0 %4788
  %4790 = vrot.lane.b32.xlu0 %v4665, 32
  %v4791 = vpop.permute.xlu0 %4790
  %4792 = vrot.lane.b32.xlu0 %v4666, 32
  %v4793 = vpop.permute.xlu0 %4792
  %4794 = vrot.lane.b32.xlu0 %v4667, 32
  %v4795 = vpop.permute.xlu0 %4794
  %v4796 = vadd.f32 %v4348, %v4669
  %v4797 = vadd.f32 %v4349, %v4671
  %v4798 = vadd.f32 %v4350, %v4673
  %v4799 = vadd.f32 %v4351, %v4675
  %v4800 = vadd.f32 %v4352, %v4677
  %v4801 = vadd.f32 %v4353, %v4679
  %v4802 = vadd.f32 %v4354, %v4681
  %v4803 = vadd.f32 %v4355, %v4683
  %v4804 = vadd.f32 %v4356, %v4685
  %v4805 = vadd.f32 %v4357, %v4687
  %v4806 = vadd.f32 %v4358, %v4689
  %v4807 = vadd.f32 %v4359, %v4691
  %v4808 = vadd.f32 %v4360, %v4693
  %v4809 = vadd.f32 %v4361, %v4695
  %v4810 = vadd.f32 %v4362, %v4697
  %v4811 = vadd.f32 %v4363, %v4699
  %v4812 = vadd.f32 %v4364, %v4701
  %v4813 = vadd.f32 %v4365, %v4703
  %v4814 = vadd.f32 %v4366, %v4705
  %v4815 = vadd.f32 %v4367, %v4707
  %v4816 = vadd.f32 %v4368, %v4709
  %v4817 = vadd.f32 %v4369, %v4711
  %v4818 = vadd.f32 %v4370, %v4713
  %v4819 = vadd.f32 %v4371, %v4715
  %v4820 = vadd.f32 %v4372, %v4717
  %v4821 = vadd.f32 %v4373, %v4719
  %v4822 = vadd.f32 %v4374, %v4721
  %v4823 = vadd.f32 %v4375, %v4723
  %v4824 = vadd.f32 %v4376, %v4725
  %v4825 = vadd.f32 %v4377, %v4727
  %v4826 = vadd.f32 %v4378, %v4729
  %v4827 = vadd.f32 %v4379, %v4731
  %v4828 = vadd.f32 %v4380, %v4733
  %v4829 = vadd.f32 %v4381, %v4735
  %v4830 = vadd.f32 %v4382, %v4737
  %v4831 = vadd.f32 %v4383, %v4739
  %v4832 = vadd.f32 %v4384, %v4741
  %v4833 = vadd.f32 %v4385, %v4743
  %v4834 = vadd.f32 %v4386, %v4745
  %v4835 = vadd.f32 %v4387, %v4747
  %v4836 = vadd.f32 %v4388, %v4749
  %v4837 = vadd.f32 %v4389, %v4751
  %v4838 = vadd.f32 %v4390, %v4753
  %v4839 = vadd.f32 %v4391, %v4755
  %v4840 = vadd.f32 %v4392, %v4757
  %v4841 = vadd.f32 %v4393, %v4759
  %v4842 = vadd.f32 %v4394, %v4761
  %v4843 = vadd.f32 %v4395, %v4763
  %v4844 = vadd.f32 %v4396, %v4765
  %v4845 = vadd.f32 %v4397, %v4767
  %v4846 = vadd.f32 %v4398, %v4769
  %v4847 = vadd.f32 %v4399, %v4771
  %v4848 = vadd.f32 %v4400, %v4773
  %v4849 = vadd.f32 %v4401, %v4775
  %v4850 = vadd.f32 %v4402, %v4777
  %v4851 = vadd.f32 %v4403, %v4779
  %v4852 = vadd.f32 %v4404, %v4781
  %v4853 = vadd.f32 %v4405, %v4783
  %v4854 = vadd.f32 %v4406, %v4785
  %v4855 = vadd.f32 %v4407, %v4787
  %v4856 = vadd.f32 %v4408, %v4789
  %v4857 = vadd.f32 %v4409, %v4791
  %v4858 = vadd.f32 %v4410, %v4793
  %v4859 = vadd.f32 %v4411, %v4795
  %v4860 = vpack.c.bf16 %v4797, %v4796
  %v4861 = vpack.c.bf16 %v4799, %v4798
  %v4862 = vpack.c.bf16 %v4801, %v4800
  %v4863 = vpack.c.bf16 %v4803, %v4802
  %v4864 = vpack.c.bf16 %v4805, %v4804
  %v4865 = vpack.c.bf16 %v4807, %v4806
  %v4866 = vpack.c.bf16 %v4809, %v4808
  %v4867 = vpack.c.bf16 %v4811, %v4810
  %v4868 = vpack.c.bf16 %v4813, %v4812
  %v4869 = vpack.c.bf16 %v4815, %v4814
  %v4870 = vpack.c.bf16 %v4817, %v4816
  %v4871 = vpack.c.bf16 %v4819, %v4818
  %v4872 = vpack.c.bf16 %v4821, %v4820
  %v4873 = vpack.c.bf16 %v4823, %v4822
  %v4874 = vpack.c.bf16 %v4825, %v4824
  %v4875 = vpack.c.bf16 %v4827, %v4826
  %v4876 = vpack.c.bf16 %v4829, %v4828
  %v4877 = vpack.c.bf16 %v4831, %v4830
  %v4878 = vpack.c.bf16 %v4833, %v4832
  %v4879 = vpack.c.bf16 %v4835, %v4834
  %v4880 = vpack.c.bf16 %v4837, %v4836
  %v4881 = vpack.c.bf16 %v4839, %v4838
  %v4882 = vpack.c.bf16 %v4841, %v4840
  %v4883 = vpack.c.bf16 %v4843, %v4842
  %v4884 = vpack.c.bf16 %v4845, %v4844
  %v4885 = vpack.c.bf16 %v4847, %v4846
  %v4886 = vpack.c.bf16 %v4849, %v4848
  %v4887 = vpack.c.bf16 %v4851, %v4850
  %v4888 = vpack.c.bf16 %v4853, %v4852
  %v4889 = vpack.c.bf16 %v4855, %v4854
  %v4890 = vpack.c.bf16 %v4857, %v4856
  %v4891 = vpack.c.bf16 %v4859, %v4858
  %s4892 = scalar_lea.vmem %s1, 64
  %v4893 = vld [vmem:[%s4892] sm:$0xf]
  %v4894 = vld [vmem:[%s4892 + $0x4] sm:$0xf]
  %v4895 = vld [vmem:[%s4892 + $0x8] sm:$0xf]
  %v4896 = vld [vmem:[%s4892 + $0xc] sm:$0xf]
  %v4897 = vld [vmem:[%s4892 + $0x10] sm:$0xf]
  %v4898 = vld [vmem:[%s4892 + $0x14] sm:$0xf]
  %v4899 = vld [vmem:[%s4892 + $0x18] sm:$0xf]
  %v4900 = vld [vmem:[%s4892 + $0x1c] sm:$0xf]
  %v4901 = vld [vmem:[%s4892 + $0x20] sm:$0xf]
  %v4902 = vld [vmem:[%s4892 + $0x24] sm:$0xf]
  %v4903 = vld [vmem:[%s4892 + $0x28] sm:$0xf]
  %v4904 = vld [vmem:[%s4892 + $0x2c] sm:$0xf]
  %v4905 = vld [vmem:[%s4892 + $0x30] sm:$0xf]
  %v4906 = vld [vmem:[%s4892 + $0x34] sm:$0xf]
  %v4907 = vld [vmem:[%s4892 + $0x38] sm:$0xf]
  %v4908 = vld [vmem:[%s4892 + $0x3c] sm:$0xf]
  %v4925 = vunpack.c.l.b16 %v4893
  %v4926 = vunpack.c.l.b16 %v4894
  %v4927 = vunpack.c.l.b16 %v4895
  %v4928 = vunpack.c.l.b16 %v4896
  %v4929 = vunpack.c.l.b16 %v4897
  %v4930 = vunpack.c.l.b16 %v4898
  %v4931 = vunpack.c.l.b16 %v4899
  %v4932 = vunpack.c.l.b16 %v4900
  %v4933 = vunpack.c.l.b16 %v4901
  %v4934 = vunpack.c.l.b16 %v4902
  %v4935 = vunpack.c.l.b16 %v4903
  %v4936 = vunpack.c.l.b16 %v4904
  %v4937 = vunpack.c.l.b16 %v4905
  %v4938 = vunpack.c.l.b16 %v4906
  %v4939 = vunpack.c.l.b16 %v4907
  %v4940 = vunpack.c.l.b16 %v4908
  %v4941 = vpack.c.b16 %v4926, %v4925
  %v4942 = vpack.c.b16 %v4928, %v4927
  %v4943 = vpack.c.b16 %v4930, %v4929
  %v4944 = vpack.c.b16 %v4932, %v4931
  %v4945 = vpack.c.b16 %v4934, %v4933
  %v4946 = vpack.c.b16 %v4936, %v4935
  %v4947 = vpack.c.b16 %v4938, %v4937
  %v4948 = vpack.c.b16 %v4940, %v4939
  %4957 = vmatpush.bf16.msra.mxu0 %v4948
  %4958 = vmatpush.bf16.msra.mxu0 %v4947
  %4959 = vmatpush.bf16.msra.mxu0 %v4946
  %4960 = vmatpush.bf16.msra.mxu0 %v4945
  %4961 = vmatpush.bf16.msra.mxu0 %v4944
  %4962 = vmatpush.bf16.msra.mxu0 %v4943
  %4963 = vmatpush.bf16.msra.mxu0 %v4942
  %4964 = vmatpush.bf16.msra.mxu0 %v4941
  %4965 = vmatmul.bf16.gmra.mxu0 %v4860
  %v4966 = vpop.f32.mrf.mxu0
  %v4967 = vadd.f32 0.0, %v4966
  %v4968 = vpop.f32.mrf.mxu0
  %v4969 = vadd.f32 0.0, %v4968
  %4970 = vmatmul.bf16.gmra.mxu0 %v4861
  %v4971 = vpop.f32.mrf.mxu0
  %v4972 = vadd.f32 0.0, %v4971
  %v4973 = vpop.f32.mrf.mxu0
  %v4974 = vadd.f32 0.0, %v4973
  %4975 = vmatmul.bf16.gmra.mxu0 %v4862
  %v4976 = vpop.f32.mrf.mxu0
  %v4977 = vadd.f32 0.0, %v4976
  %v4978 = vpop.f32.mrf.mxu0
  %v4979 = vadd.f32 0.0, %v4978
  %4980 = vmatmul.bf16.gmra.mxu0 %v4863
  %v4981 = vpop.f32.mrf.mxu0
  %v4982 = vadd.f32 0.0, %v4981
  %v4983 = vpop.f32.mrf.mxu0
  %v4984 = vadd.f32 0.0, %v4983
  %4985 = vmatmul.bf16.gmra.mxu0 %v4864
  %v4986 = vpop.f32.mrf.mxu0
  %v4987 = vadd.f32 0.0, %v4986
  %v4988 = vpop.f32.mrf.mxu0
  %v4989 = vadd.f32 0.0, %v4988
  %4990 = vmatmul.bf16.gmra.mxu0 %v4865
  %v4991 = vpop.f32.mrf.mxu0
  %v4992 = vadd.f32 0.0, %v4991
  %v4993 = vpop.f32.mrf.mxu0
  %v4994 = vadd.f32 0.0, %v4993
  %4995 = vmatmul.bf16.gmra.mxu0 %v4866
  %v4996 = vpop.f32.mrf.mxu0
  %v4997 = vadd.f32 0.0, %v4996
  %v4998 = vpop.f32.mrf.mxu0
  %v4999 = vadd.f32 0.0, %v4998
  %5000 = vmatmul.bf16.gmra.mxu0 %v4867
  %v5001 = vpop.f32.mrf.mxu0
  %v5002 = vadd.f32 0.0, %v5001
  %v5003 = vpop.f32.mrf.mxu0
  %v5004 = vadd.f32 0.0, %v5003
  %5005 = vmatmul.bf16.gmra.mxu0 %v4868
  %v5006 = vpop.f32.mrf.mxu0
  %v5007 = vadd.f32 0.0, %v5006
  %v5008 = vpop.f32.mrf.mxu0
  %v5009 = vadd.f32 0.0, %v5008
  %5010 = vmatmul.bf16.gmra.mxu0 %v4869
  %v5011 = vpop.f32.mrf.mxu0
  %v5012 = vadd.f32 0.0, %v5011
  %v5013 = vpop.f32.mrf.mxu0
  %v5014 = vadd.f32 0.0, %v5013
  %5015 = vmatmul.bf16.gmra.mxu0 %v4870
  %v5016 = vpop.f32.mrf.mxu0
  %v5017 = vadd.f32 0.0, %v5016
  %v5018 = vpop.f32.mrf.mxu0
  %v5019 = vadd.f32 0.0, %v5018
  %5020 = vmatmul.bf16.gmra.mxu0 %v4871
  %v5021 = vpop.f32.mrf.mxu0
  %v5022 = vadd.f32 0.0, %v5021
  %v5023 = vpop.f32.mrf.mxu0
  %v5024 = vadd.f32 0.0, %v5023
  %5025 = vmatmul.bf16.gmra.mxu0 %v4872
  %v5026 = vpop.f32.mrf.mxu0
  %v5027 = vadd.f32 0.0, %v5026
  %v5028 = vpop.f32.mrf.mxu0
  %v5029 = vadd.f32 0.0, %v5028
  %5030 = vmatmul.bf16.gmra.mxu0 %v4873
  %v5031 = vpop.f32.mrf.mxu0
  %v5032 = vadd.f32 0.0, %v5031
  %v5033 = vpop.f32.mrf.mxu0
  %v5034 = vadd.f32 0.0, %v5033
  %5035 = vmatmul.bf16.gmra.mxu0 %v4874
  %v5036 = vpop.f32.mrf.mxu0
  %v5037 = vadd.f32 0.0, %v5036
  %v5038 = vpop.f32.mrf.mxu0
  %v5039 = vadd.f32 0.0, %v5038
  %5040 = vmatmul.bf16.gmra.mxu0 %v4875
  %v5041 = vpop.f32.mrf.mxu0
  %v5042 = vadd.f32 0.0, %v5041
  %v5043 = vpop.f32.mrf.mxu0
  %v5044 = vadd.f32 0.0, %v5043
  %5045 = vmatmul.bf16.gmra.mxu0 %v4876
  %v5046 = vpop.f32.mrf.mxu0
  %v5047 = vadd.f32 0.0, %v5046
  %v5048 = vpop.f32.mrf.mxu0
  %v5049 = vadd.f32 0.0, %v5048
  %5050 = vmatmul.bf16.gmra.mxu0 %v4877
  %v5051 = vpop.f32.mrf.mxu0
  %v5052 = vadd.f32 0.0, %v5051
  %v5053 = vpop.f32.mrf.mxu0
  %v5054 = vadd.f32 0.0, %v5053
  %5055 = vmatmul.bf16.gmra.mxu0 %v4878
  %v5056 = vpop.f32.mrf.mxu0
  %v5057 = vadd.f32 0.0, %v5056
  %v5058 = vpop.f32.mrf.mxu0
  %v5059 = vadd.f32 0.0, %v5058
  %5060 = vmatmul.bf16.gmra.mxu0 %v4879
  %v5061 = vpop.f32.mrf.mxu0
  %v5062 = vadd.f32 0.0, %v5061
  %v5063 = vpop.f32.mrf.mxu0
  %v5064 = vadd.f32 0.0, %v5063
  %5065 = vmatmul.bf16.gmra.mxu0 %v4880
  %v5066 = vpop.f32.mrf.mxu0
  %v5067 = vadd.f32 0.0, %v5066
  %v5068 = vpop.f32.mrf.mxu0
  %v5069 = vadd.f32 0.0, %v5068
  %5070 = vmatmul.bf16.gmra.mxu0 %v4881
  %v5071 = vpop.f32.mrf.mxu0
  %v5072 = vadd.f32 0.0, %v5071
  %v5073 = vpop.f32.mrf.mxu0
  %v5074 = vadd.f32 0.0, %v5073
  %5075 = vmatmul.bf16.gmra.mxu0 %v4882
  %v5076 = vpop.f32.mrf.mxu0
  %v5077 = vadd.f32 0.0, %v5076
  %v5078 = vpop.f32.mrf.mxu0
  %v5079 = vadd.f32 0.0, %v5078
  %5080 = vmatmul.bf16.gmra.mxu0 %v4883
  %v5081 = vpop.f32.mrf.mxu0
  %v5082 = vadd.f32 0.0, %v5081
  %v5083 = vpop.f32.mrf.mxu0
  %v5084 = vadd.f32 0.0, %v5083
  %5085 = vmatmul.bf16.gmra.mxu0 %v4884
  %v5086 = vpop.f32.mrf.mxu0
  %v5087 = vadd.f32 0.0, %v5086
  %v5088 = vpop.f32.mrf.mxu0
  %v5089 = vadd.f32 0.0, %v5088
  %5090 = vmatmul.bf16.gmra.mxu0 %v4885
  %v5091 = vpop.f32.mrf.mxu0
  %v5092 = vadd.f32 0.0, %v5091
  %v5093 = vpop.f32.mrf.mxu0
  %v5094 = vadd.f32 0.0, %v5093
  %5095 = vmatmul.bf16.gmra.mxu0 %v4886
  %v5096 = vpop.f32.mrf.mxu0
  %v5097 = vadd.f32 0.0, %v5096
  %v5098 = vpop.f32.mrf.mxu0
  %v5099 = vadd.f32 0.0, %v5098
  %5100 = vmatmul.bf16.gmra.mxu0 %v4887
  %v5101 = vpop.f32.mrf.mxu0
  %v5102 = vadd.f32 0.0, %v5101
  %v5103 = vpop.f32.mrf.mxu0
  %v5104 = vadd.f32 0.0, %v5103
  %5105 = vmatmul.bf16.gmra.mxu0 %v4888
  %v5106 = vpop.f32.mrf.mxu0
  %v5107 = vadd.f32 0.0, %v5106
  %v5108 = vpop.f32.mrf.mxu0
  %v5109 = vadd.f32 0.0, %v5108
  %5110 = vmatmul.bf16.gmra.mxu0 %v4889
  %v5111 = vpop.f32.mrf.mxu0
  %v5112 = vadd.f32 0.0, %v5111
  %v5113 = vpop.f32.mrf.mxu0
  %v5114 = vadd.f32 0.0, %v5113
  %5115 = vmatmul.bf16.gmra.mxu0 %v4890
  %v5116 = vpop.f32.mrf.mxu0
  %v5117 = vadd.f32 0.0, %v5116
  %v5118 = vpop.f32.mrf.mxu0
  %v5119 = vadd.f32 0.0, %v5118
  %5120 = vmatmul.bf16.gmra.mxu0 %v4891
  %v5121 = vpop.f32.mrf.mxu0
  %v5122 = vadd.f32 0.0, %v5121
  %v5123 = vpop.f32.mrf.mxu0
  %v5124 = vadd.f32 0.0, %v5123
  %5125 = vdwg.mxu0
  %v5126 = vadd.f32 %v4967, %v4969
  %v5127 = vadd.f32 %v5126, %v4972
  %v5128 = vadd.f32 %v5127, %v4974
  %v5129 = vadd.f32 %v5128, %v4977
  %v5130 = vadd.f32 %v5129, %v4979
  %v5131 = vadd.f32 %v5130, %v4982
  %v5132 = vadd.f32 %v5131, %v4984
  %v5133 = vadd.f32 %v5132, %v4987
  %v5134 = vadd.f32 %v5133, %v4989
  %v5135 = vadd.f32 %v5134, %v4992
  %v5136 = vadd.f32 %v5135, %v4994
  %v5137 = vadd.f32 %v5136, %v4997
  %v5138 = vadd.f32 %v5137, %v4999
  %v5139 = vadd.f32 %v5138, %v5002
  %v5140 = vadd.f32 %v5139, %v5004
  %v5141 = vadd.f32 %v5140, %v5007
  %v5142 = vadd.f32 %v5141, %v5009
  %v5143 = vadd.f32 %v5142, %v5012
  %v5144 = vadd.f32 %v5143, %v5014
  %v5145 = vadd.f32 %v5144, %v5017
  %v5146 = vadd.f32 %v5145, %v5019
  %v5147 = vadd.f32 %v5146, %v5022
  %v5148 = vadd.f32 %v5147, %v5024
  %v5149 = vadd.f32 %v5148, %v5027
  %v5150 = vadd.f32 %v5149, %v5029
  %v5151 = vadd.f32 %v5150, %v5032
  %v5152 = vadd.f32 %v5151, %v5034
  %v5153 = vadd.f32 %v5152, %v5037
  %v5154 = vadd.f32 %v5153, %v5039
  %v5155 = vadd.f32 %v5154, %v5042
  %v5156 = vadd.f32 %v5155, %v5044
  %v5157 = vadd.f32 %v5156, %v5047
  %v5158 = vadd.f32 %v5157, %v5049
  %v5159 = vadd.f32 %v5158, %v5052
  %v5160 = vadd.f32 %v5159, %v5054
  %v5161 = vadd.f32 %v5160, %v5057
  %v5162 = vadd.f32 %v5161, %v5059
  %v5163 = vadd.f32 %v5162, %v5062
  %v5164 = vadd.f32 %v5163, %v5064
  %v5165 = vadd.f32 %v5164, %v5067
  %v5166 = vadd.f32 %v5165, %v5069
  %v5167 = vadd.f32 %v5166, %v5072
  %v5168 = vadd.f32 %v5167, %v5074
  %v5169 = vadd.f32 %v5168, %v5077
  %v5170 = vadd.f32 %v5169, %v5079
  %v5171 = vadd.f32 %v5170, %v5082
  %v5172 = vadd.f32 %v5171, %v5084
  %v5173 = vadd.f32 %v5172, %v5087
  %v5174 = vadd.f32 %v5173, %v5089
  %v5175 = vadd.f32 %v5174, %v5092
  %v5176 = vadd.f32 %v5175, %v5094
  %v5177 = vadd.f32 %v5176, %v5097
  %v5178 = vadd.f32 %v5177, %v5099
  %v5179 = vadd.f32 %v5178, %v5102
  %v5180 = vadd.f32 %v5179, %v5104
  %v5181 = vadd.f32 %v5180, %v5107
  %v5182 = vadd.f32 %v5181, %v5109
  %v5183 = vadd.f32 %v5182, %v5112
  %v5184 = vadd.f32 %v5183, %v5114
  %v5185 = vadd.f32 %v5184, %v5117
  %v5186 = vadd.f32 %v5185, %v5119
  %v5187 = vadd.f32 %v5186, %v5122
  %v5188 = vadd.f32 %v5187, %v5124
  %v5189 = vrot.slane %v5188, 4
  %v5190 = vadd.f32 %v5188, %v5189
  %v5191 = vrot.slane %v5190, 2
  %v5192 = vadd.f32 %v5190, %v5191
  %v5193 = vrot.slane %v5192, 1
  %v5194 = vadd.f32 %v5192, %v5193
  %v5195 = vmul.f32 %v4967, %v4967
  %v5196 = vmul.f32 %v4969, %v4969
  %v5197 = vmul.f32 %v4972, %v4972
  %v5198 = vmul.f32 %v4974, %v4974
  %v5199 = vmul.f32 %v4977, %v4977
  %v5200 = vmul.f32 %v4979, %v4979
  %v5201 = vmul.f32 %v4982, %v4982
  %v5202 = vmul.f32 %v4984, %v4984
  %v5203 = vmul.f32 %v4987, %v4987
  %v5204 = vmul.f32 %v4989, %v4989
  %v5205 = vmul.f32 %v4992, %v4992
  %v5206 = vmul.f32 %v4994, %v4994
  %v5207 = vmul.f32 %v4997, %v4997
  %v5208 = vmul.f32 %v4999, %v4999
  %v5209 = vmul.f32 %v5002, %v5002
  %v5210 = vmul.f32 %v5004, %v5004
  %v5211 = vmul.f32 %v5007, %v5007
  %v5212 = vmul.f32 %v5009, %v5009
  %v5213 = vmul.f32 %v5012, %v5012
  %v5214 = vmul.f32 %v5014, %v5014
  %v5215 = vmul.f32 %v5017, %v5017
  %v5216 = vmul.f32 %v5019, %v5019
  %v5217 = vmul.f32 %v5022, %v5022
  %v5218 = vmul.f32 %v5024, %v5024
  %v5219 = vmul.f32 %v5027, %v5027
  %v5220 = vmul.f32 %v5029, %v5029
  %v5221 = vmul.f32 %v5032, %v5032
  %v5222 = vmul.f32 %v5034, %v5034
  %v5223 = vmul.f32 %v5037, %v5037
  %v5224 = vmul.f32 %v5039, %v5039
  %v5225 = vmul.f32 %v5042, %v5042
  %v5226 = vmul.f32 %v5044, %v5044
  %v5227 = vmul.f32 %v5047, %v5047
  %v5228 = vmul.f32 %v5049, %v5049
  %v5229 = vmul.f32 %v5052, %v5052
  %v5230 = vmul.f32 %v5054, %v5054
  %v5231 = vmul.f32 %v5057, %v5057
  %v5232 = vmul.f32 %v5059, %v5059
  %v5233 = vmul.f32 %v5062, %v5062
  %v5234 = vmul.f32 %v5064, %v5064
  %v5235 = vmul.f32 %v5067, %v5067
  %v5236 = vmul.f32 %v5069, %v5069
  %v5237 = vmul.f32 %v5072, %v5072
  %v5238 = vmul.f32 %v5074, %v5074
  %v5239 = vmul.f32 %v5077, %v5077
  %v5240 = vmul.f32 %v5079, %v5079
  %v5241 = vmul.f32 %v5082, %v5082
  %v5242 = vmul.f32 %v5084, %v5084
  %v5243 = vmul.f32 %v5087, %v5087
  %v5244 = vmul.f32 %v5089, %v5089
  %v5245 = vmul.f32 %v5092, %v5092
  %v5246 = vmul.f32 %v5094, %v5094
  %v5247 = vmul.f32 %v5097, %v5097
  %v5248 = vmul.f32 %v5099, %v5099
  %v5249 = vmul.f32 %v5102, %v5102
  %v5250 = vmul.f32 %v5104, %v5104
  %v5251 = vmul.f32 %v5107, %v5107
  %v5252 = vmul.f32 %v5109, %v5109
  %v5253 = vmul.f32 %v5112, %v5112
  %v5254 = vmul.f32 %v5114, %v5114
  %v5255 = vmul.f32 %v5117, %v5117
  %v5256 = vmul.f32 %v5119, %v5119
  %v5257 = vmul.f32 %v5122, %v5122
  %v5258 = vmul.f32 %v5124, %v5124
  %v5259 = vadd.f32 %v5195, %v5196
  %v5260 = vadd.f32 %v5259, %v5197
  %v5261 = vadd.f32 %v5260, %v5198
  %v5262 = vadd.f32 %v5261, %v5199
  %v5263 = vadd.f32 %v5262, %v5200
  %v5264 = vadd.f32 %v5263, %v5201
  %v5265 = vadd.f32 %v5264, %v5202
  %v5266 = vadd.f32 %v5265, %v5203
  %v5267 = vadd.f32 %v5266, %v5204
  %v5268 = vadd.f32 %v5267, %v5205
  %v5269 = vadd.f32 %v5268, %v5206
  %v5270 = vadd.f32 %v5269, %v5207
  %v5271 = vadd.f32 %v5270, %v5208
  %v5272 = vadd.f32 %v5271, %v5209
  %v5273 = vadd.f32 %v5272, %v5210
  %v5274 = vadd.f32 %v5273, %v5211
  %v5275 = vadd.f32 %v5274, %v5212
  %v5276 = vadd.f32 %v5275, %v5213
  %v5277 = vadd.f32 %v5276, %v5214
  %v5278 = vadd.f32 %v5277, %v5215
  %v5279 = vadd.f32 %v5278, %v5216
  %v5280 = vadd.f32 %v5279, %v5217
  %v5281 = vadd.f32 %v5280, %v5218
  %v5282 = vadd.f32 %v5281, %v5219
  %v5283 = vadd.f32 %v5282, %v5220
  %v5284 = vadd.f32 %v5283, %v5221
  %v5285 = vadd.f32 %v5284, %v5222
  %v5286 = vadd.f32 %v5285, %v5223
  %v5287 = vadd.f32 %v5286, %v5224
  %v5288 = vadd.f32 %v5287, %v5225
  %v5289 = vadd.f32 %v5288, %v5226
  %v5290 = vadd.f32 %v5289, %v5227
  %v5291 = vadd.f32 %v5290, %v5228
  %v5292 = vadd.f32 %v5291, %v5229
  %v5293 = vadd.f32 %v5292, %v5230
  %v5294 = vadd.f32 %v5293, %v5231
  %v5295 = vadd.f32 %v5294, %v5232
  %v5296 = vadd.f32 %v5295, %v5233
  %v5297 = vadd.f32 %v5296, %v5234
  %v5298 = vadd.f32 %v5297, %v5235
  %v5299 = vadd.f32 %v5298, %v5236
  %v5300 = vadd.f32 %v5299, %v5237
  %v5301 = vadd.f32 %v5300, %v5238
  %v5302 = vadd.f32 %v5301, %v5239
  %v5303 = vadd.f32 %v5302, %v5240
  %v5304 = vadd.f32 %v5303, %v5241
  %v5305 = vadd.f32 %v5304, %v5242
  %v5306 = vadd.f32 %v5305, %v5243
  %v5307 = vadd.f32 %v5306, %v5244
  %v5308 = vadd.f32 %v5307, %v5245
  %v5309 = vadd.f32 %v5308, %v5246
  %v5310 = vadd.f32 %v5309, %v5247
  %v5311 = vadd.f32 %v5310, %v5248
  %v5312 = vadd.f32 %v5311, %v5249
  %v5313 = vadd.f32 %v5312, %v5250
  %v5314 = vadd.f32 %v5313, %v5251
  %v5315 = vadd.f32 %v5314, %v5252
  %v5316 = vadd.f32 %v5315, %v5253
  %v5317 = vadd.f32 %v5316, %v5254
  %v5318 = vadd.f32 %v5317, %v5255
  %v5319 = vadd.f32 %v5318, %v5256
  %v5320 = vadd.f32 %v5319, %v5257
  %v5321 = vadd.f32 %v5320, %v5258
  %v5322 = vrot.slane %v5321, 4
  %v5323 = vadd.f32 %v5321, %v5322
  %v5324 = vrot.slane %v5323, 2
  %v5325 = vadd.f32 %v5323, %v5324
  %v5326 = vrot.slane %v5325, 1
  %v5327 = vadd.f32 %v5325, %v5326
  %v5328 = vmul.f32 %v5194, 0.001953125
  %v5329 = vmul.f32 %v5327, 0.001953125
  %v5330 = vmul.f32 %v5328, %v5328
  %v5331 = vsub.f32 %v5329, %v5330
  %v5332 = vadd.f32 %v5331, 1e-05
  %v5333 = vrsqrt.pop %v5332
  %v5334 = vmul.f32 %v5333, %v5332
  %v5335 = vmul.f32 %v5334, %v5333
  %v5336 = vmul.f32 0.5, %v5335
  %v5337 = vsub.f32 1.5, %v5336
  %v5338 = vmul.f32 %v5333, %v5337
  %vm5339 = vweird.f32 %v5332
  %vm5340 = vweird.f32 %v5333
  %vm5341 = vmor %vm5339, %vm5340
  %v5342 = vsel %vm5341, %v5333, %v5338
  %v5343 = vmul.f32 %v78, %v5342
  %v5344 = vmul.f32 %v5328, %v5343
  %v5346 = vrot.slane %v5344, 7
  %v5348 = vsub.f32 %v78, %v5346
  %v5349 = vperm.slane %v5343, 2
  %v5350 = vmul.f32 %v4967, %v5349
  %v5351 = vmul.f32 %v4969, %v5349
  %v5352 = vmul.f32 %v4972, %v5349
  %v5353 = vmul.f32 %v4974, %v5349
  %v5354 = vmul.f32 %v4977, %v5349
  %v5355 = vmul.f32 %v4979, %v5349
  %v5356 = vmul.f32 %v4982, %v5349
  %v5357 = vmul.f32 %v4984, %v5349
  %v5358 = vmul.f32 %v4987, %v5349
  %v5359 = vmul.f32 %v4989, %v5349
  %v5360 = vmul.f32 %v4992, %v5349
  %v5361 = vmul.f32 %v4994, %v5349
  %v5362 = vmul.f32 %v4997, %v5349
  %v5363 = vmul.f32 %v4999, %v5349
  %v5364 = vmul.f32 %v5002, %v5349
  %v5365 = vmul.f32 %v5004, %v5349
  %v5366 = vmul.f32 %v5007, %v5349
  %v5367 = vmul.f32 %v5009, %v5349
  %v5368 = vmul.f32 %v5012, %v5349
  %v5369 = vmul.f32 %v5014, %v5349
  %v5370 = vmul.f32 %v5017, %v5349
  %v5371 = vmul.f32 %v5019, %v5349
  %v5372 = vmul.f32 %v5022, %v5349
  %v5373 = vmul.f32 %v5024, %v5349
  %v5374 = vmul.f32 %v5027, %v5349
  %v5375 = vmul.f32 %v5029, %v5349
  %v5376 = vmul.f32 %v5032, %v5349
  %v5377 = vmul.f32 %v5034, %v5349
  %v5378 = vmul.f32 %v5037, %v5349
  %v5379 = vmul.f32 %v5039, %v5349
  %v5380 = vmul.f32 %v5042, %v5349
  %v5381 = vmul.f32 %v5044, %v5349
  %v5382 = vmul.f32 %v5047, %v5349
  %v5383 = vmul.f32 %v5049, %v5349
  %v5384 = vmul.f32 %v5052, %v5349
  %v5385 = vmul.f32 %v5054, %v5349
  %v5386 = vmul.f32 %v5057, %v5349
  %v5387 = vmul.f32 %v5059, %v5349
  %v5388 = vmul.f32 %v5062, %v5349
  %v5389 = vmul.f32 %v5064, %v5349
  %v5390 = vmul.f32 %v5067, %v5349
  %v5391 = vmul.f32 %v5069, %v5349
  %v5392 = vmul.f32 %v5072, %v5349
  %v5393 = vmul.f32 %v5074, %v5349
  %v5394 = vmul.f32 %v5077, %v5349
  %v5395 = vmul.f32 %v5079, %v5349
  %v5396 = vmul.f32 %v5082, %v5349
  %v5397 = vmul.f32 %v5084, %v5349
  %v5398 = vmul.f32 %v5087, %v5349
  %v5399 = vmul.f32 %v5089, %v5349
  %v5400 = vmul.f32 %v5092, %v5349
  %v5401 = vmul.f32 %v5094, %v5349
  %v5402 = vmul.f32 %v5097, %v5349
  %v5403 = vmul.f32 %v5099, %v5349
  %v5404 = vmul.f32 %v5102, %v5349
  %v5405 = vmul.f32 %v5104, %v5349
  %v5406 = vmul.f32 %v5107, %v5349
  %v5407 = vmul.f32 %v5109, %v5349
  %v5408 = vmul.f32 %v5112, %v5349
  %v5409 = vmul.f32 %v5114, %v5349
  %v5410 = vmul.f32 %v5117, %v5349
  %v5411 = vmul.f32 %v5119, %v5349
  %v5412 = vmul.f32 %v5122, %v5349
  %v5413 = vmul.f32 %v5124, %v5349
  %v5414 = vperm.slane %v5348, 3
  %v5415 = vadd.f32 %v5350, %v5414
  %v5416 = vadd.f32 %v5351, %v5414
  %v5417 = vadd.f32 %v5352, %v5414
  %v5418 = vadd.f32 %v5353, %v5414
  %v5419 = vadd.f32 %v5354, %v5414
  %v5420 = vadd.f32 %v5355, %v5414
  %v5421 = vadd.f32 %v5356, %v5414
  %v5422 = vadd.f32 %v5357, %v5414
  %v5423 = vadd.f32 %v5358, %v5414
  %v5424 = vadd.f32 %v5359, %v5414
  %v5425 = vadd.f32 %v5360, %v5414
  %v5426 = vadd.f32 %v5361, %v5414
  %v5427 = vadd.f32 %v5362, %v5414
  %v5428 = vadd.f32 %v5363, %v5414
  %v5429 = vadd.f32 %v5364, %v5414
  %v5430 = vadd.f32 %v5365, %v5414
  %v5431 = vadd.f32 %v5366, %v5414
  %v5432 = vadd.f32 %v5367, %v5414
  %v5433 = vadd.f32 %v5368, %v5414
  %v5434 = vadd.f32 %v5369, %v5414
  %v5435 = vadd.f32 %v5370, %v5414
  %v5436 = vadd.f32 %v5371, %v5414
  %v5437 = vadd.f32 %v5372, %v5414
  %v5438 = vadd.f32 %v5373, %v5414
  %v5439 = vadd.f32 %v5374, %v5414
  %v5440 = vadd.f32 %v5375, %v5414
  %v5441 = vadd.f32 %v5376, %v5414
  %v5442 = vadd.f32 %v5377, %v5414
  %v5443 = vadd.f32 %v5378, %v5414
  %v5444 = vadd.f32 %v5379, %v5414
  %v5445 = vadd.f32 %v5380, %v5414
  %v5446 = vadd.f32 %v5381, %v5414
  %v5447 = vadd.f32 %v5382, %v5414
  %v5448 = vadd.f32 %v5383, %v5414
  %v5449 = vadd.f32 %v5384, %v5414
  %v5450 = vadd.f32 %v5385, %v5414
  %v5451 = vadd.f32 %v5386, %v5414
  %v5452 = vadd.f32 %v5387, %v5414
  %v5453 = vadd.f32 %v5388, %v5414
  %v5454 = vadd.f32 %v5389, %v5414
  %v5455 = vadd.f32 %v5390, %v5414
  %v5456 = vadd.f32 %v5391, %v5414
  %v5457 = vadd.f32 %v5392, %v5414
  %v5458 = vadd.f32 %v5393, %v5414
  %v5459 = vadd.f32 %v5394, %v5414
  %v5460 = vadd.f32 %v5395, %v5414
  %v5461 = vadd.f32 %v5396, %v5414
  %v5462 = vadd.f32 %v5397, %v5414
  %v5463 = vadd.f32 %v5398, %v5414
  %v5464 = vadd.f32 %v5399, %v5414
  %v5465 = vadd.f32 %v5400, %v5414
  %v5466 = vadd.f32 %v5401, %v5414
  %v5467 = vadd.f32 %v5402, %v5414
  %v5468 = vadd.f32 %v5403, %v5414
  %v5469 = vadd.f32 %v5404, %v5414
  %v5470 = vadd.f32 %v5405, %v5414
  %v5471 = vadd.f32 %v5406, %v5414
  %v5472 = vadd.f32 %v5407, %v5414
  %v5473 = vadd.f32 %v5408, %v5414
  %v5474 = vadd.f32 %v5409, %v5414
  %v5475 = vadd.f32 %v5410, %v5414
  %v5476 = vadd.f32 %v5411, %v5414
  %v5477 = vadd.f32 %v5412, %v5414
  %v5478 = vadd.f32 %v5413, %v5414
  %v5479 = vmax.f32 %v5415, 0.0
  %v5480 = vmax.f32 %v5416, 0.0
  %v5481 = vmax.f32 %v5417, 0.0
  %v5482 = vmax.f32 %v5418, 0.0
  %v5483 = vmax.f32 %v5419, 0.0
  %v5484 = vmax.f32 %v5420, 0.0
  %v5485 = vmax.f32 %v5421, 0.0
  %v5486 = vmax.f32 %v5422, 0.0
  %v5487 = vmax.f32 %v5423, 0.0
  %v5488 = vmax.f32 %v5424, 0.0
  %v5489 = vmax.f32 %v5425, 0.0
  %v5490 = vmax.f32 %v5426, 0.0
  %v5491 = vmax.f32 %v5427, 0.0
  %v5492 = vmax.f32 %v5428, 0.0
  %v5493 = vmax.f32 %v5429, 0.0
  %v5494 = vmax.f32 %v5430, 0.0
  %v5495 = vmax.f32 %v5431, 0.0
  %v5496 = vmax.f32 %v5432, 0.0
  %v5497 = vmax.f32 %v5433, 0.0
  %v5498 = vmax.f32 %v5434, 0.0
  %v5499 = vmax.f32 %v5435, 0.0
  %v5500 = vmax.f32 %v5436, 0.0
  %v5501 = vmax.f32 %v5437, 0.0
  %v5502 = vmax.f32 %v5438, 0.0
  %v5503 = vmax.f32 %v5439, 0.0
  %v5504 = vmax.f32 %v5440, 0.0
  %v5505 = vmax.f32 %v5441, 0.0
  %v5506 = vmax.f32 %v5442, 0.0
  %v5507 = vmax.f32 %v5443, 0.0
  %v5508 = vmax.f32 %v5444, 0.0
  %v5509 = vmax.f32 %v5445, 0.0
  %v5510 = vmax.f32 %v5446, 0.0
  %v5511 = vmax.f32 %v5447, 0.0
  %v5512 = vmax.f32 %v5448, 0.0
  %v5513 = vmax.f32 %v5449, 0.0
  %v5514 = vmax.f32 %v5450, 0.0
  %v5515 = vmax.f32 %v5451, 0.0
  %v5516 = vmax.f32 %v5452, 0.0
  %v5517 = vmax.f32 %v5453, 0.0
  %v5518 = vmax.f32 %v5454, 0.0
  %v5519 = vmax.f32 %v5455, 0.0
  %v5520 = vmax.f32 %v5456, 0.0
  %v5521 = vmax.f32 %v5457, 0.0
  %v5522 = vmax.f32 %v5458, 0.0
  %v5523 = vmax.f32 %v5459, 0.0
  %v5524 = vmax.f32 %v5460, 0.0
  %v5525 = vmax.f32 %v5461, 0.0
  %v5526 = vmax.f32 %v5462, 0.0
  %v5527 = vmax.f32 %v5463, 0.0
  %v5528 = vmax.f32 %v5464, 0.0
  %v5529 = vmax.f32 %v5465, 0.0
  %v5530 = vmax.f32 %v5466, 0.0
  %v5531 = vmax.f32 %v5467, 0.0
  %v5532 = vmax.f32 %v5468, 0.0
  %v5533 = vmax.f32 %v5469, 0.0
  %v5534 = vmax.f32 %v5470, 0.0
  %v5535 = vmax.f32 %v5471, 0.0
  %v5536 = vmax.f32 %v5472, 0.0
  %v5537 = vmax.f32 %v5473, 0.0
  %v5538 = vmax.f32 %v5474, 0.0
  %v5539 = vmax.f32 %v5475, 0.0
  %v5540 = vmax.f32 %v5476, 0.0
  %v5541 = vmax.f32 %v5477, 0.0
  %v5542 = vmax.f32 %v5478, 0.0
  %v5543 = vpack.c.bf16 %v5480, %v5479
  %v5544 = vpack.c.bf16 %v5482, %v5481
  %v5545 = vpack.c.bf16 %v5484, %v5483
  %v5546 = vpack.c.bf16 %v5486, %v5485
  %v5547 = vpack.c.bf16 %v5488, %v5487
  %v5548 = vpack.c.bf16 %v5490, %v5489
  %v5549 = vpack.c.bf16 %v5492, %v5491
  %v5550 = vpack.c.bf16 %v5494, %v5493
  %v5551 = vpack.c.bf16 %v5496, %v5495
  %v5552 = vpack.c.bf16 %v5498, %v5497
  %v5553 = vpack.c.bf16 %v5500, %v5499
  %v5554 = vpack.c.bf16 %v5502, %v5501
  %v5555 = vpack.c.bf16 %v5504, %v5503
  %v5556 = vpack.c.bf16 %v5506, %v5505
  %v5557 = vpack.c.bf16 %v5508, %v5507
  %v5558 = vpack.c.bf16 %v5510, %v5509
  %v5559 = vpack.c.bf16 %v5512, %v5511
  %v5560 = vpack.c.bf16 %v5514, %v5513
  %v5561 = vpack.c.bf16 %v5516, %v5515
  %v5562 = vpack.c.bf16 %v5518, %v5517
  %v5563 = vpack.c.bf16 %v5520, %v5519
  %v5564 = vpack.c.bf16 %v5522, %v5521
  %v5565 = vpack.c.bf16 %v5524, %v5523
  %v5566 = vpack.c.bf16 %v5526, %v5525
  %v5567 = vpack.c.bf16 %v5528, %v5527
  %v5568 = vpack.c.bf16 %v5530, %v5529
  %v5569 = vpack.c.bf16 %v5532, %v5531
  %v5570 = vpack.c.bf16 %v5534, %v5533
  %v5571 = vpack.c.bf16 %v5536, %v5535
  %v5572 = vpack.c.bf16 %v5538, %v5537
  %v5573 = vpack.c.bf16 %v5540, %v5539
  %v5574 = vpack.c.bf16 %v5542, %v5541
  %s5575 = scalar_lea.vmem %s1, 128
  %v5576 = vld [vmem:[%s5575] sm:$0xf]
  %v5577 = vld [vmem:[%s5575 + $0x4] sm:$0xf]
  %v5578 = vld [vmem:[%s5575 + $0x8] sm:$0xf]
  %v5579 = vld [vmem:[%s5575 + $0xc] sm:$0xf]
  %v5580 = vld [vmem:[%s5575 + $0x10] sm:$0xf]
  %v5581 = vld [vmem:[%s5575 + $0x14] sm:$0xf]
  %v5582 = vld [vmem:[%s5575 + $0x18] sm:$0xf]
  %v5583 = vld [vmem:[%s5575 + $0x1c] sm:$0xf]
  %v5584 = vld [vmem:[%s5575 + $0x20] sm:$0xf]
  %v5585 = vld [vmem:[%s5575 + $0x24] sm:$0xf]
  %v5586 = vld [vmem:[%s5575 + $0x28] sm:$0xf]
  %v5587 = vld [vmem:[%s5575 + $0x2c] sm:$0xf]
  %v5588 = vld [vmem:[%s5575 + $0x30] sm:$0xf]
  %v5589 = vld [vmem:[%s5575 + $0x34] sm:$0xf]
  %v5590 = vld [vmem:[%s5575 + $0x38] sm:$0xf]
  %v5591 = vld [vmem:[%s5575 + $0x3c] sm:$0xf]
  %v5608 = vunpack.c.l.b16 %v5576
  %v5609 = vunpack.c.l.b16 %v5577
  %v5610 = vunpack.c.l.b16 %v5578
  %v5611 = vunpack.c.l.b16 %v5579
  %v5612 = vunpack.c.l.b16 %v5580
  %v5613 = vunpack.c.l.b16 %v5581
  %v5614 = vunpack.c.l.b16 %v5582
  %v5615 = vunpack.c.l.b16 %v5583
  %v5616 = vunpack.c.l.b16 %v5584
  %v5617 = vunpack.c.l.b16 %v5585
  %v5618 = vunpack.c.l.b16 %v5586
  %v5619 = vunpack.c.l.b16 %v5587
  %v5620 = vunpack.c.l.b16 %v5588
  %v5621 = vunpack.c.l.b16 %v5589
  %v5622 = vunpack.c.l.b16 %v5590
  %v5623 = vunpack.c.l.b16 %v5591
  %v5624 = vpack.c.b16 %v5609, %v5608
  %v5625 = vpack.c.b16 %v5611, %v5610
  %v5626 = vpack.c.b16 %v5613, %v5612
  %v5627 = vpack.c.b16 %v5615, %v5614
  %v5628 = vpack.c.b16 %v5617, %v5616
  %v5629 = vpack.c.b16 %v5619, %v5618
  %v5630 = vpack.c.b16 %v5621, %v5620
  %v5631 = vpack.c.b16 %v5623, %v5622
  %5640 = vmatpush.bf16.msra.mxu0 %v5631
  %5641 = vmatpush.bf16.msra.mxu0 %v5630
  %5642 = vmatpush.bf16.msra.mxu0 %v5629
  %5643 = vmatpush.bf16.msra.mxu0 %v5628
  %5644 = vmatpush.bf16.msra.mxu0 %v5627
  %5645 = vmatpush.bf16.msra.mxu0 %v5626
  %5646 = vmatpush.bf16.msra.mxu0 %v5625
  %5647 = vmatpush.bf16.msra.mxu0 %v5624
  %5648 = vmatmul.bf16.gmra.mxu0 %v5543
  %v5649 = vpop.f32.mrf.mxu0
  %v5650 = vadd.f32 0.0, %v5649
  %v5651 = vpop.f32.mrf.mxu0
  %v5652 = vadd.f32 0.0, %v5651
  %5653 = vmatmul.bf16.gmra.mxu0 %v5544
  %v5654 = vpop.f32.mrf.mxu0
  %v5655 = vadd.f32 0.0, %v5654
  %v5656 = vpop.f32.mrf.mxu0
  %v5657 = vadd.f32 0.0, %v5656
  %5658 = vmatmul.bf16.gmra.mxu0 %v5545
  %v5659 = vpop.f32.mrf.mxu0
  %v5660 = vadd.f32 0.0, %v5659
  %v5661 = vpop.f32.mrf.mxu0
  %v5662 = vadd.f32 0.0, %v5661
  %5663 = vmatmul.bf16.gmra.mxu0 %v5546
  %v5664 = vpop.f32.mrf.mxu0
  %v5665 = vadd.f32 0.0, %v5664
  %v5666 = vpop.f32.mrf.mxu0
  %v5667 = vadd.f32 0.0, %v5666
  %5668 = vmatmul.bf16.gmra.mxu0 %v5547
  %v5669 = vpop.f32.mrf.mxu0
  %v5670 = vadd.f32 0.0, %v5669
  %v5671 = vpop.f32.mrf.mxu0
  %v5672 = vadd.f32 0.0, %v5671
  %5673 = vmatmul.bf16.gmra.mxu0 %v5548
  %v5674 = vpop.f32.mrf.mxu0
  %v5675 = vadd.f32 0.0, %v5674
  %v5676 = vpop.f32.mrf.mxu0
  %v5677 = vadd.f32 0.0, %v5676
  %5678 = vmatmul.bf16.gmra.mxu0 %v5549
  %v5679 = vpop.f32.mrf.mxu0
  %v5680 = vadd.f32 0.0, %v5679
  %v5681 = vpop.f32.mrf.mxu0
  %v5682 = vadd.f32 0.0, %v5681
  %5683 = vmatmul.bf16.gmra.mxu0 %v5550
  %v5684 = vpop.f32.mrf.mxu0
  %v5685 = vadd.f32 0.0, %v5684
  %v5686 = vpop.f32.mrf.mxu0
  %v5687 = vadd.f32 0.0, %v5686
  %5688 = vmatmul.bf16.gmra.mxu0 %v5551
  %v5689 = vpop.f32.mrf.mxu0
  %v5690 = vadd.f32 0.0, %v5689
  %v5691 = vpop.f32.mrf.mxu0
  %v5692 = vadd.f32 0.0, %v5691
  %5693 = vmatmul.bf16.gmra.mxu0 %v5552
  %v5694 = vpop.f32.mrf.mxu0
  %v5695 = vadd.f32 0.0, %v5694
  %v5696 = vpop.f32.mrf.mxu0
  %v5697 = vadd.f32 0.0, %v5696
  %5698 = vmatmul.bf16.gmra.mxu0 %v5553
  %v5699 = vpop.f32.mrf.mxu0
  %v5700 = vadd.f32 0.0, %v5699
  %v5701 = vpop.f32.mrf.mxu0
  %v5702 = vadd.f32 0.0, %v5701
  %5703 = vmatmul.bf16.gmra.mxu0 %v5554
  %v5704 = vpop.f32.mrf.mxu0
  %v5705 = vadd.f32 0.0, %v5704
  %v5706 = vpop.f32.mrf.mxu0
  %v5707 = vadd.f32 0.0, %v5706
  %5708 = vmatmul.bf16.gmra.mxu0 %v5555
  %v5709 = vpop.f32.mrf.mxu0
  %v5710 = vadd.f32 0.0, %v5709
  %v5711 = vpop.f32.mrf.mxu0
  %v5712 = vadd.f32 0.0, %v5711
  %5713 = vmatmul.bf16.gmra.mxu0 %v5556
  %v5714 = vpop.f32.mrf.mxu0
  %v5715 = vadd.f32 0.0, %v5714
  %v5716 = vpop.f32.mrf.mxu0
  %v5717 = vadd.f32 0.0, %v5716
  %5718 = vmatmul.bf16.gmra.mxu0 %v5557
  %v5719 = vpop.f32.mrf.mxu0
  %v5720 = vadd.f32 0.0, %v5719
  %v5721 = vpop.f32.mrf.mxu0
  %v5722 = vadd.f32 0.0, %v5721
  %5723 = vmatmul.bf16.gmra.mxu0 %v5558
  %v5724 = vpop.f32.mrf.mxu0
  %v5725 = vadd.f32 0.0, %v5724
  %v5726 = vpop.f32.mrf.mxu0
  %v5727 = vadd.f32 0.0, %v5726
  %5728 = vmatmul.bf16.gmra.mxu0 %v5559
  %v5729 = vpop.f32.mrf.mxu0
  %v5730 = vadd.f32 0.0, %v5729
  %v5731 = vpop.f32.mrf.mxu0
  %v5732 = vadd.f32 0.0, %v5731
  %5733 = vmatmul.bf16.gmra.mxu0 %v5560
  %v5734 = vpop.f32.mrf.mxu0
  %v5735 = vadd.f32 0.0, %v5734
  %v5736 = vpop.f32.mrf.mxu0
  %v5737 = vadd.f32 0.0, %v5736
  %5738 = vmatmul.bf16.gmra.mxu0 %v5561
  %v5739 = vpop.f32.mrf.mxu0
  %v5740 = vadd.f32 0.0, %v5739
  %v5741 = vpop.f32.mrf.mxu0
  %v5742 = vadd.f32 0.0, %v5741
  %5743 = vmatmul.bf16.gmra.mxu0 %v5562
  %v5744 = vpop.f32.mrf.mxu0
  %v5745 = vadd.f32 0.0, %v5744
  %v5746 = vpop.f32.mrf.mxu0
  %v5747 = vadd.f32 0.0, %v5746
  %5748 = vmatmul.bf16.gmra.mxu0 %v5563
  %v5749 = vpop.f32.mrf.mxu0
  %v5750 = vadd.f32 0.0, %v5749
  %v5751 = vpop.f32.mrf.mxu0
  %v5752 = vadd.f32 0.0, %v5751
  %5753 = vmatmul.bf16.gmra.mxu0 %v5564
  %v5754 = vpop.f32.mrf.mxu0
  %v5755 = vadd.f32 0.0, %v5754
  %v5756 = vpop.f32.mrf.mxu0
  %v5757 = vadd.f32 0.0, %v5756
  %5758 = vmatmul.bf16.gmra.mxu0 %v5565
  %v5759 = vpop.f32.mrf.mxu0
  %v5760 = vadd.f32 0.0, %v5759
  %v5761 = vpop.f32.mrf.mxu0
  %v5762 = vadd.f32 0.0, %v5761
  %5763 = vmatmul.bf16.gmra.mxu0 %v5566
  %v5764 = vpop.f32.mrf.mxu0
  %v5765 = vadd.f32 0.0, %v5764
  %v5766 = vpop.f32.mrf.mxu0
  %v5767 = vadd.f32 0.0, %v5766
  %5768 = vmatmul.bf16.gmra.mxu0 %v5567
  %v5769 = vpop.f32.mrf.mxu0
  %v5770 = vadd.f32 0.0, %v5769
  %v5771 = vpop.f32.mrf.mxu0
  %v5772 = vadd.f32 0.0, %v5771
  %5773 = vmatmul.bf16.gmra.mxu0 %v5568
  %v5774 = vpop.f32.mrf.mxu0
  %v5775 = vadd.f32 0.0, %v5774
  %v5776 = vpop.f32.mrf.mxu0
  %v5777 = vadd.f32 0.0, %v5776
  %5778 = vmatmul.bf16.gmra.mxu0 %v5569
  %v5779 = vpop.f32.mrf.mxu0
  %v5780 = vadd.f32 0.0, %v5779
  %v5781 = vpop.f32.mrf.mxu0
  %v5782 = vadd.f32 0.0, %v5781
  %5783 = vmatmul.bf16.gmra.mxu0 %v5570
  %v5784 = vpop.f32.mrf.mxu0
  %v5785 = vadd.f32 0.0, %v5784
  %v5786 = vpop.f32.mrf.mxu0
  %v5787 = vadd.f32 0.0, %v5786
  %5788 = vmatmul.bf16.gmra.mxu0 %v5571
  %v5789 = vpop.f32.mrf.mxu0
  %v5790 = vadd.f32 0.0, %v5789
  %v5791 = vpop.f32.mrf.mxu0
  %v5792 = vadd.f32 0.0, %v5791
  %5793 = vmatmul.bf16.gmra.mxu0 %v5572
  %v5794 = vpop.f32.mrf.mxu0
  %v5795 = vadd.f32 0.0, %v5794
  %v5796 = vpop.f32.mrf.mxu0
  %v5797 = vadd.f32 0.0, %v5796
  %5798 = vmatmul.bf16.gmra.mxu0 %v5573
  %v5799 = vpop.f32.mrf.mxu0
  %v5800 = vadd.f32 0.0, %v5799
  %v5801 = vpop.f32.mrf.mxu0
  %v5802 = vadd.f32 0.0, %v5801
  %5803 = vmatmul.bf16.gmra.mxu0 %v5574
  %v5804 = vpop.f32.mrf.mxu0
  %v5805 = vadd.f32 0.0, %v5804
  %v5806 = vpop.f32.mrf.mxu0
  %v5807 = vadd.f32 0.0, %v5806
  %5808 = vdwg.mxu0
  %v5809 = vadd.f32 %v5650, %v5652
  %v5810 = vadd.f32 %v5809, %v5655
  %v5811 = vadd.f32 %v5810, %v5657
  %v5812 = vadd.f32 %v5811, %v5660
  %v5813 = vadd.f32 %v5812, %v5662
  %v5814 = vadd.f32 %v5813, %v5665
  %v5815 = vadd.f32 %v5814, %v5667
  %v5816 = vadd.f32 %v5815, %v5670
  %v5817 = vadd.f32 %v5816, %v5672
  %v5818 = vadd.f32 %v5817, %v5675
  %v5819 = vadd.f32 %v5818, %v5677
  %v5820 = vadd.f32 %v5819, %v5680
  %v5821 = vadd.f32 %v5820, %v5682
  %v5822 = vadd.f32 %v5821, %v5685
  %v5823 = vadd.f32 %v5822, %v5687
  %v5824 = vadd.f32 %v5823, %v5690
  %v5825 = vadd.f32 %v5824, %v5692
  %v5826 = vadd.f32 %v5825, %v5695
  %v5827 = vadd.f32 %v5826, %v5697
  %v5828 = vadd.f32 %v5827, %v5700
  %v5829 = vadd.f32 %v5828, %v5702
  %v5830 = vadd.f32 %v5829, %v5705
  %v5831 = vadd.f32 %v5830, %v5707
  %v5832 = vadd.f32 %v5831, %v5710
  %v5833 = vadd.f32 %v5832, %v5712
  %v5834 = vadd.f32 %v5833, %v5715
  %v5835 = vadd.f32 %v5834, %v5717
  %v5836 = vadd.f32 %v5835, %v5720
  %v5837 = vadd.f32 %v5836, %v5722
  %v5838 = vadd.f32 %v5837, %v5725
  %v5839 = vadd.f32 %v5838, %v5727
  %v5840 = vadd.f32 %v5839, %v5730
  %v5841 = vadd.f32 %v5840, %v5732
  %v5842 = vadd.f32 %v5841, %v5735
  %v5843 = vadd.f32 %v5842, %v5737
  %v5844 = vadd.f32 %v5843, %v5740
  %v5845 = vadd.f32 %v5844, %v5742
  %v5846 = vadd.f32 %v5845, %v5745
  %v5847 = vadd.f32 %v5846, %v5747
  %v5848 = vadd.f32 %v5847, %v5750
  %v5849 = vadd.f32 %v5848, %v5752
  %v5850 = vadd.f32 %v5849, %v5755
  %v5851 = vadd.f32 %v5850, %v5757
  %v5852 = vadd.f32 %v5851, %v5760
  %v5853 = vadd.f32 %v5852, %v5762
  %v5854 = vadd.f32 %v5853, %v5765
  %v5855 = vadd.f32 %v5854, %v5767
  %v5856 = vadd.f32 %v5855, %v5770
  %v5857 = vadd.f32 %v5856, %v5772
  %v5858 = vadd.f32 %v5857, %v5775
  %v5859 = vadd.f32 %v5858, %v5777
  %v5860 = vadd.f32 %v5859, %v5780
  %v5861 = vadd.f32 %v5860, %v5782
  %v5862 = vadd.f32 %v5861, %v5785
  %v5863 = vadd.f32 %v5862, %v5787
  %v5864 = vadd.f32 %v5863, %v5790
  %v5865 = vadd.f32 %v5864, %v5792
  %v5866 = vadd.f32 %v5865, %v5795
  %v5867 = vadd.f32 %v5866, %v5797
  %v5868 = vadd.f32 %v5867, %v5800
  %v5869 = vadd.f32 %v5868, %v5802
  %v5870 = vadd.f32 %v5869, %v5805
  %v5871 = vadd.f32 %v5870, %v5807
  %v5872 = vrot.slane %v5871, 4
  %v5873 = vadd.f32 %v5871, %v5872
  %v5874 = vrot.slane %v5873, 2
  %v5875 = vadd.f32 %v5873, %v5874
  %v5876 = vrot.slane %v5875, 1
  %v5877 = vadd.f32 %v5875, %v5876
  %v5878 = vmul.f32 %v5650, %v5650
  %v5879 = vmul.f32 %v5652, %v5652
  %v5880 = vmul.f32 %v5655, %v5655
  %v5881 = vmul.f32 %v5657, %v5657
  %v5882 = vmul.f32 %v5660, %v5660
  %v5883 = vmul.f32 %v5662, %v5662
  %v5884 = vmul.f32 %v5665, %v5665
  %v5885 = vmul.f32 %v5667, %v5667
  %v5886 = vmul.f32 %v5670, %v5670
  %v5887 = vmul.f32 %v5672, %v5672
  %v5888 = vmul.f32 %v5675, %v5675
  %v5889 = vmul.f32 %v5677, %v5677
  %v5890 = vmul.f32 %v5680, %v5680
  %v5891 = vmul.f32 %v5682, %v5682
  %v5892 = vmul.f32 %v5685, %v5685
  %v5893 = vmul.f32 %v5687, %v5687
  %v5894 = vmul.f32 %v5690, %v5690
  %v5895 = vmul.f32 %v5692, %v5692
  %v5896 = vmul.f32 %v5695, %v5695
  %v5897 = vmul.f32 %v5697, %v5697
  %v5898 = vmul.f32 %v5700, %v5700
  %v5899 = vmul.f32 %v5702, %v5702
  %v5900 = vmul.f32 %v5705, %v5705
  %v5901 = vmul.f32 %v5707, %v5707
  %v5902 = vmul.f32 %v5710, %v5710
  %v5903 = vmul.f32 %v5712, %v5712
  %v5904 = vmul.f32 %v5715, %v5715
  %v5905 = vmul.f32 %v5717, %v5717
  %v5906 = vmul.f32 %v5720, %v5720
  %v5907 = vmul.f32 %v5722, %v5722
  %v5908 = vmul.f32 %v5725, %v5725
  %v5909 = vmul.f32 %v5727, %v5727
  %v5910 = vmul.f32 %v5730, %v5730
  %v5911 = vmul.f32 %v5732, %v5732
  %v5912 = vmul.f32 %v5735, %v5735
  %v5913 = vmul.f32 %v5737, %v5737
  %v5914 = vmul.f32 %v5740, %v5740
  %v5915 = vmul.f32 %v5742, %v5742
  %v5916 = vmul.f32 %v5745, %v5745
  %v5917 = vmul.f32 %v5747, %v5747
  %v5918 = vmul.f32 %v5750, %v5750
  %v5919 = vmul.f32 %v5752, %v5752
  %v5920 = vmul.f32 %v5755, %v5755
  %v5921 = vmul.f32 %v5757, %v5757
  %v5922 = vmul.f32 %v5760, %v5760
  %v5923 = vmul.f32 %v5762, %v5762
  %v5924 = vmul.f32 %v5765, %v5765
  %v5925 = vmul.f32 %v5767, %v5767
  %v5926 = vmul.f32 %v5770, %v5770
  %v5927 = vmul.f32 %v5772, %v5772
  %v5928 = vmul.f32 %v5775, %v5775
  %v5929 = vmul.f32 %v5777, %v5777
  %v5930 = vmul.f32 %v5780, %v5780
  %v5931 = vmul.f32 %v5782, %v5782
  %v5932 = vmul.f32 %v5785, %v5785
  %v5933 = vmul.f32 %v5787, %v5787
  %v5934 = vmul.f32 %v5790, %v5790
  %v5935 = vmul.f32 %v5792, %v5792
  %v5936 = vmul.f32 %v5795, %v5795
  %v5937 = vmul.f32 %v5797, %v5797
  %v5938 = vmul.f32 %v5800, %v5800
  %v5939 = vmul.f32 %v5802, %v5802
  %v5940 = vmul.f32 %v5805, %v5805
  %v5941 = vmul.f32 %v5807, %v5807
  %v5942 = vadd.f32 %v5878, %v5879
  %v5943 = vadd.f32 %v5942, %v5880
  %v5944 = vadd.f32 %v5943, %v5881
  %v5945 = vadd.f32 %v5944, %v5882
  %v5946 = vadd.f32 %v5945, %v5883
  %v5947 = vadd.f32 %v5946, %v5884
  %v5948 = vadd.f32 %v5947, %v5885
  %v5949 = vadd.f32 %v5948, %v5886
  %v5950 = vadd.f32 %v5949, %v5887
  %v5951 = vadd.f32 %v5950, %v5888
  %v5952 = vadd.f32 %v5951, %v5889
  %v5953 = vadd.f32 %v5952, %v5890
  %v5954 = vadd.f32 %v5953, %v5891
  %v5955 = vadd.f32 %v5954, %v5892
  %v5956 = vadd.f32 %v5955, %v5893
  %v5957 = vadd.f32 %v5956, %v5894
  %v5958 = vadd.f32 %v5957, %v5895
  %v5959 = vadd.f32 %v5958, %v5896
  %v5960 = vadd.f32 %v5959, %v5897
  %v5961 = vadd.f32 %v5960, %v5898
  %v5962 = vadd.f32 %v5961, %v5899
  %v5963 = vadd.f32 %v5962, %v5900
  %v5964 = vadd.f32 %v5963, %v5901
  %v5965 = vadd.f32 %v5964, %v5902
  %v5966 = vadd.f32 %v5965, %v5903
  %v5967 = vadd.f32 %v5966, %v5904
  %v5968 = vadd.f32 %v5967, %v5905
  %v5969 = vadd.f32 %v5968, %v5906
  %v5970 = vadd.f32 %v5969, %v5907
  %v5971 = vadd.f32 %v5970, %v5908
  %v5972 = vadd.f32 %v5971, %v5909
  %v5973 = vadd.f32 %v5972, %v5910
  %v5974 = vadd.f32 %v5973, %v5911
  %v5975 = vadd.f32 %v5974, %v5912
  %v5976 = vadd.f32 %v5975, %v5913
  %v5977 = vadd.f32 %v5976, %v5914
  %v5978 = vadd.f32 %v5977, %v5915
  %v5979 = vadd.f32 %v5978, %v5916
  %v5980 = vadd.f32 %v5979, %v5917
  %v5981 = vadd.f32 %v5980, %v5918
  %v5982 = vadd.f32 %v5981, %v5919
  %v5983 = vadd.f32 %v5982, %v5920
  %v5984 = vadd.f32 %v5983, %v5921
  %v5985 = vadd.f32 %v5984, %v5922
  %v5986 = vadd.f32 %v5985, %v5923
  %v5987 = vadd.f32 %v5986, %v5924
  %v5988 = vadd.f32 %v5987, %v5925
  %v5989 = vadd.f32 %v5988, %v5926
  %v5990 = vadd.f32 %v5989, %v5927
  %v5991 = vadd.f32 %v5990, %v5928
  %v5992 = vadd.f32 %v5991, %v5929
  %v5993 = vadd.f32 %v5992, %v5930
  %v5994 = vadd.f32 %v5993, %v5931
  %v5995 = vadd.f32 %v5994, %v5932
  %v5996 = vadd.f32 %v5995, %v5933
  %v5997 = vadd.f32 %v5996, %v5934
  %v5998 = vadd.f32 %v5997, %v5935
  %v5999 = vadd.f32 %v5998, %v5936
  %v6000 = vadd.f32 %v5999, %v5937
  %v6001 = vadd.f32 %v6000, %v5938
  %v6002 = vadd.f32 %v6001, %v5939
  %v6003 = vadd.f32 %v6002, %v5940
  %v6004 = vadd.f32 %v6003, %v5941
  %v6005 = vrot.slane %v6004, 4
  %v6006 = vadd.f32 %v6004, %v6005
  %v6007 = vrot.slane %v6006, 2
  %v6008 = vadd.f32 %v6006, %v6007
  %v6009 = vrot.slane %v6008, 1
  %v6010 = vadd.f32 %v6008, %v6009
  %v6011 = vmul.f32 %v5877, 0.001953125
  %v6012 = vmul.f32 %v6010, 0.001953125
  %v6013 = vmul.f32 %v6011, %v6011
  %v6014 = vsub.f32 %v6012, %v6013
  %v6015 = vadd.f32 %v6014, 1e-05
  %v6016 = vrsqrt.pop %v6015
  %v6017 = vmul.f32 %v6016, %v6015
  %v6018 = vmul.f32 %v6017, %v6016
  %v6019 = vmul.f32 0.5, %v6018
  %v6020 = vsub.f32 1.5, %v6019
  %v6021 = vmul.f32 %v6016, %v6020
  %vm6022 = vweird.f32 %v6015
  %vm6023 = vweird.f32 %v6016
  %vm6024 = vmor %vm6022, %vm6023
  %v6025 = vsel %vm6024, %v6016, %v6021
  %v6026 = vmul.f32 %v78, %v6025
  %v6027 = vmul.f32 %v6011, %v6026
  %v6029 = vrot.slane %v6027, 7
  %v6031 = vsub.f32 %v78, %v6029
  %v6032 = vperm.slane %v6026, 4
  %v6033 = vmul.f32 %v5650, %v6032
  %v6034 = vmul.f32 %v5652, %v6032
  %v6035 = vmul.f32 %v5655, %v6032
  %v6036 = vmul.f32 %v5657, %v6032
  %v6037 = vmul.f32 %v5660, %v6032
  %v6038 = vmul.f32 %v5662, %v6032
  %v6039 = vmul.f32 %v5665, %v6032
  %v6040 = vmul.f32 %v5667, %v6032
  %v6041 = vmul.f32 %v5670, %v6032
  %v6042 = vmul.f32 %v5672, %v6032
  %v6043 = vmul.f32 %v5675, %v6032
  %v6044 = vmul.f32 %v5677, %v6032
  %v6045 = vmul.f32 %v5680, %v6032
  %v6046 = vmul.f32 %v5682, %v6032
  %v6047 = vmul.f32 %v5685, %v6032
  %v6048 = vmul.f32 %v5687, %v6032
  %v6049 = vmul.f32 %v5690, %v6032
  %v6050 = vmul.f32 %v5692, %v6032
  %v6051 = vmul.f32 %v5695, %v6032
  %v6052 = vmul.f32 %v5697, %v6032
  %v6053 = vmul.f32 %v5700, %v6032
  %v6054 = vmul.f32 %v5702, %v6032
  %v6055 = vmul.f32 %v5705, %v6032
  %v6056 = vmul.f32 %v5707, %v6032
  %v6057 = vmul.f32 %v5710, %v6032
  %v6058 = vmul.f32 %v5712, %v6032
  %v6059 = vmul.f32 %v5715, %v6032
  %v6060 = vmul.f32 %v5717, %v6032
  %v6061 = vmul.f32 %v5720, %v6032
  %v6062 = vmul.f32 %v5722, %v6032
  %v6063 = vmul.f32 %v5725, %v6032
  %v6064 = vmul.f32 %v5727, %v6032
  %v6065 = vmul.f32 %v5730, %v6032
  %v6066 = vmul.f32 %v5732, %v6032
  %v6067 = vmul.f32 %v5735, %v6032
  %v6068 = vmul.f32 %v5737, %v6032
  %v6069 = vmul.f32 %v5740, %v6032
  %v6070 = vmul.f32 %v5742, %v6032
  %v6071 = vmul.f32 %v5745, %v6032
  %v6072 = vmul.f32 %v5747, %v6032
  %v6073 = vmul.f32 %v5750, %v6032
  %v6074 = vmul.f32 %v5752, %v6032
  %v6075 = vmul.f32 %v5755, %v6032
  %v6076 = vmul.f32 %v5757, %v6032
  %v6077 = vmul.f32 %v5760, %v6032
  %v6078 = vmul.f32 %v5762, %v6032
  %v6079 = vmul.f32 %v5765, %v6032
  %v6080 = vmul.f32 %v5767, %v6032
  %v6081 = vmul.f32 %v5770, %v6032
  %v6082 = vmul.f32 %v5772, %v6032
  %v6083 = vmul.f32 %v5775, %v6032
  %v6084 = vmul.f32 %v5777, %v6032
  %v6085 = vmul.f32 %v5780, %v6032
  %v6086 = vmul.f32 %v5782, %v6032
  %v6087 = vmul.f32 %v5785, %v6032
  %v6088 = vmul.f32 %v5787, %v6032
  %v6089 = vmul.f32 %v5790, %v6032
  %v6090 = vmul.f32 %v5792, %v6032
  %v6091 = vmul.f32 %v5795, %v6032
  %v6092 = vmul.f32 %v5797, %v6032
  %v6093 = vmul.f32 %v5800, %v6032
  %v6094 = vmul.f32 %v5802, %v6032
  %v6095 = vmul.f32 %v5805, %v6032
  %v6096 = vmul.f32 %v5807, %v6032
  %v6097 = vperm.slane %v6031, 5
  %v6098 = vadd.f32 %v6033, %v6097
  %v6099 = vadd.f32 %v6034, %v6097
  %v6100 = vadd.f32 %v6035, %v6097
  %v6101 = vadd.f32 %v6036, %v6097
  %v6102 = vadd.f32 %v6037, %v6097
  %v6103 = vadd.f32 %v6038, %v6097
  %v6104 = vadd.f32 %v6039, %v6097
  %v6105 = vadd.f32 %v6040, %v6097
  %v6106 = vadd.f32 %v6041, %v6097
  %v6107 = vadd.f32 %v6042, %v6097
  %v6108 = vadd.f32 %v6043, %v6097
  %v6109 = vadd.f32 %v6044, %v6097
  %v6110 = vadd.f32 %v6045, %v6097
  %v6111 = vadd.f32 %v6046, %v6097
  %v6112 = vadd.f32 %v6047, %v6097
  %v6113 = vadd.f32 %v6048, %v6097
  %v6114 = vadd.f32 %v6049, %v6097
  %v6115 = vadd.f32 %v6050, %v6097
  %v6116 = vadd.f32 %v6051, %v6097
  %v6117 = vadd.f32 %v6052, %v6097
  %v6118 = vadd.f32 %v6053, %v6097
  %v6119 = vadd.f32 %v6054, %v6097
  %v6120 = vadd.f32 %v6055, %v6097
  %v6121 = vadd.f32 %v6056, %v6097
  %v6122 = vadd.f32 %v6057, %v6097
  %v6123 = vadd.f32 %v6058, %v6097
  %v6124 = vadd.f32 %v6059, %v6097
  %v6125 = vadd.f32 %v6060, %v6097
  %v6126 = vadd.f32 %v6061, %v6097
  %v6127 = vadd.f32 %v6062, %v6097
  %v6128 = vadd.f32 %v6063, %v6097
  %v6129 = vadd.f32 %v6064, %v6097
  %v6130 = vadd.f32 %v6065, %v6097
  %v6131 = vadd.f32 %v6066, %v6097
  %v6132 = vadd.f32 %v6067, %v6097
  %v6133 = vadd.f32 %v6068, %v6097
  %v6134 = vadd.f32 %v6069, %v6097
  %v6135 = vadd.f32 %v6070, %v6097
  %v6136 = vadd.f32 %v6071, %v6097
  %v6137 = vadd.f32 %v6072, %v6097
  %v6138 = vadd.f32 %v6073, %v6097
  %v6139 = vadd.f32 %v6074, %v6097
  %v6140 = vadd.f32 %v6075, %v6097
  %v6141 = vadd.f32 %v6076, %v6097
  %v6142 = vadd.f32 %v6077, %v6097
  %v6143 = vadd.f32 %v6078, %v6097
  %v6144 = vadd.f32 %v6079, %v6097
  %v6145 = vadd.f32 %v6080, %v6097
  %v6146 = vadd.f32 %v6081, %v6097
  %v6147 = vadd.f32 %v6082, %v6097
  %v6148 = vadd.f32 %v6083, %v6097
  %v6149 = vadd.f32 %v6084, %v6097
  %v6150 = vadd.f32 %v6085, %v6097
  %v6151 = vadd.f32 %v6086, %v6097
  %v6152 = vadd.f32 %v6087, %v6097
  %v6153 = vadd.f32 %v6088, %v6097
  %v6154 = vadd.f32 %v6089, %v6097
  %v6155 = vadd.f32 %v6090, %v6097
  %v6156 = vadd.f32 %v6091, %v6097
  %v6157 = vadd.f32 %v6092, %v6097
  %v6158 = vadd.f32 %v6093, %v6097
  %v6159 = vadd.f32 %v6094, %v6097
  %v6160 = vadd.f32 %v6095, %v6097
  %v6161 = vadd.f32 %v6096, %v6097
  %v6162 = vadd.f32 %v6098, %v14
  %v6163 = vadd.f32 %v6099, %v15
  %v6164 = vadd.f32 %v6100, %v16
  %v6165 = vadd.f32 %v6101, %v17
  %v6166 = vadd.f32 %v6102, %v18
  %v6167 = vadd.f32 %v6103, %v19
  %v6168 = vadd.f32 %v6104, %v20
  %v6169 = vadd.f32 %v6105, %v21
  %v6170 = vadd.f32 %v6106, %v22
  %v6171 = vadd.f32 %v6107, %v23
  %v6172 = vadd.f32 %v6108, %v24
  %v6173 = vadd.f32 %v6109, %v25
  %v6174 = vadd.f32 %v6110, %v26
  %v6175 = vadd.f32 %v6111, %v27
  %v6176 = vadd.f32 %v6112, %v28
  %v6177 = vadd.f32 %v6113, %v29
  %v6178 = vadd.f32 %v6114, %v30
  %v6179 = vadd.f32 %v6115, %v31
  %v6180 = vadd.f32 %v6116, %v32
  %v6181 = vadd.f32 %v6117, %v33
  %v6182 = vadd.f32 %v6118, %v34
  %v6183 = vadd.f32 %v6119, %v35
  %v6184 = vadd.f32 %v6120, %v36
  %v6185 = vadd.f32 %v6121, %v37
  %v6186 = vadd.f32 %v6122, %v38
  %v6187 = vadd.f32 %v6123, %v39
  %v6188 = vadd.f32 %v6124, %v40
  %v6189 = vadd.f32 %v6125, %v41
  %v6190 = vadd.f32 %v6126, %v42
  %v6191 = vadd.f32 %v6127, %v43
  %v6192 = vadd.f32 %v6128, %v44
  %v6193 = vadd.f32 %v6129, %v45
  %v6194 = vadd.f32 %v6130, %v46
  %v6195 = vadd.f32 %v6131, %v47
  %v6196 = vadd.f32 %v6132, %v48
  %v6197 = vadd.f32 %v6133, %v49
  %v6198 = vadd.f32 %v6134, %v50
  %v6199 = vadd.f32 %v6135, %v51
  %v6200 = vadd.f32 %v6136, %v52
  %v6201 = vadd.f32 %v6137, %v53
  %v6202 = vadd.f32 %v6138, %v54
  %v6203 = vadd.f32 %v6139, %v55
  %v6204 = vadd.f32 %v6140, %v56
  %v6205 = vadd.f32 %v6141, %v57
  %v6206 = vadd.f32 %v6142, %v58
  %v6207 = vadd.f32 %v6143, %v59
  %v6208 = vadd.f32 %v6144, %v60
  %v6209 = vadd.f32 %v6145, %v61
  %v6210 = vadd.f32 %v6146, %v62
  %v6211 = vadd.f32 %v6147, %v63
  %v6212 = vadd.f32 %v6148, %v64
  %v6213 = vadd.f32 %v6149, %v65
  %v6214 = vadd.f32 %v6150, %v66
  %v6215 = vadd.f32 %v6151, %v67
  %v6216 = vadd.f32 %v6152, %v68
  %v6217 = vadd.f32 %v6153, %v69
  %v6218 = vadd.f32 %v6154, %v70
  %v6219 = vadd.f32 %v6155, %v71
  %v6220 = vadd.f32 %v6156, %v72
  %v6221 = vadd.f32 %v6157, %v73
  %v6222 = vadd.f32 %v6158, %v74
  %v6223 = vadd.f32 %v6159, %v75
  %v6224 = vadd.f32 %v6160, %v76
  %v6225 = vadd.f32 %v6161, %v77
  %v6226 = vmax.f32 %v6162, 0.0
  %v6227 = vmax.f32 %v6163, 0.0
  %v6228 = vmax.f32 %v6164, 0.0
  %v6229 = vmax.f32 %v6165, 0.0
  %v6230 = vmax.f32 %v6166, 0.0
  %v6231 = vmax.f32 %v6167, 0.0
  %v6232 = vmax.f32 %v6168, 0.0
  %v6233 = vmax.f32 %v6169, 0.0
  %v6234 = vmax.f32 %v6170, 0.0
  %v6235 = vmax.f32 %v6171, 0.0
  %v6236 = vmax.f32 %v6172, 0.0
  %v6237 = vmax.f32 %v6173, 0.0
  %v6238 = vmax.f32 %v6174, 0.0
  %v6239 = vmax.f32 %v6175, 0.0
  %v6240 = vmax.f32 %v6176, 0.0
  %v6241 = vmax.f32 %v6177, 0.0
  %v6242 = vmax.f32 %v6178, 0.0
  %v6243 = vmax.f32 %v6179, 0.0
  %v6244 = vmax.f32 %v6180, 0.0
  %v6245 = vmax.f32 %v6181, 0.0
  %v6246 = vmax.f32 %v6182, 0.0
  %v6247 = vmax.f32 %v6183, 0.0
  %v6248 = vmax.f32 %v6184, 0.0
  %v6249 = vmax.f32 %v6185, 0.0
  %v6250 = vmax.f32 %v6186, 0.0
  %v6251 = vmax.f32 %v6187, 0.0
  %v6252 = vmax.f32 %v6188, 0.0
  %v6253 = vmax.f32 %v6189, 0.0
  %v6254 = vmax.f32 %v6190, 0.0
  %v6255 = vmax.f32 %v6191, 0.0
  %v6256 = vmax.f32 %v6192, 0.0
  %v6257 = vmax.f32 %v6193, 0.0
  %v6258 = vmax.f32 %v6194, 0.0
  %v6259 = vmax.f32 %v6195, 0.0
  %v6260 = vmax.f32 %v6196, 0.0
  %v6261 = vmax.f32 %v6197, 0.0
  %v6262 = vmax.f32 %v6198, 0.0
  %v6263 = vmax.f32 %v6199, 0.0
  %v6264 = vmax.f32 %v6200, 0.0
  %v6265 = vmax.f32 %v6201, 0.0
  %v6266 = vmax.f32 %v6202, 0.0
  %v6267 = vmax.f32 %v6203, 0.0
  %v6268 = vmax.f32 %v6204, 0.0
  %v6269 = vmax.f32 %v6205, 0.0
  %v6270 = vmax.f32 %v6206, 0.0
  %v6271 = vmax.f32 %v6207, 0.0
  %v6272 = vmax.f32 %v6208, 0.0
  %v6273 = vmax.f32 %v6209, 0.0
  %v6274 = vmax.f32 %v6210, 0.0
  %v6275 = vmax.f32 %v6211, 0.0
  %v6276 = vmax.f32 %v6212, 0.0
  %v6277 = vmax.f32 %v6213, 0.0
  %v6278 = vmax.f32 %v6214, 0.0
  %v6279 = vmax.f32 %v6215, 0.0
  %v6280 = vmax.f32 %v6216, 0.0
  %v6281 = vmax.f32 %v6217, 0.0
  %v6282 = vmax.f32 %v6218, 0.0
  %v6283 = vmax.f32 %v6219, 0.0
  %v6284 = vmax.f32 %v6220, 0.0
  %v6285 = vmax.f32 %v6221, 0.0
  %v6286 = vmax.f32 %v6222, 0.0
  %v6287 = vmax.f32 %v6223, 0.0
  %v6288 = vmax.f32 %v6224, 0.0
  %v6289 = vmax.f32 %v6225, 0.0
  %6290 = vst [vmem:[%s3] sm:$0xff] %v6226
  %6291 = vst [vmem:[%s3 + $0x8] sm:$0xff] %v6227
  %6292 = vst [vmem:[%s3 + $0x10] sm:$0xff] %v6228
  %6293 = vst [vmem:[%s3 + $0x18] sm:$0xff] %v6229
  %6294 = vst [vmem:[%s3 + $0x20] sm:$0xff] %v6230
  %6295 = vst [vmem:[%s3 + $0x28] sm:$0xff] %v6231
  %6296 = vst [vmem:[%s3 + $0x30] sm:$0xff] %v6232
  %6297 = vst [vmem:[%s3 + $0x38] sm:$0xff] %v6233
  %6298 = vst [vmem:[%s3 + $0x40] sm:$0xff] %v6234
  %6299 = vst [vmem:[%s3 + $0x48] sm:$0xff] %v6235
  %6300 = vst [vmem:[%s3 + $0x50] sm:$0xff] %v6236
  %6301 = vst [vmem:[%s3 + $0x58] sm:$0xff] %v6237
  %6302 = vst [vmem:[%s3 + $0x60] sm:$0xff] %v6238
  %6303 = vst [vmem:[%s3 + $0x68] sm:$0xff] %v6239
  %6304 = vst [vmem:[%s3 + $0x70] sm:$0xff] %v6240
  %6305 = vst [vmem:[%s3 + $0x78] sm:$0xff] %v6241
  %6306 = vst [vmem:[%s3 + $0x80] sm:$0xff] %v6242
  %6307 = vst [vmem:[%s3 + $0x88] sm:$0xff] %v6243
  %6308 = vst [vmem:[%s3 + $0x90] sm:$0xff] %v6244
  %6309 = vst [vmem:[%s3 + $0x98] sm:$0xff] %v6245
  %6310 = vst [vmem:[%s3 + $0xa0] sm:$0xff] %v6246
  %6311 = vst [vmem:[%s3 + $0xa8] sm:$0xff] %v6247
  %6312 = vst [vmem:[%s3 + $0xb0] sm:$0xff] %v6248
  %6313 = vst [vmem:[%s3 + $0xb8] sm:$0xff] %v6249
  %6314 = vst [vmem:[%s3 + $0xc0] sm:$0xff] %v6250
  %6315 = vst [vmem:[%s3 + $0xc8] sm:$0xff] %v6251
  %6316 = vst [vmem:[%s3 + $0xd0] sm:$0xff] %v6252
  %6317 = vst [vmem:[%s3 + $0xd8] sm:$0xff] %v6253
  %6318 = vst [vmem:[%s3 + $0xe0] sm:$0xff] %v6254
  %6319 = vst [vmem:[%s3 + $0xe8] sm:$0xff] %v6255
  %6320 = vst [vmem:[%s3 + $0xf0] sm:$0xff] %v6256
  %6321 = vst [vmem:[%s3 + $0xf8] sm:$0xff] %v6257
  %6322 = vst [vmem:[%s3 + $0x100] sm:$0xff] %v6258
  %6323 = vst [vmem:[%s3 + $0x108] sm:$0xff] %v6259
  %6324 = vst [vmem:[%s3 + $0x110] sm:$0xff] %v6260
  %6325 = vst [vmem:[%s3 + $0x118] sm:$0xff] %v6261
  %6326 = vst [vmem:[%s3 + $0x120] sm:$0xff] %v6262
  %6327 = vst [vmem:[%s3 + $0x128] sm:$0xff] %v6263
  %6328 = vst [vmem:[%s3 + $0x130] sm:$0xff] %v6264
  %6329 = vst [vmem:[%s3 + $0x138] sm:$0xff] %v6265
  %6330 = vst [vmem:[%s3 + $0x140] sm:$0xff] %v6266
  %6331 = vst [vmem:[%s3 + $0x148] sm:$0xff] %v6267
  %6332 = vst [vmem:[%s3 + $0x150] sm:$0xff] %v6268
  %6333 = vst [vmem:[%s3 + $0x158] sm:$0xff] %v6269
  %6334 = vst [vmem:[%s3 + $0x160] sm:$0xff] %v6270
  %6335 = vst [vmem:[%s3 + $0x168] sm:$0xff] %v6271
  %6336 = vst [vmem:[%s3 + $0x170] sm:$0xff] %v6272
  %6337 = vst [vmem:[%s3 + $0x178] sm:$0xff] %v6273
  %6338 = vst [vmem:[%s3 + $0x180] sm:$0xff] %v6274
  %6339 = vst [vmem:[%s3 + $0x188] sm:$0xff] %v6275
  %6340 = vst [vmem:[%s3 + $0x190] sm:$0xff] %v6276
  %6341 = vst [vmem:[%s3 + $0x198] sm:$0xff] %v6277
  %6342 = vst [vmem:[%s3 + $0x1a0] sm:$0xff] %v6278
  %6343 = vst [vmem:[%s3 + $0x1a8] sm:$0xff] %v6279
  %6344 = vst [vmem:[%s3 + $0x1b0] sm:$0xff] %v6280
  %6345 = vst [vmem:[%s3 + $0x1b8] sm:$0xff] %v6281
  %6346 = vst [vmem:[%s3 + $0x1c0] sm:$0xff] %v6282
  %6347 = vst [vmem:[%s3 + $0x1c8] sm:$0xff] %v6283
  %6348 = vst [vmem:[%s3 + $0x1d0] sm:$0xff] %v6284
  %6349 = vst [vmem:[%s3 + $0x1d8] sm:$0xff] %v6285
  %6350 = vst [vmem:[%s3 + $0x1e0] sm:$0xff] %v6286
  %6351 = vst [vmem:[%s3 + $0x1e8] sm:$0xff] %v6287
  %6352 = vst [vmem:[%s3 + $0x1f0] sm:$0xff] %v6288
  %6353 = vst [vmem:[%s3 + $0x1f8] sm:$0xff] %v6289
  // Predicated region
  $region14: #{bottleneck_pallas.1} parent=0 // pred_check
    _
  $region15: #{bottleneck_pallas.1} parent=0 // pred_check_branch
    %6355 = sbr.rel (0) target = $region17
  $region16: #{bottleneck_pallas.1} parent=0 // pred_region
    _
  $region17: #{bottleneck_pallas.1} parent=0 // pred_fallthru
    _
  // Predicated region
  $region18: #{bottleneck_pallas.1} parent=0 // pred_check
    _
  $region19: #{bottleneck_pallas.1} parent=0 // pred_check_branch
    %6357 = sbr.rel (0) target = $region21
  $region20: #{bottleneck_pallas.1} parent=0 // pred_region
    _
  $region21: #{bottleneck_pallas.1} parent=0 // pred_fallthru
    _

</llo_original>
